<compile_context>
chip_gen: v6e
topology: v6e:2x2x1
jax: 0.10.0
libtpu: 0.0.40
codegen_flags: <defaults>
</compile_context>

<pallas_src>
import jax
import jax.numpy as jnp
from jax import lax
from jax.experimental import pallas as pl
from jax.experimental.pallas import tpu as pltpu

C_LANE = 128      # conv1 out-channels padded to one full lane tile
BN_EPS = 1e-5


def _make_conv_block_kernel(N, H, W, Cin, Cout):
    HW = H * W
    P = N * HW                      # spatial positions across the whole batch

    def kernel(x_ref, w1_ref, b1_ref, g1_ref, bt1_ref,
               w2_ref, b2_ref, g2_ref, bt2_ref,
               o_ref, xp1_ref, xp2_ref):
        f32 = jnp.float32
        cnt = f32(P)

        # ---- stage 0: NCHW input -> zero-padded NHWC halo scratch --------------
        # (HW, Cin) = eye_hw @ x_n^T as a minor-minor (A@B^T) MXU contraction
        # (same pattern as flash-attention q@k^T); avoids an XLU transpose of an
        # awkward (Cin, HW) tile and keeps the wrapper transpose-free.
        row = lax.broadcasted_iota(jnp.int32, (HW, HW), 0)
        col = lax.broadcasted_iota(jnp.int32, (HW, HW), 1)
        eye_hw = jnp.where(row == col, f32(1.0), f32(0.0))
        xp1_ref[...] = jnp.zeros(xp1_ref.shape, f32)
        for n in range(N):
            xn_t = lax.dot_general(eye_hw, x_ref[n], (((1,), (1,)), ((), ())),
                                   preferred_element_type=f32)      # (HW, Cin)
            xp1_ref[n, 1:H + 1, 1:W + 1, :] = xn_t.reshape(H, W, Cin)

        # ---- conv1: ONE im2col matmul (P, 9*Cin) @ (9*Cin, 128) ----------------
        taps1 = [xp1_ref[:, kh:kh + H, kw:kw + W, :]
                 for kh in range(3) for kw in range(3)]
        patch1 = jnp.concatenate(taps1, axis=-1).reshape(P, 9 * Cin)
        h = jnp.dot(patch1, w1_ref[...], preferred_element_type=f32)   # (P, 128)
        h = h + b1_ref[...]

        # ---- BN1 (batch stats over rows; all 128 lanes dense) + ReLU -----------
        mean1 = jnp.sum(h, axis=0, keepdims=True) / cnt
        d1 = h - mean1
        var1 = jnp.sum(d1 * d1, axis=0, keepdims=True) / cnt            # biased var
        h = d1 * lax.rsqrt(var1 + BN_EPS) * g1_ref[...] + bt1_ref[...]
        h = jnp.maximum(h, 0.0)

        # ---- conv2 input: useful channels into a zero-padded halo scratch ------
        xp2_ref[...] = jnp.zeros(xp2_ref.shape, f32)
        xp2_ref[:, 1:H + 1, 1:W + 1, :] = h[:, :Cout].reshape(N, H, W, Cout)

        # ---- conv2: ONE matmul, emitted in channel-row form (Cout, P) ----------
        taps2 = [xp2_ref[:, kh:kh + H, kw:kw + W, :]
                 for kh in range(3) for kw in range(3)]
        patch2 = jnp.concatenate(taps2, axis=-1).reshape(P, 9 * Cout)
        # y[c, p] = sum_k w2[c, k] * patch2[p, k]   (A @ B^T on the MXU)
        y = lax.dot_general(w2_ref[...], patch2, (((1,), (1,)), ((), ())),
                            preferred_element_type=f32)                 # (Cout, P)
        y = y + b2_ref[...]

        # ---- BN2 (stats along 512 dense lanes per channel) + ReLU --------------
        mean2 = jnp.sum(y, axis=1, keepdims=True) / cnt
        d2 = y - mean2
        var2 = jnp.sum(d2 * d2, axis=1, keepdims=True) / cnt
        y = d2 * lax.rsqrt(var2 + BN_EPS) * g2_ref[...] + bt2_ref[...]
        y = jnp.maximum(y, 0.0)

        # ---- lane-dense output store: (N, Cout, H*W), 256-wide unmasked vst ----
        for n in range(N):
            o_ref[n] = y[:, n * HW:(n + 1) * HW]

    return kernel


def conv_block_forward(x_nchw, params):
    """x_nchw: (N, Cin, H, W) f32; params: HWIO conv weights + BN affine params."""
    N, Cin, H, W = x_nchw.shape
    Cout = params["w1"].shape[-1]
    HW = H * W
    C2 = C_LANE
    assert Cout <= C2 and params["w1"].shape == (3, 3, Cin, Cout)

    # conv1: HWIO -> (9*Cin, Cout), out-channels zero-padded to the 128-lane tile.
    w1 = jnp.pad(params["w1"].reshape(9 * Cin, Cout), ((0, 0), (0, C2 - Cout)))
    b1 = jnp.pad(params["b1"], (0, C2 - Cout)).reshape(1, C2)
    g1 = jnp.pad(params["gamma1"], (0, C2 - Cout), constant_values=1.0).reshape(1, C2)
    bt1 = jnp.pad(params["beta1"], (0, C2 - Cout)).reshape(1, C2)

    # conv2: HWIO -> (Cout, 9*Cin2) so the kernel emits a (Cout, N*H*W) channel map.
    w2 = jnp.transpose(params["w2"].reshape(9 * Cout, Cout))        # (Cout, 9*Cout)
    b2 = params["b2"].reshape(Cout, 1)
    g2 = params["gamma2"].reshape(Cout, 1)
    bt2 = params["beta2"].reshape(Cout, 1)

    kernel = _make_conv_block_kernel(N, H, W, Cin, Cout)
    out = pl.pallas_call(
        kernel,
        out_shape=jax.ShapeDtypeStruct((N, Cout, HW), jnp.float32),
        scratch_shapes=[
            pltpu.VMEM((N, H + 2, W + 2, Cin), jnp.float32),    # conv1 halo buffer
            pltpu.VMEM((N, H + 2, W + 2, Cout), jnp.float32),   # conv2 halo buffer
        ],
        compiler_params=pltpu.CompilerParams(vmem_limit_bytes=32 * 1024 * 1024),
    )(x_nchw.reshape(N, Cin, HW), w1, b1, g1, bt1, w2, b2, g2, bt2)

    # (N, Cout, H*W) -> (N, Cout, H, W): pure metadata reshape, no transpose/copy.
    return out.reshape(N, Cout, H, W)


# ------------------------------------------------------------------------------
# Pure-JAX reference (correctness check only)
# ------------------------------------------------------------------------------
def conv_block_reference(x_nchw, params):
    def conv(x, w, b):  # x NCHW, w HWIO
        y = lax.conv_general_dilated(
            x, w, window_strides=(1, 1), padding="SAME",
            dimension_numbers=("NCHW", "HWIO", "NCHW"))
        return y + b[None, :, None, None]

    def bnr(x, g, bt):
        mean = jnp.mean(x, axis=(0, 2, 3), keepdims=True)
        var = jnp.mean((x - mean) ** 2, axis=(0, 2, 3), keepdims=True)
        y = (x - mean) * lax.rsqrt(var + BN_EPS)
        y = y * g[None, :, None, None] + bt[None, :, None, None]
        return jnp.maximum(y, 0.0)

    x = bnr(conv(x_nchw, params["w1"], params["b1"]), params["gamma1"], params["beta1"])
    x = bnr(conv(x, params["w2"], params["b2"]), params["gamma2"], params["beta2"])
    return x


if __name__ == "__main__":
    key = jax.random.PRNGKey(0)
    N, Cin, Cout, H, W = 2, 4, 8, 16, 16

    k_x, k_w1, k_b1, k_w2, k_b2 = jax.random.split(key, 5)
    x = jax.random.normal(k_x, (N, Cin, H, W), dtype=jnp.float32)

    params = {
        "w1": 0.1 * jax.random.normal(k_w1, (3, 3, Cin, Cout), dtype=jnp.float32),
        "b1": 0.05 * jax.random.normal(k_b1, (Cout,), dtype=jnp.float32),
        "gamma1": jnp.ones((Cout,), jnp.float32),
        "beta1": jnp.zeros((Cout,), jnp.float32),
        "w2": 0.1 * jax.random.normal(k_w2, (3, 3, Cout, Cout), dtype=jnp.float32),
        "b2": 0.05 * jax.random.normal(k_b2, (Cout,), dtype=jnp.float32),
        "gamma2": jnp.ones((Cout,), jnp.float32),
        "beta2": jnp.zeros((Cout,), jnp.float32),
    }

    out = jax.block_until_ready(conv_block_forward(x, params))
    ref = jax.block_until_ready(conv_block_reference(x, params))

    assert out.shape == (N, Cout, H, W), out.shape
    assert jnp.allclose(out, ref, atol=1e-4, rtol=1e-4), float(
        jnp.max(jnp.abs(out - ref))
    )
    print("KERNEL_OK")
</pallas_src>

<mosaic_0001>
module attributes {stable_mosaic.version = 11 : i64} {
  func.func @kernel(%arg0: memref<2x4x256xf32, #tpu.memory_space<vmem>>, %arg1: memref<36x128xf32, #tpu.memory_space<vmem>>, %arg2: memref<1x128xf32, #tpu.memory_space<vmem>>, %arg3: memref<1x128xf32, #tpu.memory_space<vmem>>, %arg4: memref<1x128xf32, #tpu.memory_space<vmem>>, %arg5: memref<8x72xf32, #tpu.memory_space<vmem>>, %arg6: memref<8x1xf32, #tpu.memory_space<vmem>>, %arg7: memref<8x1xf32, #tpu.memory_space<vmem>>, %arg8: memref<8x1xf32, #tpu.memory_space<vmem>>, %arg9: memref<2x8x256xf32, #tpu.memory_space<vmem>>, %arg10: memref<2x18x18x4xf32, #tpu.memory_space<vmem>>, %arg11: memref<2x18x18x8xf32, #tpu.memory_space<vmem>>) attributes {dimension_semantics = [], scalar_prefetch = 0 : i64, scratch_operands = 2 : i64, tpu.core_type = #tpu.core_type<tc>} {
    %0 = tpu.iota {dimensions = array<i32: 0>} : vector<256x256xi32>
    %1 = tpu.iota {dimensions = array<i32: 1>} : vector<256x256xi32>
    %2 = arith.cmpi eq, %0, %1 : vector<256x256xi32>
    %cst = arith.constant 1.000000e+00 : f32
    %cst_0 = arith.constant 0.000000e+00 : f32
    %3 = vector.broadcast %cst : f32 to vector<256x256xf32>
    %4 = vector.broadcast %cst_0 : f32 to vector<256x256xf32>
    %5 = arith.select %2, %3, %4 : vector<256x256xi1>, vector<256x256xf32>
    %cst_1 = arith.constant 0.000000e+00 : f32
    %6 = vector.broadcast %cst_1 : f32 to vector<2x18x18x4xf32>
    %c0 = arith.constant 0 : index
    %c0_2 = arith.constant 0 : index
    %c0_3 = arith.constant 0 : index
    %c0_4 = arith.constant 0 : index
    %7 = vector.load %arg10[%c0, %c0_2, %c0_3, %c0_4] : memref<2x18x18x4xf32, #tpu.memory_space<vmem>>, vector<2x18x18x4xf32>
    tpu.vector_store %arg10[%c0, %c0_2, %c0_3, %c0_4], %6 {strides = array<i32>} : memref<2x18x18x4xf32, #tpu.memory_space<vmem>>, vector<2x18x18x4xf32>,
    %c0_5 = arith.constant 0 : index
    %c0_6 = arith.constant 0 : index
    %c0_7 = arith.constant 0 : index
    %8 = vector.load %arg0[%c0_5, %c0_6, %c0_7] : memref<2x4x256xf32, #tpu.memory_space<vmem>>, vector<1x4x256xf32>
    %9 = vector.shape_cast %8 : vector<1x4x256xf32> to vector<4x256xf32>
    %cst_8 = arith.constant dense<0.000000e+00> : vector<256x4xf32>
    %10 = tpu.matmul %5, %9, %cst_8 {dimension_numbers = #tpu.dot_dimension_numbers<[1], [1], [0], [0], [0, 0, 1, 0], [], []>} : vector<256x256xf32>, vector<4x256xf32>, vector<256x4xf32> -> vector<256x4xf32>
    %11 = vector.shape_cast %10 : vector<256x4xf32> to vector<16x16x4xf32>
    %c0_9 = arith.constant 0 : index
    %c1 = arith.constant 1 : index
    %c1_10 = arith.constant 1 : index
    %c0_11 = arith.constant 0 : index
    %12 = vector.load %arg10[%c0_9, %c1, %c1_10, %c0_11] : memref<2x18x18x4xf32, #tpu.memory_space<vmem>>, vector<1x16x16x4xf32>
    %13 = vector.shape_cast %12 : vector<1x16x16x4xf32> to vector<16x16x4xf32>
    %14 = vector.shape_cast %11 : vector<16x16x4xf32> to vector<1x16x16x4xf32>
    tpu.vector_store %arg10[%c0_9, %c1, %c1_10, %c0_11], %14 {strides = array<i32>} : memref<2x18x18x4xf32, #tpu.memory_space<vmem>>, vector<1x16x16x4xf32>,
    %c1_12 = arith.constant 1 : index
    %c0_13 = arith.constant 0 : index
    %c0_14 = arith.constant 0 : index
    %15 = vector.load %arg0[%c1_12, %c0_13, %c0_14] : memref<2x4x256xf32, #tpu.memory_space<vmem>>, vector<1x4x256xf32>
    %16 = vector.shape_cast %15 : vector<1x4x256xf32> to vector<4x256xf32>
    %cst_15 = arith.constant dense<0.000000e+00> : vector<256x4xf32>
    %17 = tpu.matmul %5, %16, %cst_15 {dimension_numbers = #tpu.dot_dimension_numbers<[1], [1], [0], [0], [0, 0, 1, 0], [], []>} : vector<256x256xf32>, vector<4x256xf32>, vector<256x4xf32> -> vector<256x4xf32>
    %18 = vector.shape_cast %17 : vector<256x4xf32> to vector<16x16x4xf32>
    %c1_16 = arith.constant 1 : index
    %c1_17 = arith.constant 1 : index
    %c1_18 = arith.constant 1 : index
    %c0_19 = arith.constant 0 : index
    %19 = vector.load %arg10[%c1_16, %c1_17, %c1_18, %c0_19] : memref<2x18x18x4xf32, #tpu.memory_space<vmem>>, vector<1x16x16x4xf32>
    %20 = vector.shape_cast %19 : vector<1x16x16x4xf32> to vector<16x16x4xf32>
    %21 = vector.shape_cast %18 : vector<16x16x4xf32> to vector<1x16x16x4xf32>
    tpu.vector_store %arg10[%c1_16, %c1_17, %c1_18, %c0_19], %21 {strides = array<i32>} : memref<2x18x18x4xf32, #tpu.memory_space<vmem>>, vector<1x16x16x4xf32>,
    %c0_20 = arith.constant 0 : index
    %c0_21 = arith.constant 0 : index
    %c0_22 = arith.constant 0 : index
    %c0_23 = arith.constant 0 : index
    %22 = vector.load %arg10[%c0_20, %c0_21, %c0_22, %c0_23] : memref<2x18x18x4xf32, #tpu.memory_space<vmem>>, vector<2x16x16x4xf32>
    %c0_24 = arith.constant 0 : index
    %c0_25 = arith.constant 0 : index
    %c1_26 = arith.constant 1 : index
    %c0_27 = arith.constant 0 : index
    %23 = vector.load %arg10[%c0_24, %c0_25, %c1_26, %c0_27] : memref<2x18x18x4xf32, #tpu.memory_space<vmem>>, vector<2x16x16x4xf32>
    %c0_28 = arith.constant 0 : index
    %c0_29 = arith.constant 0 : index
    %c2 = arith.constant 2 : index
    %c0_30 = arith.constant 0 : index
    %24 = vector.load %arg10[%c0_28, %c0_29, %c2, %c0_30] : memref<2x18x18x4xf32, #tpu.memory_space<vmem>>, vector<2x16x16x4xf32>
    %c0_31 = arith.constant 0 : index
    %c1_32 = arith.constant 1 : index
    %c0_33 = arith.constant 0 : index
    %c0_34 = arith.constant 0 : index
    %25 = vector.load %arg10[%c0_31, %c1_32, %c0_33, %c0_34] : memref<2x18x18x4xf32, #tpu.memory_space<vmem>>, vector<2x16x16x4xf32>
    %c0_35 = arith.constant 0 : index
    %c1_36 = arith.constant 1 : index
    %c1_37 = arith.constant 1 : index
    %c0_38 = arith.constant 0 : index
    %26 = vector.load %arg10[%c0_35, %c1_36, %c1_37, %c0_38] : memref<2x18x18x4xf32, #tpu.memory_space<vmem>>, vector<2x16x16x4xf32>
    %c0_39 = arith.constant 0 : index
    %c1_40 = arith.constant 1 : index
    %c2_41 = arith.constant 2 : index
    %c0_42 = arith.constant 0 : index
    %27 = vector.load %arg10[%c0_39, %c1_40, %c2_41, %c0_42] : memref<2x18x18x4xf32, #tpu.memory_space<vmem>>, vector<2x16x16x4xf32>
    %c0_43 = arith.constant 0 : index
    %c2_44 = arith.constant 2 : index
    %c0_45 = arith.constant 0 : index
    %c0_46 = arith.constant 0 : index
    %28 = vector.load %arg10[%c0_43, %c2_44, %c0_45, %c0_46] : memref<2x18x18x4xf32, #tpu.memory_space<vmem>>, vector<2x16x16x4xf32>
    %c0_47 = arith.constant 0 : index
    %c2_48 = arith.constant 2 : index
    %c1_49 = arith.constant 1 : index
    %c0_50 = arith.constant 0 : index
    %29 = vector.load %arg10[%c0_47, %c2_48, %c1_49, %c0_50] : memref<2x18x18x4xf32, #tpu.memory_space<vmem>>, vector<2x16x16x4xf32>
    %c0_51 = arith.constant 0 : index
    %c2_52 = arith.constant 2 : index
    %c2_53 = arith.constant 2 : index
    %c0_54 = arith.constant 0 : index
    %30 = vector.load %arg10[%c0_51, %c2_52, %c2_53, %c0_54] : memref<2x18x18x4xf32, #tpu.memory_space<vmem>>, vector<2x16x16x4xf32>
    %31 = tpu.concatenate %22, %23, %24, %25, %26, %27, %28, %29, %30 in 3 : vector<2x16x16x4xf32>, vector<2x16x16x4xf32>, vector<2x16x16x4xf32>, vector<2x16x16x4xf32>, vector<2x16x16x4xf32>, vector<2x16x16x4xf32>, vector<2x16x16x4xf32>, vector<2x16x16x4xf32>, vector<2x16x16x4xf32> -> vector<2x16x16x36xf32>
    %32 = vector.shape_cast %31 : vector<2x16x16x36xf32> to vector<512x36xf32>
    %c0_55 = arith.constant 0 : index
    %c0_56 = arith.constant 0 : index
    %33 = vector.load %arg1[%c0_55, %c0_56] : memref<36x128xf32, #tpu.memory_space<vmem>>, vector<36x128xf32>
    %cst_57 = arith.constant dense<0.000000e+00> : vector<512x128xf32>
    %34 = tpu.matmul %32, %33, %cst_57 {dimension_numbers = #tpu.dot_dimension_numbers<[1], [0], [0], [1], [0, 0, 1, 1], [], []>} : vector<512x36xf32>, vector<36x128xf32>, vector<512x128xf32> -> vector<512x128xf32>
    %c0_58 = arith.constant 0 : index
    %c0_59 = arith.constant 0 : index
    %35 = vector.load %arg2[%c0_58, %c0_59] : memref<1x128xf32, #tpu.memory_space<vmem>>, vector<1x128xf32>
    %36 = vector.broadcast %35 : vector<1x128xf32> to vector<512x128xf32>
    %37 = arith.addf %34, %36 : vector<512x128xf32>
    %cst_60 = arith.constant dense<0.000000e+00> : vector<128xf32>
    %38 = vector.multi_reduction <add>, %37, %cst_60 [0] : vector<512x128xf32> to vector<128xf32>
    %39 = vector.shape_cast %38 : vector<128xf32> to vector<1x128xf32>
    %cst_61 = arith.constant 5.120000e+02 : f32
    %40 = vector.broadcast %cst_61 : f32 to vector<1x128xf32>
    %41 = arith.divf %39, %40 : vector<1x128xf32>
    %42 = vector.broadcast %41 : vector<1x128xf32> to vector<512x128xf32>
    %43 = arith.subf %37, %42 : vector<512x128xf32>
    %44 = arith.mulf %43, %43 : vector<512x128xf32>
    %cst_62 = arith.constant dense<0.000000e+00> : vector<128xf32>
    %45 = vector.multi_reduction <add>, %44, %cst_62 [0] : vector<512x128xf32> to vector<128xf32>
    %46 = vector.shape_cast %45 : vector<128xf32> to vector<1x128xf32>
    %cst_63 = arith.constant 5.120000e+02 : f32
    %47 = vector.broadcast %cst_63 : f32 to vector<1x128xf32>
    %48 = arith.divf %46, %47 : vector<1x128xf32>
    %cst_64 = arith.constant 9.99999974E-6 : f32
    %49 = vector.broadcast %cst_64 : f32 to vector<1x128xf32>
    %50 = arith.addf %48, %49 : vector<1x128xf32>
    %51 = math.rsqrt %50 : vector<1x128xf32>
    %52 = vector.broadcast %51 : vector<1x128xf32> to vector<512x128xf32>
    %53 = arith.mulf %43, %52 : vector<512x128xf32>
    %c0_65 = arith.constant 0 : index
    %c0_66 = arith.constant 0 : index
    %54 = vector.load %arg3[%c0_65, %c0_66] : memref<1x128xf32, #tpu.memory_space<vmem>>, vector<1x128xf32>
    %55 = vector.broadcast %54 : vector<1x128xf32> to vector<512x128xf32>
    %56 = arith.mulf %53, %55 : vector<512x128xf32>
    %c0_67 = arith.constant 0 : index
    %c0_68 = arith.constant 0 : index
    %57 = vector.load %arg4[%c0_67, %c0_68] : memref<1x128xf32, #tpu.memory_space<vmem>>, vector<1x128xf32>
    %58 = vector.broadcast %57 : vector<1x128xf32> to vector<512x128xf32>
    %59 = arith.addf %56, %58 : vector<512x128xf32>
    %cst_69 = arith.constant 0.000000e+00 : f32
    %60 = vector.broadcast %cst_69 : f32 to vector<512x128xf32>
    %61 = arith.maximumf %59, %60 : vector<512x128xf32>
    %cst_70 = arith.constant 0.000000e+00 : f32
    %62 = vector.broadcast %cst_70 : f32 to vector<2x18x18x8xf32>
    %c0_71 = arith.constant 0 : index
    %c0_72 = arith.constant 0 : index
    %c0_73 = arith.constant 0 : index
    %c0_74 = arith.constant 0 : index
    %63 = vector.load %arg11[%c0_71, %c0_72, %c0_73, %c0_74] : memref<2x18x18x8xf32, #tpu.memory_space<vmem>>, vector<2x18x18x8xf32>
    tpu.vector_store %arg11[%c0_71, %c0_72, %c0_73, %c0_74], %62 {strides = array<i32>} : memref<2x18x18x8xf32, #tpu.memory_space<vmem>>, vector<2x18x18x8xf32>,
    %64 = vector.extract_strided_slice %61 {offsets = [0, 0], sizes = [512, 8], strides = [1, 1]} : vector<512x128xf32> to vector<512x8xf32>
    %65 = vector.shape_cast %64 : vector<512x8xf32> to vector<2x16x16x8xf32>
    %c0_75 = arith.constant 0 : index
    %c1_76 = arith.constant 1 : index
    %c1_77 = arith.constant 1 : index
    %c0_78 = arith.constant 0 : index
    %66 = vector.load %arg11[%c0_75, %c1_76, %c1_77, %c0_78] : memref<2x18x18x8xf32, #tpu.memory_space<vmem>>, vector<2x16x16x8xf32>
    tpu.vector_store %arg11[%c0_75, %c1_76, %c1_77, %c0_78], %65 {strides = array<i32>} : memref<2x18x18x8xf32, #tpu.memory_space<vmem>>, vector<2x16x16x8xf32>,
    %c0_79 = arith.constant 0 : index
    %c0_80 = arith.constant 0 : index
    %c0_81 = arith.constant 0 : index
    %c0_82 = arith.constant 0 : index
    %67 = vector.load %arg11[%c0_79, %c0_80, %c0_81, %c0_82] : memref<2x18x18x8xf32, #tpu.memory_space<vmem>>, vector<2x16x16x8xf32>
    %c0_83 = arith.constant 0 : index
    %c0_84 = arith.constant 0 : index
    %c1_85 = arith.constant 1 : index
    %c0_86 = arith.constant 0 : index
    %68 = vector.load %arg11[%c0_83, %c0_84, %c1_85, %c0_86] : memref<2x18x18x8xf32, #tpu.memory_space<vmem>>, vector<2x16x16x8xf32>
    %c0_87 = arith.constant 0 : index
    %c0_88 = arith.constant 0 : index
    %c2_89 = arith.constant 2 : index
    %c0_90 = arith.constant 0 : index
    %69 = vector.load %arg11[%c0_87, %c0_88, %c2_89, %c0_90] : memref<2x18x18x8xf32, #tpu.memory_space<vmem>>, vector<2x16x16x8xf32>
    %c0_91 = arith.constant 0 : index
    %c1_92 = arith.constant 1 : index
    %c0_93 = arith.constant 0 : index
    %c0_94 = arith.constant 0 : index
    %70 = vector.load %arg11[%c0_91, %c1_92, %c0_93, %c0_94] : memref<2x18x18x8xf32, #tpu.memory_space<vmem>>, vector<2x16x16x8xf32>
    %c0_95 = arith.constant 0 : index
    %c1_96 = arith.constant 1 : index
    %c1_97 = arith.constant 1 : index
    %c0_98 = arith.constant 0 : index
    %71 = vector.load %arg11[%c0_95, %c1_96, %c1_97, %c0_98] : memref<2x18x18x8xf32, #tpu.memory_space<vmem>>, vector<2x16x16x8xf32>
    %c0_99 = arith.constant 0 : index
    %c1_100 = arith.constant 1 : index
    %c2_101 = arith.constant 2 : index
    %c0_102 = arith.constant 0 : index
    %72 = vector.load %arg11[%c0_99, %c1_100, %c2_101, %c0_102] : memref<2x18x18x8xf32, #tpu.memory_space<vmem>>, vector<2x16x16x8xf32>
    %c0_103 = arith.constant 0 : index
    %c2_104 = arith.constant 2 : index
    %c0_105 = arith.constant 0 : index
    %c0_106 = arith.constant 0 : index
    %73 = vector.load %arg11[%c0_103, %c2_104, %c0_105, %c0_106] : memref<2x18x18x8xf32, #tpu.memory_space<vmem>>, vector<2x16x16x8xf32>
    %c0_107 = arith.constant 0 : index
    %c2_108 = arith.constant 2 : index
    %c1_109 = arith.constant 1 : index
    %c0_110 = arith.constant 0 : index
    %74 = vector.load %arg11[%c0_107, %c2_108, %c1_109, %c0_110] : memref<2x18x18x8xf32, #tpu.memory_space<vmem>>, vector<2x16x16x8xf32>
    %c0_111 = arith.constant 0 : index
    %c2_112 = arith.constant 2 : index
    %c2_113 = arith.constant 2 : index
    %c0_114 = arith.constant 0 : index
    %75 = vector.load %arg11[%c0_111, %c2_112, %c2_113, %c0_114] : memref<2x18x18x8xf32, #tpu.memory_space<vmem>>, vector<2x16x16x8xf32>
    %76 = tpu.concatenate %67, %68, %69, %70, %71, %72, %73, %74, %75 in 3 : vector<2x16x16x8xf32>, vector<2x16x16x8xf32>, vector<2x16x16x8xf32>, vector<2x16x16x8xf32>, vector<2x16x16x8xf32>, vector<2x16x16x8xf32>, vector<2x16x16x8xf32>, vector<2x16x16x8xf32>, vector<2x16x16x8xf32> -> vector<2x16x16x72xf32>
    %77 = vector.shape_cast %76 : vector<2x16x16x72xf32> to vector<512x72xf32>
    %c0_115 = arith.constant 0 : index
    %c0_116 = arith.constant 0 : index
    %78 = vector.load %arg5[%c0_115, %c0_116] : memref<8x72xf32, #tpu.memory_space<vmem>>, vector<8x72xf32>
    %cst_117 = arith.constant dense<0.000000e+00> : vector<8x512xf32>
    %79 = tpu.matmul %78, %77, %cst_117 {dimension_numbers = #tpu.dot_dimension_numbers<[1], [1], [0], [0], [0, 0, 1, 0], [], []>} : vector<8x72xf32>, vector<512x72xf32>, vector<8x512xf32> -> vector<8x512xf32>
    %c0_118 = arith.constant 0 : index
    %c0_119 = arith.constant 0 : index
    %80 = vector.load %arg6[%c0_118, %c0_119] : memref<8x1xf32, #tpu.memory_space<vmem>>, vector<8x1xf32>
    %81 = vector.broadcast %80 : vector<8x1xf32> to vector<8x512xf32>
    %82 = arith.addf %79, %81 : vector<8x512xf32>
    %cst_120 = arith.constant dense<0.000000e+00> : vector<8xf32>
    %83 = vector.multi_reduction <add>, %82, %cst_120 [1] : vector<8x512xf32> to vector<8xf32>
    %84 = vector.shape_cast %83 : vector<8xf32> to vector<8x1xf32>
    %cst_121 = arith.constant 5.120000e+02 : f32
    %85 = vector.broadcast %cst_121 : f32 to vector<8x1xf32>
    %86 = arith.divf %84, %85 : vector<8x1xf32>
    %87 = vector.broadcast %86 : vector<8x1xf32> to vector<8x512xf32>
    %88 = arith.subf %82, %87 : vector<8x512xf32>
    %89 = arith.mulf %88, %88 : vector<8x512xf32>
    %cst_122 = arith.constant dense<0.000000e+00> : vector<8xf32>
    %90 = vector.multi_reduction <add>, %89, %cst_122 [1] : vector<8x512xf32> to vector<8xf32>
    %91 = vector.shape_cast %90 : vector<8xf32> to vector<8x1xf32>
    %cst_123 = arith.constant 5.120000e+02 : f32
    %92 = vector.broadcast %cst_123 : f32 to vector<8x1xf32>
    %93 = arith.divf %91, %92 : vector<8x1xf32>
    %cst_124 = arith.constant 9.99999974E-6 : f32
    %94 = vector.broadcast %cst_124 : f32 to vector<8x1xf32>
    %95 = arith.addf %93, %94 : vector<8x1xf32>
    %96 = math.rsqrt %95 : vector<8x1xf32>
    %97 = vector.broadcast %96 : vector<8x1xf32> to vector<8x512xf32>
    %98 = arith.mulf %88, %97 : vector<8x512xf32>
    %c0_125 = arith.constant 0 : index
    %c0_126 = arith.constant 0 : index
    %99 = vector.load %arg7[%c0_125, %c0_126] : memref<8x1xf32, #tpu.memory_space<vmem>>, vector<8x1xf32>
    %100 = vector.broadcast %99 : vector<8x1xf32> to vector<8x512xf32>
    %101 = arith.mulf %98, %100 : vector<8x512xf32>
    %c0_127 = arith.constant 0 : index
    %c0_128 = arith.constant 0 : index
    %102 = vector.load %arg8[%c0_127, %c0_128] : memref<8x1xf32, #tpu.memory_space<vmem>>, vector<8x1xf32>
    %103 = vector.broadcast %102 : vector<8x1xf32> to vector<8x512xf32>
    %104 = arith.addf %101, %103 : vector<8x512xf32>
    %cst_129 = arith.constant 0.000000e+00 : f32
    %105 = vector.broadcast %cst_129 : f32 to vector<8x512xf32>
    %106 = arith.maximumf %104, %105 : vector<8x512xf32>
    %107 = vector.extract_strided_slice %106 {offsets = [0, 0], sizes = [8, 256], strides = [1, 1]} : vector<8x512xf32> to vector<8x256xf32>
    %c0_130 = arith.constant 0 : index
    %c0_131 = arith.constant 0 : index
    %c0_132 = arith.constant 0 : index
    %108 = vector.load %arg9[%c0_130, %c0_131, %c0_132] : memref<2x8x256xf32, #tpu.memory_space<vmem>>, vector<1x8x256xf32>
    %109 = vector.shape_cast %108 : vector<1x8x256xf32> to vector<8x256xf32>
    %110 = vector.shape_cast %107 : vector<8x256xf32> to vector<1x8x256xf32>
    tpu.vector_store %arg9[%c0_130, %c0_131, %c0_132], %110 {strides = array<i32>} : memref<2x8x256xf32, #tpu.memory_space<vmem>>, vector<1x8x256xf32>,
    %111 = vector.extract_strided_slice %106 {offsets = [0, 256], sizes = [8, 256], strides = [1, 1]} : vector<8x512xf32> to vector<8x256xf32>
    %c1_133 = arith.constant 1 : index
    %c0_134 = arith.constant 0 : index
    %c0_135 = arith.constant 0 : index
    %112 = vector.load %arg9[%c1_133, %c0_134, %c0_135] : memref<2x8x256xf32, #tpu.memory_space<vmem>>, vector<1x8x256xf32>
    %113 = vector.shape_cast %112 : vector<1x8x256xf32> to vector<8x256xf32>
    %114 = vector.shape_cast %111 : vector<8x256xf32> to vector<1x8x256xf32>
    tpu.vector_store %arg9[%c1_133, %c0_134, %c0_135], %114 {strides = array<i32>} : memref<2x8x256xf32, #tpu.memory_space<vmem>>, vector<1x8x256xf32>,
    return
  }
}

</mosaic_0001>

<llo_original>
// kernel: tpu_custom_call.1
$region0: #{tpu_custom_call.1}
  #allocation0 [shape = 'u32[]', space=smem, size = 0x4, offset = 0x4, fixed_abs, tag = 'smem constant byte address 0x4 - core index']
  #allocation1 [shape = 'u32[144,128]{1,0:T(1,128)}', space=vmem, size = 0x12000, scoped, tag = 'internal scratch']
  #allocation2 [shape = 'f32[2,18,18,4]{3,2,1,0:T(8,128)}', space=vmem, size = 0x6c000, scoped, tag = 'scratch operand']
  #allocation3 [shape = 'f32[2,18,18,8]{3,2,1,0:T(8,128)}', space=vmem, size = 0x6c000, scoped, tag = 'scratch operand']
  %s0 = inlined_call_operand.vmem [shape: f32[2,4,256], index: 0, kind: input, shape index: {}]
  %s1 = inlined_call_operand.hbm [shape: f32[36,128], index: 1, kind: input, shape index: {}]
  %s2 = inlined_call_operand.vmem [shape: f32[1,128], index: 2, kind: input, shape index: {}]
  %s3 = inlined_call_operand.vmem [shape: f32[1,128], index: 3, kind: input, shape index: {}]
  %s4 = inlined_call_operand.vmem [shape: f32[1,128], index: 4, kind: input, shape index: {}]
  %s5 = inlined_call_operand.vmem [shape: f32[8,72], index: 5, kind: input, shape index: {}]
  %s6 = inlined_call_operand.vmem [shape: f32[8,1], index: 6, kind: input, shape index: {}]
  %s7 = inlined_call_operand.vmem [shape: f32[8,1], index: 7, kind: input, shape index: {}]
  %s8 = inlined_call_operand.vmem [shape: f32[8,1], index: 8, kind: input, shape index: {}]
  %s9 = inlined_call_operand.hbm [shape: f32[2,8,256], index: 9, kind: output, shape index: {}]
  %s10 = sld [smem:[#allocation0]]
  $region50: #{tpu_custom_call.1} parent=0
    _
  %s12 = ssub.s32 1, %s10
  %s13 = scalar_select 0, %s12, %s10
  $region1: #{tpu_custom_call.1} parent=0
    #allocation4 [shape = 'u8[20480]{0}', space=vmem, size = 0x5000, scoped, tag = 'input window, operand 1, single buffered']
    #allocation5 [shape = 's32[1]{0}', space=sflag, size = 0x4, scoped, tag = 'scoped memory for tpu_custom_call.1']
    #allocation6 [shape = 's32[1]{0}', space=sflag, size = 0x4, scoped, tag = 'scoped memory for tpu_custom_call.1']
    #allocation7 [shape = 'u8[16384]{0}', space=vmem, size = 0x4000, scoped, tag = 'output window, operand 0, single buffered']
    %14 = vsyncpa [#allocation5], 0
    %15 = vsyncpa [#allocation6], 0
    // Predicated region
    $region2: #{tpu_custom_call.1} parent=1 // pred_check
      _
    $region3: #{tpu_custom_call.1} parent=1 // pred_check_branch
      %17 = sbr.rel (0) target = $region5
    $region4: #{tpu_custom_call.1} parent=1 // pred_region
      _
    $region5: #{tpu_custom_call.1} parent=1 // pred_fallthru
      _
    // Predicated region
    $region6: #{tpu_custom_call.1} parent=1 // pred_check
      _
    $region7: #{tpu_custom_call.1} parent=1 // pred_check_branch
      %19 = sbr.rel (0) target = $region9
    $region8: #{tpu_custom_call.1} parent=1 // pred_region
      %s21 = ssub.s32 640, 640
      %22 = vsyncadd [#allocation5], %s21
      %s23 = sshll.u32 [#allocation4], 4
      %s24 = int_to_ptr.vmem [resolvable:$true] %s23
      %29 = dma.hbm_to_vmem [thread:$0]  %s1, 640, %s24, [#allocation5], 128, 128, 8
    $region9: #{tpu_custom_call.1} parent=1 // pred_fallthru
      _
    // Predicated region
    $region10: #{tpu_custom_call.1} parent=1 // pred_check
      _
    $region11: #{tpu_custom_call.1} parent=1 // pred_check_branch
      %31 = sbr.rel (0) target = $region13
    $region12: #{tpu_custom_call.1} parent=1 // pred_region
      _
    $region13: #{tpu_custom_call.1} parent=1 // pred_fallthru
      _
    // Predicated region
    $region14: #{tpu_custom_call.1} parent=1 // pred_check
      _
    $region15: #{tpu_custom_call.1} parent=1 // pred_check_branch
      %33 = sbr.rel (0) target = $region17
    $region16: #{tpu_custom_call.1} parent=1 // pred_region
      _
    $region17: #{tpu_custom_call.1} parent=1 // pred_fallthru
      _
    // Predicated region
    $region18: #{tpu_custom_call.1} parent=1 // pred_check
      _
    $region19: #{tpu_custom_call.1} parent=1 // pred_check_branch
      %35 = sbr.rel (0) target = $region21
    $region20: #{tpu_custom_call.1} parent=1 // pred_region
      _
    $region21: #{tpu_custom_call.1} parent=1 // pred_fallthru
      _
    // Predicated region
    $region22: #{tpu_custom_call.1} parent=1 // pred_check
      _
    $region23: #{tpu_custom_call.1} parent=1 // pred_check_branch
      %37 = sbr.rel (0) target = $region25
    $region24: #{tpu_custom_call.1} parent=1 // pred_region
      _
    $region25: #{tpu_custom_call.1} parent=1 // pred_fallthru
      _
    // Predicated region
    $region26: #{tpu_custom_call.1} parent=1 // pred_check
      _
    $region27: #{tpu_custom_call.1} parent=1 // pred_check_branch
      %39 = sbr.rel (0) target = $region29
    $region28: #{tpu_custom_call.1} parent=1 // pred_region
      _
    $region29: #{tpu_custom_call.1} parent=1 // pred_fallthru
      _
    // Predicated region
    $region30: #{tpu_custom_call.1} parent=1 // pred_check
      _
    $region31: #{tpu_custom_call.1} parent=1 // pred_check_branch
      %41 = sbr.rel (0) target = $region33
    $region32: #{tpu_custom_call.1} parent=1 // pred_region
      _
    $region33: #{tpu_custom_call.1} parent=1 // pred_fallthru
      _
    // Predicated region
    $region34: #{tpu_custom_call.1} parent=1 // pred_check
      _
    $region35: #{tpu_custom_call.1} parent=1 // pred_check_branch
      %43 = sbr.rel (0) target = $region37
    $region36: #{tpu_custom_call.1} parent=1 // pred_region
      _
    $region37: #{tpu_custom_call.1} parent=1 // pred_fallthru
      _
    // Predicated region
    $region38: #{tpu_custom_call.1} parent=1 // pred_check
      _
    $region39: #{tpu_custom_call.1} parent=1 // pred_check_branch
      %45 = sbr.rel (0) target = $region41
    $region40: #{tpu_custom_call.1} parent=1 // pred_region
      %46 = dma.done [#allocation5], 640
    $region41: #{tpu_custom_call.1} parent=1 // pred_fallthru
      _
    %v47 = vlaneseq
    %v48 = vshrl.u32 %v47, 7
    %v49 = vadd.s32 %v48, 8
    %v50 = vadd.s32 %v48, 16
    %v51 = vadd.s32 %v48, 24
    %v52 = vadd.s32 %v48, 32
    %v53 = vadd.s32 %v48, 40
    %v54 = vadd.s32 %v48, 48
    %v55 = vadd.s32 %v48, 56
    %v56 = vadd.s32 %v48, 64
    %v57 = vadd.s32 %v48, 72
    %v58 = vadd.s32 %v48, 80
    %v59 = vadd.s32 %v48, 88
    %v60 = vadd.s32 %v48, 96
    %v61 = vadd.s32 %v48, 104
    %v62 = vadd.s32 %v48, 112
    %v63 = vadd.s32 %v48, 120
    %v64 = vadd.s32 %v48, 128
    %v65 = vadd.s32 %v48, 136
    %v66 = vadd.s32 %v48, 144
    %v67 = vadd.s32 %v48, 152
    %v68 = vadd.s32 %v48, 160
    %v69 = vadd.s32 %v48, 168
    %v70 = vadd.s32 %v48, 176
    %v71 = vadd.s32 %v48, 184
    %v72 = vadd.s32 %v48, 192
    %v73 = vadd.s32 %v48, 200
    %v74 = vadd.s32 %v48, 208
    %v75 = vadd.s32 %v48, 216
    %v76 = vadd.s32 %v48, 224
    %v77 = vadd.s32 %v48, 232
    %v78 = vadd.s32 %v48, 240
    %v79 = vadd.s32 %v48, 248
    %v80 = vlaneseq
    %v81 = vand.u32 %v80, 127
    %v82 = vadd.s32 %v81, 128
    %vm83 = vcmp.eq.s32.totalorder %v48, %v81
    %vm84 = vcmp.eq.s32.totalorder %v48, %v82
    %vm85 = vcmp.eq.s32.totalorder %v49, %v81
    %vm86 = vcmp.eq.s32.totalorder %v49, %v82
    %vm87 = vcmp.eq.s32.totalorder %v50, %v81
    %vm88 = vcmp.eq.s32.totalorder %v50, %v82
    %vm89 = vcmp.eq.s32.totalorder %v51, %v81
    %vm90 = vcmp.eq.s32.totalorder %v51, %v82
    %vm91 = vcmp.eq.s32.totalorder %v52, %v81
    %vm92 = vcmp.eq.s32.totalorder %v52, %v82
    %vm93 = vcmp.eq.s32.totalorder %v53, %v81
    %vm94 = vcmp.eq.s32.totalorder %v53, %v82
    %vm95 = vcmp.eq.s32.totalorder %v54, %v81
    %vm96 = vcmp.eq.s32.totalorder %v54, %v82
    %vm97 = vcmp.eq.s32.totalorder %v55, %v81
    %vm98 = vcmp.eq.s32.totalorder %v55, %v82
    %vm99 = vcmp.eq.s32.totalorder %v56, %v81
    %vm100 = vcmp.eq.s32.totalorder %v56, %v82
    %vm101 = vcmp.eq.s32.totalorder %v57, %v81
    %vm102 = vcmp.eq.s32.totalorder %v57, %v82
    %vm103 = vcmp.eq.s32.totalorder %v58, %v81
    %vm104 = vcmp.eq.s32.totalorder %v58, %v82
    %vm105 = vcmp.eq.s32.totalorder %v59, %v81
    %vm106 = vcmp.eq.s32.totalorder %v59, %v82
    %vm107 = vcmp.eq.s32.totalorder %v60, %v81
    %vm108 = vcmp.eq.s32.totalorder %v60, %v82
    %vm109 = vcmp.eq.s32.totalorder %v61, %v81
    %vm110 = vcmp.eq.s32.totalorder %v61, %v82
    %vm111 = vcmp.eq.s32.totalorder %v62, %v81
    %vm112 = vcmp.eq.s32.totalorder %v62, %v82
    %vm113 = vcmp.eq.s32.totalorder %v63, %v81
    %vm114 = vcmp.eq.s32.totalorder %v63, %v82
    %vm115 = vcmp.eq.s32.totalorder %v64, %v81
    %vm116 = vcmp.eq.s32.totalorder %v64, %v82
    %vm117 = vcmp.eq.s32.totalorder %v65, %v81
    %vm118 = vcmp.eq.s32.totalorder %v65, %v82
    %vm119 = vcmp.eq.s32.totalorder %v66, %v81
    %vm120 = vcmp.eq.s32.totalorder %v66, %v82
    %vm121 = vcmp.eq.s32.totalorder %v67, %v81
    %vm122 = vcmp.eq.s32.totalorder %v67, %v82
    %vm123 = vcmp.eq.s32.totalorder %v68, %v81
    %vm124 = vcmp.eq.s32.totalorder %v68, %v82
    %vm125 = vcmp.eq.s32.totalorder %v69, %v81
    %vm126 = vcmp.eq.s32.totalorder %v69, %v82
    %vm127 = vcmp.eq.s32.totalorder %v70, %v81
    %vm128 = vcmp.eq.s32.totalorder %v70, %v82
    %vm129 = vcmp.eq.s32.totalorder %v71, %v81
    %vm130 = vcmp.eq.s32.totalorder %v71, %v82
    %vm131 = vcmp.eq.s32.totalorder %v72, %v81
    %vm132 = vcmp.eq.s32.totalorder %v72, %v82
    %vm133 = vcmp.eq.s32.totalorder %v73, %v81
    %vm134 = vcmp.eq.s32.totalorder %v73, %v82
    %vm135 = vcmp.eq.s32.totalorder %v74, %v81
    %vm136 = vcmp.eq.s32.totalorder %v74, %v82
    %vm137 = vcmp.eq.s32.totalorder %v75, %v81
    %vm138 = vcmp.eq.s32.totalorder %v75, %v82
    %vm139 = vcmp.eq.s32.totalorder %v76, %v81
    %vm140 = vcmp.eq.s32.totalorder %v76, %v82
    %vm141 = vcmp.eq.s32.totalorder %v77, %v81
    %vm142 = vcmp.eq.s32.totalorder %v77, %v82
    %vm143 = vcmp.eq.s32.totalorder %v78, %v81
    %vm144 = vcmp.eq.s32.totalorder %v78, %v82
    %vm145 = vcmp.eq.s32.totalorder %v79, %v81
    %vm146 = vcmp.eq.s32.totalorder %v79, %v82
    %v147 = vsel %vm83, 1.0, 0.0
    %v148 = vsel %vm84, 1.0, 0.0
    %v149 = vsel %vm85, 1.0, 0.0
    %v150 = vsel %vm86, 1.0, 0.0
    %v151 = vsel %vm87, 1.0, 0.0
    %v152 = vsel %vm88, 1.0, 0.0
    %v153 = vsel %vm89, 1.0, 0.0
    %v154 = vsel %vm90, 1.0, 0.0
    %v155 = vsel %vm91, 1.0, 0.0
    %v156 = vsel %vm92, 1.0, 0.0
    %v157 = vsel %vm93, 1.0, 0.0
    %v158 = vsel %vm94, 1.0, 0.0
    %v159 = vsel %vm95, 1.0, 0.0
    %v160 = vsel %vm96, 1.0, 0.0
    %v161 = vsel %vm97, 1.0, 0.0
    %v162 = vsel %vm98, 1.0, 0.0
    %v163 = vsel %vm99, 1.0, 0.0
    %v164 = vsel %vm100, 1.0, 0.0
    %v165 = vsel %vm101, 1.0, 0.0
    %v166 = vsel %vm102, 1.0, 0.0
    %v167 = vsel %vm103, 1.0, 0.0
    %v168 = vsel %vm104, 1.0, 0.0
    %v169 = vsel %vm105, 1.0, 0.0
    %v170 = vsel %vm106, 1.0, 0.0
    %v171 = vsel %vm107, 1.0, 0.0
    %v172 = vsel %vm108, 1.0, 0.0
    %v173 = vsel %vm109, 1.0, 0.0
    %v174 = vsel %vm110, 1.0, 0.0
    %v175 = vsel %vm111, 1.0, 0.0
    %v176 = vsel %vm112, 1.0, 0.0
    %v177 = vsel %vm113, 1.0, 0.0
    %v178 = vsel %vm114, 1.0, 0.0
    %v179 = vsel %vm115, 1.0, 0.0
    %v180 = vsel %vm116, 1.0, 0.0
    %v181 = vsel %vm117, 1.0, 0.0
    %v182 = vsel %vm118, 1.0, 0.0
    %v183 = vsel %vm119, 1.0, 0.0
    %v184 = vsel %vm120, 1.0, 0.0
    %v185 = vsel %vm121, 1.0, 0.0
    %v186 = vsel %vm122, 1.0, 0.0
    %v187 = vsel %vm123, 1.0, 0.0
    %v188 = vsel %vm124, 1.0, 0.0
    %v189 = vsel %vm125, 1.0, 0.0
    %v190 = vsel %vm126, 1.0, 0.0
    %v191 = vsel %vm127, 1.0, 0.0
    %v192 = vsel %vm128, 1.0, 0.0
    %v193 = vsel %vm129, 1.0, 0.0
    %v194 = vsel %vm130, 1.0, 0.0
    %v195 = vsel %vm131, 1.0, 0.0
    %v196 = vsel %vm132, 1.0, 0.0
    %v197 = vsel %vm133, 1.0, 0.0
    %v198 = vsel %vm134, 1.0, 0.0
    %v199 = vsel %vm135, 1.0, 0.0
    %v200 = vsel %vm136, 1.0, 0.0
    %v201 = vsel %vm137, 1.0, 0.0
    %v202 = vsel %vm138, 1.0, 0.0
    %v203 = vsel %vm139, 1.0, 0.0
    %v204 = vsel %vm140, 1.0, 0.0
    %v205 = vsel %vm141, 1.0, 0.0
    %v206 = vsel %vm142, 1.0, 0.0
    %v207 = vsel %vm143, 1.0, 0.0
    %v208 = vsel %vm144, 1.0, 0.0
    %v209 = vsel %vm145, 1.0, 0.0
    %v210 = vsel %vm146, 1.0, 0.0
    %vm211 = vcmask 31744
    %212 = vst.msk [vmem:[#allocation2] sm:$0xff] %vm211, 0.0
    %213 = vst.msk [vmem:[#allocation2 + $0x8] sm:$0xff] %vm211, 0.0
    %vm214 = vcmask 25600
    %215 = vst.msk [vmem:[#allocation2 + $0x10] sm:$0x3] %vm214, 0.0
    %216 = vst.msk [vmem:[#allocation2 + $0x18] sm:$0xff] %vm211, 0.0
    %217 = vst.msk [vmem:[#allocation2 + $0x20] sm:$0xff] %vm211, 0.0
    %218 = vst.msk [vmem:[#allocation2 + $0x28] sm:$0x3] %vm214, 0.0
    %219 = vst.msk [vmem:[#allocation2 + $0x30] sm:$0xff] %vm211, 0.0
    %220 = vst.msk [vmem:[#allocation2 + $0x38] sm:$0xff] %vm211, 0.0
    %221 = vst.msk [vmem:[#allocation2 + $0x40] sm:$0x3] %vm214, 0.0
    %222 = vst.msk [vmem:[#allocation2 + $0x48] sm:$0xff] %vm211, 0.0
    %223 = vst.msk [vmem:[#allocation2 + $0x50] sm:$0xff] %vm211, 0.0
    %224 = vst.msk [vmem:[#allocation2 + $0x58] sm:$0x3] %vm214, 0.0
    %225 = vst.msk [vmem:[#allocation2 + $0x60] sm:$0xff] %vm211, 0.0
    %226 = vst.msk [vmem:[#allocation2 + $0x68] sm:$0xff] %vm211, 0.0
    %227 = vst.msk [vmem:[#allocation2 + $0x70] sm:$0x3] %vm214, 0.0
    %228 = vst.msk [vmem:[#allocation2 + $0x78] sm:$0xff] %vm211, 0.0
    %229 = vst.msk [vmem:[#allocation2 + $0x80] sm:$0xff] %vm211, 0.0
    %230 = vst.msk [vmem:[#allocation2 + $0x88] sm:$0x3] %vm214, 0.0
    %231 = vst.msk [vmem:[#allocation2 + $0x90] sm:$0xff] %vm211, 0.0
    %232 = vst.msk [vmem:[#allocation2 + $0x98] sm:$0xff] %vm211, 0.0
    %233 = vst.msk [vmem:[#allocation2 + $0xa0] sm:$0x3] %vm214, 0.0
    %234 = vst.msk [vmem:[#allocation2 + $0xa8] sm:$0xff] %vm211, 0.0
    %235 = vst.msk [vmem:[#allocation2 + $0xb0] sm:$0xff] %vm211, 0.0
    %236 = vst.msk [vmem:[#allocation2 + $0xb8] sm:$0x3] %vm214, 0.0
    %237 = vst.msk [vmem:[#allocation2 + $0xc0] sm:$0xff] %vm211, 0.0
    %238 = vst.msk [vmem:[#allocation2 + $0xc8] sm:$0xff] %vm211, 0.0
    %239 = vst.msk [vmem:[#allocation2 + $0xd0] sm:$0x3] %vm214, 0.0
    %240 = vst.msk [vmem:[#allocation2 + $0xd8] sm:$0xff] %vm211, 0.0
    %241 = vst.msk [vmem:[#allocation2 + $0xe0] sm:$0xff] %vm211, 0.0
    %242 = vst.msk [vmem:[#allocation2 + $0xe8] sm:$0x3] %vm214, 0.0
    %243 = vst.msk [vmem:[#allocation2 + $0xf0] sm:$0xff] %vm211, 0.0
    %244 = vst.msk [vmem:[#allocation2 + $0xf8] sm:$0xff] %vm211, 0.0
    %245 = vst.msk [vmem:[#allocation2 + $0x100] sm:$0x3] %vm214, 0.0
    %246 = vst.msk [vmem:[#allocation2 + $0x108] sm:$0xff] %vm211, 0.0
    %247 = vst.msk [vmem:[#allocation2 + $0x110] sm:$0xff] %vm211, 0.0
    %248 = vst.msk [vmem:[#allocation2 + $0x118] sm:$0x3] %vm214, 0.0
    %249 = vst.msk [vmem:[#allocation2 + $0x120] sm:$0xff] %vm211, 0.0
    %250 = vst.msk [vmem:[#allocation2 + $0x128] sm:$0xff] %vm211, 0.0
    %251 = vst.msk [vmem:[#allocation2 + $0x130] sm:$0x3] %vm214, 0.0
    %252 = vst.msk [vmem:[#allocation2 + $0x138] sm:$0xff] %vm211, 0.0
    %253 = vst.msk [vmem:[#allocation2 + $0x140] sm:$0xff] %vm211, 0.0
    %254 = vst.msk [vmem:[#allocation2 + $0x148] sm:$0x3] %vm214, 0.0
    %255 = vst.msk [vmem:[#allocation2 + $0x150] sm:$0xff] %vm211, 0.0
    %256 = vst.msk [vmem:[#allocation2 + $0x158] sm:$0xff] %vm211, 0.0
    %257 = vst.msk [vmem:[#allocation2 + $0x160] sm:$0x3] %vm214, 0.0
    %258 = vst.msk [vmem:[#allocation2 + $0x168] sm:$0xff] %vm211, 0.0
    %259 = vst.msk [vmem:[#allocation2 + $0x170] sm:$0xff] %vm211, 0.0
    %260 = vst.msk [vmem:[#allocation2 + $0x178] sm:$0x3] %vm214, 0.0
    %261 = vst.msk [vmem:[#allocation2 + $0x180] sm:$0xff] %vm211, 0.0
    %262 = vst.msk [vmem:[#allocation2 + $0x188] sm:$0xff] %vm211, 0.0
    %263 = vst.msk [vmem:[#allocation2 + $0x190] sm:$0x3] %vm214, 0.0
    %264 = vst.msk [vmem:[#allocation2 + $0x198] sm:$0xff] %vm211, 0.0
    %265 = vst.msk [vmem:[#allocation2 + $0x1a0] sm:$0xff] %vm211, 0.0
    %266 = vst.msk [vmem:[#allocation2 + $0x1a8] sm:$0x3] %vm214, 0.0
    %267 = vst.msk [vmem:[#allocation2 + $0x1b0] sm:$0xff] %vm211, 0.0
    %268 = vst.msk [vmem:[#allocation2 + $0x1b8] sm:$0xff] %vm211, 0.0
    %269 = vst.msk [vmem:[#allocation2 + $0x1c0] sm:$0x3] %vm214, 0.0
    %270 = vst.msk [vmem:[#allocation2 + $0x1c8] sm:$0xff] %vm211, 0.0
    %271 = vst.msk [vmem:[#allocation2 + $0x1d0] sm:$0xff] %vm211, 0.0
    %272 = vst.msk [vmem:[#allocation2 + $0x1d8] sm:$0x3] %vm214, 0.0
    %273 = vst.msk [vmem:[#allocation2 + $0x1e0] sm:$0xff] %vm211, 0.0
    %274 = vst.msk [vmem:[#allocation2 + $0x1e8] sm:$0xff] %vm211, 0.0
    %275 = vst.msk [vmem:[#allocation2 + $0x1f0] sm:$0x3] %vm214, 0.0
    %276 = vst.msk [vmem:[#allocation2 + $0x1f8] sm:$0xff] %vm211, 0.0
    %277 = vst.msk [vmem:[#allocation2 + $0x200] sm:$0xff] %vm211, 0.0
    %278 = vst.msk [vmem:[#allocation2 + $0x208] sm:$0x3] %vm214, 0.0
    %279 = vst.msk [vmem:[#allocation2 + $0x210] sm:$0xff] %vm211, 0.0
    %280 = vst.msk [vmem:[#allocation2 + $0x218] sm:$0xff] %vm211, 0.0
    %281 = vst.msk [vmem:[#allocation2 + $0x220] sm:$0x3] %vm214, 0.0
    %282 = vst.msk [vmem:[#allocation2 + $0x228] sm:$0xff] %vm211, 0.0
    %283 = vst.msk [vmem:[#allocation2 + $0x230] sm:$0xff] %vm211, 0.0
    %284 = vst.msk [vmem:[#allocation2 + $0x238] sm:$0x3] %vm214, 0.0
    %285 = vst.msk [vmem:[#allocation2 + $0x240] sm:$0xff] %vm211, 0.0
    %286 = vst.msk [vmem:[#allocation2 + $0x248] sm:$0xff] %vm211, 0.0
    %287 = vst.msk [vmem:[#allocation2 + $0x250] sm:$0x3] %vm214, 0.0
    %288 = vst.msk [vmem:[#allocation2 + $0x258] sm:$0xff] %vm211, 0.0
    %289 = vst.msk [vmem:[#allocation2 + $0x260] sm:$0xff] %vm211, 0.0
    %290 = vst.msk [vmem:[#allocation2 + $0x268] sm:$0x3] %vm214, 0.0
    %291 = vst.msk [vmem:[#allocation2 + $0x270] sm:$0xff] %vm211, 0.0
    %292 = vst.msk [vmem:[#allocation2 + $0x278] sm:$0xff] %vm211, 0.0
    %293 = vst.msk [vmem:[#allocation2 + $0x280] sm:$0x3] %vm214, 0.0
    %294 = vst.msk [vmem:[#allocation2 + $0x288] sm:$0xff] %vm211, 0.0
    %295 = vst.msk [vmem:[#allocation2 + $0x290] sm:$0xff] %vm211, 0.0
    %296 = vst.msk [vmem:[#allocation2 + $0x298] sm:$0x3] %vm214, 0.0
    %297 = vst.msk [vmem:[#allocation2 + $0x2a0] sm:$0xff] %vm211, 0.0
    %298 = vst.msk [vmem:[#allocation2 + $0x2a8] sm:$0xff] %vm211, 0.0
    %299 = vst.msk [vmem:[#allocation2 + $0x2b0] sm:$0x3] %vm214, 0.0
    %300 = vst.msk [vmem:[#allocation2 + $0x2b8] sm:$0xff] %vm211, 0.0
    %301 = vst.msk [vmem:[#allocation2 + $0x2c0] sm:$0xff] %vm211, 0.0
    %302 = vst.msk [vmem:[#allocation2 + $0x2c8] sm:$0x3] %vm214, 0.0
    %303 = vst.msk [vmem:[#allocation2 + $0x2d0] sm:$0xff] %vm211, 0.0
    %304 = vst.msk [vmem:[#allocation2 + $0x2d8] sm:$0xff] %vm211, 0.0
    %305 = vst.msk [vmem:[#allocation2 + $0x2e0] sm:$0x3] %vm214, 0.0
    %306 = vst.msk [vmem:[#allocation2 + $0x2e8] sm:$0xff] %vm211, 0.0
    %307 = vst.msk [vmem:[#allocation2 + $0x2f0] sm:$0xff] %vm211, 0.0
    %308 = vst.msk [vmem:[#allocation2 + $0x2f8] sm:$0x3] %vm214, 0.0
    %309 = vst.msk [vmem:[#allocation2 + $0x300] sm:$0xff] %vm211, 0.0
    %310 = vst.msk [vmem:[#allocation2 + $0x308] sm:$0xff] %vm211, 0.0
    %311 = vst.msk [vmem:[#allocation2 + $0x310] sm:$0x3] %vm214, 0.0
    %312 = vst.msk [vmem:[#allocation2 + $0x318] sm:$0xff] %vm211, 0.0
    %313 = vst.msk [vmem:[#allocation2 + $0x320] sm:$0xff] %vm211, 0.0
    %314 = vst.msk [vmem:[#allocation2 + $0x328] sm:$0x3] %vm214, 0.0
    %315 = vst.msk [vmem:[#allocation2 + $0x330] sm:$0xff] %vm211, 0.0
    %316 = vst.msk [vmem:[#allocation2 + $0x338] sm:$0xff] %vm211, 0.0
    %317 = vst.msk [vmem:[#allocation2 + $0x340] sm:$0x3] %vm214, 0.0
    %318 = vst.msk [vmem:[#allocation2 + $0x348] sm:$0xff] %vm211, 0.0
    %319 = vst.msk [vmem:[#allocation2 + $0x350] sm:$0xff] %vm211, 0.0
    %320 = vst.msk [vmem:[#allocation2 + $0x358] sm:$0x3] %vm214, 0.0
    %v321 = vld [vmem:[%s0] sm:$0xff]
    %v323 = vcombine.high %v321, %v321
    %325 = vmatprep.subr.mxu0 0.0
    %326 = vmatpush1.xpose.msra.mxu0 0.0
    %327 = vmatprep.subr.mxu0 0.0
    %328 = vmatpush1.xpose.msra.mxu0 0.0
    %329 = vmatprep.subr.mxu0 0.0
    %330 = vmatpush1.xpose.msra.mxu0 0.0
    %331 = vmatprep.subr.mxu0 0.0
    %332 = vmatpush1.xpose.msra.mxu0 0.0
    %333 = vmatprep.subr.mxu0 0.0
    %334 = vmatpush1.xpose.msra.mxu0 0.0
    %335 = vmatprep.subr.mxu0 0.0
    %336 = vmatpush1.xpose.msra.mxu0 0.0
    %337 = vmatprep.subr.mxu0 0.0
    %338 = vmatpush1.xpose.msra.mxu0 0.0
    %339 = vmatprep.subr.mxu0 0.0
    %340 = vmatpush1.xpose.msra.mxu0 0.0
    %341 = vmatprep.subr.mxu0 0.0
    %342 = vmatpush1.xpose.msra.mxu0 0.0
    %343 = vmatprep.subr.mxu0 0.0
    %344 = vmatpush1.xpose.msra.mxu0 0.0
    %345 = vmatprep.subr.mxu0 0.0
    %346 = vmatpush1.xpose.msra.mxu0 0.0
    %347 = vmatprep.subr.mxu0 0.0
    %348 = vmatpush1.xpose.msra.mxu0 0.0
    %349 = vmatprep.subr.mxu0 0.0
    %350 = vmatpush1.xpose.msra.mxu0 0.0
    %351 = vmatprep.subr.mxu0 0.0
    %352 = vmatpush1.xpose.msra.mxu0 0.0
    %353 = vmatprep.subr.mxu0 0.0
    %354 = vmatpush1.xpose.msra.mxu0 0.0
    %355 = vmatprep.subr.mxu0 %v323
    %356 = vmatpush1.xpose.msra.mxu0 %v321
    %357 = vmatprep.subr.mxu0 0.0
    %358 = vmatpush2.xpose.msra.mxu0 0.0
    %359 = vmatprep.subr.mxu0 0.0
    %360 = vmatpush2.xpose.msra.mxu0 0.0
    %361 = vmatprep.subr.mxu0 0.0
    %362 = vmatpush2.xpose.msra.mxu0 0.0
    %363 = vmatprep.subr.mxu0 0.0
    %364 = vmatpush2.xpose.msra.mxu0 0.0
    %365 = vmatprep.subr.mxu0 0.0
    %366 = vmatpush2.xpose.msra.mxu0 0.0
    %367 = vmatprep.subr.mxu0 0.0
    %368 = vmatpush2.xpose.msra.mxu0 0.0
    %369 = vmatprep.subr.mxu0 0.0
    %370 = vmatpush2.xpose.msra.mxu0 0.0
    %371 = vmatprep.subr.mxu0 0.0
    %372 = vmatpush2.xpose.msra.mxu0 0.0
    %373 = vmatprep.subr.mxu0 0.0
    %374 = vmatpush2.xpose.msra.mxu0 0.0
    %375 = vmatprep.subr.mxu0 0.0
    %376 = vmatpush2.xpose.msra.mxu0 0.0
    %377 = vmatprep.subr.mxu0 0.0
    %378 = vmatpush2.xpose.msra.mxu0 0.0
    %379 = vmatprep.subr.mxu0 0.0
    %380 = vmatpush2.xpose.msra.mxu0 0.0
    %381 = vmatprep.subr.mxu0 0.0
    %382 = vmatpush2.xpose.msra.mxu0 0.0
    %383 = vmatprep.subr.mxu0 0.0
    %384 = vmatpush2.xpose.msra.mxu0 0.0
    %385 = vmatprep.subr.mxu0 0.0
    %386 = vmatpush2.xpose.msra.mxu0 0.0
    %387 = vmatprep.subr.mxu0 0.0
    %388 = vmatpush2.xpose.msra.mxu0 0.0
    %389 = vmatprep.mubr.f32.mxu0 %v148
    %390 = vmatmul.mubr.f32.gmra.mxu0 %v147
    %v391 = vpop.f32.mrf.mxu0
    %v392 = vadd.f32 0.0, %v391
    %v393 = vpop.f32.mrf.mxu0
    %394 = vmatprep.mubr.f32.mxu0 %v150
    %395 = vmatmul.mubr.f32.gmra.mxu0 %v149
    %v396 = vpop.f32.mrf.mxu0
    %v397 = vadd.f32 0.0, %v396
    %v398 = vpop.f32.mrf.mxu0
    %399 = vmatprep.mubr.f32.mxu0 %v152
    %400 = vmatmul.mubr.f32.gmra.mxu0 %v151
    %v401 = vpop.f32.mrf.mxu0
    %v402 = vadd.f32 0.0, %v401
    %v403 = vpop.f32.mrf.mxu0
    %404 = vmatprep.mubr.f32.mxu0 %v154
    %405 = vmatmul.mubr.f32.gmra.mxu0 %v153
    %v406 = vpop.f32.mrf.mxu0
    %v407 = vadd.f32 0.0, %v406
    %v408 = vpop.f32.mrf.mxu0
    %409 = vmatprep.mubr.f32.mxu0 %v156
    %410 = vmatmul.mubr.f32.gmra.mxu0 %v155
    %v411 = vpop.f32.mrf.mxu0
    %v412 = vadd.f32 0.0, %v411
    %v413 = vpop.f32.mrf.mxu0
    %414 = vmatprep.mubr.f32.mxu0 %v158
    %415 = vmatmul.mubr.f32.gmra.mxu0 %v157
    %v416 = vpop.f32.mrf.mxu0
    %v417 = vadd.f32 0.0, %v416
    %v418 = vpop.f32.mrf.mxu0
    %419 = vmatprep.mubr.f32.mxu0 %v160
    %420 = vmatmul.mubr.f32.gmra.mxu0 %v159
    %v421 = vpop.f32.mrf.mxu0
    %v422 = vadd.f32 0.0, %v421
    %v423 = vpop.f32.mrf.mxu0
    %424 = vmatprep.mubr.f32.mxu0 %v162
    %425 = vmatmul.mubr.f32.gmra.mxu0 %v161
    %v426 = vpop.f32.mrf.mxu0
    %v427 = vadd.f32 0.0, %v426
    %v428 = vpop.f32.mrf.mxu0
    %429 = vmatprep.mubr.f32.mxu0 %v164
    %430 = vmatmul.mubr.f32.gmra.mxu0 %v163
    %v431 = vpop.f32.mrf.mxu0
    %v432 = vadd.f32 0.0, %v431
    %v433 = vpop.f32.mrf.mxu0
    %434 = vmatprep.mubr.f32.mxu0 %v166
    %435 = vmatmul.mubr.f32.gmra.mxu0 %v165
    %v436 = vpop.f32.mrf.mxu0
    %v437 = vadd.f32 0.0, %v436
    %v438 = vpop.f32.mrf.mxu0
    %439 = vmatprep.mubr.f32.mxu0 %v168
    %440 = vmatmul.mubr.f32.gmra.mxu0 %v167
    %v441 = vpop.f32.mrf.mxu0
    %v442 = vadd.f32 0.0, %v441
    %v443 = vpop.f32.mrf.mxu0
    %444 = vmatprep.mubr.f32.mxu0 %v170
    %445 = vmatmul.mubr.f32.gmra.mxu0 %v169
    %v446 = vpop.f32.mrf.mxu0
    %v447 = vadd.f32 0.0, %v446
    %v448 = vpop.f32.mrf.mxu0
    %449 = vmatprep.mubr.f32.mxu0 %v172
    %450 = vmatmul.mubr.f32.gmra.mxu0 %v171
    %v451 = vpop.f32.mrf.mxu0
    %v452 = vadd.f32 0.0, %v451
    %v453 = vpop.f32.mrf.mxu0
    %454 = vmatprep.mubr.f32.mxu0 %v174
    %455 = vmatmul.mubr.f32.gmra.mxu0 %v173
    %v456 = vpop.f32.mrf.mxu0
    %v457 = vadd.f32 0.0, %v456
    %v458 = vpop.f32.mrf.mxu0
    %459 = vmatprep.mubr.f32.mxu0 %v176
    %460 = vmatmul.mubr.f32.gmra.mxu0 %v175
    %v461 = vpop.f32.mrf.mxu0
    %v462 = vadd.f32 0.0, %v461
    %v463 = vpop.f32.mrf.mxu0
    %464 = vmatprep.mubr.f32.mxu0 %v178
    %465 = vmatmul.mubr.f32.gmra.mxu0 %v177
    %v466 = vpop.f32.mrf.mxu0
    %v467 = vadd.f32 0.0, %v466
    %v468 = vpop.f32.mrf.mxu0
    %469 = vmatprep.mubr.f32.mxu0 %v180
    %470 = vmatmul.mubr.f32.gmra.mxu0 %v179
    %v471 = vpop.f32.mrf.mxu0
    %v472 = vadd.f32 0.0, %v471
    %v473 = vpop.f32.mrf.mxu0
    %474 = vmatprep.mubr.f32.mxu0 %v182
    %475 = vmatmul.mubr.f32.gmra.mxu0 %v181
    %v476 = vpop.f32.mrf.mxu0
    %v477 = vadd.f32 0.0, %v476
    %v478 = vpop.f32.mrf.mxu0
    %479 = vmatprep.mubr.f32.mxu0 %v184
    %480 = vmatmul.mubr.f32.gmra.mxu0 %v183
    %v481 = vpop.f32.mrf.mxu0
    %v482 = vadd.f32 0.0, %v481
    %v483 = vpop.f32.mrf.mxu0
    %484 = vmatprep.mubr.f32.mxu0 %v186
    %485 = vmatmul.mubr.f32.gmra.mxu0 %v185
    %v486 = vpop.f32.mrf.mxu0
    %v487 = vadd.f32 0.0, %v486
    %v488 = vpop.f32.mrf.mxu0
    %489 = vmatprep.mubr.f32.mxu0 %v188
    %490 = vmatmul.mubr.f32.gmra.mxu0 %v187
    %v491 = vpop.f32.mrf.mxu0
    %v492 = vadd.f32 0.0, %v491
    %v493 = vpop.f32.mrf.mxu0
    %494 = vmatprep.mubr.f32.mxu0 %v190
    %495 = vmatmul.mubr.f32.gmra.mxu0 %v189
    %v496 = vpop.f32.mrf.mxu0
    %v497 = vadd.f32 0.0, %v496
    %v498 = vpop.f32.mrf.mxu0
    %499 = vmatprep.mubr.f32.mxu0 %v192
    %500 = vmatmul.mubr.f32.gmra.mxu0 %v191
    %v501 = vpop.f32.mrf.mxu0
    %v502 = vadd.f32 0.0, %v501
    %v503 = vpop.f32.mrf.mxu0
    %504 = vmatprep.mubr.f32.mxu0 %v194
    %505 = vmatmul.mubr.f32.gmra.mxu0 %v193
    %v506 = vpop.f32.mrf.mxu0
    %v507 = vadd.f32 0.0, %v506
    %v508 = vpop.f32.mrf.mxu0
    %509 = vmatprep.mubr.f32.mxu0 %v196
    %510 = vmatmul.mubr.f32.gmra.mxu0 %v195
    %v511 = vpop.f32.mrf.mxu0
    %v512 = vadd.f32 0.0, %v511
    %v513 = vpop.f32.mrf.mxu0
    %514 = vmatprep.mubr.f32.mxu0 %v198
    %515 = vmatmul.mubr.f32.gmra.mxu0 %v197
    %v516 = vpop.f32.mrf.mxu0
    %v517 = vadd.f32 0.0, %v516
    %v518 = vpop.f32.mrf.mxu0
    %519 = vmatprep.mubr.f32.mxu0 %v200
    %520 = vmatmul.mubr.f32.gmra.mxu0 %v199
    %v521 = vpop.f32.mrf.mxu0
    %v522 = vadd.f32 0.0, %v521
    %v523 = vpop.f32.mrf.mxu0
    %524 = vmatprep.mubr.f32.mxu0 %v202
    %525 = vmatmul.mubr.f32.gmra.mxu0 %v201
    %v526 = vpop.f32.mrf.mxu0
    %v527 = vadd.f32 0.0, %v526
    %v528 = vpop.f32.mrf.mxu0
    %529 = vmatprep.mubr.f32.mxu0 %v204
    %530 = vmatmul.mubr.f32.gmra.mxu0 %v203
    %v531 = vpop.f32.mrf.mxu0
    %v532 = vadd.f32 0.0, %v531
    %v533 = vpop.f32.mrf.mxu0
    %534 = vmatprep.mubr.f32.mxu0 %v206
    %535 = vmatmul.mubr.f32.gmra.mxu0 %v205
    %v536 = vpop.f32.mrf.mxu0
    %v537 = vadd.f32 0.0, %v536
    %v538 = vpop.f32.mrf.mxu0
    %539 = vmatprep.mubr.f32.mxu0 %v208
    %540 = vmatmul.mubr.f32.gmra.mxu0 %v207
    %v541 = vpop.f32.mrf.mxu0
    %v542 = vadd.f32 0.0, %v541
    %v543 = vpop.f32.mrf.mxu0
    %544 = vmatprep.mubr.f32.mxu0 %v210
    %545 = vmatmul.mubr.f32.gmra.mxu0 %v209
    %v546 = vpop.f32.mrf.mxu0
    %v547 = vadd.f32 0.0, %v546
    %v548 = vpop.f32.mrf.mxu0
    %549 = vdwg.mxu0
    %s550 = scalar_lea.vmem [#allocation2], 24
    %551 = vst.msk [vmem:[%s550 + $0x1] sm:$0xff] %vm211, %v392
    %552 = vst.msk [vmem:[%s550 + $0x9] sm:$0xff] %vm211, %v397
    %553 = vst.msk [vmem:[%s550 + $0x19] sm:$0xff] %vm211, %v402
    %554 = vst.msk [vmem:[%s550 + $0x21] sm:$0xff] %vm211, %v407
    %555 = vst.msk [vmem:[%s550 + $0x31] sm:$0xff] %vm211, %v412
    %556 = vst.msk [vmem:[%s550 + $0x39] sm:$0xff] %vm211, %v417
    %557 = vst.msk [vmem:[%s550 + $0x49] sm:$0xff] %vm211, %v422
    %558 = vst.msk [vmem:[%s550 + $0x51] sm:$0xff] %vm211, %v427
    %559 = vst.msk [vmem:[%s550 + $0x61] sm:$0xff] %vm211, %v432
    %560 = vst.msk [vmem:[%s550 + $0x69] sm:$0xff] %vm211, %v437
    %561 = vst.msk [vmem:[%s550 + $0x79] sm:$0xff] %vm211, %v442
    %562 = vst.msk [vmem:[%s550 + $0x81] sm:$0xff] %vm211, %v447
    %563 = vst.msk [vmem:[%s550 + $0x91] sm:$0xff] %vm211, %v452
    %564 = vst.msk [vmem:[%s550 + $0x99] sm:$0xff] %vm211, %v457
    %565 = vst.msk [vmem:[%s550 + $0xa9] sm:$0xff] %vm211, %v462
    %566 = vst.msk [vmem:[%s550 + $0xb1] sm:$0xff] %vm211, %v467
    %567 = vst.msk [vmem:[%s550 + $0xc1] sm:$0xff] %vm211, %v472
    %568 = vst.msk [vmem:[%s550 + $0xc9] sm:$0xff] %vm211, %v477
    %569 = vst.msk [vmem:[%s550 + $0xd9] sm:$0xff] %vm211, %v482
    %570 = vst.msk [vmem:[%s550 + $0xe1] sm:$0xff] %vm211, %v487
    %571 = vst.msk [vmem:[%s550 + $0xf1] sm:$0xff] %vm211, %v492
    %572 = vst.msk [vmem:[%s550 + $0xf9] sm:$0xff] %vm211, %v497
    %573 = vst.msk [vmem:[%s550 + $0x109] sm:$0xff] %vm211, %v502
    %574 = vst.msk [vmem:[%s550 + $0x111] sm:$0xff] %vm211, %v507
    %575 = vst.msk [vmem:[%s550 + $0x121] sm:$0xff] %vm211, %v512
    %576 = vst.msk [vmem:[%s550 + $0x129] sm:$0xff] %vm211, %v517
    %577 = vst.msk [vmem:[%s550 + $0x139] sm:$0xff] %vm211, %v522
    %578 = vst.msk [vmem:[%s550 + $0x141] sm:$0xff] %vm211, %v527
    %579 = vst.msk [vmem:[%s550 + $0x151] sm:$0xff] %vm211, %v532
    %580 = vst.msk [vmem:[%s550 + $0x159] sm:$0xff] %vm211, %v537
    %581 = vst.msk [vmem:[%s550 + $0x169] sm:$0xff] %vm211, %v542
    %582 = vst.msk [vmem:[%s550 + $0x171] sm:$0xff] %vm211, %v547
    %s583 = scalar_lea.vmem %s0, 8
    %v584 = vld [vmem:[%s583] sm:$0xff]
    %v586 = vcombine.high %v584, %v584
    %588 = vmatprep.subr.mxu0 0.0
    %589 = vmatpush1.xpose.msra.mxu0 0.0
    %590 = vmatprep.subr.mxu0 0.0
    %591 = vmatpush1.xpose.msra.mxu0 0.0
    %592 = vmatprep.subr.mxu0 0.0
    %593 = vmatpush1.xpose.msra.mxu0 0.0
    %594 = vmatprep.subr.mxu0 0.0
    %595 = vmatpush1.xpose.msra.mxu0 0.0
    %596 = vmatprep.subr.mxu0 0.0
    %597 = vmatpush1.xpose.msra.mxu0 0.0
    %598 = vmatprep.subr.mxu0 0.0
    %599 = vmatpush1.xpose.msra.mxu0 0.0
    %600 = vmatprep.subr.mxu0 0.0
    %601 = vmatpush1.xpose.msra.mxu0 0.0
    %602 = vmatprep.subr.mxu0 0.0
    %603 = vmatpush1.xpose.msra.mxu0 0.0
    %604 = vmatprep.subr.mxu0 0.0
    %605 = vmatpush1.xpose.msra.mxu0 0.0
    %606 = vmatprep.subr.mxu0 0.0
    %607 = vmatpush1.xpose.msra.mxu0 0.0
    %608 = vmatprep.subr.mxu0 0.0
    %609 = vmatpush1.xpose.msra.mxu0 0.0
    %610 = vmatprep.subr.mxu0 0.0
    %611 = vmatpush1.xpose.msra.mxu0 0.0
    %612 = vmatprep.subr.mxu0 0.0
    %613 = vmatpush1.xpose.msra.mxu0 0.0
    %614 = vmatprep.subr.mxu0 0.0
    %615 = vmatpush1.xpose.msra.mxu0 0.0
    %616 = vmatprep.subr.mxu0 0.0
    %617 = vmatpush1.xpose.msra.mxu0 0.0
    %618 = vmatprep.subr.mxu0 %v586
    %619 = vmatpush1.xpose.msra.mxu0 %v584
    %620 = vmatprep.subr.mxu0 0.0
    %621 = vmatpush2.xpose.msra.mxu0 0.0
    %622 = vmatprep.subr.mxu0 0.0
    %623 = vmatpush2.xpose.msra.mxu0 0.0
    %624 = vmatprep.subr.mxu0 0.0
    %625 = vmatpush2.xpose.msra.mxu0 0.0
    %626 = vmatprep.subr.mxu0 0.0
    %627 = vmatpush2.xpose.msra.mxu0 0.0
    %628 = vmatprep.subr.mxu0 0.0
    %629 = vmatpush2.xpose.msra.mxu0 0.0
    %630 = vmatprep.subr.mxu0 0.0
    %631 = vmatpush2.xpose.msra.mxu0 0.0
    %632 = vmatprep.subr.mxu0 0.0
    %633 = vmatpush2.xpose.msra.mxu0 0.0
    %634 = vmatprep.subr.mxu0 0.0
    %635 = vmatpush2.xpose.msra.mxu0 0.0
    %636 = vmatprep.subr.mxu0 0.0
    %637 = vmatpush2.xpose.msra.mxu0 0.0
    %638 = vmatprep.subr.mxu0 0.0
    %639 = vmatpush2.xpose.msra.mxu0 0.0
    %640 = vmatprep.subr.mxu0 0.0
    %641 = vmatpush2.xpose.msra.mxu0 0.0
    %642 = vmatprep.subr.mxu0 0.0
    %643 = vmatpush2.xpose.msra.mxu0 0.0
    %644 = vmatprep.subr.mxu0 0.0
    %645 = vmatpush2.xpose.msra.mxu0 0.0
    %646 = vmatprep.subr.mxu0 0.0
    %647 = vmatpush2.xpose.msra.mxu0 0.0
    %648 = vmatprep.subr.mxu0 0.0
    %649 = vmatpush2.xpose.msra.mxu0 0.0
    %650 = vmatprep.subr.mxu0 0.0
    %651 = vmatpush2.xpose.msra.mxu0 0.0
    %652 = vmatprep.mubr.f32.mxu0 %v148
    %653 = vmatmul.mubr.f32.gmra.mxu0 %v147
    %v654 = vpop.f32.mrf.mxu0
    %v655 = vadd.f32 0.0, %v654
    %v656 = vpop.f32.mrf.mxu0
    %657 = vmatprep.mubr.f32.mxu0 %v150
    %658 = vmatmul.mubr.f32.gmra.mxu0 %v149
    %v659 = vpop.f32.mrf.mxu0
    %v660 = vadd.f32 0.0, %v659
    %v661 = vpop.f32.mrf.mxu0
    %662 = vmatprep.mubr.f32.mxu0 %v152
    %663 = vmatmul.mubr.f32.gmra.mxu0 %v151
    %v664 = vpop.f32.mrf.mxu0
    %v665 = vadd.f32 0.0, %v664
    %v666 = vpop.f32.mrf.mxu0
    %667 = vmatprep.mubr.f32.mxu0 %v154
    %668 = vmatmul.mubr.f32.gmra.mxu0 %v153
    %v669 = vpop.f32.mrf.mxu0
    %v670 = vadd.f32 0.0, %v669
    %v671 = vpop.f32.mrf.mxu0
    %672 = vmatprep.mubr.f32.mxu0 %v156
    %673 = vmatmul.mubr.f32.gmra.mxu0 %v155
    %v674 = vpop.f32.mrf.mxu0
    %v675 = vadd.f32 0.0, %v674
    %v676 = vpop.f32.mrf.mxu0
    %677 = vmatprep.mubr.f32.mxu0 %v158
    %678 = vmatmul.mubr.f32.gmra.mxu0 %v157
    %v679 = vpop.f32.mrf.mxu0
    %v680 = vadd.f32 0.0, %v679
    %v681 = vpop.f32.mrf.mxu0
    %682 = vmatprep.mubr.f32.mxu0 %v160
    %683 = vmatmul.mubr.f32.gmra.mxu0 %v159
    %v684 = vpop.f32.mrf.mxu0
    %v685 = vadd.f32 0.0, %v684
    %v686 = vpop.f32.mrf.mxu0
    %687 = vmatprep.mubr.f32.mxu0 %v162
    %688 = vmatmul.mubr.f32.gmra.mxu0 %v161
    %v689 = vpop.f32.mrf.mxu0
    %v690 = vadd.f32 0.0, %v689
    %v691 = vpop.f32.mrf.mxu0
    %692 = vmatprep.mubr.f32.mxu0 %v164
    %693 = vmatmul.mubr.f32.gmra.mxu0 %v163
    %v694 = vpop.f32.mrf.mxu0
    %v695 = vadd.f32 0.0, %v694
    %v696 = vpop.f32.mrf.mxu0
    %697 = vmatprep.mubr.f32.mxu0 %v166
    %698 = vmatmul.mubr.f32.gmra.mxu0 %v165
    %v699 = vpop.f32.mrf.mxu0
    %v700 = vadd.f32 0.0, %v699
    %v701 = vpop.f32.mrf.mxu0
    %702 = vmatprep.mubr.f32.mxu0 %v168
    %703 = vmatmul.mubr.f32.gmra.mxu0 %v167
    %v704 = vpop.f32.mrf.mxu0
    %v705 = vadd.f32 0.0, %v704
    %v706 = vpop.f32.mrf.mxu0
    %707 = vmatprep.mubr.f32.mxu0 %v170
    %708 = vmatmul.mubr.f32.gmra.mxu0 %v169
    %v709 = vpop.f32.mrf.mxu0
    %v710 = vadd.f32 0.0, %v709
    %v711 = vpop.f32.mrf.mxu0
    %712 = vmatprep.mubr.f32.mxu0 %v172
    %713 = vmatmul.mubr.f32.gmra.mxu0 %v171
    %v714 = vpop.f32.mrf.mxu0
    %v715 = vadd.f32 0.0, %v714
    %v716 = vpop.f32.mrf.mxu0
    %717 = vmatprep.mubr.f32.mxu0 %v174
    %718 = vmatmul.mubr.f32.gmra.mxu0 %v173
    %v719 = vpop.f32.mrf.mxu0
    %v720 = vadd.f32 0.0, %v719
    %v721 = vpop.f32.mrf.mxu0
    %722 = vmatprep.mubr.f32.mxu0 %v176
    %723 = vmatmul.mubr.f32.gmra.mxu0 %v175
    %v724 = vpop.f32.mrf.mxu0
    %v725 = vadd.f32 0.0, %v724
    %v726 = vpop.f32.mrf.mxu0
    %727 = vmatprep.mubr.f32.mxu0 %v178
    %728 = vmatmul.mubr.f32.gmra.mxu0 %v177
    %v729 = vpop.f32.mrf.mxu0
    %v730 = vadd.f32 0.0, %v729
    %v731 = vpop.f32.mrf.mxu0
    %732 = vmatprep.mubr.f32.mxu0 %v180
    %733 = vmatmul.mubr.f32.gmra.mxu0 %v179
    %v734 = vpop.f32.mrf.mxu0
    %v735 = vadd.f32 0.0, %v734
    %v736 = vpop.f32.mrf.mxu0
    %737 = vmatprep.mubr.f32.mxu0 %v182
    %738 = vmatmul.mubr.f32.gmra.mxu0 %v181
    %v739 = vpop.f32.mrf.mxu0
    %v740 = vadd.f32 0.0, %v739
    %v741 = vpop.f32.mrf.mxu0
    %742 = vmatprep.mubr.f32.mxu0 %v184
    %743 = vmatmul.mubr.f32.gmra.mxu0 %v183
    %v744 = vpop.f32.mrf.mxu0
    %v745 = vadd.f32 0.0, %v744
    %v746 = vpop.f32.mrf.mxu0
    %747 = vmatprep.mubr.f32.mxu0 %v186
    %748 = vmatmul.mubr.f32.gmra.mxu0 %v185
    %v749 = vpop.f32.mrf.mxu0
    %v750 = vadd.f32 0.0, %v749
    %v751 = vpop.f32.mrf.mxu0
    %752 = vmatprep.mubr.f32.mxu0 %v188
    %753 = vmatmul.mubr.f32.gmra.mxu0 %v187
    %v754 = vpop.f32.mrf.mxu0
    %v755 = vadd.f32 0.0, %v754
    %v756 = vpop.f32.mrf.mxu0
    %757 = vmatprep.mubr.f32.mxu0 %v190
    %758 = vmatmul.mubr.f32.gmra.mxu0 %v189
    %v759 = vpop.f32.mrf.mxu0
    %v760 = vadd.f32 0.0, %v759
    %v761 = vpop.f32.mrf.mxu0
    %762 = vmatprep.mubr.f32.mxu0 %v192
    %763 = vmatmul.mubr.f32.gmra.mxu0 %v191
    %v764 = vpop.f32.mrf.mxu0
    %v765 = vadd.f32 0.0, %v764
    %v766 = vpop.f32.mrf.mxu0
    %767 = vmatprep.mubr.f32.mxu0 %v194
    %768 = vmatmul.mubr.f32.gmra.mxu0 %v193
    %v769 = vpop.f32.mrf.mxu0
    %v770 = vadd.f32 0.0, %v769
    %v771 = vpop.f32.mrf.mxu0
    %772 = vmatprep.mubr.f32.mxu0 %v196
    %773 = vmatmul.mubr.f32.gmra.mxu0 %v195
    %v774 = vpop.f32.mrf.mxu0
    %v775 = vadd.f32 0.0, %v774
    %v776 = vpop.f32.mrf.mxu0
    %777 = vmatprep.mubr.f32.mxu0 %v198
    %778 = vmatmul.mubr.f32.gmra.mxu0 %v197
    %v779 = vpop.f32.mrf.mxu0
    %v780 = vadd.f32 0.0, %v779
    %v781 = vpop.f32.mrf.mxu0
    %782 = vmatprep.mubr.f32.mxu0 %v200
    %783 = vmatmul.mubr.f32.gmra.mxu0 %v199
    %v784 = vpop.f32.mrf.mxu0
    %v785 = vadd.f32 0.0, %v784
    %v786 = vpop.f32.mrf.mxu0
    %787 = vmatprep.mubr.f32.mxu0 %v202
    %788 = vmatmul.mubr.f32.gmra.mxu0 %v201
    %v789 = vpop.f32.mrf.mxu0
    %v790 = vadd.f32 0.0, %v789
    %v791 = vpop.f32.mrf.mxu0
    %792 = vmatprep.mubr.f32.mxu0 %v204
    %793 = vmatmul.mubr.f32.gmra.mxu0 %v203
    %v794 = vpop.f32.mrf.mxu0
    %v795 = vadd.f32 0.0, %v794
    %v796 = vpop.f32.mrf.mxu0
    %797 = vmatprep.mubr.f32.mxu0 %v206
    %798 = vmatmul.mubr.f32.gmra.mxu0 %v205
    %v799 = vpop.f32.mrf.mxu0
    %v800 = vadd.f32 0.0, %v799
    %v801 = vpop.f32.mrf.mxu0
    %802 = vmatprep.mubr.f32.mxu0 %v208
    %803 = vmatmul.mubr.f32.gmra.mxu0 %v207
    %v804 = vpop.f32.mrf.mxu0
    %v805 = vadd.f32 0.0, %v804
    %v806 = vpop.f32.mrf.mxu0
    %807 = vmatprep.mubr.f32.mxu0 %v210
    %808 = vmatmul.mubr.f32.gmra.mxu0 %v209
    %v809 = vpop.f32.mrf.mxu0
    %v810 = vadd.f32 0.0, %v809
    %v811 = vpop.f32.mrf.mxu0
    %812 = vdwg.mxu0
    %s813 = scalar_lea.vmem [#allocation2], 456
    %814 = vst.msk [vmem:[%s813 + $0x1] sm:$0xff] %vm211, %v655
    %815 = vst.msk [vmem:[%s813 + $0x9] sm:$0xff] %vm211, %v660
    %816 = vst.msk [vmem:[%s813 + $0x19] sm:$0xff] %vm211, %v665
    %817 = vst.msk [vmem:[%s813 + $0x21] sm:$0xff] %vm211, %v670
    %818 = vst.msk [vmem:[%s813 + $0x31] sm:$0xff] %vm211, %v675
    %819 = vst.msk [vmem:[%s813 + $0x39] sm:$0xff] %vm211, %v680
    %820 = vst.msk [vmem:[%s813 + $0x49] sm:$0xff] %vm211, %v685
    %821 = vst.msk [vmem:[%s813 + $0x51] sm:$0xff] %vm211, %v690
    %822 = vst.msk [vmem:[%s813 + $0x61] sm:$0xff] %vm211, %v695
    %823 = vst.msk [vmem:[%s813 + $0x69] sm:$0xff] %vm211, %v700
    %824 = vst.msk [vmem:[%s813 + $0x79] sm:$0xff] %vm211, %v705
    %825 = vst.msk [vmem:[%s813 + $0x81] sm:$0xff] %vm211, %v710
    %826 = vst.msk [vmem:[%s813 + $0x91] sm:$0xff] %vm211, %v715
    %827 = vst.msk [vmem:[%s813 + $0x99] sm:$0xff] %vm211, %v720
    %828 = vst.msk [vmem:[%s813 + $0xa9] sm:$0xff] %vm211, %v725
    %829 = vst.msk [vmem:[%s813 + $0xb1] sm:$0xff] %vm211, %v730
    %830 = vst.msk [vmem:[%s813 + $0xc1] sm:$0xff] %vm211, %v735
    %831 = vst.msk [vmem:[%s813 + $0xc9] sm:$0xff] %vm211, %v740
    %832 = vst.msk [vmem:[%s813 + $0xd9] sm:$0xff] %vm211, %v745
    %833 = vst.msk [vmem:[%s813 + $0xe1] sm:$0xff] %vm211, %v750
    %834 = vst.msk [vmem:[%s813 + $0xf1] sm:$0xff] %vm211, %v755
    %835 = vst.msk [vmem:[%s813 + $0xf9] sm:$0xff] %vm211, %v760
    %836 = vst.msk [vmem:[%s813 + $0x109] sm:$0xff] %vm211, %v765
    %837 = vst.msk [vmem:[%s813 + $0x111] sm:$0xff] %vm211, %v770
    %838 = vst.msk [vmem:[%s813 + $0x121] sm:$0xff] %vm211, %v775
    %839 = vst.msk [vmem:[%s813 + $0x129] sm:$0xff] %vm211, %v780
    %840 = vst.msk [vmem:[%s813 + $0x139] sm:$0xff] %vm211, %v785
    %841 = vst.msk [vmem:[%s813 + $0x141] sm:$0xff] %vm211, %v790
    %842 = vst.msk [vmem:[%s813 + $0x151] sm:$0xff] %vm211, %v795
    %843 = vst.msk [vmem:[%s813 + $0x159] sm:$0xff] %vm211, %v800
    %844 = vst.msk [vmem:[%s813 + $0x169] sm:$0xff] %vm211, %v805
    %845 = vst.msk [vmem:[%s813 + $0x171] sm:$0xff] %vm211, %v810
    %v846 = vld [vmem:[#allocation2] sm:$0xff]
    %v847 = vld [vmem:[#allocation2 + $0x8] sm:$0xff]
    %v848 = vld [vmem:[#allocation2 + $0x18] sm:$0xff]
    %v849 = vld [vmem:[#allocation2 + $0x20] sm:$0xff]
    %v850 = vld [vmem:[#allocation2 + $0x30] sm:$0xff]
    %v851 = vld [vmem:[#allocation2 + $0x38] sm:$0xff]
    %v852 = vld [vmem:[#allocation2 + $0x48] sm:$0xff]
    %v853 = vld [vmem:[#allocation2 + $0x50] sm:$0xff]
    %v854 = vld [vmem:[#allocation2 + $0x60] sm:$0xff]
    %v855 = vld [vmem:[#allocation2 + $0x68] sm:$0xff]
    %v856 = vld [vmem:[#allocation2 + $0x78] sm:$0xff]
    %v857 = vld [vmem:[#allocation2 + $0x80] sm:$0xff]
    %v858 = vld [vmem:[#allocation2 + $0x90] sm:$0xff]
    %v859 = vld [vmem:[#allocation2 + $0x98] sm:$0xff]
    %v860 = vld [vmem:[#allocation2 + $0xa8] sm:$0xff]
    %v861 = vld [vmem:[#allocation2 + $0xb0] sm:$0xff]
    %v862 = vld [vmem:[#allocation2 + $0xc0] sm:$0xff]
    %v863 = vld [vmem:[#allocation2 + $0xc8] sm:$0xff]
    %v864 = vld [vmem:[#allocation2 + $0xd8] sm:$0xff]
    %v865 = vld [vmem:[#allocation2 + $0xe0] sm:$0xff]
    %v866 = vld [vmem:[#allocation2 + $0xf0] sm:$0xff]
    %v867 = vld [vmem:[#allocation2 + $0xf8] sm:$0xff]
    %v868 = vld [vmem:[#allocation2 + $0x108] sm:$0xff]
    %v869 = vld [vmem:[#allocation2 + $0x110] sm:$0xff]
    %v870 = vld [vmem:[#allocation2 + $0x120] sm:$0xff]
    %v871 = vld [vmem:[#allocation2 + $0x128] sm:$0xff]
    %v872 = vld [vmem:[#allocation2 + $0x138] sm:$0xff]
    %v873 = vld [vmem:[#allocation2 + $0x140] sm:$0xff]
    %v874 = vld [vmem:[#allocation2 + $0x150] sm:$0xff]
    %v875 = vld [vmem:[#allocation2 + $0x158] sm:$0xff]
    %v876 = vld [vmem:[#allocation2 + $0x168] sm:$0xff]
    %v877 = vld [vmem:[#allocation2 + $0x170] sm:$0xff]
    %v878 = vld [vmem:[#allocation2 + $0x1b0] sm:$0xff]
    %v879 = vld [vmem:[#allocation2 + $0x1b8] sm:$0xff]
    %v880 = vld [vmem:[#allocation2 + $0x1c8] sm:$0xff]
    %v881 = vld [vmem:[#allocation2 + $0x1d0] sm:$0xff]
    %v882 = vld [vmem:[#allocation2 + $0x1e0] sm:$0xff]
    %v883 = vld [vmem:[#allocation2 + $0x1e8] sm:$0xff]
    %v884 = vld [vmem:[#allocation2 + $0x1f8] sm:$0xff]
    %v885 = vld [vmem:[#allocation2 + $0x200] sm:$0xff]
    %v886 = vld [vmem:[#allocation2 + $0x210] sm:$0xff]
    %v887 = vld [vmem:[#allocation2 + $0x218] sm:$0xff]
    %v888 = vld [vmem:[#allocation2 + $0x228] sm:$0xff]
    %v889 = vld [vmem:[#allocation2 + $0x230] sm:$0xff]
    %v890 = vld [vmem:[#allocation2 + $0x240] sm:$0xff]
    %v891 = vld [vmem:[#allocation2 + $0x248] sm:$0xff]
    %v892 = vld [vmem:[#allocation2 + $0x258] sm:$0xff]
    %v893 = vld [vmem:[#allocation2 + $0x260] sm:$0xff]
    %v894 = vld [vmem:[#allocation2 + $0x270] sm:$0xff]
    %v895 = vld [vmem:[#allocation2 + $0x278] sm:$0xff]
    %v896 = vld [vmem:[#allocation2 + $0x288] sm:$0xff]
    %v897 = vld [vmem:[#allocation2 + $0x290] sm:$0xff]
    %v898 = vld [vmem:[#allocation2 + $0x2a0] sm:$0xff]
    %v899 = vld [vmem:[#allocation2 + $0x2a8] sm:$0xff]
    %v900 = vld [vmem:[#allocation2 + $0x2b8] sm:$0xff]
    %v901 = vld [vmem:[#allocation2 + $0x2c0] sm:$0xff]
    %v902 = vld [vmem:[#allocation2 + $0x2d0] sm:$0xff]
    %v903 = vld [vmem:[#allocation2 + $0x2d8] sm:$0xff]
    %v904 = vld [vmem:[#allocation2 + $0x2e8] sm:$0xff]
    %v905 = vld [vmem:[#allocation2 + $0x2f0] sm:$0xff]
    %v906 = vld [vmem:[#allocation2 + $0x300] sm:$0xff]
    %v907 = vld [vmem:[#allocation2 + $0x308] sm:$0xff]
    %v908 = vld [vmem:[#allocation2 + $0x318] sm:$0xff]
    %v909 = vld [vmem:[#allocation2 + $0x320] sm:$0xff]
    %v910 = vld [vmem:[#allocation2 + $0x1] sm:$0xff]
    %v911 = vld [vmem:[#allocation2 + $0x9] sm:$0xff]
    %v912 = vld [vmem:[#allocation2 + $0x19] sm:$0xff]
    %v913 = vld [vmem:[#allocation2 + $0x21] sm:$0xff]
    %v914 = vld [vmem:[#allocation2 + $0x31] sm:$0xff]
    %v915 = vld [vmem:[#allocation2 + $0x39] sm:$0xff]
    %v916 = vld [vmem:[#allocation2 + $0x49] sm:$0xff]
    %v917 = vld [vmem:[#allocation2 + $0x51] sm:$0xff]
    %v918 = vld [vmem:[#allocation2 + $0x61] sm:$0xff]
    %v919 = vld [vmem:[#allocation2 + $0x69] sm:$0xff]
    %v920 = vld [vmem:[#allocation2 + $0x79] sm:$0xff]
    %v921 = vld [vmem:[#allocation2 + $0x81] sm:$0xff]
    %v922 = vld [vmem:[#allocation2 + $0x91] sm:$0xff]
    %v923 = vld [vmem:[#allocation2 + $0x99] sm:$0xff]
    %v924 = vld [vmem:[#allocation2 + $0xa9] sm:$0xff]
    %v925 = vld [vmem:[#allocation2 + $0xb1] sm:$0xff]
    %v926 = vld [vmem:[#allocation2 + $0xc1] sm:$0xff]
    %v927 = vld [vmem:[#allocation2 + $0xc9] sm:$0xff]
    %v928 = vld [vmem:[#allocation2 + $0xd9] sm:$0xff]
    %v929 = vld [vmem:[#allocation2 + $0xe1] sm:$0xff]
    %v930 = vld [vmem:[#allocation2 + $0xf1] sm:$0xff]
    %v931 = vld [vmem:[#allocation2 + $0xf9] sm:$0xff]
    %v932 = vld [vmem:[#allocation2 + $0x109] sm:$0xff]
    %v933 = vld [vmem:[#allocation2 + $0x111] sm:$0xff]
    %v934 = vld [vmem:[#allocation2 + $0x121] sm:$0xff]
    %v935 = vld [vmem:[#allocation2 + $0x129] sm:$0xff]
    %v936 = vld [vmem:[#allocation2 + $0x139] sm:$0xff]
    %v937 = vld [vmem:[#allocation2 + $0x141] sm:$0xff]
    %v938 = vld [vmem:[#allocation2 + $0x151] sm:$0xff]
    %v939 = vld [vmem:[#allocation2 + $0x159] sm:$0xff]
    %v940 = vld [vmem:[#allocation2 + $0x169] sm:$0xff]
    %v941 = vld [vmem:[#allocation2 + $0x171] sm:$0xff]
    %v942 = vld [vmem:[#allocation2 + $0x1b1] sm:$0xff]
    %v943 = vld [vmem:[#allocation2 + $0x1b9] sm:$0xff]
    %v944 = vld [vmem:[#allocation2 + $0x1c9] sm:$0xff]
    %v945 = vld [vmem:[#allocation2 + $0x1d1] sm:$0xff]
    %v946 = vld [vmem:[#allocation2 + $0x1e1] sm:$0xff]
    %v947 = vld [vmem:[#allocation2 + $0x1e9] sm:$0xff]
    %v948 = vld [vmem:[#allocation2 + $0x1f9] sm:$0xff]
    %v949 = vld [vmem:[#allocation2 + $0x201] sm:$0xff]
    %v950 = vld [vmem:[#allocation2 + $0x211] sm:$0xff]
    %v951 = vld [vmem:[#allocation2 + $0x219] sm:$0xff]
    %v952 = vld [vmem:[#allocation2 + $0x229] sm:$0xff]
    %v953 = vld [vmem:[#allocation2 + $0x231] sm:$0xff]
    %v954 = vld [vmem:[#allocation2 + $0x241] sm:$0xff]
    %v955 = vld [vmem:[#allocation2 + $0x249] sm:$0xff]
    %v956 = vld [vmem:[#allocation2 + $0x259] sm:$0xff]
    %v957 = vld [vmem:[#allocation2 + $0x261] sm:$0xff]
    %v958 = vld [vmem:[#allocation2 + $0x271] sm:$0xff]
    %v959 = vld [vmem:[#allocation2 + $0x279] sm:$0xff]
    %v960 = vld [vmem:[#allocation2 + $0x289] sm:$0xff]
    %v961 = vld [vmem:[#allocation2 + $0x291] sm:$0xff]
    %v962 = vld [vmem:[#allocation2 + $0x2a1] sm:$0xff]
    %v963 = vld [vmem:[#allocation2 + $0x2a9] sm:$0xff]
    %v964 = vld [vmem:[#allocation2 + $0x2b9] sm:$0xff]
    %v965 = vld [vmem:[#allocation2 + $0x2c1] sm:$0xff]
    %v966 = vld [vmem:[#allocation2 + $0x2d1] sm:$0xff]
    %v967 = vld [vmem:[#allocation2 + $0x2d9] sm:$0xff]
    %v968 = vld [vmem:[#allocation2 + $0x2e9] sm:$0xff]
    %v969 = vld [vmem:[#allocation2 + $0x2f1] sm:$0xff]
    %v970 = vld [vmem:[#allocation2 + $0x301] sm:$0xff]
    %v971 = vld [vmem:[#allocation2 + $0x309] sm:$0xff]
    %v972 = vld [vmem:[#allocation2 + $0x319] sm:$0xff]
    %v973 = vld [vmem:[#allocation2 + $0x321] sm:$0xff]
    %v974 = vld [vmem:[#allocation2 + $0x2] sm:$0xff]
    %v975 = vld [vmem:[#allocation2 + $0xa] sm:$0xff]
    %v976 = vld [vmem:[#allocation2 + $0x1a] sm:$0xff]
    %v977 = vld [vmem:[#allocation2 + $0x22] sm:$0xff]
    %v978 = vld [vmem:[#allocation2 + $0x32] sm:$0xff]
    %v979 = vld [vmem:[#allocation2 + $0x3a] sm:$0xff]
    %v980 = vld [vmem:[#allocation2 + $0x4a] sm:$0xff]
    %v981 = vld [vmem:[#allocation2 + $0x52] sm:$0xff]
    %v982 = vld [vmem:[#allocation2 + $0x62] sm:$0xff]
    %v983 = vld [vmem:[#allocation2 + $0x6a] sm:$0xff]
    %v984 = vld [vmem:[#allocation2 + $0x7a] sm:$0xff]
    %v985 = vld [vmem:[#allocation2 + $0x82] sm:$0xff]
    %v986 = vld [vmem:[#allocation2 + $0x92] sm:$0xff]
    %v987 = vld [vmem:[#allocation2 + $0x9a] sm:$0xff]
    %v988 = vld [vmem:[#allocation2 + $0xaa] sm:$0xff]
    %v989 = vld [vmem:[#allocation2 + $0xb2] sm:$0xff]
    %v990 = vld [vmem:[#allocation2 + $0xc2] sm:$0xff]
    %v991 = vld [vmem:[#allocation2 + $0xca] sm:$0xff]
    %v992 = vld [vmem:[#allocation2 + $0xda] sm:$0xff]
    %v993 = vld [vmem:[#allocation2 + $0xe2] sm:$0xff]
    %v994 = vld [vmem:[#allocation2 + $0xf2] sm:$0xff]
    %v995 = vld [vmem:[#allocation2 + $0xfa] sm:$0xff]
    %v996 = vld [vmem:[#allocation2 + $0x10a] sm:$0xff]
    %v997 = vld [vmem:[#allocation2 + $0x112] sm:$0xff]
    %v998 = vld [vmem:[#allocation2 + $0x122] sm:$0xff]
    %v999 = vld [vmem:[#allocation2 + $0x12a] sm:$0xff]
    %v1000 = vld [vmem:[#allocation2 + $0x13a] sm:$0xff]
    %v1001 = vld [vmem:[#allocation2 + $0x142] sm:$0xff]
    %v1002 = vld [vmem:[#allocation2 + $0x152] sm:$0xff]
    %v1003 = vld [vmem:[#allocation2 + $0x15a] sm:$0xff]
    %v1004 = vld [vmem:[#allocation2 + $0x16a] sm:$0xff]
    %v1005 = vld [vmem:[#allocation2 + $0x172] sm:$0xff]
    %v1006 = vld [vmem:[#allocation2 + $0x1b2] sm:$0xff]
    %v1007 = vld [vmem:[#allocation2 + $0x1ba] sm:$0xff]
    %v1008 = vld [vmem:[#allocation2 + $0x1ca] sm:$0xff]
    %v1009 = vld [vmem:[#allocation2 + $0x1d2] sm:$0xff]
    %v1010 = vld [vmem:[#allocation2 + $0x1e2] sm:$0xff]
    %v1011 = vld [vmem:[#allocation2 + $0x1ea] sm:$0xff]
    %v1012 = vld [vmem:[#allocation2 + $0x1fa] sm:$0xff]
    %v1013 = vld [vmem:[#allocation2 + $0x202] sm:$0xff]
    %v1014 = vld [vmem:[#allocation2 + $0x212] sm:$0xff]
    %v1015 = vld [vmem:[#allocation2 + $0x21a] sm:$0xff]
    %v1016 = vld [vmem:[#allocation2 + $0x22a] sm:$0xff]
    %v1017 = vld [vmem:[#allocation2 + $0x232] sm:$0xff]
    %v1018 = vld [vmem:[#allocation2 + $0x242] sm:$0xff]
    %v1019 = vld [vmem:[#allocation2 + $0x24a] sm:$0xff]
    %v1020 = vld [vmem:[#allocation2 + $0x25a] sm:$0xff]
    %v1021 = vld [vmem:[#allocation2 + $0x262] sm:$0xff]
    %v1022 = vld [vmem:[#allocation2 + $0x272] sm:$0xff]
    %v1023 = vld [vmem:[#allocation2 + $0x27a] sm:$0xff]
    %v1024 = vld [vmem:[#allocation2 + $0x28a] sm:$0xff]
    %v1025 = vld [vmem:[#allocation2 + $0x292] sm:$0xff]
    %v1026 = vld [vmem:[#allocation2 + $0x2a2] sm:$0xff]
    %v1027 = vld [vmem:[#allocation2 + $0x2aa] sm:$0xff]
    %v1028 = vld [vmem:[#allocation2 + $0x2ba] sm:$0xff]
    %v1029 = vld [vmem:[#allocation2 + $0x2c2] sm:$0xff]
    %v1030 = vld [vmem:[#allocation2 + $0x2d2] sm:$0xff]
    %v1031 = vld [vmem:[#allocation2 + $0x2da] sm:$0xff]
    %v1032 = vld [vmem:[#allocation2 + $0x2ea] sm:$0xff]
    %v1033 = vld [vmem:[#allocation2 + $0x2f2] sm:$0xff]
    %v1034 = vld [vmem:[#allocation2 + $0x302] sm:$0xff]
    %v1035 = vld [vmem:[#allocation2 + $0x30a] sm:$0xff]
    %v1036 = vld [vmem:[#allocation2 + $0x31a] sm:$0xff]
    %v1037 = vld [vmem:[#allocation2 + $0x322] sm:$0xff]
    %v1038 = vld [vmem:[%s550] sm:$0xff]
    %v1039 = vld [vmem:[%s550 + $0x8] sm:$0xff]
    %v1040 = vld [vmem:[%s550 + $0x18] sm:$0xff]
    %v1041 = vld [vmem:[%s550 + $0x20] sm:$0xff]
    %v1042 = vld [vmem:[%s550 + $0x30] sm:$0xff]
    %v1043 = vld [vmem:[%s550 + $0x38] sm:$0xff]
    %v1044 = vld [vmem:[%s550 + $0x48] sm:$0xff]
    %v1045 = vld [vmem:[%s550 + $0x50] sm:$0xff]
    %v1046 = vld [vmem:[%s550 + $0x60] sm:$0xff]
    %v1047 = vld [vmem:[%s550 + $0x68] sm:$0xff]
    %v1048 = vld [vmem:[%s550 + $0x78] sm:$0xff]
    %v1049 = vld [vmem:[%s550 + $0x80] sm:$0xff]
    %v1050 = vld [vmem:[%s550 + $0x90] sm:$0xff]
    %v1051 = vld [vmem:[%s550 + $0x98] sm:$0xff]
    %v1052 = vld [vmem:[%s550 + $0xa8] sm:$0xff]
    %v1053 = vld [vmem:[%s550 + $0xb0] sm:$0xff]
    %v1054 = vld [vmem:[%s550 + $0xc0] sm:$0xff]
    %v1055 = vld [vmem:[%s550 + $0xc8] sm:$0xff]
    %v1056 = vld [vmem:[%s550 + $0xd8] sm:$0xff]
    %v1057 = vld [vmem:[%s550 + $0xe0] sm:$0xff]
    %v1058 = vld [vmem:[%s550 + $0xf0] sm:$0xff]
    %v1059 = vld [vmem:[%s550 + $0xf8] sm:$0xff]
    %v1060 = vld [vmem:[%s550 + $0x108] sm:$0xff]
    %v1061 = vld [vmem:[%s550 + $0x110] sm:$0xff]
    %v1062 = vld [vmem:[%s550 + $0x120] sm:$0xff]
    %v1063 = vld [vmem:[%s550 + $0x128] sm:$0xff]
    %v1064 = vld [vmem:[%s550 + $0x138] sm:$0xff]
    %v1065 = vld [vmem:[%s550 + $0x140] sm:$0xff]
    %v1066 = vld [vmem:[%s550 + $0x150] sm:$0xff]
    %v1067 = vld [vmem:[%s550 + $0x158] sm:$0xff]
    %v1068 = vld [vmem:[%s550 + $0x168] sm:$0xff]
    %v1069 = vld [vmem:[%s550 + $0x170] sm:$0xff]
    %v1070 = vld [vmem:[%s550 + $0x1b0] sm:$0xff]
    %v1071 = vld [vmem:[%s550 + $0x1b8] sm:$0xff]
    %v1072 = vld [vmem:[%s550 + $0x1c8] sm:$0xff]
    %v1073 = vld [vmem:[%s550 + $0x1d0] sm:$0xff]
    %v1074 = vld [vmem:[%s550 + $0x1e0] sm:$0xff]
    %v1075 = vld [vmem:[%s550 + $0x1e8] sm:$0xff]
    %v1076 = vld [vmem:[%s550 + $0x1f8] sm:$0xff]
    %v1077 = vld [vmem:[%s550 + $0x200] sm:$0xff]
    %v1078 = vld [vmem:[%s550 + $0x210] sm:$0xff]
    %v1079 = vld [vmem:[%s550 + $0x218] sm:$0xff]
    %v1080 = vld [vmem:[%s550 + $0x228] sm:$0xff]
    %v1081 = vld [vmem:[%s550 + $0x230] sm:$0xff]
    %v1082 = vld [vmem:[%s550 + $0x240] sm:$0xff]
    %v1083 = vld [vmem:[%s550 + $0x248] sm:$0xff]
    %v1084 = vld [vmem:[%s550 + $0x258] sm:$0xff]
    %v1085 = vld [vmem:[%s550 + $0x260] sm:$0xff]
    %v1086 = vld [vmem:[%s550 + $0x270] sm:$0xff]
    %v1087 = vld [vmem:[%s550 + $0x278] sm:$0xff]
    %v1088 = vld [vmem:[%s550 + $0x288] sm:$0xff]
    %v1089 = vld [vmem:[%s550 + $0x290] sm:$0xff]
    %v1090 = vld [vmem:[%s550 + $0x2a0] sm:$0xff]
    %v1091 = vld [vmem:[%s550 + $0x2a8] sm:$0xff]
    %v1092 = vld [vmem:[%s550 + $0x2b8] sm:$0xff]
    %v1093 = vld [vmem:[%s550 + $0x2c0] sm:$0xff]
    %v1094 = vld [vmem:[%s550 + $0x2d0] sm:$0xff]
    %v1095 = vld [vmem:[%s550 + $0x2d8] sm:$0xff]
    %v1096 = vld [vmem:[%s550 + $0x2e8] sm:$0xff]
    %v1097 = vld [vmem:[%s550 + $0x2f0] sm:$0xff]
    %v1098 = vld [vmem:[%s550 + $0x300] sm:$0xff]
    %v1099 = vld [vmem:[%s550 + $0x308] sm:$0xff]
    %v1100 = vld [vmem:[%s550 + $0x318] sm:$0xff]
    %v1101 = vld [vmem:[%s550 + $0x320] sm:$0xff]
    %v1102 = vld [vmem:[%s550 + $0x1] sm:$0xff]
    %v1103 = vld [vmem:[%s550 + $0x9] sm:$0xff]
    %v1104 = vld [vmem:[%s550 + $0x19] sm:$0xff]
    %v1105 = vld [vmem:[%s550 + $0x21] sm:$0xff]
    %v1106 = vld [vmem:[%s550 + $0x31] sm:$0xff]
    %v1107 = vld [vmem:[%s550 + $0x39] sm:$0xff]
    %v1108 = vld [vmem:[%s550 + $0x49] sm:$0xff]
    %v1109 = vld [vmem:[%s550 + $0x51] sm:$0xff]
    %v1110 = vld [vmem:[%s550 + $0x61] sm:$0xff]
    %v1111 = vld [vmem:[%s550 + $0x69] sm:$0xff]
    %v1112 = vld [vmem:[%s550 + $0x79] sm:$0xff]
    %v1113 = vld [vmem:[%s550 + $0x81] sm:$0xff]
    %v1114 = vld [vmem:[%s550 + $0x91] sm:$0xff]
    %v1115 = vld [vmem:[%s550 + $0x99] sm:$0xff]
    %v1116 = vld [vmem:[%s550 + $0xa9] sm:$0xff]
    %v1117 = vld [vmem:[%s550 + $0xb1] sm:$0xff]
    %v1118 = vld [vmem:[%s550 + $0xc1] sm:$0xff]
    %v1119 = vld [vmem:[%s550 + $0xc9] sm:$0xff]
    %v1120 = vld [vmem:[%s550 + $0xd9] sm:$0xff]
    %v1121 = vld [vmem:[%s550 + $0xe1] sm:$0xff]
    %v1122 = vld [vmem:[%s550 + $0xf1] sm:$0xff]
    %v1123 = vld [vmem:[%s550 + $0xf9] sm:$0xff]
    %v1124 = vld [vmem:[%s550 + $0x109] sm:$0xff]
    %v1125 = vld [vmem:[%s550 + $0x111] sm:$0xff]
    %v1126 = vld [vmem:[%s550 + $0x121] sm:$0xff]
    %v1127 = vld [vmem:[%s550 + $0x129] sm:$0xff]
    %v1128 = vld [vmem:[%s550 + $0x139] sm:$0xff]
    %v1129 = vld [vmem:[%s550 + $0x141] sm:$0xff]
    %v1130 = vld [vmem:[%s550 + $0x151] sm:$0xff]
    %v1131 = vld [vmem:[%s550 + $0x159] sm:$0xff]
    %v1132 = vld [vmem:[%s550 + $0x169] sm:$0xff]
    %v1133 = vld [vmem:[%s550 + $0x171] sm:$0xff]
    %v1134 = vld [vmem:[%s550 + $0x1b1] sm:$0xff]
    %v1135 = vld [vmem:[%s550 + $0x1b9] sm:$0xff]
    %v1136 = vld [vmem:[%s550 + $0x1c9] sm:$0xff]
    %v1137 = vld [vmem:[%s550 + $0x1d1] sm:$0xff]
    %v1138 = vld [vmem:[%s550 + $0x1e1] sm:$0xff]
    %v1139 = vld [vmem:[%s550 + $0x1e9] sm:$0xff]
    %v1140 = vld [vmem:[%s550 + $0x1f9] sm:$0xff]
    %v1141 = vld [vmem:[%s550 + $0x201] sm:$0xff]
    %v1142 = vld [vmem:[%s550 + $0x211] sm:$0xff]
    %v1143 = vld [vmem:[%s550 + $0x219] sm:$0xff]
    %v1144 = vld [vmem:[%s550 + $0x229] sm:$0xff]
    %v1145 = vld [vmem:[%s550 + $0x231] sm:$0xff]
    %v1146 = vld [vmem:[%s550 + $0x241] sm:$0xff]
    %v1147 = vld [vmem:[%s550 + $0x249] sm:$0xff]
    %v1148 = vld [vmem:[%s550 + $0x259] sm:$0xff]
    %v1149 = vld [vmem:[%s550 + $0x261] sm:$0xff]
    %v1150 = vld [vmem:[%s550 + $0x271] sm:$0xff]
    %v1151 = vld [vmem:[%s550 + $0x279] sm:$0xff]
    %v1152 = vld [vmem:[%s550 + $0x289] sm:$0xff]
    %v1153 = vld [vmem:[%s550 + $0x291] sm:$0xff]
    %v1154 = vld [vmem:[%s550 + $0x2a1] sm:$0xff]
    %v1155 = vld [vmem:[%s550 + $0x2a9] sm:$0xff]
    %v1156 = vld [vmem:[%s550 + $0x2b9] sm:$0xff]
    %v1157 = vld [vmem:[%s550 + $0x2c1] sm:$0xff]
    %v1158 = vld [vmem:[%s550 + $0x2d1] sm:$0xff]
    %v1159 = vld [vmem:[%s550 + $0x2d9] sm:$0xff]
    %v1160 = vld [vmem:[%s550 + $0x2e9] sm:$0xff]
    %v1161 = vld [vmem:[%s550 + $0x2f1] sm:$0xff]
    %v1162 = vld [vmem:[%s550 + $0x301] sm:$0xff]
    %v1163 = vld [vmem:[%s550 + $0x309] sm:$0xff]
    %v1164 = vld [vmem:[%s550 + $0x319] sm:$0xff]
    %v1165 = vld [vmem:[%s550 + $0x321] sm:$0xff]
    %v1166 = vld [vmem:[%s550 + $0x2] sm:$0xff]
    %v1167 = vld [vmem:[%s550 + $0xa] sm:$0xff]
    %v1168 = vld [vmem:[%s550 + $0x1a] sm:$0xff]
    %v1169 = vld [vmem:[%s550 + $0x22] sm:$0xff]
    %v1170 = vld [vmem:[%s550 + $0x32] sm:$0xff]
    %v1171 = vld [vmem:[%s550 + $0x3a] sm:$0xff]
    %v1172 = vld [vmem:[%s550 + $0x4a] sm:$0xff]
    %v1173 = vld [vmem:[%s550 + $0x52] sm:$0xff]
    %v1174 = vld [vmem:[%s550 + $0x62] sm:$0xff]
    %v1175 = vld [vmem:[%s550 + $0x6a] sm:$0xff]
    %v1176 = vld [vmem:[%s550 + $0x7a] sm:$0xff]
    %v1177 = vld [vmem:[%s550 + $0x82] sm:$0xff]
    %v1178 = vld [vmem:[%s550 + $0x92] sm:$0xff]
    %v1179 = vld [vmem:[%s550 + $0x9a] sm:$0xff]
    %v1180 = vld [vmem:[%s550 + $0xaa] sm:$0xff]
    %v1181 = vld [vmem:[%s550 + $0xb2] sm:$0xff]
    %v1182 = vld [vmem:[%s550 + $0xc2] sm:$0xff]
    %v1183 = vld [vmem:[%s550 + $0xca] sm:$0xff]
    %v1184 = vld [vmem:[%s550 + $0xda] sm:$0xff]
    %v1185 = vld [vmem:[%s550 + $0xe2] sm:$0xff]
    %v1186 = vld [vmem:[%s550 + $0xf2] sm:$0xff]
    %v1187 = vld [vmem:[%s550 + $0xfa] sm:$0xff]
    %v1188 = vld [vmem:[%s550 + $0x10a] sm:$0xff]
    %v1189 = vld [vmem:[%s550 + $0x112] sm:$0xff]
    %v1190 = vld [vmem:[%s550 + $0x122] sm:$0xff]
    %v1191 = vld [vmem:[%s550 + $0x12a] sm:$0xff]
    %v1192 = vld [vmem:[%s550 + $0x13a] sm:$0xff]
    %v1193 = vld [vmem:[%s550 + $0x142] sm:$0xff]
    %v1194 = vld [vmem:[%s550 + $0x152] sm:$0xff]
    %v1195 = vld [vmem:[%s550 + $0x15a] sm:$0xff]
    %v1196 = vld [vmem:[%s550 + $0x16a] sm:$0xff]
    %v1197 = vld [vmem:[%s550 + $0x172] sm:$0xff]
    %v1198 = vld [vmem:[%s550 + $0x1b2] sm:$0xff]
    %v1199 = vld [vmem:[%s550 + $0x1ba] sm:$0xff]
    %v1200 = vld [vmem:[%s550 + $0x1ca] sm:$0xff]
    %v1201 = vld [vmem:[%s550 + $0x1d2] sm:$0xff]
    %v1202 = vld [vmem:[%s550 + $0x1e2] sm:$0xff]
    %v1203 = vld [vmem:[%s550 + $0x1ea] sm:$0xff]
    %v1204 = vld [vmem:[%s550 + $0x1fa] sm:$0xff]
    %v1205 = vld [vmem:[%s550 + $0x202] sm:$0xff]
    %v1206 = vld [vmem:[%s550 + $0x212] sm:$0xff]
    %v1207 = vld [vmem:[%s550 + $0x21a] sm:$0xff]
    %v1208 = vld [vmem:[%s550 + $0x22a] sm:$0xff]
    %v1209 = vld [vmem:[%s550 + $0x232] sm:$0xff]
    %v1210 = vld [vmem:[%s550 + $0x242] sm:$0xff]
    %v1211 = vld [vmem:[%s550 + $0x24a] sm:$0xff]
    %v1212 = vld [vmem:[%s550 + $0x25a] sm:$0xff]
    %v1213 = vld [vmem:[%s550 + $0x262] sm:$0xff]
    %v1214 = vld [vmem:[%s550 + $0x272] sm:$0xff]
    %v1215 = vld [vmem:[%s550 + $0x27a] sm:$0xff]
    %v1216 = vld [vmem:[%s550 + $0x28a] sm:$0xff]
    %v1217 = vld [vmem:[%s550 + $0x292] sm:$0xff]
    %v1218 = vld [vmem:[%s550 + $0x2a2] sm:$0xff]
    %v1219 = vld [vmem:[%s550 + $0x2aa] sm:$0xff]
    %v1220 = vld [vmem:[%s550 + $0x2ba] sm:$0xff]
    %v1221 = vld [vmem:[%s550 + $0x2c2] sm:$0xff]
    %v1222 = vld [vmem:[%s550 + $0x2d2] sm:$0xff]
    %v1223 = vld [vmem:[%s550 + $0x2da] sm:$0xff]
    %v1224 = vld [vmem:[%s550 + $0x2ea] sm:$0xff]
    %v1225 = vld [vmem:[%s550 + $0x2f2] sm:$0xff]
    %v1226 = vld [vmem:[%s550 + $0x302] sm:$0xff]
    %v1227 = vld [vmem:[%s550 + $0x30a] sm:$0xff]
    %v1228 = vld [vmem:[%s550 + $0x31a] sm:$0xff]
    %v1229 = vld [vmem:[%s550 + $0x322] sm:$0xff]
    %s1230 = scalar_lea.vmem [#allocation2], 48
    %v1231 = vld [vmem:[%s1230] sm:$0xff]
    %v1232 = vld [vmem:[%s1230 + $0x8] sm:$0xff]
    %v1233 = vld [vmem:[%s1230 + $0x18] sm:$0xff]
    %v1234 = vld [vmem:[%s1230 + $0x20] sm:$0xff]
    %v1235 = vld [vmem:[%s1230 + $0x30] sm:$0xff]
    %v1236 = vld [vmem:[%s1230 + $0x38] sm:$0xff]
    %v1237 = vld [vmem:[%s1230 + $0x48] sm:$0xff]
    %v1238 = vld [vmem:[%s1230 + $0x50] sm:$0xff]
    %v1239 = vld [vmem:[%s1230 + $0x60] sm:$0xff]
    %v1240 = vld [vmem:[%s1230 + $0x68] sm:$0xff]
    %v1241 = vld [vmem:[%s1230 + $0x78] sm:$0xff]
    %v1242 = vld [vmem:[%s1230 + $0x80] sm:$0xff]
    %v1243 = vld [vmem:[%s1230 + $0x90] sm:$0xff]
    %v1244 = vld [vmem:[%s1230 + $0x98] sm:$0xff]
    %v1245 = vld [vmem:[%s1230 + $0xa8] sm:$0xff]
    %v1246 = vld [vmem:[%s1230 + $0xb0] sm:$0xff]
    %v1247 = vld [vmem:[%s1230 + $0xc0] sm:$0xff]
    %v1248 = vld [vmem:[%s1230 + $0xc8] sm:$0xff]
    %v1249 = vld [vmem:[%s1230 + $0xd8] sm:$0xff]
    %v1250 = vld [vmem:[%s1230 + $0xe0] sm:$0xff]
    %v1251 = vld [vmem:[%s1230 + $0xf0] sm:$0xff]
    %v1252 = vld [vmem:[%s1230 + $0xf8] sm:$0xff]
    %v1253 = vld [vmem:[%s1230 + $0x108] sm:$0xff]
    %v1254 = vld [vmem:[%s1230 + $0x110] sm:$0xff]
    %v1255 = vld [vmem:[%s1230 + $0x120] sm:$0xff]
    %v1256 = vld [vmem:[%s1230 + $0x128] sm:$0xff]
    %v1257 = vld [vmem:[%s1230 + $0x138] sm:$0xff]
    %v1258 = vld [vmem:[%s1230 + $0x140] sm:$0xff]
    %v1259 = vld [vmem:[%s1230 + $0x150] sm:$0xff]
    %v1260 = vld [vmem:[%s1230 + $0x158] sm:$0xff]
    %v1261 = vld [vmem:[%s1230 + $0x168] sm:$0xff]
    %v1262 = vld [vmem:[%s1230 + $0x170] sm:$0xff]
    %v1263 = vld [vmem:[%s1230 + $0x1b0] sm:$0xff]
    %v1264 = vld [vmem:[%s1230 + $0x1b8] sm:$0xff]
    %v1265 = vld [vmem:[%s1230 + $0x1c8] sm:$0xff]
    %v1266 = vld [vmem:[%s1230 + $0x1d0] sm:$0xff]
    %v1267 = vld [vmem:[%s1230 + $0x1e0] sm:$0xff]
    %v1268 = vld [vmem:[%s1230 + $0x1e8] sm:$0xff]
    %v1269 = vld [vmem:[%s1230 + $0x1f8] sm:$0xff]
    %v1270 = vld [vmem:[%s1230 + $0x200] sm:$0xff]
    %v1271 = vld [vmem:[%s1230 + $0x210] sm:$0xff]
    %v1272 = vld [vmem:[%s1230 + $0x218] sm:$0xff]
    %v1273 = vld [vmem:[%s1230 + $0x228] sm:$0xff]
    %v1274 = vld [vmem:[%s1230 + $0x230] sm:$0xff]
    %v1275 = vld [vmem:[%s1230 + $0x240] sm:$0xff]
    %v1276 = vld [vmem:[%s1230 + $0x248] sm:$0xff]
    %v1277 = vld [vmem:[%s1230 + $0x258] sm:$0xff]
    %v1278 = vld [vmem:[%s1230 + $0x260] sm:$0xff]
    %v1279 = vld [vmem:[%s1230 + $0x270] sm:$0xff]
    %v1280 = vld [vmem:[%s1230 + $0x278] sm:$0xff]
    %v1281 = vld [vmem:[%s1230 + $0x288] sm:$0xff]
    %v1282 = vld [vmem:[%s1230 + $0x290] sm:$0xff]
    %v1283 = vld [vmem:[%s1230 + $0x2a0] sm:$0xff]
    %v1284 = vld [vmem:[%s1230 + $0x2a8] sm:$0xff]
    %v1285 = vld [vmem:[%s1230 + $0x2b8] sm:$0xff]
    %v1286 = vld [vmem:[%s1230 + $0x2c0] sm:$0xff]
    %v1287 = vld [vmem:[%s1230 + $0x2d0] sm:$0xff]
    %v1288 = vld [vmem:[%s1230 + $0x2d8] sm:$0xff]
    %v1289 = vld [vmem:[%s1230 + $0x2e8] sm:$0xff]
    %v1290 = vld [vmem:[%s1230 + $0x2f0] sm:$0xff]
    %v1291 = vld [vmem:[%s1230 + $0x300] sm:$0xff]
    %v1292 = vld [vmem:[%s1230 + $0x308] sm:$0xff]
    %v1293 = vld [vmem:[%s1230 + $0x318] sm:$0xff]
    %v1294 = vld [vmem:[%s1230 + $0x320] sm:$0xff]
    %v1295 = vld [vmem:[%s1230 + $0x1] sm:$0xff]
    %v1296 = vld [vmem:[%s1230 + $0x9] sm:$0xff]
    %v1297 = vld [vmem:[%s1230 + $0x19] sm:$0xff]
    %v1298 = vld [vmem:[%s1230 + $0x21] sm:$0xff]
    %v1299 = vld [vmem:[%s1230 + $0x31] sm:$0xff]
    %v1300 = vld [vmem:[%s1230 + $0x39] sm:$0xff]
    %v1301 = vld [vmem:[%s1230 + $0x49] sm:$0xff]
    %v1302 = vld [vmem:[%s1230 + $0x51] sm:$0xff]
    %v1303 = vld [vmem:[%s1230 + $0x61] sm:$0xff]
    %v1304 = vld [vmem:[%s1230 + $0x69] sm:$0xff]
    %v1305 = vld [vmem:[%s1230 + $0x79] sm:$0xff]
    %v1306 = vld [vmem:[%s1230 + $0x81] sm:$0xff]
    %v1307 = vld [vmem:[%s1230 + $0x91] sm:$0xff]
    %v1308 = vld [vmem:[%s1230 + $0x99] sm:$0xff]
    %v1309 = vld [vmem:[%s1230 + $0xa9] sm:$0xff]
    %v1310 = vld [vmem:[%s1230 + $0xb1] sm:$0xff]
    %v1311 = vld [vmem:[%s1230 + $0xc1] sm:$0xff]
    %v1312 = vld [vmem:[%s1230 + $0xc9] sm:$0xff]
    %v1313 = vld [vmem:[%s1230 + $0xd9] sm:$0xff]
    %v1314 = vld [vmem:[%s1230 + $0xe1] sm:$0xff]
    %v1315 = vld [vmem:[%s1230 + $0xf1] sm:$0xff]
    %v1316 = vld [vmem:[%s1230 + $0xf9] sm:$0xff]
    %v1317 = vld [vmem:[%s1230 + $0x109] sm:$0xff]
    %v1318 = vld [vmem:[%s1230 + $0x111] sm:$0xff]
    %v1319 = vld [vmem:[%s1230 + $0x121] sm:$0xff]
    %v1320 = vld [vmem:[%s1230 + $0x129] sm:$0xff]
    %v1321 = vld [vmem:[%s1230 + $0x139] sm:$0xff]
    %v1322 = vld [vmem:[%s1230 + $0x141] sm:$0xff]
    %v1323 = vld [vmem:[%s1230 + $0x151] sm:$0xff]
    %v1324 = vld [vmem:[%s1230 + $0x159] sm:$0xff]
    %v1325 = vld [vmem:[%s1230 + $0x169] sm:$0xff]
    %v1326 = vld [vmem:[%s1230 + $0x171] sm:$0xff]
    %v1327 = vld [vmem:[%s1230 + $0x1b1] sm:$0xff]
    %v1328 = vld [vmem:[%s1230 + $0x1b9] sm:$0xff]
    %v1329 = vld [vmem:[%s1230 + $0x1c9] sm:$0xff]
    %v1330 = vld [vmem:[%s1230 + $0x1d1] sm:$0xff]
    %v1331 = vld [vmem:[%s1230 + $0x1e1] sm:$0xff]
    %v1332 = vld [vmem:[%s1230 + $0x1e9] sm:$0xff]
    %v1333 = vld [vmem:[%s1230 + $0x1f9] sm:$0xff]
    %v1334 = vld [vmem:[%s1230 + $0x201] sm:$0xff]
    %v1335 = vld [vmem:[%s1230 + $0x211] sm:$0xff]
    %v1336 = vld [vmem:[%s1230 + $0x219] sm:$0xff]
    %v1337 = vld [vmem:[%s1230 + $0x229] sm:$0xff]
    %v1338 = vld [vmem:[%s1230 + $0x231] sm:$0xff]
    %v1339 = vld [vmem:[%s1230 + $0x241] sm:$0xff]
    %v1340 = vld [vmem:[%s1230 + $0x249] sm:$0xff]
    %v1341 = vld [vmem:[%s1230 + $0x259] sm:$0xff]
    %v1342 = vld [vmem:[%s1230 + $0x261] sm:$0xff]
    %v1343 = vld [vmem:[%s1230 + $0x271] sm:$0xff]
    %v1344 = vld [vmem:[%s1230 + $0x279] sm:$0xff]
    %v1345 = vld [vmem:[%s1230 + $0x289] sm:$0xff]
    %v1346 = vld [vmem:[%s1230 + $0x291] sm:$0xff]
    %v1347 = vld [vmem:[%s1230 + $0x2a1] sm:$0xff]
    %v1348 = vld [vmem:[%s1230 + $0x2a9] sm:$0xff]
    %v1349 = vld [vmem:[%s1230 + $0x2b9] sm:$0xff]
    %v1350 = vld [vmem:[%s1230 + $0x2c1] sm:$0xff]
    %v1351 = vld [vmem:[%s1230 + $0x2d1] sm:$0xff]
    %v1352 = vld [vmem:[%s1230 + $0x2d9] sm:$0xff]
    %v1353 = vld [vmem:[%s1230 + $0x2e9] sm:$0xff]
    %v1354 = vld [vmem:[%s1230 + $0x2f1] sm:$0xff]
    %v1355 = vld [vmem:[%s1230 + $0x301] sm:$0xff]
    %v1356 = vld [vmem:[%s1230 + $0x309] sm:$0xff]
    %v1357 = vld [vmem:[%s1230 + $0x319] sm:$0xff]
    %v1358 = vld [vmem:[%s1230 + $0x321] sm:$0xff]
    %v1359 = vld [vmem:[%s1230 + $0x2] sm:$0xff]
    %v1360 = vld [vmem:[%s1230 + $0xa] sm:$0xff]
    %v1361 = vld [vmem:[%s1230 + $0x1a] sm:$0xff]
    %v1362 = vld [vmem:[%s1230 + $0x22] sm:$0xff]
    %v1363 = vld [vmem:[%s1230 + $0x32] sm:$0xff]
    %v1364 = vld [vmem:[%s1230 + $0x3a] sm:$0xff]
    %v1365 = vld [vmem:[%s1230 + $0x4a] sm:$0xff]
    %v1366 = vld [vmem:[%s1230 + $0x52] sm:$0xff]
    %v1367 = vld [vmem:[%s1230 + $0x62] sm:$0xff]
    %v1368 = vld [vmem:[%s1230 + $0x6a] sm:$0xff]
    %v1369 = vld [vmem:[%s1230 + $0x7a] sm:$0xff]
    %v1370 = vld [vmem:[%s1230 + $0x82] sm:$0xff]
    %v1371 = vld [vmem:[%s1230 + $0x92] sm:$0xff]
    %v1372 = vld [vmem:[%s1230 + $0x9a] sm:$0xff]
    %v1373 = vld [vmem:[%s1230 + $0xaa] sm:$0xff]
    %v1374 = vld [vmem:[%s1230 + $0xb2] sm:$0xff]
    %v1375 = vld [vmem:[%s1230 + $0xc2] sm:$0xff]
    %v1376 = vld [vmem:[%s1230 + $0xca] sm:$0xff]
    %v1377 = vld [vmem:[%s1230 + $0xda] sm:$0xff]
    %v1378 = vld [vmem:[%s1230 + $0xe2] sm:$0xff]
    %v1379 = vld [vmem:[%s1230 + $0xf2] sm:$0xff]
    %v1380 = vld [vmem:[%s1230 + $0xfa] sm:$0xff]
    %v1381 = vld [vmem:[%s1230 + $0x10a] sm:$0xff]
    %v1382 = vld [vmem:[%s1230 + $0x112] sm:$0xff]
    %v1383 = vld [vmem:[%s1230 + $0x122] sm:$0xff]
    %v1384 = vld [vmem:[%s1230 + $0x12a] sm:$0xff]
    %v1385 = vld [vmem:[%s1230 + $0x13a] sm:$0xff]
    %v1386 = vld [vmem:[%s1230 + $0x142] sm:$0xff]
    %v1387 = vld [vmem:[%s1230 + $0x152] sm:$0xff]
    %v1388 = vld [vmem:[%s1230 + $0x15a] sm:$0xff]
    %v1389 = vld [vmem:[%s1230 + $0x16a] sm:$0xff]
    %v1390 = vld [vmem:[%s1230 + $0x172] sm:$0xff]
    %v1391 = vld [vmem:[%s1230 + $0x1b2] sm:$0xff]
    %v1392 = vld [vmem:[%s1230 + $0x1ba] sm:$0xff]
    %v1393 = vld [vmem:[%s1230 + $0x1ca] sm:$0xff]
    %v1394 = vld [vmem:[%s1230 + $0x1d2] sm:$0xff]
    %v1395 = vld [vmem:[%s1230 + $0x1e2] sm:$0xff]
    %v1396 = vld [vmem:[%s1230 + $0x1ea] sm:$0xff]
    %v1397 = vld [vmem:[%s1230 + $0x1fa] sm:$0xff]
    %v1398 = vld [vmem:[%s1230 + $0x202] sm:$0xff]
    %v1399 = vld [vmem:[%s1230 + $0x212] sm:$0xff]
    %v1400 = vld [vmem:[%s1230 + $0x21a] sm:$0xff]
    %v1401 = vld [vmem:[%s1230 + $0x22a] sm:$0xff]
    %v1402 = vld [vmem:[%s1230 + $0x232] sm:$0xff]
    %v1403 = vld [vmem:[%s1230 + $0x242] sm:$0xff]
    %v1404 = vld [vmem:[%s1230 + $0x24a] sm:$0xff]
    %v1405 = vld [vmem:[%s1230 + $0x25a] sm:$0xff]
    %v1406 = vld [vmem:[%s1230 + $0x262] sm:$0xff]
    %v1407 = vld [vmem:[%s1230 + $0x272] sm:$0xff]
    %v1408 = vld [vmem:[%s1230 + $0x27a] sm:$0xff]
    %v1409 = vld [vmem:[%s1230 + $0x28a] sm:$0xff]
    %v1410 = vld [vmem:[%s1230 + $0x292] sm:$0xff]
    %v1411 = vld [vmem:[%s1230 + $0x2a2] sm:$0xff]
    %v1412 = vld [vmem:[%s1230 + $0x2aa] sm:$0xff]
    %v1413 = vld [vmem:[%s1230 + $0x2ba] sm:$0xff]
    %v1414 = vld [vmem:[%s1230 + $0x2c2] sm:$0xff]
    %v1415 = vld [vmem:[%s1230 + $0x2d2] sm:$0xff]
    %v1416 = vld [vmem:[%s1230 + $0x2da] sm:$0xff]
    %v1417 = vld [vmem:[%s1230 + $0x2ea] sm:$0xff]
    %v1418 = vld [vmem:[%s1230 + $0x2f2] sm:$0xff]
    %v1419 = vld [vmem:[%s1230 + $0x302] sm:$0xff]
    %v1420 = vld [vmem:[%s1230 + $0x30a] sm:$0xff]
    %v1421 = vld [vmem:[%s1230 + $0x31a] sm:$0xff]
    %v1422 = vld [vmem:[%s1230 + $0x322] sm:$0xff]
    %1487 = vrot.lane.b32.xlu0 %v910, 4
    %v1488 = vpop.permute.xlu0 %1487
    %1489 = vrot.lane.b32.xlu0 %v911, 4
    %v1490 = vpop.permute.xlu0 %1489
    %1491 = vrot.lane.b32.xlu0 %v912, 4
    %v1492 = vpop.permute.xlu0 %1491
    %1493 = vrot.lane.b32.xlu0 %v913, 4
    %v1494 = vpop.permute.xlu0 %1493
    %1495 = vrot.lane.b32.xlu0 %v914, 4
    %v1496 = vpop.permute.xlu0 %1495
    %1497 = vrot.lane.b32.xlu0 %v915, 4
    %v1498 = vpop.permute.xlu0 %1497
    %1499 = vrot.lane.b32.xlu0 %v916, 4
    %v1500 = vpop.permute.xlu0 %1499
    %1501 = vrot.lane.b32.xlu0 %v917, 4
    %v1502 = vpop.permute.xlu0 %1501
    %1503 = vrot.lane.b32.xlu0 %v918, 4
    %v1504 = vpop.permute.xlu0 %1503
    %1505 = vrot.lane.b32.xlu0 %v919, 4
    %v1506 = vpop.permute.xlu0 %1505
    %1507 = vrot.lane.b32.xlu0 %v920, 4
    %v1508 = vpop.permute.xlu0 %1507
    %1509 = vrot.lane.b32.xlu0 %v921, 4
    %v1510 = vpop.permute.xlu0 %1509
    %1511 = vrot.lane.b32.xlu0 %v922, 4
    %v1512 = vpop.permute.xlu0 %1511
    %1513 = vrot.lane.b32.xlu0 %v923, 4
    %v1514 = vpop.permute.xlu0 %1513
    %1515 = vrot.lane.b32.xlu0 %v924, 4
    %v1516 = vpop.permute.xlu0 %1515
    %1517 = vrot.lane.b32.xlu0 %v925, 4
    %v1518 = vpop.permute.xlu0 %1517
    %1519 = vrot.lane.b32.xlu0 %v926, 4
    %v1520 = vpop.permute.xlu0 %1519
    %1521 = vrot.lane.b32.xlu0 %v927, 4
    %v1522 = vpop.permute.xlu0 %1521
    %1523 = vrot.lane.b32.xlu0 %v928, 4
    %v1524 = vpop.permute.xlu0 %1523
    %1525 = vrot.lane.b32.xlu0 %v929, 4
    %v1526 = vpop.permute.xlu0 %1525
    %1527 = vrot.lane.b32.xlu0 %v930, 4
    %v1528 = vpop.permute.xlu0 %1527
    %1529 = vrot.lane.b32.xlu0 %v931, 4
    %v1530 = vpop.permute.xlu0 %1529
    %1531 = vrot.lane.b32.xlu0 %v932, 4
    %v1532 = vpop.permute.xlu0 %1531
    %1533 = vrot.lane.b32.xlu0 %v933, 4
    %v1534 = vpop.permute.xlu0 %1533
    %1535 = vrot.lane.b32.xlu0 %v934, 4
    %v1536 = vpop.permute.xlu0 %1535
    %1537 = vrot.lane.b32.xlu0 %v935, 4
    %v1538 = vpop.permute.xlu0 %1537
    %1539 = vrot.lane.b32.xlu0 %v936, 4
    %v1540 = vpop.permute.xlu0 %1539
    %1541 = vrot.lane.b32.xlu0 %v937, 4
    %v1542 = vpop.permute.xlu0 %1541
    %1543 = vrot.lane.b32.xlu0 %v938, 4
    %v1544 = vpop.permute.xlu0 %1543
    %1545 = vrot.lane.b32.xlu0 %v939, 4
    %v1546 = vpop.permute.xlu0 %1545
    %1547 = vrot.lane.b32.xlu0 %v940, 4
    %v1548 = vpop.permute.xlu0 %1547
    %1549 = vrot.lane.b32.xlu0 %v941, 4
    %v1550 = vpop.permute.xlu0 %1549
    %1551 = vrot.lane.b32.xlu0 %v942, 4
    %v1552 = vpop.permute.xlu0 %1551
    %1553 = vrot.lane.b32.xlu0 %v943, 4
    %v1554 = vpop.permute.xlu0 %1553
    %1555 = vrot.lane.b32.xlu0 %v944, 4
    %v1556 = vpop.permute.xlu0 %1555
    %1557 = vrot.lane.b32.xlu0 %v945, 4
    %v1558 = vpop.permute.xlu0 %1557
    %1559 = vrot.lane.b32.xlu0 %v946, 4
    %v1560 = vpop.permute.xlu0 %1559
    %1561 = vrot.lane.b32.xlu0 %v947, 4
    %v1562 = vpop.permute.xlu0 %1561
    %1563 = vrot.lane.b32.xlu0 %v948, 4
    %v1564 = vpop.permute.xlu0 %1563
    %1565 = vrot.lane.b32.xlu0 %v949, 4
    %v1566 = vpop.permute.xlu0 %1565
    %1567 = vrot.lane.b32.xlu0 %v950, 4
    %v1568 = vpop.permute.xlu0 %1567
    %1569 = vrot.lane.b32.xlu0 %v951, 4
    %v1570 = vpop.permute.xlu0 %1569
    %1571 = vrot.lane.b32.xlu0 %v952, 4
    %v1572 = vpop.permute.xlu0 %1571
    %1573 = vrot.lane.b32.xlu0 %v953, 4
    %v1574 = vpop.permute.xlu0 %1573
    %1575 = vrot.lane.b32.xlu0 %v954, 4
    %v1576 = vpop.permute.xlu0 %1575
    %1577 = vrot.lane.b32.xlu0 %v955, 4
    %v1578 = vpop.permute.xlu0 %1577
    %1579 = vrot.lane.b32.xlu0 %v956, 4
    %v1580 = vpop.permute.xlu0 %1579
    %1581 = vrot.lane.b32.xlu0 %v957, 4
    %v1582 = vpop.permute.xlu0 %1581
    %1583 = vrot.lane.b32.xlu0 %v958, 4
    %v1584 = vpop.permute.xlu0 %1583
    %1585 = vrot.lane.b32.xlu0 %v959, 4
    %v1586 = vpop.permute.xlu0 %1585
    %1587 = vrot.lane.b32.xlu0 %v960, 4
    %v1588 = vpop.permute.xlu0 %1587
    %1589 = vrot.lane.b32.xlu0 %v961, 4
    %v1590 = vpop.permute.xlu0 %1589
    %1591 = vrot.lane.b32.xlu0 %v962, 4
    %v1592 = vpop.permute.xlu0 %1591
    %1593 = vrot.lane.b32.xlu0 %v963, 4
    %v1594 = vpop.permute.xlu0 %1593
    %1595 = vrot.lane.b32.xlu0 %v964, 4
    %v1596 = vpop.permute.xlu0 %1595
    %1597 = vrot.lane.b32.xlu0 %v965, 4
    %v1598 = vpop.permute.xlu0 %1597
    %1599 = vrot.lane.b32.xlu0 %v966, 4
    %v1600 = vpop.permute.xlu0 %1599
    %1601 = vrot.lane.b32.xlu0 %v967, 4
    %v1602 = vpop.permute.xlu0 %1601
    %1603 = vrot.lane.b32.xlu0 %v968, 4
    %v1604 = vpop.permute.xlu0 %1603
    %1605 = vrot.lane.b32.xlu0 %v969, 4
    %v1606 = vpop.permute.xlu0 %1605
    %1607 = vrot.lane.b32.xlu0 %v970, 4
    %v1608 = vpop.permute.xlu0 %1607
    %1609 = vrot.lane.b32.xlu0 %v971, 4
    %v1610 = vpop.permute.xlu0 %1609
    %1611 = vrot.lane.b32.xlu0 %v972, 4
    %v1612 = vpop.permute.xlu0 %1611
    %1613 = vrot.lane.b32.xlu0 %v973, 4
    %v1614 = vpop.permute.xlu0 %1613
    %1743 = vrot.lane.b32.xlu0 %v974, 8
    %v1744 = vpop.permute.xlu0 %1743
    %1745 = vrot.lane.b32.xlu0 %v975, 8
    %v1746 = vpop.permute.xlu0 %1745
    %1747 = vrot.lane.b32.xlu0 %v976, 8
    %v1748 = vpop.permute.xlu0 %1747
    %1749 = vrot.lane.b32.xlu0 %v977, 8
    %v1750 = vpop.permute.xlu0 %1749
    %1751 = vrot.lane.b32.xlu0 %v978, 8
    %v1752 = vpop.permute.xlu0 %1751
    %1753 = vrot.lane.b32.xlu0 %v979, 8
    %v1754 = vpop.permute.xlu0 %1753
    %1755 = vrot.lane.b32.xlu0 %v980, 8
    %v1756 = vpop.permute.xlu0 %1755
    %1757 = vrot.lane.b32.xlu0 %v981, 8
    %v1758 = vpop.permute.xlu0 %1757
    %1759 = vrot.lane.b32.xlu0 %v982, 8
    %v1760 = vpop.permute.xlu0 %1759
    %1761 = vrot.lane.b32.xlu0 %v983, 8
    %v1762 = vpop.permute.xlu0 %1761
    %1763 = vrot.lane.b32.xlu0 %v984, 8
    %v1764 = vpop.permute.xlu0 %1763
    %1765 = vrot.lane.b32.xlu0 %v985, 8
    %v1766 = vpop.permute.xlu0 %1765
    %1767 = vrot.lane.b32.xlu0 %v986, 8
    %v1768 = vpop.permute.xlu0 %1767
    %1769 = vrot.lane.b32.xlu0 %v987, 8
    %v1770 = vpop.permute.xlu0 %1769
    %1771 = vrot.lane.b32.xlu0 %v988, 8
    %v1772 = vpop.permute.xlu0 %1771
    %1773 = vrot.lane.b32.xlu0 %v989, 8
    %v1774 = vpop.permute.xlu0 %1773
    %1775 = vrot.lane.b32.xlu0 %v990, 8
    %v1776 = vpop.permute.xlu0 %1775
    %1777 = vrot.lane.b32.xlu0 %v991, 8
    %v1778 = vpop.permute.xlu0 %1777
    %1779 = vrot.lane.b32.xlu0 %v992, 8
    %v1780 = vpop.permute.xlu0 %1779
    %1781 = vrot.lane.b32.xlu0 %v993, 8
    %v1782 = vpop.permute.xlu0 %1781
    %1783 = vrot.lane.b32.xlu0 %v994, 8
    %v1784 = vpop.permute.xlu0 %1783
    %1785 = vrot.lane.b32.xlu0 %v995, 8
    %v1786 = vpop.permute.xlu0 %1785
    %1787 = vrot.lane.b32.xlu0 %v996, 8
    %v1788 = vpop.permute.xlu0 %1787
    %1789 = vrot.lane.b32.xlu0 %v997, 8
    %v1790 = vpop.permute.xlu0 %1789
    %1791 = vrot.lane.b32.xlu0 %v998, 8
    %v1792 = vpop.permute.xlu0 %1791
    %1793 = vrot.lane.b32.xlu0 %v999, 8
    %v1794 = vpop.permute.xlu0 %1793
    %1795 = vrot.lane.b32.xlu0 %v1000, 8
    %v1796 = vpop.permute.xlu0 %1795
    %1797 = vrot.lane.b32.xlu0 %v1001, 8
    %v1798 = vpop.permute.xlu0 %1797
    %1799 = vrot.lane.b32.xlu0 %v1002, 8
    %v1800 = vpop.permute.xlu0 %1799
    %1801 = vrot.lane.b32.xlu0 %v1003, 8
    %v1802 = vpop.permute.xlu0 %1801
    %1803 = vrot.lane.b32.xlu0 %v1004, 8
    %v1804 = vpop.permute.xlu0 %1803
    %1805 = vrot.lane.b32.xlu0 %v1005, 8
    %v1806 = vpop.permute.xlu0 %1805
    %1807 = vrot.lane.b32.xlu0 %v1006, 8
    %v1808 = vpop.permute.xlu0 %1807
    %1809 = vrot.lane.b32.xlu0 %v1007, 8
    %v1810 = vpop.permute.xlu0 %1809
    %1811 = vrot.lane.b32.xlu0 %v1008, 8
    %v1812 = vpop.permute.xlu0 %1811
    %1813 = vrot.lane.b32.xlu0 %v1009, 8
    %v1814 = vpop.permute.xlu0 %1813
    %1815 = vrot.lane.b32.xlu0 %v1010, 8
    %v1816 = vpop.permute.xlu0 %1815
    %1817 = vrot.lane.b32.xlu0 %v1011, 8
    %v1818 = vpop.permute.xlu0 %1817
    %1819 = vrot.lane.b32.xlu0 %v1012, 8
    %v1820 = vpop.permute.xlu0 %1819
    %1821 = vrot.lane.b32.xlu0 %v1013, 8
    %v1822 = vpop.permute.xlu0 %1821
    %1823 = vrot.lane.b32.xlu0 %v1014, 8
    %v1824 = vpop.permute.xlu0 %1823
    %1825 = vrot.lane.b32.xlu0 %v1015, 8
    %v1826 = vpop.permute.xlu0 %1825
    %1827 = vrot.lane.b32.xlu0 %v1016, 8
    %v1828 = vpop.permute.xlu0 %1827
    %1829 = vrot.lane.b32.xlu0 %v1017, 8
    %v1830 = vpop.permute.xlu0 %1829
    %1831 = vrot.lane.b32.xlu0 %v1018, 8
    %v1832 = vpop.permute.xlu0 %1831
    %1833 = vrot.lane.b32.xlu0 %v1019, 8
    %v1834 = vpop.permute.xlu0 %1833
    %1835 = vrot.lane.b32.xlu0 %v1020, 8
    %v1836 = vpop.permute.xlu0 %1835
    %1837 = vrot.lane.b32.xlu0 %v1021, 8
    %v1838 = vpop.permute.xlu0 %1837
    %1839 = vrot.lane.b32.xlu0 %v1022, 8
    %v1840 = vpop.permute.xlu0 %1839
    %1841 = vrot.lane.b32.xlu0 %v1023, 8
    %v1842 = vpop.permute.xlu0 %1841
    %1843 = vrot.lane.b32.xlu0 %v1024, 8
    %v1844 = vpop.permute.xlu0 %1843
    %1845 = vrot.lane.b32.xlu0 %v1025, 8
    %v1846 = vpop.permute.xlu0 %1845
    %1847 = vrot.lane.b32.xlu0 %v1026, 8
    %v1848 = vpop.permute.xlu0 %1847
    %1849 = vrot.lane.b32.xlu0 %v1027, 8
    %v1850 = vpop.permute.xlu0 %1849
    %1851 = vrot.lane.b32.xlu0 %v1028, 8
    %v1852 = vpop.permute.xlu0 %1851
    %1853 = vrot.lane.b32.xlu0 %v1029, 8
    %v1854 = vpop.permute.xlu0 %1853
    %1855 = vrot.lane.b32.xlu0 %v1030, 8
    %v1856 = vpop.permute.xlu0 %1855
    %1857 = vrot.lane.b32.xlu0 %v1031, 8
    %v1858 = vpop.permute.xlu0 %1857
    %1859 = vrot.lane.b32.xlu0 %v1032, 8
    %v1860 = vpop.permute.xlu0 %1859
    %1861 = vrot.lane.b32.xlu0 %v1033, 8
    %v1862 = vpop.permute.xlu0 %1861
    %1863 = vrot.lane.b32.xlu0 %v1034, 8
    %v1864 = vpop.permute.xlu0 %1863
    %1865 = vrot.lane.b32.xlu0 %v1035, 8
    %v1866 = vpop.permute.xlu0 %1865
    %1867 = vrot.lane.b32.xlu0 %v1036, 8
    %v1868 = vpop.permute.xlu0 %1867
    %1869 = vrot.lane.b32.xlu0 %v1037, 8
    %v1870 = vpop.permute.xlu0 %1869
    %1999 = vrot.lane.b32.xlu0 %v1038, 12
    %v2000 = vpop.permute.xlu0 %1999
    %2001 = vrot.lane.b32.xlu0 %v1039, 12
    %v2002 = vpop.permute.xlu0 %2001
    %2003 = vrot.lane.b32.xlu0 %v1040, 12
    %v2004 = vpop.permute.xlu0 %2003
    %2005 = vrot.lane.b32.xlu0 %v1041, 12
    %v2006 = vpop.permute.xlu0 %2005
    %2007 = vrot.lane.b32.xlu0 %v1042, 12
    %v2008 = vpop.permute.xlu0 %2007
    %2009 = vrot.lane.b32.xlu0 %v1043, 12
    %v2010 = vpop.permute.xlu0 %2009
    %2011 = vrot.lane.b32.xlu0 %v1044, 12
    %v2012 = vpop.permute.xlu0 %2011
    %2013 = vrot.lane.b32.xlu0 %v1045, 12
    %v2014 = vpop.permute.xlu0 %2013
    %2015 = vrot.lane.b32.xlu0 %v1046, 12
    %v2016 = vpop.permute.xlu0 %2015
    %2017 = vrot.lane.b32.xlu0 %v1047, 12
    %v2018 = vpop.permute.xlu0 %2017
    %2019 = vrot.lane.b32.xlu0 %v1048, 12
    %v2020 = vpop.permute.xlu0 %2019
    %2021 = vrot.lane.b32.xlu0 %v1049, 12
    %v2022 = vpop.permute.xlu0 %2021
    %2023 = vrot.lane.b32.xlu0 %v1050, 12
    %v2024 = vpop.permute.xlu0 %2023
    %2025 = vrot.lane.b32.xlu0 %v1051, 12
    %v2026 = vpop.permute.xlu0 %2025
    %2027 = vrot.lane.b32.xlu0 %v1052, 12
    %v2028 = vpop.permute.xlu0 %2027
    %2029 = vrot.lane.b32.xlu0 %v1053, 12
    %v2030 = vpop.permute.xlu0 %2029
    %2031 = vrot.lane.b32.xlu0 %v1054, 12
    %v2032 = vpop.permute.xlu0 %2031
    %2033 = vrot.lane.b32.xlu0 %v1055, 12
    %v2034 = vpop.permute.xlu0 %2033
    %2035 = vrot.lane.b32.xlu0 %v1056, 12
    %v2036 = vpop.permute.xlu0 %2035
    %2037 = vrot.lane.b32.xlu0 %v1057, 12
    %v2038 = vpop.permute.xlu0 %2037
    %2039 = vrot.lane.b32.xlu0 %v1058, 12
    %v2040 = vpop.permute.xlu0 %2039
    %2041 = vrot.lane.b32.xlu0 %v1059, 12
    %v2042 = vpop.permute.xlu0 %2041
    %2043 = vrot.lane.b32.xlu0 %v1060, 12
    %v2044 = vpop.permute.xlu0 %2043
    %2045 = vrot.lane.b32.xlu0 %v1061, 12
    %v2046 = vpop.permute.xlu0 %2045
    %2047 = vrot.lane.b32.xlu0 %v1062, 12
    %v2048 = vpop.permute.xlu0 %2047
    %2049 = vrot.lane.b32.xlu0 %v1063, 12
    %v2050 = vpop.permute.xlu0 %2049
    %2051 = vrot.lane.b32.xlu0 %v1064, 12
    %v2052 = vpop.permute.xlu0 %2051
    %2053 = vrot.lane.b32.xlu0 %v1065, 12
    %v2054 = vpop.permute.xlu0 %2053
    %2055 = vrot.lane.b32.xlu0 %v1066, 12
    %v2056 = vpop.permute.xlu0 %2055
    %2057 = vrot.lane.b32.xlu0 %v1067, 12
    %v2058 = vpop.permute.xlu0 %2057
    %2059 = vrot.lane.b32.xlu0 %v1068, 12
    %v2060 = vpop.permute.xlu0 %2059
    %2061 = vrot.lane.b32.xlu0 %v1069, 12
    %v2062 = vpop.permute.xlu0 %2061
    %2063 = vrot.lane.b32.xlu0 %v1070, 12
    %v2064 = vpop.permute.xlu0 %2063
    %2065 = vrot.lane.b32.xlu0 %v1071, 12
    %v2066 = vpop.permute.xlu0 %2065
    %2067 = vrot.lane.b32.xlu0 %v1072, 12
    %v2068 = vpop.permute.xlu0 %2067
    %2069 = vrot.lane.b32.xlu0 %v1073, 12
    %v2070 = vpop.permute.xlu0 %2069
    %2071 = vrot.lane.b32.xlu0 %v1074, 12
    %v2072 = vpop.permute.xlu0 %2071
    %2073 = vrot.lane.b32.xlu0 %v1075, 12
    %v2074 = vpop.permute.xlu0 %2073
    %2075 = vrot.lane.b32.xlu0 %v1076, 12
    %v2076 = vpop.permute.xlu0 %2075
    %2077 = vrot.lane.b32.xlu0 %v1077, 12
    %v2078 = vpop.permute.xlu0 %2077
    %2079 = vrot.lane.b32.xlu0 %v1078, 12
    %v2080 = vpop.permute.xlu0 %2079
    %2081 = vrot.lane.b32.xlu0 %v1079, 12
    %v2082 = vpop.permute.xlu0 %2081
    %2083 = vrot.lane.b32.xlu0 %v1080, 12
    %v2084 = vpop.permute.xlu0 %2083
    %2085 = vrot.lane.b32.xlu0 %v1081, 12
    %v2086 = vpop.permute.xlu0 %2085
    %2087 = vrot.lane.b32.xlu0 %v1082, 12
    %v2088 = vpop.permute.xlu0 %2087
    %2089 = vrot.lane.b32.xlu0 %v1083, 12
    %v2090 = vpop.permute.xlu0 %2089
    %2091 = vrot.lane.b32.xlu0 %v1084, 12
    %v2092 = vpop.permute.xlu0 %2091
    %2093 = vrot.lane.b32.xlu0 %v1085, 12
    %v2094 = vpop.permute.xlu0 %2093
    %2095 = vrot.lane.b32.xlu0 %v1086, 12
    %v2096 = vpop.permute.xlu0 %2095
    %2097 = vrot.lane.b32.xlu0 %v1087, 12
    %v2098 = vpop.permute.xlu0 %2097
    %2099 = vrot.lane.b32.xlu0 %v1088, 12
    %v2100 = vpop.permute.xlu0 %2099
    %2101 = vrot.lane.b32.xlu0 %v1089, 12
    %v2102 = vpop.permute.xlu0 %2101
    %2103 = vrot.lane.b32.xlu0 %v1090, 12
    %v2104 = vpop.permute.xlu0 %2103
    %2105 = vrot.lane.b32.xlu0 %v1091, 12
    %v2106 = vpop.permute.xlu0 %2105
    %2107 = vrot.lane.b32.xlu0 %v1092, 12
    %v2108 = vpop.permute.xlu0 %2107
    %2109 = vrot.lane.b32.xlu0 %v1093, 12
    %v2110 = vpop.permute.xlu0 %2109
    %2111 = vrot.lane.b32.xlu0 %v1094, 12
    %v2112 = vpop.permute.xlu0 %2111
    %2113 = vrot.lane.b32.xlu0 %v1095, 12
    %v2114 = vpop.permute.xlu0 %2113
    %2115 = vrot.lane.b32.xlu0 %v1096, 12
    %v2116 = vpop.permute.xlu0 %2115
    %2117 = vrot.lane.b32.xlu0 %v1097, 12
    %v2118 = vpop.permute.xlu0 %2117
    %2119 = vrot.lane.b32.xlu0 %v1098, 12
    %v2120 = vpop.permute.xlu0 %2119
    %2121 = vrot.lane.b32.xlu0 %v1099, 12
    %v2122 = vpop.permute.xlu0 %2121
    %2123 = vrot.lane.b32.xlu0 %v1100, 12
    %v2124 = vpop.permute.xlu0 %2123
    %2125 = vrot.lane.b32.xlu0 %v1101, 12
    %v2126 = vpop.permute.xlu0 %2125
    %2255 = vrot.lane.b32.xlu0 %v1102, 16
    %v2256 = vpop.permute.xlu0 %2255
    %2257 = vrot.lane.b32.xlu0 %v1103, 16
    %v2258 = vpop.permute.xlu0 %2257
    %2259 = vrot.lane.b32.xlu0 %v1104, 16
    %v2260 = vpop.permute.xlu0 %2259
    %2261 = vrot.lane.b32.xlu0 %v1105, 16
    %v2262 = vpop.permute.xlu0 %2261
    %2263 = vrot.lane.b32.xlu0 %v1106, 16
    %v2264 = vpop.permute.xlu0 %2263
    %2265 = vrot.lane.b32.xlu0 %v1107, 16
    %v2266 = vpop.permute.xlu0 %2265
    %2267 = vrot.lane.b32.xlu0 %v1108, 16
    %v2268 = vpop.permute.xlu0 %2267
    %2269 = vrot.lane.b32.xlu0 %v1109, 16
    %v2270 = vpop.permute.xlu0 %2269
    %2271 = vrot.lane.b32.xlu0 %v1110, 16
    %v2272 = vpop.permute.xlu0 %2271
    %2273 = vrot.lane.b32.xlu0 %v1111, 16
    %v2274 = vpop.permute.xlu0 %2273
    %2275 = vrot.lane.b32.xlu0 %v1112, 16
    %v2276 = vpop.permute.xlu0 %2275
    %2277 = vrot.lane.b32.xlu0 %v1113, 16
    %v2278 = vpop.permute.xlu0 %2277
    %2279 = vrot.lane.b32.xlu0 %v1114, 16
    %v2280 = vpop.permute.xlu0 %2279
    %2281 = vrot.lane.b32.xlu0 %v1115, 16
    %v2282 = vpop.permute.xlu0 %2281
    %2283 = vrot.lane.b32.xlu0 %v1116, 16
    %v2284 = vpop.permute.xlu0 %2283
    %2285 = vrot.lane.b32.xlu0 %v1117, 16
    %v2286 = vpop.permute.xlu0 %2285
    %2287 = vrot.lane.b32.xlu0 %v1118, 16
    %v2288 = vpop.permute.xlu0 %2287
    %2289 = vrot.lane.b32.xlu0 %v1119, 16
    %v2290 = vpop.permute.xlu0 %2289
    %2291 = vrot.lane.b32.xlu0 %v1120, 16
    %v2292 = vpop.permute.xlu0 %2291
    %2293 = vrot.lane.b32.xlu0 %v1121, 16
    %v2294 = vpop.permute.xlu0 %2293
    %2295 = vrot.lane.b32.xlu0 %v1122, 16
    %v2296 = vpop.permute.xlu0 %2295
    %2297 = vrot.lane.b32.xlu0 %v1123, 16
    %v2298 = vpop.permute.xlu0 %2297
    %2299 = vrot.lane.b32.xlu0 %v1124, 16
    %v2300 = vpop.permute.xlu0 %2299
    %2301 = vrot.lane.b32.xlu0 %v1125, 16
    %v2302 = vpop.permute.xlu0 %2301
    %2303 = vrot.lane.b32.xlu0 %v1126, 16
    %v2304 = vpop.permute.xlu0 %2303
    %2305 = vrot.lane.b32.xlu0 %v1127, 16
    %v2306 = vpop.permute.xlu0 %2305
    %2307 = vrot.lane.b32.xlu0 %v1128, 16
    %v2308 = vpop.permute.xlu0 %2307
    %2309 = vrot.lane.b32.xlu0 %v1129, 16
    %v2310 = vpop.permute.xlu0 %2309
    %2311 = vrot.lane.b32.xlu0 %v1130, 16
    %v2312 = vpop.permute.xlu0 %2311
    %2313 = vrot.lane.b32.xlu0 %v1131, 16
    %v2314 = vpop.permute.xlu0 %2313
    %2315 = vrot.lane.b32.xlu0 %v1132, 16
    %v2316 = vpop.permute.xlu0 %2315
    %2317 = vrot.lane.b32.xlu0 %v1133, 16
    %v2318 = vpop.permute.xlu0 %2317
    %2319 = vrot.lane.b32.xlu0 %v1134, 16
    %v2320 = vpop.permute.xlu0 %2319
    %2321 = vrot.lane.b32.xlu0 %v1135, 16
    %v2322 = vpop.permute.xlu0 %2321
    %2323 = vrot.lane.b32.xlu0 %v1136, 16
    %v2324 = vpop.permute.xlu0 %2323
    %2325 = vrot.lane.b32.xlu0 %v1137, 16
    %v2326 = vpop.permute.xlu0 %2325
    %2327 = vrot.lane.b32.xlu0 %v1138, 16
    %v2328 = vpop.permute.xlu0 %2327
    %2329 = vrot.lane.b32.xlu0 %v1139, 16
    %v2330 = vpop.permute.xlu0 %2329
    %2331 = vrot.lane.b32.xlu0 %v1140, 16
    %v2332 = vpop.permute.xlu0 %2331
    %2333 = vrot.lane.b32.xlu0 %v1141, 16
    %v2334 = vpop.permute.xlu0 %2333
    %2335 = vrot.lane.b32.xlu0 %v1142, 16
    %v2336 = vpop.permute.xlu0 %2335
    %2337 = vrot.lane.b32.xlu0 %v1143, 16
    %v2338 = vpop.permute.xlu0 %2337
    %2339 = vrot.lane.b32.xlu0 %v1144, 16
    %v2340 = vpop.permute.xlu0 %2339
    %2341 = vrot.lane.b32.xlu0 %v1145, 16
    %v2342 = vpop.permute.xlu0 %2341
    %2343 = vrot.lane.b32.xlu0 %v1146, 16
    %v2344 = vpop.permute.xlu0 %2343
    %2345 = vrot.lane.b32.xlu0 %v1147, 16
    %v2346 = vpop.permute.xlu0 %2345
    %2347 = vrot.lane.b32.xlu0 %v1148, 16
    %v2348 = vpop.permute.xlu0 %2347
    %2349 = vrot.lane.b32.xlu0 %v1149, 16
    %v2350 = vpop.permute.xlu0 %2349
    %2351 = vrot.lane.b32.xlu0 %v1150, 16
    %v2352 = vpop.permute.xlu0 %2351
    %2353 = vrot.lane.b32.xlu0 %v1151, 16
    %v2354 = vpop.permute.xlu0 %2353
    %2355 = vrot.lane.b32.xlu0 %v1152, 16
    %v2356 = vpop.permute.xlu0 %2355
    %2357 = vrot.lane.b32.xlu0 %v1153, 16
    %v2358 = vpop.permute.xlu0 %2357
    %2359 = vrot.lane.b32.xlu0 %v1154, 16
    %v2360 = vpop.permute.xlu0 %2359
    %2361 = vrot.lane.b32.xlu0 %v1155, 16
    %v2362 = vpop.permute.xlu0 %2361
    %2363 = vrot.lane.b32.xlu0 %v1156, 16
    %v2364 = vpop.permute.xlu0 %2363
    %2365 = vrot.lane.b32.xlu0 %v1157, 16
    %v2366 = vpop.permute.xlu0 %2365
    %2367 = vrot.lane.b32.xlu0 %v1158, 16
    %v2368 = vpop.permute.xlu0 %2367
    %2369 = vrot.lane.b32.xlu0 %v1159, 16
    %v2370 = vpop.permute.xlu0 %2369
    %2371 = vrot.lane.b32.xlu0 %v1160, 16
    %v2372 = vpop.permute.xlu0 %2371
    %2373 = vrot.lane.b32.xlu0 %v1161, 16
    %v2374 = vpop.permute.xlu0 %2373
    %2375 = vrot.lane.b32.xlu0 %v1162, 16
    %v2376 = vpop.permute.xlu0 %2375
    %2377 = vrot.lane.b32.xlu0 %v1163, 16
    %v2378 = vpop.permute.xlu0 %2377
    %2379 = vrot.lane.b32.xlu0 %v1164, 16
    %v2380 = vpop.permute.xlu0 %2379
    %2381 = vrot.lane.b32.xlu0 %v1165, 16
    %v2382 = vpop.permute.xlu0 %2381
    %2511 = vrot.lane.b32.xlu0 %v1166, 20
    %v2512 = vpop.permute.xlu0 %2511
    %2513 = vrot.lane.b32.xlu0 %v1167, 20
    %v2514 = vpop.permute.xlu0 %2513
    %2515 = vrot.lane.b32.xlu0 %v1168, 20
    %v2516 = vpop.permute.xlu0 %2515
    %2517 = vrot.lane.b32.xlu0 %v1169, 20
    %v2518 = vpop.permute.xlu0 %2517
    %2519 = vrot.lane.b32.xlu0 %v1170, 20
    %v2520 = vpop.permute.xlu0 %2519
    %2521 = vrot.lane.b32.xlu0 %v1171, 20
    %v2522 = vpop.permute.xlu0 %2521
    %2523 = vrot.lane.b32.xlu0 %v1172, 20
    %v2524 = vpop.permute.xlu0 %2523
    %2525 = vrot.lane.b32.xlu0 %v1173, 20
    %v2526 = vpop.permute.xlu0 %2525
    %2527 = vrot.lane.b32.xlu0 %v1174, 20
    %v2528 = vpop.permute.xlu0 %2527
    %2529 = vrot.lane.b32.xlu0 %v1175, 20
    %v2530 = vpop.permute.xlu0 %2529
    %2531 = vrot.lane.b32.xlu0 %v1176, 20
    %v2532 = vpop.permute.xlu0 %2531
    %2533 = vrot.lane.b32.xlu0 %v1177, 20
    %v2534 = vpop.permute.xlu0 %2533
    %2535 = vrot.lane.b32.xlu0 %v1178, 20
    %v2536 = vpop.permute.xlu0 %2535
    %2537 = vrot.lane.b32.xlu0 %v1179, 20
    %v2538 = vpop.permute.xlu0 %2537
    %2539 = vrot.lane.b32.xlu0 %v1180, 20
    %v2540 = vpop.permute.xlu0 %2539
    %2541 = vrot.lane.b32.xlu0 %v1181, 20
    %v2542 = vpop.permute.xlu0 %2541
    %2543 = vrot.lane.b32.xlu0 %v1182, 20
    %v2544 = vpop.permute.xlu0 %2543
    %2545 = vrot.lane.b32.xlu0 %v1183, 20
    %v2546 = vpop.permute.xlu0 %2545
    %2547 = vrot.lane.b32.xlu0 %v1184, 20
    %v2548 = vpop.permute.xlu0 %2547
    %2549 = vrot.lane.b32.xlu0 %v1185, 20
    %v2550 = vpop.permute.xlu0 %2549
    %2551 = vrot.lane.b32.xlu0 %v1186, 20
    %v2552 = vpop.permute.xlu0 %2551
    %2553 = vrot.lane.b32.xlu0 %v1187, 20
    %v2554 = vpop.permute.xlu0 %2553
    %2555 = vrot.lane.b32.xlu0 %v1188, 20
    %v2556 = vpop.permute.xlu0 %2555
    %2557 = vrot.lane.b32.xlu0 %v1189, 20
    %v2558 = vpop.permute.xlu0 %2557
    %2559 = vrot.lane.b32.xlu0 %v1190, 20
    %v2560 = vpop.permute.xlu0 %2559
    %2561 = vrot.lane.b32.xlu0 %v1191, 20
    %v2562 = vpop.permute.xlu0 %2561
    %2563 = vrot.lane.b32.xlu0 %v1192, 20
    %v2564 = vpop.permute.xlu0 %2563
    %2565 = vrot.lane.b32.xlu0 %v1193, 20
    %v2566 = vpop.permute.xlu0 %2565
    %2567 = vrot.lane.b32.xlu0 %v1194, 20
    %v2568 = vpop.permute.xlu0 %2567
    %2569 = vrot.lane.b32.xlu0 %v1195, 20
    %v2570 = vpop.permute.xlu0 %2569
    %2571 = vrot.lane.b32.xlu0 %v1196, 20
    %v2572 = vpop.permute.xlu0 %2571
    %2573 = vrot.lane.b32.xlu0 %v1197, 20
    %v2574 = vpop.permute.xlu0 %2573
    %2575 = vrot.lane.b32.xlu0 %v1198, 20
    %v2576 = vpop.permute.xlu0 %2575
    %2577 = vrot.lane.b32.xlu0 %v1199, 20
    %v2578 = vpop.permute.xlu0 %2577
    %2579 = vrot.lane.b32.xlu0 %v1200, 20
    %v2580 = vpop.permute.xlu0 %2579
    %2581 = vrot.lane.b32.xlu0 %v1201, 20
    %v2582 = vpop.permute.xlu0 %2581
    %2583 = vrot.lane.b32.xlu0 %v1202, 20
    %v2584 = vpop.permute.xlu0 %2583
    %2585 = vrot.lane.b32.xlu0 %v1203, 20
    %v2586 = vpop.permute.xlu0 %2585
    %2587 = vrot.lane.b32.xlu0 %v1204, 20
    %v2588 = vpop.permute.xlu0 %2587
    %2589 = vrot.lane.b32.xlu0 %v1205, 20
    %v2590 = vpop.permute.xlu0 %2589
    %2591 = vrot.lane.b32.xlu0 %v1206, 20
    %v2592 = vpop.permute.xlu0 %2591
    %2593 = vrot.lane.b32.xlu0 %v1207, 20
    %v2594 = vpop.permute.xlu0 %2593
    %2595 = vrot.lane.b32.xlu0 %v1208, 20
    %v2596 = vpop.permute.xlu0 %2595
    %2597 = vrot.lane.b32.xlu0 %v1209, 20
    %v2598 = vpop.permute.xlu0 %2597
    %2599 = vrot.lane.b32.xlu0 %v1210, 20
    %v2600 = vpop.permute.xlu0 %2599
    %2601 = vrot.lane.b32.xlu0 %v1211, 20
    %v2602 = vpop.permute.xlu0 %2601
    %2603 = vrot.lane.b32.xlu0 %v1212, 20
    %v2604 = vpop.permute.xlu0 %2603
    %2605 = vrot.lane.b32.xlu0 %v1213, 20
    %v2606 = vpop.permute.xlu0 %2605
    %2607 = vrot.lane.b32.xlu0 %v1214, 20
    %v2608 = vpop.permute.xlu0 %2607
    %2609 = vrot.lane.b32.xlu0 %v1215, 20
    %v2610 = vpop.permute.xlu0 %2609
    %2611 = vrot.lane.b32.xlu0 %v1216, 20
    %v2612 = vpop.permute.xlu0 %2611
    %2613 = vrot.lane.b32.xlu0 %v1217, 20
    %v2614 = vpop.permute.xlu0 %2613
    %2615 = vrot.lane.b32.xlu0 %v1218, 20
    %v2616 = vpop.permute.xlu0 %2615
    %2617 = vrot.lane.b32.xlu0 %v1219, 20
    %v2618 = vpop.permute.xlu0 %2617
    %2619 = vrot.lane.b32.xlu0 %v1220, 20
    %v2620 = vpop.permute.xlu0 %2619
    %2621 = vrot.lane.b32.xlu0 %v1221, 20
    %v2622 = vpop.permute.xlu0 %2621
    %2623 = vrot.lane.b32.xlu0 %v1222, 20
    %v2624 = vpop.permute.xlu0 %2623
    %2625 = vrot.lane.b32.xlu0 %v1223, 20
    %v2626 = vpop.permute.xlu0 %2625
    %2627 = vrot.lane.b32.xlu0 %v1224, 20
    %v2628 = vpop.permute.xlu0 %2627
    %2629 = vrot.lane.b32.xlu0 %v1225, 20
    %v2630 = vpop.permute.xlu0 %2629
    %2631 = vrot.lane.b32.xlu0 %v1226, 20
    %v2632 = vpop.permute.xlu0 %2631
    %2633 = vrot.lane.b32.xlu0 %v1227, 20
    %v2634 = vpop.permute.xlu0 %2633
    %2635 = vrot.lane.b32.xlu0 %v1228, 20
    %v2636 = vpop.permute.xlu0 %2635
    %2637 = vrot.lane.b32.xlu0 %v1229, 20
    %v2638 = vpop.permute.xlu0 %2637
    %2767 = vrot.lane.b32.xlu0 %v1231, 24
    %v2768 = vpop.permute.xlu0 %2767
    %2769 = vrot.lane.b32.xlu0 %v1232, 24
    %v2770 = vpop.permute.xlu0 %2769
    %2771 = vrot.lane.b32.xlu0 %v1233, 24
    %v2772 = vpop.permute.xlu0 %2771
    %2773 = vrot.lane.b32.xlu0 %v1234, 24
    %v2774 = vpop.permute.xlu0 %2773
    %2775 = vrot.lane.b32.xlu0 %v1235, 24
    %v2776 = vpop.permute.xlu0 %2775
    %2777 = vrot.lane.b32.xlu0 %v1236, 24
    %v2778 = vpop.permute.xlu0 %2777
    %2779 = vrot.lane.b32.xlu0 %v1237, 24
    %v2780 = vpop.permute.xlu0 %2779
    %2781 = vrot.lane.b32.xlu0 %v1238, 24
    %v2782 = vpop.permute.xlu0 %2781
    %2783 = vrot.lane.b32.xlu0 %v1239, 24
    %v2784 = vpop.permute.xlu0 %2783
    %2785 = vrot.lane.b32.xlu0 %v1240, 24
    %v2786 = vpop.permute.xlu0 %2785
    %2787 = vrot.lane.b32.xlu0 %v1241, 24
    %v2788 = vpop.permute.xlu0 %2787
    %2789 = vrot.lane.b32.xlu0 %v1242, 24
    %v2790 = vpop.permute.xlu0 %2789
    %2791 = vrot.lane.b32.xlu0 %v1243, 24
    %v2792 = vpop.permute.xlu0 %2791
    %2793 = vrot.lane.b32.xlu0 %v1244, 24
    %v2794 = vpop.permute.xlu0 %2793
    %2795 = vrot.lane.b32.xlu0 %v1245, 24
    %v2796 = vpop.permute.xlu0 %2795
    %2797 = vrot.lane.b32.xlu0 %v1246, 24
    %v2798 = vpop.permute.xlu0 %2797
    %2799 = vrot.lane.b32.xlu0 %v1247, 24
    %v2800 = vpop.permute.xlu0 %2799
    %2801 = vrot.lane.b32.xlu0 %v1248, 24
    %v2802 = vpop.permute.xlu0 %2801
    %2803 = vrot.lane.b32.xlu0 %v1249, 24
    %v2804 = vpop.permute.xlu0 %2803
    %2805 = vrot.lane.b32.xlu0 %v1250, 24
    %v2806 = vpop.permute.xlu0 %2805
    %2807 = vrot.lane.b32.xlu0 %v1251, 24
    %v2808 = vpop.permute.xlu0 %2807
    %2809 = vrot.lane.b32.xlu0 %v1252, 24
    %v2810 = vpop.permute.xlu0 %2809
    %2811 = vrot.lane.b32.xlu0 %v1253, 24
    %v2812 = vpop.permute.xlu0 %2811
    %2813 = vrot.lane.b32.xlu0 %v1254, 24
    %v2814 = vpop.permute.xlu0 %2813
    %2815 = vrot.lane.b32.xlu0 %v1255, 24
    %v2816 = vpop.permute.xlu0 %2815
    %2817 = vrot.lane.b32.xlu0 %v1256, 24
    %v2818 = vpop.permute.xlu0 %2817
    %2819 = vrot.lane.b32.xlu0 %v1257, 24
    %v2820 = vpop.permute.xlu0 %2819
    %2821 = vrot.lane.b32.xlu0 %v1258, 24
    %v2822 = vpop.permute.xlu0 %2821
    %2823 = vrot.lane.b32.xlu0 %v1259, 24
    %v2824 = vpop.permute.xlu0 %2823
    %2825 = vrot.lane.b32.xlu0 %v1260, 24
    %v2826 = vpop.permute.xlu0 %2825
    %2827 = vrot.lane.b32.xlu0 %v1261, 24
    %v2828 = vpop.permute.xlu0 %2827
    %2829 = vrot.lane.b32.xlu0 %v1262, 24
    %v2830 = vpop.permute.xlu0 %2829
    %2831 = vrot.lane.b32.xlu0 %v1263, 24
    %v2832 = vpop.permute.xlu0 %2831
    %2833 = vrot.lane.b32.xlu0 %v1264, 24
    %v2834 = vpop.permute.xlu0 %2833
    %2835 = vrot.lane.b32.xlu0 %v1265, 24
    %v2836 = vpop.permute.xlu0 %2835
    %2837 = vrot.lane.b32.xlu0 %v1266, 24
    %v2838 = vpop.permute.xlu0 %2837
    %2839 = vrot.lane.b32.xlu0 %v1267, 24
    %v2840 = vpop.permute.xlu0 %2839
    %2841 = vrot.lane.b32.xlu0 %v1268, 24
    %v2842 = vpop.permute.xlu0 %2841
    %2843 = vrot.lane.b32.xlu0 %v1269, 24
    %v2844 = vpop.permute.xlu0 %2843
    %2845 = vrot.lane.b32.xlu0 %v1270, 24
    %v2846 = vpop.permute.xlu0 %2845
    %2847 = vrot.lane.b32.xlu0 %v1271, 24
    %v2848 = vpop.permute.xlu0 %2847
    %2849 = vrot.lane.b32.xlu0 %v1272, 24
    %v2850 = vpop.permute.xlu0 %2849
    %2851 = vrot.lane.b32.xlu0 %v1273, 24
    %v2852 = vpop.permute.xlu0 %2851
    %2853 = vrot.lane.b32.xlu0 %v1274, 24
    %v2854 = vpop.permute.xlu0 %2853
    %2855 = vrot.lane.b32.xlu0 %v1275, 24
    %v2856 = vpop.permute.xlu0 %2855
    %2857 = vrot.lane.b32.xlu0 %v1276, 24
    %v2858 = vpop.permute.xlu0 %2857
    %2859 = vrot.lane.b32.xlu0 %v1277, 24
    %v2860 = vpop.permute.xlu0 %2859
    %2861 = vrot.lane.b32.xlu0 %v1278, 24
    %v2862 = vpop.permute.xlu0 %2861
    %2863 = vrot.lane.b32.xlu0 %v1279, 24
    %v2864 = vpop.permute.xlu0 %2863
    %2865 = vrot.lane.b32.xlu0 %v1280, 24
    %v2866 = vpop.permute.xlu0 %2865
    %2867 = vrot.lane.b32.xlu0 %v1281, 24
    %v2868 = vpop.permute.xlu0 %2867
    %2869 = vrot.lane.b32.xlu0 %v1282, 24
    %v2870 = vpop.permute.xlu0 %2869
    %2871 = vrot.lane.b32.xlu0 %v1283, 24
    %v2872 = vpop.permute.xlu0 %2871
    %2873 = vrot.lane.b32.xlu0 %v1284, 24
    %v2874 = vpop.permute.xlu0 %2873
    %2875 = vrot.lane.b32.xlu0 %v1285, 24
    %v2876 = vpop.permute.xlu0 %2875
    %2877 = vrot.lane.b32.xlu0 %v1286, 24
    %v2878 = vpop.permute.xlu0 %2877
    %2879 = vrot.lane.b32.xlu0 %v1287, 24
    %v2880 = vpop.permute.xlu0 %2879
    %2881 = vrot.lane.b32.xlu0 %v1288, 24
    %v2882 = vpop.permute.xlu0 %2881
    %2883 = vrot.lane.b32.xlu0 %v1289, 24
    %v2884 = vpop.permute.xlu0 %2883
    %2885 = vrot.lane.b32.xlu0 %v1290, 24
    %v2886 = vpop.permute.xlu0 %2885
    %2887 = vrot.lane.b32.xlu0 %v1291, 24
    %v2888 = vpop.permute.xlu0 %2887
    %2889 = vrot.lane.b32.xlu0 %v1292, 24
    %v2890 = vpop.permute.xlu0 %2889
    %2891 = vrot.lane.b32.xlu0 %v1293, 24
    %v2892 = vpop.permute.xlu0 %2891
    %2893 = vrot.lane.b32.xlu0 %v1294, 24
    %v2894 = vpop.permute.xlu0 %2893
    %3023 = vrot.lane.b32.xlu0 %v1295, 28
    %v3024 = vpop.permute.xlu0 %3023
    %3025 = vrot.lane.b32.xlu0 %v1296, 28
    %v3026 = vpop.permute.xlu0 %3025
    %3027 = vrot.lane.b32.xlu0 %v1297, 28
    %v3028 = vpop.permute.xlu0 %3027
    %3029 = vrot.lane.b32.xlu0 %v1298, 28
    %v3030 = vpop.permute.xlu0 %3029
    %3031 = vrot.lane.b32.xlu0 %v1299, 28
    %v3032 = vpop.permute.xlu0 %3031
    %3033 = vrot.lane.b32.xlu0 %v1300, 28
    %v3034 = vpop.permute.xlu0 %3033
    %3035 = vrot.lane.b32.xlu0 %v1301, 28
    %v3036 = vpop.permute.xlu0 %3035
    %3037 = vrot.lane.b32.xlu0 %v1302, 28
    %v3038 = vpop.permute.xlu0 %3037
    %3039 = vrot.lane.b32.xlu0 %v1303, 28
    %v3040 = vpop.permute.xlu0 %3039
    %3041 = vrot.lane.b32.xlu0 %v1304, 28
    %v3042 = vpop.permute.xlu0 %3041
    %3043 = vrot.lane.b32.xlu0 %v1305, 28
    %v3044 = vpop.permute.xlu0 %3043
    %3045 = vrot.lane.b32.xlu0 %v1306, 28
    %v3046 = vpop.permute.xlu0 %3045
    %3047 = vrot.lane.b32.xlu0 %v1307, 28
    %v3048 = vpop.permute.xlu0 %3047
    %3049 = vrot.lane.b32.xlu0 %v1308, 28
    %v3050 = vpop.permute.xlu0 %3049
    %3051 = vrot.lane.b32.xlu0 %v1309, 28
    %v3052 = vpop.permute.xlu0 %3051
    %3053 = vrot.lane.b32.xlu0 %v1310, 28
    %v3054 = vpop.permute.xlu0 %3053
    %3055 = vrot.lane.b32.xlu0 %v1311, 28
    %v3056 = vpop.permute.xlu0 %3055
    %3057 = vrot.lane.b32.xlu0 %v1312, 28
    %v3058 = vpop.permute.xlu0 %3057
    %3059 = vrot.lane.b32.xlu0 %v1313, 28
    %v3060 = vpop.permute.xlu0 %3059
    %3061 = vrot.lane.b32.xlu0 %v1314, 28
    %v3062 = vpop.permute.xlu0 %3061
    %3063 = vrot.lane.b32.xlu0 %v1315, 28
    %v3064 = vpop.permute.xlu0 %3063
    %3065 = vrot.lane.b32.xlu0 %v1316, 28
    %v3066 = vpop.permute.xlu0 %3065
    %3067 = vrot.lane.b32.xlu0 %v1317, 28
    %v3068 = vpop.permute.xlu0 %3067
    %3069 = vrot.lane.b32.xlu0 %v1318, 28
    %v3070 = vpop.permute.xlu0 %3069
    %3071 = vrot.lane.b32.xlu0 %v1319, 28
    %v3072 = vpop.permute.xlu0 %3071
    %3073 = vrot.lane.b32.xlu0 %v1320, 28
    %v3074 = vpop.permute.xlu0 %3073
    %3075 = vrot.lane.b32.xlu0 %v1321, 28
    %v3076 = vpop.permute.xlu0 %3075
    %3077 = vrot.lane.b32.xlu0 %v1322, 28
    %v3078 = vpop.permute.xlu0 %3077
    %3079 = vrot.lane.b32.xlu0 %v1323, 28
    %v3080 = vpop.permute.xlu0 %3079
    %3081 = vrot.lane.b32.xlu0 %v1324, 28
    %v3082 = vpop.permute.xlu0 %3081
    %3083 = vrot.lane.b32.xlu0 %v1325, 28
    %v3084 = vpop.permute.xlu0 %3083
    %3085 = vrot.lane.b32.xlu0 %v1326, 28
    %v3086 = vpop.permute.xlu0 %3085
    %3087 = vrot.lane.b32.xlu0 %v1327, 28
    %v3088 = vpop.permute.xlu0 %3087
    %3089 = vrot.lane.b32.xlu0 %v1328, 28
    %v3090 = vpop.permute.xlu0 %3089
    %3091 = vrot.lane.b32.xlu0 %v1329, 28
    %v3092 = vpop.permute.xlu0 %3091
    %3093 = vrot.lane.b32.xlu0 %v1330, 28
    %v3094 = vpop.permute.xlu0 %3093
    %3095 = vrot.lane.b32.xlu0 %v1331, 28
    %v3096 = vpop.permute.xlu0 %3095
    %3097 = vrot.lane.b32.xlu0 %v1332, 28
    %v3098 = vpop.permute.xlu0 %3097
    %3099 = vrot.lane.b32.xlu0 %v1333, 28
    %v3100 = vpop.permute.xlu0 %3099
    %3101 = vrot.lane.b32.xlu0 %v1334, 28
    %v3102 = vpop.permute.xlu0 %3101
    %3103 = vrot.lane.b32.xlu0 %v1335, 28
    %v3104 = vpop.permute.xlu0 %3103
    %3105 = vrot.lane.b32.xlu0 %v1336, 28
    %v3106 = vpop.permute.xlu0 %3105
    %3107 = vrot.lane.b32.xlu0 %v1337, 28
    %v3108 = vpop.permute.xlu0 %3107
    %3109 = vrot.lane.b32.xlu0 %v1338, 28
    %v3110 = vpop.permute.xlu0 %3109
    %3111 = vrot.lane.b32.xlu0 %v1339, 28
    %v3112 = vpop.permute.xlu0 %3111
    %3113 = vrot.lane.b32.xlu0 %v1340, 28
    %v3114 = vpop.permute.xlu0 %3113
    %3115 = vrot.lane.b32.xlu0 %v1341, 28
    %v3116 = vpop.permute.xlu0 %3115
    %3117 = vrot.lane.b32.xlu0 %v1342, 28
    %v3118 = vpop.permute.xlu0 %3117
    %3119 = vrot.lane.b32.xlu0 %v1343, 28
    %v3120 = vpop.permute.xlu0 %3119
    %3121 = vrot.lane.b32.xlu0 %v1344, 28
    %v3122 = vpop.permute.xlu0 %3121
    %3123 = vrot.lane.b32.xlu0 %v1345, 28
    %v3124 = vpop.permute.xlu0 %3123
    %3125 = vrot.lane.b32.xlu0 %v1346, 28
    %v3126 = vpop.permute.xlu0 %3125
    %3127 = vrot.lane.b32.xlu0 %v1347, 28
    %v3128 = vpop.permute.xlu0 %3127
    %3129 = vrot.lane.b32.xlu0 %v1348, 28
    %v3130 = vpop.permute.xlu0 %3129
    %3131 = vrot.lane.b32.xlu0 %v1349, 28
    %v3132 = vpop.permute.xlu0 %3131
    %3133 = vrot.lane.b32.xlu0 %v1350, 28
    %v3134 = vpop.permute.xlu0 %3133
    %3135 = vrot.lane.b32.xlu0 %v1351, 28
    %v3136 = vpop.permute.xlu0 %3135
    %3137 = vrot.lane.b32.xlu0 %v1352, 28
    %v3138 = vpop.permute.xlu0 %3137
    %3139 = vrot.lane.b32.xlu0 %v1353, 28
    %v3140 = vpop.permute.xlu0 %3139
    %3141 = vrot.lane.b32.xlu0 %v1354, 28
    %v3142 = vpop.permute.xlu0 %3141
    %3143 = vrot.lane.b32.xlu0 %v1355, 28
    %v3144 = vpop.permute.xlu0 %3143
    %3145 = vrot.lane.b32.xlu0 %v1356, 28
    %v3146 = vpop.permute.xlu0 %3145
    %3147 = vrot.lane.b32.xlu0 %v1357, 28
    %v3148 = vpop.permute.xlu0 %3147
    %3149 = vrot.lane.b32.xlu0 %v1358, 28
    %v3150 = vpop.permute.xlu0 %3149
    %3279 = vrot.lane.b32.xlu0 %v1359, 32
    %v3280 = vpop.permute.xlu0 %3279
    %3281 = vrot.lane.b32.xlu0 %v1360, 32
    %v3282 = vpop.permute.xlu0 %3281
    %3283 = vrot.lane.b32.xlu0 %v1361, 32
    %v3284 = vpop.permute.xlu0 %3283
    %3285 = vrot.lane.b32.xlu0 %v1362, 32
    %v3286 = vpop.permute.xlu0 %3285
    %3287 = vrot.lane.b32.xlu0 %v1363, 32
    %v3288 = vpop.permute.xlu0 %3287
    %3289 = vrot.lane.b32.xlu0 %v1364, 32
    %v3290 = vpop.permute.xlu0 %3289
    %3291 = vrot.lane.b32.xlu0 %v1365, 32
    %v3292 = vpop.permute.xlu0 %3291
    %3293 = vrot.lane.b32.xlu0 %v1366, 32
    %v3294 = vpop.permute.xlu0 %3293
    %3295 = vrot.lane.b32.xlu0 %v1367, 32
    %v3296 = vpop.permute.xlu0 %3295
    %3297 = vrot.lane.b32.xlu0 %v1368, 32
    %v3298 = vpop.permute.xlu0 %3297
    %3299 = vrot.lane.b32.xlu0 %v1369, 32
    %v3300 = vpop.permute.xlu0 %3299
    %3301 = vrot.lane.b32.xlu0 %v1370, 32
    %v3302 = vpop.permute.xlu0 %3301
    %3303 = vrot.lane.b32.xlu0 %v1371, 32
    %v3304 = vpop.permute.xlu0 %3303
    %3305 = vrot.lane.b32.xlu0 %v1372, 32
    %v3306 = vpop.permute.xlu0 %3305
    %3307 = vrot.lane.b32.xlu0 %v1373, 32
    %v3308 = vpop.permute.xlu0 %3307
    %3309 = vrot.lane.b32.xlu0 %v1374, 32
    %v3310 = vpop.permute.xlu0 %3309
    %3311 = vrot.lane.b32.xlu0 %v1375, 32
    %v3312 = vpop.permute.xlu0 %3311
    %3313 = vrot.lane.b32.xlu0 %v1376, 32
    %v3314 = vpop.permute.xlu0 %3313
    %3315 = vrot.lane.b32.xlu0 %v1377, 32
    %v3316 = vpop.permute.xlu0 %3315
    %3317 = vrot.lane.b32.xlu0 %v1378, 32
    %v3318 = vpop.permute.xlu0 %3317
    %3319 = vrot.lane.b32.xlu0 %v1379, 32
    %v3320 = vpop.permute.xlu0 %3319
    %3321 = vrot.lane.b32.xlu0 %v1380, 32
    %v3322 = vpop.permute.xlu0 %3321
    %3323 = vrot.lane.b32.xlu0 %v1381, 32
    %v3324 = vpop.permute.xlu0 %3323
    %3325 = vrot.lane.b32.xlu0 %v1382, 32
    %v3326 = vpop.permute.xlu0 %3325
    %3327 = vrot.lane.b32.xlu0 %v1383, 32
    %v3328 = vpop.permute.xlu0 %3327
    %3329 = vrot.lane.b32.xlu0 %v1384, 32
    %v3330 = vpop.permute.xlu0 %3329
    %3331 = vrot.lane.b32.xlu0 %v1385, 32
    %v3332 = vpop.permute.xlu0 %3331
    %3333 = vrot.lane.b32.xlu0 %v1386, 32
    %v3334 = vpop.permute.xlu0 %3333
    %3335 = vrot.lane.b32.xlu0 %v1387, 32
    %v3336 = vpop.permute.xlu0 %3335
    %3337 = vrot.lane.b32.xlu0 %v1388, 32
    %v3338 = vpop.permute.xlu0 %3337
    %3339 = vrot.lane.b32.xlu0 %v1389, 32
    %v3340 = vpop.permute.xlu0 %3339
    %3341 = vrot.lane.b32.xlu0 %v1390, 32
    %v3342 = vpop.permute.xlu0 %3341
    %3343 = vrot.lane.b32.xlu0 %v1391, 32
    %v3344 = vpop.permute.xlu0 %3343
    %3345 = vrot.lane.b32.xlu0 %v1392, 32
    %v3346 = vpop.permute.xlu0 %3345
    %3347 = vrot.lane.b32.xlu0 %v1393, 32
    %v3348 = vpop.permute.xlu0 %3347
    %3349 = vrot.lane.b32.xlu0 %v1394, 32
    %v3350 = vpop.permute.xlu0 %3349
    %3351 = vrot.lane.b32.xlu0 %v1395, 32
    %v3352 = vpop.permute.xlu0 %3351
    %3353 = vrot.lane.b32.xlu0 %v1396, 32
    %v3354 = vpop.permute.xlu0 %3353
    %3355 = vrot.lane.b32.xlu0 %v1397, 32
    %v3356 = vpop.permute.xlu0 %3355
    %3357 = vrot.lane.b32.xlu0 %v1398, 32
    %v3358 = vpop.permute.xlu0 %3357
    %3359 = vrot.lane.b32.xlu0 %v1399, 32
    %v3360 = vpop.permute.xlu0 %3359
    %3361 = vrot.lane.b32.xlu0 %v1400, 32
    %v3362 = vpop.permute.xlu0 %3361
    %3363 = vrot.lane.b32.xlu0 %v1401, 32
    %v3364 = vpop.permute.xlu0 %3363
    %3365 = vrot.lane.b32.xlu0 %v1402, 32
    %v3366 = vpop.permute.xlu0 %3365
    %3367 = vrot.lane.b32.xlu0 %v1403, 32
    %v3368 = vpop.permute.xlu0 %3367
    %3369 = vrot.lane.b32.xlu0 %v1404, 32
    %v3370 = vpop.permute.xlu0 %3369
    %3371 = vrot.lane.b32.xlu0 %v1405, 32
    %v3372 = vpop.permute.xlu0 %3371
    %3373 = vrot.lane.b32.xlu0 %v1406, 32
    %v3374 = vpop.permute.xlu0 %3373
    %3375 = vrot.lane.b32.xlu0 %v1407, 32
    %v3376 = vpop.permute.xlu0 %3375
    %3377 = vrot.lane.b32.xlu0 %v1408, 32
    %v3378 = vpop.permute.xlu0 %3377
    %3379 = vrot.lane.b32.xlu0 %v1409, 32
    %v3380 = vpop.permute.xlu0 %3379
    %3381 = vrot.lane.b32.xlu0 %v1410, 32
    %v3382 = vpop.permute.xlu0 %3381
    %3383 = vrot.lane.b32.xlu0 %v1411, 32
    %v3384 = vpop.permute.xlu0 %3383
    %3385 = vrot.lane.b32.xlu0 %v1412, 32
    %v3386 = vpop.permute.xlu0 %3385
    %3387 = vrot.lane.b32.xlu0 %v1413, 32
    %v3388 = vpop.permute.xlu0 %3387
    %3389 = vrot.lane.b32.xlu0 %v1414, 32
    %v3390 = vpop.permute.xlu0 %3389
    %3391 = vrot.lane.b32.xlu0 %v1415, 32
    %v3392 = vpop.permute.xlu0 %3391
    %3393 = vrot.lane.b32.xlu0 %v1416, 32
    %v3394 = vpop.permute.xlu0 %3393
    %3395 = vrot.lane.b32.xlu0 %v1417, 32
    %v3396 = vpop.permute.xlu0 %3395
    %3397 = vrot.lane.b32.xlu0 %v1418, 32
    %v3398 = vpop.permute.xlu0 %3397
    %3399 = vrot.lane.b32.xlu0 %v1419, 32
    %v3400 = vpop.permute.xlu0 %3399
    %3401 = vrot.lane.b32.xlu0 %v1420, 32
    %v3402 = vpop.permute.xlu0 %3401
    %3403 = vrot.lane.b32.xlu0 %v1421, 32
    %v3404 = vpop.permute.xlu0 %3403
    %3405 = vrot.lane.b32.xlu0 %v1422, 32
    %v3406 = vpop.permute.xlu0 %3405
    %v3471 = vsel %vm211, %v846, %v1488
    %v3472 = vsel %vm211, %v847, %v1490
    %v3473 = vsel %vm211, %v848, %v1492
    %v3474 = vsel %vm211, %v849, %v1494
    %v3475 = vsel %vm211, %v850, %v1496
    %v3476 = vsel %vm211, %v851, %v1498
    %v3477 = vsel %vm211, %v852, %v1500
    %v3478 = vsel %vm211, %v853, %v1502
    %v3479 = vsel %vm211, %v854, %v1504
    %v3480 = vsel %vm211, %v855, %v1506
    %v3481 = vsel %vm211, %v856, %v1508
    %v3482 = vsel %vm211, %v857, %v1510
    %v3483 = vsel %vm211, %v858, %v1512
    %v3484 = vsel %vm211, %v859, %v1514
    %v3485 = vsel %vm211, %v860, %v1516
    %v3486 = vsel %vm211, %v861, %v1518
    %v3487 = vsel %vm211, %v862, %v1520
    %v3488 = vsel %vm211, %v863, %v1522
    %v3489 = vsel %vm211, %v864, %v1524
    %v3490 = vsel %vm211, %v865, %v1526
    %v3491 = vsel %vm211, %v866, %v1528
    %v3492 = vsel %vm211, %v867, %v1530
    %v3493 = vsel %vm211, %v868, %v1532
    %v3494 = vsel %vm211, %v869, %v1534
    %v3495 = vsel %vm211, %v870, %v1536
    %v3496 = vsel %vm211, %v871, %v1538
    %v3497 = vsel %vm211, %v872, %v1540
    %v3498 = vsel %vm211, %v873, %v1542
    %v3499 = vsel %vm211, %v874, %v1544
    %v3500 = vsel %vm211, %v875, %v1546
    %v3501 = vsel %vm211, %v876, %v1548
    %v3502 = vsel %vm211, %v877, %v1550
    %v3503 = vsel %vm211, %v878, %v1552
    %v3504 = vsel %vm211, %v879, %v1554
    %v3505 = vsel %vm211, %v880, %v1556
    %v3506 = vsel %vm211, %v881, %v1558
    %v3507 = vsel %vm211, %v882, %v1560
    %v3508 = vsel %vm211, %v883, %v1562
    %v3509 = vsel %vm211, %v884, %v1564
    %v3510 = vsel %vm211, %v885, %v1566
    %v3511 = vsel %vm211, %v886, %v1568
    %v3512 = vsel %vm211, %v887, %v1570
    %v3513 = vsel %vm211, %v888, %v1572
    %v3514 = vsel %vm211, %v889, %v1574
    %v3515 = vsel %vm211, %v890, %v1576
    %v3516 = vsel %vm211, %v891, %v1578
    %v3517 = vsel %vm211, %v892, %v1580
    %v3518 = vsel %vm211, %v893, %v1582
    %v3519 = vsel %vm211, %v894, %v1584
    %v3520 = vsel %vm211, %v895, %v1586
    %v3521 = vsel %vm211, %v896, %v1588
    %v3522 = vsel %vm211, %v897, %v1590
    %v3523 = vsel %vm211, %v898, %v1592
    %v3524 = vsel %vm211, %v899, %v1594
    %v3525 = vsel %vm211, %v900, %v1596
    %v3526 = vsel %vm211, %v901, %v1598
    %v3527 = vsel %vm211, %v902, %v1600
    %v3528 = vsel %vm211, %v903, %v1602
    %v3529 = vsel %vm211, %v904, %v1604
    %v3530 = vsel %vm211, %v905, %v1606
    %v3531 = vsel %vm211, %v906, %v1608
    %v3532 = vsel %vm211, %v907, %v1610
    %v3533 = vsel %vm211, %v908, %v1612
    %v3534 = vsel %vm211, %v909, %v1614
    %vm3535 = vcmask 64512
    %v3536 = vsel %vm3535, %v3471, %v1744
    %v3537 = vsel %vm3535, %v3472, %v1746
    %v3538 = vsel %vm3535, %v3473, %v1748
    %v3539 = vsel %vm3535, %v3474, %v1750
    %v3540 = vsel %vm3535, %v3475, %v1752
    %v3541 = vsel %vm3535, %v3476, %v1754
    %v3542 = vsel %vm3535, %v3477, %v1756
    %v3543 = vsel %vm3535, %v3478, %v1758
    %v3544 = vsel %vm3535, %v3479, %v1760
    %v3545 = vsel %vm3535, %v3480, %v1762
    %v3546 = vsel %vm3535, %v3481, %v1764
    %v3547 = vsel %vm3535, %v3482, %v1766
    %v3548 = vsel %vm3535, %v3483, %v1768
    %v3549 = vsel %vm3535, %v3484, %v1770
    %v3550 = vsel %vm3535, %v3485, %v1772
    %v3551 = vsel %vm3535, %v3486, %v1774
    %v3552 = vsel %vm3535, %v3487, %v1776
    %v3553 = vsel %vm3535, %v3488, %v1778
    %v3554 = vsel %vm3535, %v3489, %v1780
    %v3555 = vsel %vm3535, %v3490, %v1782
    %v3556 = vsel %vm3535, %v3491, %v1784
    %v3557 = vsel %vm3535, %v3492, %v1786
    %v3558 = vsel %vm3535, %v3493, %v1788
    %v3559 = vsel %vm3535, %v3494, %v1790
    %v3560 = vsel %vm3535, %v3495, %v1792
    %v3561 = vsel %vm3535, %v3496, %v1794
    %v3562 = vsel %vm3535, %v3497, %v1796
    %v3563 = vsel %vm3535, %v3498, %v1798
    %v3564 = vsel %vm3535, %v3499, %v1800
    %v3565 = vsel %vm3535, %v3500, %v1802
    %v3566 = vsel %vm3535, %v3501, %v1804
    %v3567 = vsel %vm3535, %v3502, %v1806
    %v3568 = vsel %vm3535, %v3503, %v1808
    %v3569 = vsel %vm3535, %v3504, %v1810
    %v3570 = vsel %vm3535, %v3505, %v1812
    %v3571 = vsel %vm3535, %v3506, %v1814
    %v3572 = vsel %vm3535, %v3507, %v1816
    %v3573 = vsel %vm3535, %v3508, %v1818
    %v3574 = vsel %vm3535, %v3509, %v1820
    %v3575 = vsel %vm3535, %v3510, %v1822
    %v3576 = vsel %vm3535, %v3511, %v1824
    %v3577 = vsel %vm3535, %v3512, %v1826
    %v3578 = vsel %vm3535, %v3513, %v1828
    %v3579 = vsel %vm3535, %v3514, %v1830
    %v3580 = vsel %vm3535, %v3515, %v1832
    %v3581 = vsel %vm3535, %v3516, %v1834
    %v3582 = vsel %vm3535, %v3517, %v1836
    %v3583 = vsel %vm3535, %v3518, %v1838
    %v3584 = vsel %vm3535, %v3519, %v1840
    %v3585 = vsel %vm3535, %v3520, %v1842
    %v3586 = vsel %vm3535, %v3521, %v1844
    %v3587 = vsel %vm3535, %v3522, %v1846
    %v3588 = vsel %vm3535, %v3523, %v1848
    %v3589 = vsel %vm3535, %v3524, %v1850
    %v3590 = vsel %vm3535, %v3525, %v1852
    %v3591 = vsel %vm3535, %v3526, %v1854
    %v3592 = vsel %vm3535, %v3527, %v1856
    %v3593 = vsel %vm3535, %v3528, %v1858
    %v3594 = vsel %vm3535, %v3529, %v1860
    %v3595 = vsel %vm3535, %v3530, %v1862
    %v3596 = vsel %vm3535, %v3531, %v1864
    %v3597 = vsel %vm3535, %v3532, %v1866
    %v3598 = vsel %vm3535, %v3533, %v1868
    %v3599 = vsel %vm3535, %v3534, %v1870
    %vm3600 = vcmask 97280
    %v3601 = vsel %vm3600, %v3536, %v2000
    %v3602 = vsel %vm3600, %v3537, %v2002
    %v3603 = vsel %vm3600, %v3538, %v2004
    %v3604 = vsel %vm3600, %v3539, %v2006
    %v3605 = vsel %vm3600, %v3540, %v2008
    %v3606 = vsel %vm3600, %v3541, %v2010
    %v3607 = vsel %vm3600, %v3542, %v2012
    %v3608 = vsel %vm3600, %v3543, %v2014
    %v3609 = vsel %vm3600, %v3544, %v2016
    %v3610 = vsel %vm3600, %v3545, %v2018
    %v3611 = vsel %vm3600, %v3546, %v2020
    %v3612 = vsel %vm3600, %v3547, %v2022
    %v3613 = vsel %vm3600, %v3548, %v2024
    %v3614 = vsel %vm3600, %v3549, %v2026
    %v3615 = vsel %vm3600, %v3550, %v2028
    %v3616 = vsel %vm3600, %v3551, %v2030
    %v3617 = vsel %vm3600, %v3552, %v2032
    %v3618 = vsel %vm3600, %v3553, %v2034
    %v3619 = vsel %vm3600, %v3554, %v2036
    %v3620 = vsel %vm3600, %v3555, %v2038
    %v3621 = vsel %vm3600, %v3556, %v2040
    %v3622 = vsel %vm3600, %v3557, %v2042
    %v3623 = vsel %vm3600, %v3558, %v2044
    %v3624 = vsel %vm3600, %v3559, %v2046
    %v3625 = vsel %vm3600, %v3560, %v2048
    %v3626 = vsel %vm3600, %v3561, %v2050
    %v3627 = vsel %vm3600, %v3562, %v2052
    %v3628 = vsel %vm3600, %v3563, %v2054
    %v3629 = vsel %vm3600, %v3564, %v2056
    %v3630 = vsel %vm3600, %v3565, %v2058
    %v3631 = vsel %vm3600, %v3566, %v2060
    %v3632 = vsel %vm3600, %v3567, %v2062
    %v3633 = vsel %vm3600, %v3568, %v2064
    %v3634 = vsel %vm3600, %v3569, %v2066
    %v3635 = vsel %vm3600, %v3570, %v2068
    %v3636 = vsel %vm3600, %v3571, %v2070
    %v3637 = vsel %vm3600, %v3572, %v2072
    %v3638 = vsel %vm3600, %v3573, %v2074
    %v3639 = vsel %vm3600, %v3574, %v2076
    %v3640 = vsel %vm3600, %v3575, %v2078
    %v3641 = vsel %vm3600, %v3576, %v2080
    %v3642 = vsel %vm3600, %v3577, %v2082
    %v3643 = vsel %vm3600, %v3578, %v2084
    %v3644 = vsel %vm3600, %v3579, %v2086
    %v3645 = vsel %vm3600, %v3580, %v2088
    %v3646 = vsel %vm3600, %v3581, %v2090
    %v3647 = vsel %vm3600, %v3582, %v2092
    %v3648 = vsel %vm3600, %v3583, %v2094
    %v3649 = vsel %vm3600, %v3584, %v2096
    %v3650 = vsel %vm3600, %v3585, %v2098
    %v3651 = vsel %vm3600, %v3586, %v2100
    %v3652 = vsel %vm3600, %v3587, %v2102
    %v3653 = vsel %vm3600, %v3588, %v2104
    %v3654 = vsel %vm3600, %v3589, %v2106
    %v3655 = vsel %vm3600, %v3590, %v2108
    %v3656 = vsel %vm3600, %v3591, %v2110
    %v3657 = vsel %vm3600, %v3592, %v2112
    %v3658 = vsel %vm3600, %v3593, %v2114
    %v3659 = vsel %vm3600, %v3594, %v2116
    %v3660 = vsel %vm3600, %v3595, %v2118
    %v3661 = vsel %vm3600, %v3596, %v2120
    %v3662 = vsel %vm3600, %v3597, %v2122
    %v3663 = vsel %vm3600, %v3598, %v2124
    %v3664 = vsel %vm3600, %v3599, %v2126
    %vm3665 = vcmask 130048
    %v3666 = vsel %vm3665, %v3601, %v2256
    %v3667 = vsel %vm3665, %v3602, %v2258
    %v3668 = vsel %vm3665, %v3603, %v2260
    %v3669 = vsel %vm3665, %v3604, %v2262
    %v3670 = vsel %vm3665, %v3605, %v2264
    %v3671 = vsel %vm3665, %v3606, %v2266
    %v3672 = vsel %vm3665, %v3607, %v2268
    %v3673 = vsel %vm3665, %v3608, %v2270
    %v3674 = vsel %vm3665, %v3609, %v2272
    %v3675 = vsel %vm3665, %v3610, %v2274
    %v3676 = vsel %vm3665, %v3611, %v2276
    %v3677 = vsel %vm3665, %v3612, %v2278
    %v3678 = vsel %vm3665, %v3613, %v2280
    %v3679 = vsel %vm3665, %v3614, %v2282
    %v3680 = vsel %vm3665, %v3615, %v2284
    %v3681 = vsel %vm3665, %v3616, %v2286
    %v3682 = vsel %vm3665, %v3617, %v2288
    %v3683 = vsel %vm3665, %v3618, %v2290
    %v3684 = vsel %vm3665, %v3619, %v2292
    %v3685 = vsel %vm3665, %v3620, %v2294
    %v3686 = vsel %vm3665, %v3621, %v2296
    %v3687 = vsel %vm3665, %v3622, %v2298
    %v3688 = vsel %vm3665, %v3623, %v2300
    %v3689 = vsel %vm3665, %v3624, %v2302
    %v3690 = vsel %vm3665, %v3625, %v2304
    %v3691 = vsel %vm3665, %v3626, %v2306
    %v3692 = vsel %vm3665, %v3627, %v2308
    %v3693 = vsel %vm3665, %v3628, %v2310
    %v3694 = vsel %vm3665, %v3629, %v2312
    %v3695 = vsel %vm3665, %v3630, %v2314
    %v3696 = vsel %vm3665, %v3631, %v2316
    %v3697 = vsel %vm3665, %v3632, %v2318
    %v3698 = vsel %vm3665, %v3633, %v2320
    %v3699 = vsel %vm3665, %v3634, %v2322
    %v3700 = vsel %vm3665, %v3635, %v2324
    %v3701 = vsel %vm3665, %v3636, %v2326
    %v3702 = vsel %vm3665, %v3637, %v2328
    %v3703 = vsel %vm3665, %v3638, %v2330
    %v3704 = vsel %vm3665, %v3639, %v2332
    %v3705 = vsel %vm3665, %v3640, %v2334
    %v3706 = vsel %vm3665, %v3641, %v2336
    %v3707 = vsel %vm3665, %v3642, %v2338
    %v3708 = vsel %vm3665, %v3643, %v2340
    %v3709 = vsel %vm3665, %v3644, %v2342
    %v3710 = vsel %vm3665, %v3645, %v2344
    %v3711 = vsel %vm3665, %v3646, %v2346
    %v3712 = vsel %vm3665, %v3647, %v2348
    %v3713 = vsel %vm3665, %v3648, %v2350
    %v3714 = vsel %vm3665, %v3649, %v2352
    %v3715 = vsel %vm3665, %v3650, %v2354
    %v3716 = vsel %vm3665, %v3651, %v2356
    %v3717 = vsel %vm3665, %v3652, %v2358
    %v3718 = vsel %vm3665, %v3653, %v2360
    %v3719 = vsel %vm3665, %v3654, %v2362
    %v3720 = vsel %vm3665, %v3655, %v2364
    %v3721 = vsel %vm3665, %v3656, %v2366
    %v3722 = vsel %vm3665, %v3657, %v2368
    %v3723 = vsel %vm3665, %v3658, %v2370
    %v3724 = vsel %vm3665, %v3659, %v2372
    %v3725 = vsel %vm3665, %v3660, %v2374
    %v3726 = vsel %vm3665, %v3661, %v2376
    %v3727 = vsel %vm3665, %v3662, %v2378
    %v3728 = vsel %vm3665, %v3663, %v2380
    %v3729 = vsel %vm3665, %v3664, %v2382
    %vm3730 = vcmask 162816
    %v3731 = vsel %vm3730, %v3666, %v2512
    %v3732 = vsel %vm3730, %v3667, %v2514
    %v3733 = vsel %vm3730, %v3668, %v2516
    %v3734 = vsel %vm3730, %v3669, %v2518
    %v3735 = vsel %vm3730, %v3670, %v2520
    %v3736 = vsel %vm3730, %v3671, %v2522
    %v3737 = vsel %vm3730, %v3672, %v2524
    %v3738 = vsel %vm3730, %v3673, %v2526
    %v3739 = vsel %vm3730, %v3674, %v2528
    %v3740 = vsel %vm3730, %v3675, %v2530
    %v3741 = vsel %vm3730, %v3676, %v2532
    %v3742 = vsel %vm3730, %v3677, %v2534
    %v3743 = vsel %vm3730, %v3678, %v2536
    %v3744 = vsel %vm3730, %v3679, %v2538
    %v3745 = vsel %vm3730, %v3680, %v2540
    %v3746 = vsel %vm3730, %v3681, %v2542
    %v3747 = vsel %vm3730, %v3682, %v2544
    %v3748 = vsel %vm3730, %v3683, %v2546
    %v3749 = vsel %vm3730, %v3684, %v2548
    %v3750 = vsel %vm3730, %v3685, %v2550
    %v3751 = vsel %vm3730, %v3686, %v2552
    %v3752 = vsel %vm3730, %v3687, %v2554
    %v3753 = vsel %vm3730, %v3688, %v2556
    %v3754 = vsel %vm3730, %v3689, %v2558
    %v3755 = vsel %vm3730, %v3690, %v2560
    %v3756 = vsel %vm3730, %v3691, %v2562
    %v3757 = vsel %vm3730, %v3692, %v2564
    %v3758 = vsel %vm3730, %v3693, %v2566
    %v3759 = vsel %vm3730, %v3694, %v2568
    %v3760 = vsel %vm3730, %v3695, %v2570
    %v3761 = vsel %vm3730, %v3696, %v2572
    %v3762 = vsel %vm3730, %v3697, %v2574
    %v3763 = vsel %vm3730, %v3698, %v2576
    %v3764 = vsel %vm3730, %v3699, %v2578
    %v3765 = vsel %vm3730, %v3700, %v2580
    %v3766 = vsel %vm3730, %v3701, %v2582
    %v3767 = vsel %vm3730, %v3702, %v2584
    %v3768 = vsel %vm3730, %v3703, %v2586
    %v3769 = vsel %vm3730, %v3704, %v2588
    %v3770 = vsel %vm3730, %v3705, %v2590
    %v3771 = vsel %vm3730, %v3706, %v2592
    %v3772 = vsel %vm3730, %v3707, %v2594
    %v3773 = vsel %vm3730, %v3708, %v2596
    %v3774 = vsel %vm3730, %v3709, %v2598
    %v3775 = vsel %vm3730, %v3710, %v2600
    %v3776 = vsel %vm3730, %v3711, %v2602
    %v3777 = vsel %vm3730, %v3712, %v2604
    %v3778 = vsel %vm3730, %v3713, %v2606
    %v3779 = vsel %vm3730, %v3714, %v2608
    %v3780 = vsel %vm3730, %v3715, %v2610
    %v3781 = vsel %vm3730, %v3716, %v2612
    %v3782 = vsel %vm3730, %v3717, %v2614
    %v3783 = vsel %vm3730, %v3718, %v2616
    %v3784 = vsel %vm3730, %v3719, %v2618
    %v3785 = vsel %vm3730, %v3720, %v2620
    %v3786 = vsel %vm3730, %v3721, %v2622
    %v3787 = vsel %vm3730, %v3722, %v2624
    %v3788 = vsel %vm3730, %v3723, %v2626
    %v3789 = vsel %vm3730, %v3724, %v2628
    %v3790 = vsel %vm3730, %v3725, %v2630
    %v3791 = vsel %vm3730, %v3726, %v2632
    %v3792 = vsel %vm3730, %v3727, %v2634
    %v3793 = vsel %vm3730, %v3728, %v2636
    %v3794 = vsel %vm3730, %v3729, %v2638
    %vm3795 = vcmask 195584
    %v3796 = vsel %vm3795, %v3731, %v2768
    %v3797 = vsel %vm3795, %v3732, %v2770
    %v3798 = vsel %vm3795, %v3733, %v2772
    %v3799 = vsel %vm3795, %v3734, %v2774
    %v3800 = vsel %vm3795, %v3735, %v2776
    %v3801 = vsel %vm3795, %v3736, %v2778
    %v3802 = vsel %vm3795, %v3737, %v2780
    %v3803 = vsel %vm3795, %v3738, %v2782
    %v3804 = vsel %vm3795, %v3739, %v2784
    %v3805 = vsel %vm3795, %v3740, %v2786
    %v3806 = vsel %vm3795, %v3741, %v2788
    %v3807 = vsel %vm3795, %v3742, %v2790
    %v3808 = vsel %vm3795, %v3743, %v2792
    %v3809 = vsel %vm3795, %v3744, %v2794
    %v3810 = vsel %vm3795, %v3745, %v2796
    %v3811 = vsel %vm3795, %v3746, %v2798
    %v3812 = vsel %vm3795, %v3747, %v2800
    %v3813 = vsel %vm3795, %v3748, %v2802
    %v3814 = vsel %vm3795, %v3749, %v2804
    %v3815 = vsel %vm3795, %v3750, %v2806
    %v3816 = vsel %vm3795, %v3751, %v2808
    %v3817 = vsel %vm3795, %v3752, %v2810
    %v3818 = vsel %vm3795, %v3753, %v2812
    %v3819 = vsel %vm3795, %v3754, %v2814
    %v3820 = vsel %vm3795, %v3755, %v2816
    %v3821 = vsel %vm3795, %v3756, %v2818
    %v3822 = vsel %vm3795, %v3757, %v2820
    %v3823 = vsel %vm3795, %v3758, %v2822
    %v3824 = vsel %vm3795, %v3759, %v2824
    %v3825 = vsel %vm3795, %v3760, %v2826
    %v3826 = vsel %vm3795, %v3761, %v2828
    %v3827 = vsel %vm3795, %v3762, %v2830
    %v3828 = vsel %vm3795, %v3763, %v2832
    %v3829 = vsel %vm3795, %v3764, %v2834
    %v3830 = vsel %vm3795, %v3765, %v2836
    %v3831 = vsel %vm3795, %v3766, %v2838
    %v3832 = vsel %vm3795, %v3767, %v2840
    %v3833 = vsel %vm3795, %v3768, %v2842
    %v3834 = vsel %vm3795, %v3769, %v2844
    %v3835 = vsel %vm3795, %v3770, %v2846
    %v3836 = vsel %vm3795, %v3771, %v2848
    %v3837 = vsel %vm3795, %v3772, %v2850
    %v3838 = vsel %vm3795, %v3773, %v2852
    %v3839 = vsel %vm3795, %v3774, %v2854
    %v3840 = vsel %vm3795, %v3775, %v2856
    %v3841 = vsel %vm3795, %v3776, %v2858
    %v3842 = vsel %vm3795, %v3777, %v2860
    %v3843 = vsel %vm3795, %v3778, %v2862
    %v3844 = vsel %vm3795, %v3779, %v2864
    %v3845 = vsel %vm3795, %v3780, %v2866
    %v3846 = vsel %vm3795, %v3781, %v2868
    %v3847 = vsel %vm3795, %v3782, %v2870
    %v3848 = vsel %vm3795, %v3783, %v2872
    %v3849 = vsel %vm3795, %v3784, %v2874
    %v3850 = vsel %vm3795, %v3785, %v2876
    %v3851 = vsel %vm3795, %v3786, %v2878
    %v3852 = vsel %vm3795, %v3787, %v2880
    %v3853 = vsel %vm3795, %v3788, %v2882
    %v3854 = vsel %vm3795, %v3789, %v2884
    %v3855 = vsel %vm3795, %v3790, %v2886
    %v3856 = vsel %vm3795, %v3791, %v2888
    %v3857 = vsel %vm3795, %v3792, %v2890
    %v3858 = vsel %vm3795, %v3793, %v2892
    %v3859 = vsel %vm3795, %v3794, %v2894
    %vm3860 = vcmask 228352
    %v3861 = vsel %vm3860, %v3796, %v3024
    %v3862 = vsel %vm3860, %v3797, %v3026
    %v3863 = vsel %vm3860, %v3798, %v3028
    %v3864 = vsel %vm3860, %v3799, %v3030
    %v3865 = vsel %vm3860, %v3800, %v3032
    %v3866 = vsel %vm3860, %v3801, %v3034
    %v3867 = vsel %vm3860, %v3802, %v3036
    %v3868 = vsel %vm3860, %v3803, %v3038
    %v3869 = vsel %vm3860, %v3804, %v3040
    %v3870 = vsel %vm3860, %v3805, %v3042
    %v3871 = vsel %vm3860, %v3806, %v3044
    %v3872 = vsel %vm3860, %v3807, %v3046
    %v3873 = vsel %vm3860, %v3808, %v3048
    %v3874 = vsel %vm3860, %v3809, %v3050
    %v3875 = vsel %vm3860, %v3810, %v3052
    %v3876 = vsel %vm3860, %v3811, %v3054
    %v3877 = vsel %vm3860, %v3812, %v3056
    %v3878 = vsel %vm3860, %v3813, %v3058
    %v3879 = vsel %vm3860, %v3814, %v3060
    %v3880 = vsel %vm3860, %v3815, %v3062
    %v3881 = vsel %vm3860, %v3816, %v3064
    %v3882 = vsel %vm3860, %v3817, %v3066
    %v3883 = vsel %vm3860, %v3818, %v3068
    %v3884 = vsel %vm3860, %v3819, %v3070
    %v3885 = vsel %vm3860, %v3820, %v3072
    %v3886 = vsel %vm3860, %v3821, %v3074
    %v3887 = vsel %vm3860, %v3822, %v3076
    %v3888 = vsel %vm3860, %v3823, %v3078
    %v3889 = vsel %vm3860, %v3824, %v3080
    %v3890 = vsel %vm3860, %v3825, %v3082
    %v3891 = vsel %vm3860, %v3826, %v3084
    %v3892 = vsel %vm3860, %v3827, %v3086
    %v3893 = vsel %vm3860, %v3828, %v3088
    %v3894 = vsel %vm3860, %v3829, %v3090
    %v3895 = vsel %vm3860, %v3830, %v3092
    %v3896 = vsel %vm3860, %v3831, %v3094
    %v3897 = vsel %vm3860, %v3832, %v3096
    %v3898 = vsel %vm3860, %v3833, %v3098
    %v3899 = vsel %vm3860, %v3834, %v3100
    %v3900 = vsel %vm3860, %v3835, %v3102
    %v3901 = vsel %vm3860, %v3836, %v3104
    %v3902 = vsel %vm3860, %v3837, %v3106
    %v3903 = vsel %vm3860, %v3838, %v3108
    %v3904 = vsel %vm3860, %v3839, %v3110
    %v3905 = vsel %vm3860, %v3840, %v3112
    %v3906 = vsel %vm3860, %v3841, %v3114
    %v3907 = vsel %vm3860, %v3842, %v3116
    %v3908 = vsel %vm3860, %v3843, %v3118
    %v3909 = vsel %vm3860, %v3844, %v3120
    %v3910 = vsel %vm3860, %v3845, %v3122
    %v3911 = vsel %vm3860, %v3846, %v3124
    %v3912 = vsel %vm3860, %v3847, %v3126
    %v3913 = vsel %vm3860, %v3848, %v3128
    %v3914 = vsel %vm3860, %v3849, %v3130
    %v3915 = vsel %vm3860, %v3850, %v3132
    %v3916 = vsel %vm3860, %v3851, %v3134
    %v3917 = vsel %vm3860, %v3852, %v3136
    %v3918 = vsel %vm3860, %v3853, %v3138
    %v3919 = vsel %vm3860, %v3854, %v3140
    %v3920 = vsel %vm3860, %v3855, %v3142
    %v3921 = vsel %vm3860, %v3856, %v3144
    %v3922 = vsel %vm3860, %v3857, %v3146
    %v3923 = vsel %vm3860, %v3858, %v3148
    %v3924 = vsel %vm3860, %v3859, %v3150
    %vm3925 = vcmask 261120
    %v3926 = vsel %vm3925, %v3861, %v3280
    %v3927 = vsel %vm3925, %v3862, %v3282
    %v3928 = vsel %vm3925, %v3863, %v3284
    %v3929 = vsel %vm3925, %v3864, %v3286
    %v3930 = vsel %vm3925, %v3865, %v3288
    %v3931 = vsel %vm3925, %v3866, %v3290
    %v3932 = vsel %vm3925, %v3867, %v3292
    %v3933 = vsel %vm3925, %v3868, %v3294
    %v3934 = vsel %vm3925, %v3869, %v3296
    %v3935 = vsel %vm3925, %v3870, %v3298
    %v3936 = vsel %vm3925, %v3871, %v3300
    %v3937 = vsel %vm3925, %v3872, %v3302
    %v3938 = vsel %vm3925, %v3873, %v3304
    %v3939 = vsel %vm3925, %v3874, %v3306
    %v3940 = vsel %vm3925, %v3875, %v3308
    %v3941 = vsel %vm3925, %v3876, %v3310
    %v3942 = vsel %vm3925, %v3877, %v3312
    %v3943 = vsel %vm3925, %v3878, %v3314
    %v3944 = vsel %vm3925, %v3879, %v3316
    %v3945 = vsel %vm3925, %v3880, %v3318
    %v3946 = vsel %vm3925, %v3881, %v3320
    %v3947 = vsel %vm3925, %v3882, %v3322
    %v3948 = vsel %vm3925, %v3883, %v3324
    %v3949 = vsel %vm3925, %v3884, %v3326
    %v3950 = vsel %vm3925, %v3885, %v3328
    %v3951 = vsel %vm3925, %v3886, %v3330
    %v3952 = vsel %vm3925, %v3887, %v3332
    %v3953 = vsel %vm3925, %v3888, %v3334
    %v3954 = vsel %vm3925, %v3889, %v3336
    %v3955 = vsel %vm3925, %v3890, %v3338
    %v3956 = vsel %vm3925, %v3891, %v3340
    %v3957 = vsel %vm3925, %v3892, %v3342
    %v3958 = vsel %vm3925, %v3893, %v3344
    %v3959 = vsel %vm3925, %v3894, %v3346
    %v3960 = vsel %vm3925, %v3895, %v3348
    %v3961 = vsel %vm3925, %v3896, %v3350
    %v3962 = vsel %vm3925, %v3897, %v3352
    %v3963 = vsel %vm3925, %v3898, %v3354
    %v3964 = vsel %vm3925, %v3899, %v3356
    %v3965 = vsel %vm3925, %v3900, %v3358
    %v3966 = vsel %vm3925, %v3901, %v3360
    %v3967 = vsel %vm3925, %v3902, %v3362
    %v3968 = vsel %vm3925, %v3903, %v3364
    %v3969 = vsel %vm3925, %v3904, %v3366
    %v3970 = vsel %vm3925, %v3905, %v3368
    %v3971 = vsel %vm3925, %v3906, %v3370
    %v3972 = vsel %vm3925, %v3907, %v3372
    %v3973 = vsel %vm3925, %v3908, %v3374
    %v3974 = vsel %vm3925, %v3909, %v3376
    %v3975 = vsel %vm3925, %v3910, %v3378
    %v3976 = vsel %vm3925, %v3911, %v3380
    %v3977 = vsel %vm3925, %v3912, %v3382
    %v3978 = vsel %vm3925, %v3913, %v3384
    %v3979 = vsel %vm3925, %v3914, %v3386
    %v3980 = vsel %vm3925, %v3915, %v3388
    %v3981 = vsel %vm3925, %v3916, %v3390
    %v3982 = vsel %vm3925, %v3917, %v3392
    %v3983 = vsel %vm3925, %v3918, %v3394
    %v3984 = vsel %vm3925, %v3919, %v3396
    %v3985 = vsel %vm3925, %v3920, %v3398
    %v3986 = vsel %vm3925, %v3921, %v3400
    %v3987 = vsel %vm3925, %v3922, %v3402
    %v3988 = vsel %vm3925, %v3923, %v3404
    %v3989 = vsel %vm3925, %v3924, %v3406
    %v3990 = vld [vmem:[#allocation4] sm:$0xff]
    %v3991 = vld [vmem:[#allocation4 + $0x8] sm:$0xff]
    %v3992 = vld [vmem:[#allocation4 + $0x10] sm:$0xff]
    %v3993 = vld [vmem:[#allocation4 + $0x18] sm:$0xff]
    %v3994 = vld [vmem:[#allocation4 + $0x20] sm:$0xf]
    %v3995 = vld [vmem:[%s2] sm:$0x1]
    %v3997 = vlaneseq
    %v3998 = vshrl.u32 %v3997, 7
    %v3999 = vsub.s32 0, %v3998
    %v4000 = vrot.slane %v3995, %v3999
    %vm4002 = vcmask 293888
    %v4004 = vsel %vm4002, %v3926, 0
    %v4007 = vsel %vm4002, %v3927, 0
    %v4010 = vsel %vm4002, %v3928, 0
    %v4013 = vsel %vm4002, %v3929, 0
    %v4016 = vsel %vm4002, %v3930, 0
    %v4019 = vsel %vm4002, %v3931, 0
    %v4022 = vsel %vm4002, %v3932, 0
    %v4025 = vsel %vm4002, %v3933, 0
    %v4028 = vsel %vm4002, %v3934, 0
    %v4031 = vsel %vm4002, %v3935, 0
    %v4034 = vsel %vm4002, %v3936, 0
    %v4037 = vsel %vm4002, %v3937, 0
    %v4040 = vsel %vm4002, %v3938, 0
    %v4043 = vsel %vm4002, %v3939, 0
    %v4046 = vsel %vm4002, %v3940, 0
    %v4049 = vsel %vm4002, %v3941, 0
    %v4052 = vsel %vm4002, %v3942, 0
    %v4055 = vsel %vm4002, %v3943, 0
    %v4058 = vsel %vm4002, %v3944, 0
    %v4061 = vsel %vm4002, %v3945, 0
    %v4064 = vsel %vm4002, %v3946, 0
    %v4067 = vsel %vm4002, %v3947, 0
    %v4070 = vsel %vm4002, %v3948, 0
    %v4073 = vsel %vm4002, %v3949, 0
    %v4076 = vsel %vm4002, %v3950, 0
    %v4079 = vsel %vm4002, %v3951, 0
    %v4082 = vsel %vm4002, %v3952, 0
    %v4085 = vsel %vm4002, %v3953, 0
    %v4088 = vsel %vm4002, %v3954, 0
    %v4091 = vsel %vm4002, %v3955, 0
    %v4094 = vsel %vm4002, %v3956, 0
    %v4097 = vsel %vm4002, %v3957, 0
    %v4100 = vsel %vm4002, %v3958, 0
    %v4103 = vsel %vm4002, %v3959, 0
    %v4106 = vsel %vm4002, %v3960, 0
    %v4109 = vsel %vm4002, %v3961, 0
    %v4112 = vsel %vm4002, %v3962, 0
    %v4115 = vsel %vm4002, %v3963, 0
    %v4118 = vsel %vm4002, %v3964, 0
    %v4121 = vsel %vm4002, %v3965, 0
    %v4124 = vsel %vm4002, %v3966, 0
    %v4127 = vsel %vm4002, %v3967, 0
    %v4130 = vsel %vm4002, %v3968, 0
    %v4133 = vsel %vm4002, %v3969, 0
    %v4136 = vsel %vm4002, %v3970, 0
    %v4139 = vsel %vm4002, %v3971, 0
    %v4142 = vsel %vm4002, %v3972, 0
    %v4145 = vsel %vm4002, %v3973, 0
    %v4148 = vsel %vm4002, %v3974, 0
    %v4151 = vsel %vm4002, %v3975, 0
    %v4154 = vsel %vm4002, %v3976, 0
    %v4157 = vsel %vm4002, %v3977, 0
    %v4160 = vsel %vm4002, %v3978, 0
    %v4163 = vsel %vm4002, %v3979, 0
    %v4166 = vsel %vm4002, %v3980, 0
    %v4169 = vsel %vm4002, %v3981, 0
    %v4172 = vsel %vm4002, %v3982, 0
    %v4175 = vsel %vm4002, %v3983, 0
    %v4178 = vsel %vm4002, %v3984, 0
    %v4181 = vsel %vm4002, %v3985, 0
    %v4184 = vsel %vm4002, %v3986, 0
    %v4187 = vsel %vm4002, %v3987, 0
    %v4190 = vsel %vm4002, %v3988, 0
    %v4193 = vsel %vm4002, %v3989, 0
    %vm4195 = vcmask 1043456
    %v4197 = vsel %vm4195, %v3994, 0
    %4199 = vmatprep.subr.mxu0 0.0
    %4200 = vmatpush1.msra.mxu0 0.0
    %4201 = vmatprep.subr.mxu0 0.0
    %4202 = vmatpush1.msra.mxu0 0.0
    %4203 = vmatprep.subr.mxu0 0.0
    %4204 = vmatpush1.msra.mxu0 0.0
    %4205 = vmatprep.subr.mxu0 0.0
    %4206 = vmatpush1.msra.mxu0 0.0
    %4207 = vmatprep.subr.mxu0 0.0
    %4208 = vmatpush1.msra.mxu0 0.0
    %4209 = vmatprep.subr.mxu0 0.0
    %4210 = vmatpush1.msra.mxu0 0.0
    %4211 = vmatprep.subr.mxu0 0.0
    %4212 = vmatpush1.msra.mxu0 0.0
    %4213 = vmatprep.subr.mxu0 0.0
    %4214 = vmatpush1.msra.mxu0 0.0
    %4215 = vmatprep.subr.mxu0 0.0
    %4216 = vmatpush1.msra.mxu0 0.0
    %4217 = vmatprep.subr.mxu0 0.0
    %4218 = vmatpush1.msra.mxu0 0.0
    %4219 = vmatprep.subr.mxu0 0.0
    %4220 = vmatpush1.msra.mxu0 0.0
    %4221 = vmatprep.subr.mxu0 0.0
    %4222 = vmatpush1.msra.mxu0 %v4197
    %4223 = vmatprep.subr.mxu0 0.0
    %4224 = vmatpush1.msra.mxu0 %v3993
    %4225 = vmatprep.subr.mxu0 0.0
    %4226 = vmatpush1.msra.mxu0 %v3992
    %4227 = vmatprep.subr.mxu0 0.0
    %4228 = vmatpush1.msra.mxu0 %v3991
    %4229 = vmatprep.subr.mxu0 0.0
    %4230 = vmatpush1.msra.mxu0 %v3990
    %4231 = vmatprep.subr.mxu0 0.0
    %4232 = vmatpush2.msra.mxu0 0.0
    %4233 = vmatprep.subr.mxu0 0.0
    %4234 = vmatpush2.msra.mxu0 0.0
    %4235 = vmatprep.subr.mxu0 0.0
    %4236 = vmatpush2.msra.mxu0 0.0
    %4237 = vmatprep.subr.mxu0 0.0
    %4238 = vmatpush2.msra.mxu0 0.0
    %4239 = vmatprep.subr.mxu0 0.0
    %4240 = vmatpush2.msra.mxu0 0.0
    %4241 = vmatprep.subr.mxu0 0.0
    %4242 = vmatpush2.msra.mxu0 0.0
    %4243 = vmatprep.subr.mxu0 0.0
    %4244 = vmatpush2.msra.mxu0 0.0
    %4245 = vmatprep.subr.mxu0 0.0
    %4246 = vmatpush2.msra.mxu0 0.0
    %4247 = vmatprep.subr.mxu0 0.0
    %4248 = vmatpush2.msra.mxu0 0.0
    %4249 = vmatprep.subr.mxu0 0.0
    %4250 = vmatpush2.msra.mxu0 0.0
    %4251 = vmatprep.subr.mxu0 0.0
    %4252 = vmatpush2.msra.mxu0 0.0
    %4253 = vmatprep.subr.mxu0 0.0
    %4254 = vmatpush2.msra.mxu0 0.0
    %4255 = vmatprep.subr.mxu0 0.0
    %4256 = vmatpush2.msra.mxu0 0.0
    %4257 = vmatprep.subr.mxu0 0.0
    %4258 = vmatpush2.msra.mxu0 0.0
    %4259 = vmatprep.subr.mxu0 0.0
    %4260 = vmatpush2.msra.mxu0 0.0
    %4261 = vmatprep.subr.mxu0 0.0
    %4262 = vmatpush2.msra.mxu0 0.0
    %4263 = vmatprep.mubr.f32.mxu0 0.0
    %4264 = vmatmul.mubr.f32.gmra.mxu0 %v4004
    %v4265 = vpop.f32.mrf.mxu0
    %v4266 = vadd.f32 %v4000, %v4265
    %v4267 = vpop.f32.mrf.mxu0
    %4268 = vmatprep.mubr.f32.mxu0 0.0
    %4269 = vmatmul.mubr.f32.gmra.mxu0 %v4007
    %v4270 = vpop.f32.mrf.mxu0
    %v4271 = vadd.f32 %v4000, %v4270
    %v4272 = vpop.f32.mrf.mxu0
    %4273 = vmatprep.mubr.f32.mxu0 0.0
    %4274 = vmatmul.mubr.f32.gmra.mxu0 %v4010
    %v4275 = vpop.f32.mrf.mxu0
    %v4276 = vadd.f32 %v4000, %v4275
    %v4277 = vpop.f32.mrf.mxu0
    %4278 = vmatprep.mubr.f32.mxu0 0.0
    %4279 = vmatmul.mubr.f32.gmra.mxu0 %v4013
    %v4280 = vpop.f32.mrf.mxu0
    %v4281 = vadd.f32 %v4000, %v4280
    %v4282 = vpop.f32.mrf.mxu0
    %4283 = vmatprep.mubr.f32.mxu0 0.0
    %4284 = vmatmul.mubr.f32.gmra.mxu0 %v4016
    %v4285 = vpop.f32.mrf.mxu0
    %v4286 = vadd.f32 %v4000, %v4285
    %v4287 = vpop.f32.mrf.mxu0
    %4288 = vmatprep.mubr.f32.mxu0 0.0
    %4289 = vmatmul.mubr.f32.gmra.mxu0 %v4019
    %v4290 = vpop.f32.mrf.mxu0
    %v4291 = vadd.f32 %v4000, %v4290
    %v4292 = vpop.f32.mrf.mxu0
    %4293 = vmatprep.mubr.f32.mxu0 0.0
    %4294 = vmatmul.mubr.f32.gmra.mxu0 %v4022
    %v4295 = vpop.f32.mrf.mxu0
    %v4296 = vadd.f32 %v4000, %v4295
    %v4297 = vpop.f32.mrf.mxu0
    %4298 = vmatprep.mubr.f32.mxu0 0.0
    %4299 = vmatmul.mubr.f32.gmra.mxu0 %v4025
    %v4300 = vpop.f32.mrf.mxu0
    %v4301 = vadd.f32 %v4000, %v4300
    %v4302 = vpop.f32.mrf.mxu0
    %4303 = vmatprep.mubr.f32.mxu0 0.0
    %4304 = vmatmul.mubr.f32.gmra.mxu0 %v4028
    %v4305 = vpop.f32.mrf.mxu0
    %v4306 = vadd.f32 %v4000, %v4305
    %v4307 = vpop.f32.mrf.mxu0
    %4308 = vmatprep.mubr.f32.mxu0 0.0
    %4309 = vmatmul.mubr.f32.gmra.mxu0 %v4031
    %v4310 = vpop.f32.mrf.mxu0
    %v4311 = vadd.f32 %v4000, %v4310
    %v4312 = vpop.f32.mrf.mxu0
    %4313 = vmatprep.mubr.f32.mxu0 0.0
    %4314 = vmatmul.mubr.f32.gmra.mxu0 %v4034
    %v4315 = vpop.f32.mrf.mxu0
    %v4316 = vadd.f32 %v4000, %v4315
    %v4317 = vpop.f32.mrf.mxu0
    %4318 = vmatprep.mubr.f32.mxu0 0.0
    %4319 = vmatmul.mubr.f32.gmra.mxu0 %v4037
    %v4320 = vpop.f32.mrf.mxu0
    %v4321 = vadd.f32 %v4000, %v4320
    %v4322 = vpop.f32.mrf.mxu0
    %4323 = vmatprep.mubr.f32.mxu0 0.0
    %4324 = vmatmul.mubr.f32.gmra.mxu0 %v4040
    %v4325 = vpop.f32.mrf.mxu0
    %v4326 = vadd.f32 %v4000, %v4325
    %v4327 = vpop.f32.mrf.mxu0
    %4328 = vmatprep.mubr.f32.mxu0 0.0
    %4329 = vmatmul.mubr.f32.gmra.mxu0 %v4043
    %v4330 = vpop.f32.mrf.mxu0
    %v4331 = vadd.f32 %v4000, %v4330
    %v4332 = vpop.f32.mrf.mxu0
    %4333 = vmatprep.mubr.f32.mxu0 0.0
    %4334 = vmatmul.mubr.f32.gmra.mxu0 %v4046
    %v4335 = vpop.f32.mrf.mxu0
    %v4336 = vadd.f32 %v4000, %v4335
    %v4337 = vpop.f32.mrf.mxu0
    %4338 = vmatprep.mubr.f32.mxu0 0.0
    %4339 = vmatmul.mubr.f32.gmra.mxu0 %v4049
    %v4340 = vpop.f32.mrf.mxu0
    %v4341 = vadd.f32 %v4000, %v4340
    %v4342 = vpop.f32.mrf.mxu0
    %4343 = vmatprep.mubr.f32.mxu0 0.0
    %4344 = vmatmul.mubr.f32.gmra.mxu0 %v4052
    %v4345 = vpop.f32.mrf.mxu0
    %v4346 = vadd.f32 %v4000, %v4345
    %v4347 = vpop.f32.mrf.mxu0
    %4348 = vmatprep.mubr.f32.mxu0 0.0
    %4349 = vmatmul.mubr.f32.gmra.mxu0 %v4055
    %v4350 = vpop.f32.mrf.mxu0
    %v4351 = vadd.f32 %v4000, %v4350
    %v4352 = vpop.f32.mrf.mxu0
    %4353 = vmatprep.mubr.f32.mxu0 0.0
    %4354 = vmatmul.mubr.f32.gmra.mxu0 %v4058
    %v4355 = vpop.f32.mrf.mxu0
    %v4356 = vadd.f32 %v4000, %v4355
    %v4357 = vpop.f32.mrf.mxu0
    %4358 = vmatprep.mubr.f32.mxu0 0.0
    %4359 = vmatmul.mubr.f32.gmra.mxu0 %v4061
    %v4360 = vpop.f32.mrf.mxu0
    %v4361 = vadd.f32 %v4000, %v4360
    %v4362 = vpop.f32.mrf.mxu0
    %4363 = vmatprep.mubr.f32.mxu0 0.0
    %4364 = vmatmul.mubr.f32.gmra.mxu0 %v4064
    %v4365 = vpop.f32.mrf.mxu0
    %v4366 = vadd.f32 %v4000, %v4365
    %v4367 = vpop.f32.mrf.mxu0
    %4368 = vmatprep.mubr.f32.mxu0 0.0
    %4369 = vmatmul.mubr.f32.gmra.mxu0 %v4067
    %v4370 = vpop.f32.mrf.mxu0
    %v4371 = vadd.f32 %v4000, %v4370
    %v4372 = vpop.f32.mrf.mxu0
    %4373 = vmatprep.mubr.f32.mxu0 0.0
    %4374 = vmatmul.mubr.f32.gmra.mxu0 %v4070
    %v4375 = vpop.f32.mrf.mxu0
    %v4376 = vadd.f32 %v4000, %v4375
    %v4377 = vpop.f32.mrf.mxu0
    %4378 = vmatprep.mubr.f32.mxu0 0.0
    %4379 = vmatmul.mubr.f32.gmra.mxu0 %v4073
    %v4380 = vpop.f32.mrf.mxu0
    %v4381 = vadd.f32 %v4000, %v4380
    %v4382 = vpop.f32.mrf.mxu0
    %4383 = vmatprep.mubr.f32.mxu0 0.0
    %4384 = vmatmul.mubr.f32.gmra.mxu0 %v4076
    %v4385 = vpop.f32.mrf.mxu0
    %v4386 = vadd.f32 %v4000, %v4385
    %v4387 = vpop.f32.mrf.mxu0
    %4388 = vmatprep.mubr.f32.mxu0 0.0
    %4389 = vmatmul.mubr.f32.gmra.mxu0 %v4079
    %v4390 = vpop.f32.mrf.mxu0
    %v4391 = vadd.f32 %v4000, %v4390
    %v4392 = vpop.f32.mrf.mxu0
    %4393 = vmatprep.mubr.f32.mxu0 0.0
    %4394 = vmatmul.mubr.f32.gmra.mxu0 %v4082
    %v4395 = vpop.f32.mrf.mxu0
    %v4396 = vadd.f32 %v4000, %v4395
    %v4397 = vpop.f32.mrf.mxu0
    %4398 = vmatprep.mubr.f32.mxu0 0.0
    %4399 = vmatmul.mubr.f32.gmra.mxu0 %v4085
    %v4400 = vpop.f32.mrf.mxu0
    %v4401 = vadd.f32 %v4000, %v4400
    %v4402 = vpop.f32.mrf.mxu0
    %4403 = vmatprep.mubr.f32.mxu0 0.0
    %4404 = vmatmul.mubr.f32.gmra.mxu0 %v4088
    %v4405 = vpop.f32.mrf.mxu0
    %v4406 = vadd.f32 %v4000, %v4405
    %v4407 = vpop.f32.mrf.mxu0
    %4408 = vmatprep.mubr.f32.mxu0 0.0
    %4409 = vmatmul.mubr.f32.gmra.mxu0 %v4091
    %v4410 = vpop.f32.mrf.mxu0
    %v4411 = vadd.f32 %v4000, %v4410
    %v4412 = vpop.f32.mrf.mxu0
    %4413 = vmatprep.mubr.f32.mxu0 0.0
    %4414 = vmatmul.mubr.f32.gmra.mxu0 %v4094
    %v4415 = vpop.f32.mrf.mxu0
    %v4416 = vadd.f32 %v4000, %v4415
    %v4417 = vpop.f32.mrf.mxu0
    %4418 = vmatprep.mubr.f32.mxu0 0.0
    %4419 = vmatmul.mubr.f32.gmra.mxu0 %v4097
    %v4420 = vpop.f32.mrf.mxu0
    %v4421 = vadd.f32 %v4000, %v4420
    %v4422 = vpop.f32.mrf.mxu0
    %4423 = vmatprep.mubr.f32.mxu0 0.0
    %4424 = vmatmul.mubr.f32.gmra.mxu0 %v4100
    %v4425 = vpop.f32.mrf.mxu0
    %v4426 = vadd.f32 %v4000, %v4425
    %v4427 = vpop.f32.mrf.mxu0
    %4428 = vmatprep.mubr.f32.mxu0 0.0
    %4429 = vmatmul.mubr.f32.gmra.mxu0 %v4103
    %v4430 = vpop.f32.mrf.mxu0
    %v4431 = vadd.f32 %v4000, %v4430
    %v4432 = vpop.f32.mrf.mxu0
    %4433 = vmatprep.mubr.f32.mxu0 0.0
    %4434 = vmatmul.mubr.f32.gmra.mxu0 %v4106
    %v4435 = vpop.f32.mrf.mxu0
    %v4436 = vadd.f32 %v4000, %v4435
    %v4437 = vpop.f32.mrf.mxu0
    %4438 = vmatprep.mubr.f32.mxu0 0.0
    %4439 = vmatmul.mubr.f32.gmra.mxu0 %v4109
    %v4440 = vpop.f32.mrf.mxu0
    %v4441 = vadd.f32 %v4000, %v4440
    %v4442 = vpop.f32.mrf.mxu0
    %4443 = vmatprep.mubr.f32.mxu0 0.0
    %4444 = vmatmul.mubr.f32.gmra.mxu0 %v4112
    %v4445 = vpop.f32.mrf.mxu0
    %v4446 = vadd.f32 %v4000, %v4445
    %v4447 = vpop.f32.mrf.mxu0
    %4448 = vmatprep.mubr.f32.mxu0 0.0
    %4449 = vmatmul.mubr.f32.gmra.mxu0 %v4115
    %v4450 = vpop.f32.mrf.mxu0
    %v4451 = vadd.f32 %v4000, %v4450
    %v4452 = vpop.f32.mrf.mxu0
    %4453 = vmatprep.mubr.f32.mxu0 0.0
    %4454 = vmatmul.mubr.f32.gmra.mxu0 %v4118
    %v4455 = vpop.f32.mrf.mxu0
    %v4456 = vadd.f32 %v4000, %v4455
    %v4457 = vpop.f32.mrf.mxu0
    %4458 = vmatprep.mubr.f32.mxu0 0.0
    %4459 = vmatmul.mubr.f32.gmra.mxu0 %v4121
    %v4460 = vpop.f32.mrf.mxu0
    %v4461 = vadd.f32 %v4000, %v4460
    %v4462 = vpop.f32.mrf.mxu0
    %4463 = vmatprep.mubr.f32.mxu0 0.0
    %4464 = vmatmul.mubr.f32.gmra.mxu0 %v4124
    %v4465 = vpop.f32.mrf.mxu0
    %v4466 = vadd.f32 %v4000, %v4465
    %v4467 = vpop.f32.mrf.mxu0
    %4468 = vmatprep.mubr.f32.mxu0 0.0
    %4469 = vmatmul.mubr.f32.gmra.mxu0 %v4127
    %v4470 = vpop.f32.mrf.mxu0
    %v4471 = vadd.f32 %v4000, %v4470
    %v4472 = vpop.f32.mrf.mxu0
    %4473 = vmatprep.mubr.f32.mxu0 0.0
    %4474 = vmatmul.mubr.f32.gmra.mxu0 %v4130
    %v4475 = vpop.f32.mrf.mxu0
    %v4476 = vadd.f32 %v4000, %v4475
    %v4477 = vpop.f32.mrf.mxu0
    %4478 = vmatprep.mubr.f32.mxu0 0.0
    %4479 = vmatmul.mubr.f32.gmra.mxu0 %v4133
    %v4480 = vpop.f32.mrf.mxu0
    %v4481 = vadd.f32 %v4000, %v4480
    %v4482 = vpop.f32.mrf.mxu0
    %4483 = vmatprep.mubr.f32.mxu0 0.0
    %4484 = vmatmul.mubr.f32.gmra.mxu0 %v4136
    %v4485 = vpop.f32.mrf.mxu0
    %v4486 = vadd.f32 %v4000, %v4485
    %v4487 = vpop.f32.mrf.mxu0
    %4488 = vmatprep.mubr.f32.mxu0 0.0
    %4489 = vmatmul.mubr.f32.gmra.mxu0 %v4139
    %v4490 = vpop.f32.mrf.mxu0
    %v4491 = vadd.f32 %v4000, %v4490
    %v4492 = vpop.f32.mrf.mxu0
    %4493 = vmatprep.mubr.f32.mxu0 0.0
    %4494 = vmatmul.mubr.f32.gmra.mxu0 %v4142
    %v4495 = vpop.f32.mrf.mxu0
    %v4496 = vadd.f32 %v4000, %v4495
    %v4497 = vpop.f32.mrf.mxu0
    %4498 = vmatprep.mubr.f32.mxu0 0.0
    %4499 = vmatmul.mubr.f32.gmra.mxu0 %v4145
    %v4500 = vpop.f32.mrf.mxu0
    %v4501 = vadd.f32 %v4000, %v4500
    %v4502 = vpop.f32.mrf.mxu0
    %4503 = vmatprep.mubr.f32.mxu0 0.0
    %4504 = vmatmul.mubr.f32.gmra.mxu0 %v4148
    %v4505 = vpop.f32.mrf.mxu0
    %v4506 = vadd.f32 %v4000, %v4505
    %v4507 = vpop.f32.mrf.mxu0
    %4508 = vmatprep.mubr.f32.mxu0 0.0
    %4509 = vmatmul.mubr.f32.gmra.mxu0 %v4151
    %v4510 = vpop.f32.mrf.mxu0
    %v4511 = vadd.f32 %v4000, %v4510
    %v4512 = vpop.f32.mrf.mxu0
    %4513 = vmatprep.mubr.f32.mxu0 0.0
    %4514 = vmatmul.mubr.f32.gmra.mxu0 %v4154
    %v4515 = vpop.f32.mrf.mxu0
    %v4516 = vadd.f32 %v4000, %v4515
    %v4517 = vpop.f32.mrf.mxu0
    %4518 = vmatprep.mubr.f32.mxu0 0.0
    %4519 = vmatmul.mubr.f32.gmra.mxu0 %v4157
    %v4520 = vpop.f32.mrf.mxu0
    %v4521 = vadd.f32 %v4000, %v4520
    %v4522 = vpop.f32.mrf.mxu0
    %4523 = vmatprep.mubr.f32.mxu0 0.0
    %4524 = vmatmul.mubr.f32.gmra.mxu0 %v4160
    %v4525 = vpop.f32.mrf.mxu0
    %v4526 = vadd.f32 %v4000, %v4525
    %v4527 = vpop.f32.mrf.mxu0
    %4528 = vmatprep.mubr.f32.mxu0 0.0
    %4529 = vmatmul.mubr.f32.gmra.mxu0 %v4163
    %v4530 = vpop.f32.mrf.mxu0
    %v4531 = vadd.f32 %v4000, %v4530
    %v4532 = vpop.f32.mrf.mxu0
    %4533 = vmatprep.mubr.f32.mxu0 0.0
    %4534 = vmatmul.mubr.f32.gmra.mxu0 %v4166
    %v4535 = vpop.f32.mrf.mxu0
    %v4536 = vadd.f32 %v4000, %v4535
    %v4537 = vpop.f32.mrf.mxu0
    %4538 = vmatprep.mubr.f32.mxu0 0.0
    %4539 = vmatmul.mubr.f32.gmra.mxu0 %v4169
    %v4540 = vpop.f32.mrf.mxu0
    %v4541 = vadd.f32 %v4000, %v4540
    %v4542 = vpop.f32.mrf.mxu0
    %4543 = vmatprep.mubr.f32.mxu0 0.0
    %4544 = vmatmul.mubr.f32.gmra.mxu0 %v4172
    %v4545 = vpop.f32.mrf.mxu0
    %v4546 = vadd.f32 %v4000, %v4545
    %v4547 = vpop.f32.mrf.mxu0
    %4548 = vmatprep.mubr.f32.mxu0 0.0
    %4549 = vmatmul.mubr.f32.gmra.mxu0 %v4175
    %v4550 = vpop.f32.mrf.mxu0
    %v4551 = vadd.f32 %v4000, %v4550
    %v4552 = vpop.f32.mrf.mxu0
    %4553 = vmatprep.mubr.f32.mxu0 0.0
    %4554 = vmatmul.mubr.f32.gmra.mxu0 %v4178
    %v4555 = vpop.f32.mrf.mxu0
    %v4556 = vadd.f32 %v4000, %v4555
    %v4557 = vpop.f32.mrf.mxu0
    %4558 = vmatprep.mubr.f32.mxu0 0.0
    %4559 = vmatmul.mubr.f32.gmra.mxu0 %v4181
    %v4560 = vpop.f32.mrf.mxu0
    %v4561 = vadd.f32 %v4000, %v4560
    %v4562 = vpop.f32.mrf.mxu0
    %4563 = vmatprep.mubr.f32.mxu0 0.0
    %4564 = vmatmul.mubr.f32.gmra.mxu0 %v4184
    %v4565 = vpop.f32.mrf.mxu0
    %v4566 = vadd.f32 %v4000, %v4565
    %v4567 = vpop.f32.mrf.mxu0
    %4568 = vmatprep.mubr.f32.mxu0 0.0
    %4569 = vmatmul.mubr.f32.gmra.mxu0 %v4187
    %v4570 = vpop.f32.mrf.mxu0
    %v4571 = vadd.f32 %v4000, %v4570
    %v4572 = vpop.f32.mrf.mxu0
    %4573 = vmatprep.mubr.f32.mxu0 0.0
    %4574 = vmatmul.mubr.f32.gmra.mxu0 %v4190
    %v4575 = vpop.f32.mrf.mxu0
    %v4576 = vadd.f32 %v4000, %v4575
    %v4577 = vpop.f32.mrf.mxu0
    %4578 = vmatprep.mubr.f32.mxu0 0.0
    %4579 = vmatmul.mubr.f32.gmra.mxu0 %v4193
    %v4580 = vpop.f32.mrf.mxu0
    %v4581 = vadd.f32 %v4000, %v4580
    %v4582 = vpop.f32.mrf.mxu0
    %4583 = vdwg.mxu0
    %v4584 = vadd.f32 %v4266, %v4271
    %v4585 = vadd.f32 %v4584, %v4276
    %v4586 = vadd.f32 %v4585, %v4281
    %v4587 = vadd.f32 %v4586, %v4286
    %v4588 = vadd.f32 %v4587, %v4291
    %v4589 = vadd.f32 %v4588, %v4296
    %v4590 = vadd.f32 %v4589, %v4301
    %v4591 = vadd.f32 %v4590, %v4306
    %v4592 = vadd.f32 %v4591, %v4311
    %v4593 = vadd.f32 %v4592, %v4316
    %v4594 = vadd.f32 %v4593, %v4321
    %v4595 = vadd.f32 %v4594, %v4326
    %v4596 = vadd.f32 %v4595, %v4331
    %v4597 = vadd.f32 %v4596, %v4336
    %v4598 = vadd.f32 %v4597, %v4341
    %v4599 = vadd.f32 %v4598, %v4346
    %v4600 = vadd.f32 %v4599, %v4351
    %v4601 = vadd.f32 %v4600, %v4356
    %v4602 = vadd.f32 %v4601, %v4361
    %v4603 = vadd.f32 %v4602, %v4366
    %v4604 = vadd.f32 %v4603, %v4371
    %v4605 = vadd.f32 %v4604, %v4376
    %v4606 = vadd.f32 %v4605, %v4381
    %v4607 = vadd.f32 %v4606, %v4386
    %v4608 = vadd.f32 %v4607, %v4391
    %v4609 = vadd.f32 %v4608, %v4396
    %v4610 = vadd.f32 %v4609, %v4401
    %v4611 = vadd.f32 %v4610, %v4406
    %v4612 = vadd.f32 %v4611, %v4411
    %v4613 = vadd.f32 %v4612, %v4416
    %v4614 = vadd.f32 %v4613, %v4421
    %v4615 = vadd.f32 %v4614, %v4426
    %v4616 = vadd.f32 %v4615, %v4431
    %v4617 = vadd.f32 %v4616, %v4436
    %v4618 = vadd.f32 %v4617, %v4441
    %v4619 = vadd.f32 %v4618, %v4446
    %v4620 = vadd.f32 %v4619, %v4451
    %v4621 = vadd.f32 %v4620, %v4456
    %v4622 = vadd.f32 %v4621, %v4461
    %v4623 = vadd.f32 %v4622, %v4466
    %v4624 = vadd.f32 %v4623, %v4471
    %v4625 = vadd.f32 %v4624, %v4476
    %v4626 = vadd.f32 %v4625, %v4481
    %v4627 = vadd.f32 %v4626, %v4486
    %v4628 = vadd.f32 %v4627, %v4491
    %v4629 = vadd.f32 %v4628, %v4496
    %v4630 = vadd.f32 %v4629, %v4501
    %v4631 = vadd.f32 %v4630, %v4506
    %v4632 = vadd.f32 %v4631, %v4511
    %v4633 = vadd.f32 %v4632, %v4516
    %v4634 = vadd.f32 %v4633, %v4521
    %v4635 = vadd.f32 %v4634, %v4526
    %v4636 = vadd.f32 %v4635, %v4531
    %v4637 = vadd.f32 %v4636, %v4536
    %v4638 = vadd.f32 %v4637, %v4541
    %v4639 = vadd.f32 %v4638, %v4546
    %v4640 = vadd.f32 %v4639, %v4551
    %v4641 = vadd.f32 %v4640, %v4556
    %v4642 = vadd.f32 %v4641, %v4561
    %v4643 = vadd.f32 %v4642, %v4566
    %v4644 = vadd.f32 %v4643, %v4571
    %v4645 = vadd.f32 %v4644, %v4576
    %v4646 = vadd.f32 %v4645, %v4581
    %v4647 = vrot.slane %v4646, 4
    %v4648 = vadd.f32 %v4646, %v4647
    %v4649 = vrot.slane %v4648, 2
    %v4650 = vadd.f32 %v4648, %v4649
    %v4651 = vrot.slane %v4650, 1
    %v4652 = vadd.f32 %v4650, %v4651
    %v4653 = vrcp.pop 512.0
    %v4654 = vmul.f32 %v4652, %v4653
    %v4655 = vsub.f32 %v4266, %v4654
    %v4656 = vsub.f32 %v4271, %v4654
    %v4657 = vsub.f32 %v4276, %v4654
    %v4658 = vsub.f32 %v4281, %v4654
    %v4659 = vsub.f32 %v4286, %v4654
    %v4660 = vsub.f32 %v4291, %v4654
    %v4661 = vsub.f32 %v4296, %v4654
    %v4662 = vsub.f32 %v4301, %v4654
    %v4663 = vsub.f32 %v4306, %v4654
    %v4664 = vsub.f32 %v4311, %v4654
    %v4665 = vsub.f32 %v4316, %v4654
    %v4666 = vsub.f32 %v4321, %v4654
    %v4667 = vsub.f32 %v4326, %v4654
    %v4668 = vsub.f32 %v4331, %v4654
    %v4669 = vsub.f32 %v4336, %v4654
    %v4670 = vsub.f32 %v4341, %v4654
    %v4671 = vsub.f32 %v4346, %v4654
    %v4672 = vsub.f32 %v4351, %v4654
    %v4673 = vsub.f32 %v4356, %v4654
    %v4674 = vsub.f32 %v4361, %v4654
    %v4675 = vsub.f32 %v4366, %v4654
    %v4676 = vsub.f32 %v4371, %v4654
    %v4677 = vsub.f32 %v4376, %v4654
    %v4678 = vsub.f32 %v4381, %v4654
    %v4679 = vsub.f32 %v4386, %v4654
    %v4680 = vsub.f32 %v4391, %v4654
    %v4681 = vsub.f32 %v4396, %v4654
    %v4682 = vsub.f32 %v4401, %v4654
    %v4683 = vsub.f32 %v4406, %v4654
    %v4684 = vsub.f32 %v4411, %v4654
    %v4685 = vsub.f32 %v4416, %v4654
    %v4686 = vsub.f32 %v4421, %v4654
    %v4687 = vsub.f32 %v4426, %v4654
    %v4688 = vsub.f32 %v4431, %v4654
    %v4689 = vsub.f32 %v4436, %v4654
    %v4690 = vsub.f32 %v4441, %v4654
    %v4691 = vsub.f32 %v4446, %v4654
    %v4692 = vsub.f32 %v4451, %v4654
    %v4693 = vsub.f32 %v4456, %v4654
    %v4694 = vsub.f32 %v4461, %v4654
    %v4695 = vsub.f32 %v4466, %v4654
    %v4696 = vsub.f32 %v4471, %v4654
    %v4697 = vsub.f32 %v4476, %v4654
    %v4698 = vsub.f32 %v4481, %v4654
    %v4699 = vsub.f32 %v4486, %v4654
    %v4700 = vsub.f32 %v4491, %v4654
    %v4701 = vsub.f32 %v4496, %v4654
    %v4702 = vsub.f32 %v4501, %v4654
    %v4703 = vsub.f32 %v4506, %v4654
    %v4704 = vsub.f32 %v4511, %v4654
    %v4705 = vsub.f32 %v4516, %v4654
    %v4706 = vsub.f32 %v4521, %v4654
    %v4707 = vsub.f32 %v4526, %v4654
    %v4708 = vsub.f32 %v4531, %v4654
    %v4709 = vsub.f32 %v4536, %v4654
    %v4710 = vsub.f32 %v4541, %v4654
    %v4711 = vsub.f32 %v4546, %v4654
    %v4712 = vsub.f32 %v4551, %v4654
    %v4713 = vsub.f32 %v4556, %v4654
    %v4714 = vsub.f32 %v4561, %v4654
    %v4715 = vsub.f32 %v4566, %v4654
    %v4716 = vsub.f32 %v4571, %v4654
    %v4717 = vsub.f32 %v4576, %v4654
    %v4718 = vsub.f32 %v4581, %v4654
    %v4719 = vmul.f32 %v4655, %v4655
    %v4720 = vmul.f32 %v4656, %v4656
    %v4721 = vmul.f32 %v4657, %v4657
    %v4722 = vmul.f32 %v4658, %v4658
    %v4723 = vmul.f32 %v4659, %v4659
    %v4724 = vmul.f32 %v4660, %v4660
    %v4725 = vmul.f32 %v4661, %v4661
    %v4726 = vmul.f32 %v4662, %v4662
    %v4727 = vmul.f32 %v4663, %v4663
    %v4728 = vmul.f32 %v4664, %v4664
    %v4729 = vmul.f32 %v4665, %v4665
    %v4730 = vmul.f32 %v4666, %v4666
    %v4731 = vmul.f32 %v4667, %v4667
    %v4732 = vmul.f32 %v4668, %v4668
    %v4733 = vmul.f32 %v4669, %v4669
    %v4734 = vmul.f32 %v4670, %v4670
    %v4735 = vmul.f32 %v4671, %v4671
    %v4736 = vmul.f32 %v4672, %v4672
    %v4737 = vmul.f32 %v4673, %v4673
    %v4738 = vmul.f32 %v4674, %v4674
    %v4739 = vmul.f32 %v4675, %v4675
    %v4740 = vmul.f32 %v4676, %v4676
    %v4741 = vmul.f32 %v4677, %v4677
    %v4742 = vmul.f32 %v4678, %v4678
    %v4743 = vmul.f32 %v4679, %v4679
    %v4744 = vmul.f32 %v4680, %v4680
    %v4745 = vmul.f32 %v4681, %v4681
    %v4746 = vmul.f32 %v4682, %v4682
    %v4747 = vmul.f32 %v4683, %v4683
    %v4748 = vmul.f32 %v4684, %v4684
    %v4749 = vmul.f32 %v4685, %v4685
    %v4750 = vmul.f32 %v4686, %v4686
    %v4751 = vmul.f32 %v4687, %v4687
    %v4752 = vmul.f32 %v4688, %v4688
    %v4753 = vmul.f32 %v4689, %v4689
    %v4754 = vmul.f32 %v4690, %v4690
    %v4755 = vmul.f32 %v4691, %v4691
    %v4756 = vmul.f32 %v4692, %v4692
    %v4757 = vmul.f32 %v4693, %v4693
    %v4758 = vmul.f32 %v4694, %v4694
    %v4759 = vmul.f32 %v4695, %v4695
    %v4760 = vmul.f32 %v4696, %v4696
    %v4761 = vmul.f32 %v4697, %v4697
    %v4762 = vmul.f32 %v4698, %v4698
    %v4763 = vmul.f32 %v4699, %v4699
    %v4764 = vmul.f32 %v4700, %v4700
    %v4765 = vmul.f32 %v4701, %v4701
    %v4766 = vmul.f32 %v4702, %v4702
    %v4767 = vmul.f32 %v4703, %v4703
    %v4768 = vmul.f32 %v4704, %v4704
    %v4769 = vmul.f32 %v4705, %v4705
    %v4770 = vmul.f32 %v4706, %v4706
    %v4771 = vmul.f32 %v4707, %v4707
    %v4772 = vmul.f32 %v4708, %v4708
    %v4773 = vmul.f32 %v4709, %v4709
    %v4774 = vmul.f32 %v4710, %v4710
    %v4775 = vmul.f32 %v4711, %v4711
    %v4776 = vmul.f32 %v4712, %v4712
    %v4777 = vmul.f32 %v4713, %v4713
    %v4778 = vmul.f32 %v4714, %v4714
    %v4779 = vmul.f32 %v4715, %v4715
    %v4780 = vmul.f32 %v4716, %v4716
    %v4781 = vmul.f32 %v4717, %v4717
    %v4782 = vmul.f32 %v4718, %v4718
    %v4783 = vadd.f32 %v4719, %v4720
    %v4784 = vadd.f32 %v4783, %v4721
    %v4785 = vadd.f32 %v4784, %v4722
    %v4786 = vadd.f32 %v4785, %v4723
    %v4787 = vadd.f32 %v4786, %v4724
    %v4788 = vadd.f32 %v4787, %v4725
    %v4789 = vadd.f32 %v4788, %v4726
    %v4790 = vadd.f32 %v4789, %v4727
    %v4791 = vadd.f32 %v4790, %v4728
    %v4792 = vadd.f32 %v4791, %v4729
    %v4793 = vadd.f32 %v4792, %v4730
    %v4794 = vadd.f32 %v4793, %v4731
    %v4795 = vadd.f32 %v4794, %v4732
    %v4796 = vadd.f32 %v4795, %v4733
    %v4797 = vadd.f32 %v4796, %v4734
    %v4798 = vadd.f32 %v4797, %v4735
    %v4799 = vadd.f32 %v4798, %v4736
    %v4800 = vadd.f32 %v4799, %v4737
    %v4801 = vadd.f32 %v4800, %v4738
    %v4802 = vadd.f32 %v4801, %v4739
    %v4803 = vadd.f32 %v4802, %v4740
    %v4804 = vadd.f32 %v4803, %v4741
    %v4805 = vadd.f32 %v4804, %v4742
    %v4806 = vadd.f32 %v4805, %v4743
    %v4807 = vadd.f32 %v4806, %v4744
    %v4808 = vadd.f32 %v4807, %v4745
    %v4809 = vadd.f32 %v4808, %v4746
    %v4810 = vadd.f32 %v4809, %v4747
    %v4811 = vadd.f32 %v4810, %v4748
    %v4812 = vadd.f32 %v4811, %v4749
    %v4813 = vadd.f32 %v4812, %v4750
    %v4814 = vadd.f32 %v4813, %v4751
    %v4815 = vadd.f32 %v4814, %v4752
    %v4816 = vadd.f32 %v4815, %v4753
    %v4817 = vadd.f32 %v4816, %v4754
    %v4818 = vadd.f32 %v4817, %v4755
    %v4819 = vadd.f32 %v4818, %v4756
    %v4820 = vadd.f32 %v4819, %v4757
    %v4821 = vadd.f32 %v4820, %v4758
    %v4822 = vadd.f32 %v4821, %v4759
    %v4823 = vadd.f32 %v4822, %v4760
    %v4824 = vadd.f32 %v4823, %v4761
    %v4825 = vadd.f32 %v4824, %v4762
    %v4826 = vadd.f32 %v4825, %v4763
    %v4827 = vadd.f32 %v4826, %v4764
    %v4828 = vadd.f32 %v4827, %v4765
    %v4829 = vadd.f32 %v4828, %v4766
    %v4830 = vadd.f32 %v4829, %v4767
    %v4831 = vadd.f32 %v4830, %v4768
    %v4832 = vadd.f32 %v4831, %v4769
    %v4833 = vadd.f32 %v4832, %v4770
    %v4834 = vadd.f32 %v4833, %v4771
    %v4835 = vadd.f32 %v4834, %v4772
    %v4836 = vadd.f32 %v4835, %v4773
    %v4837 = vadd.f32 %v4836, %v4774
    %v4838 = vadd.f32 %v4837, %v4775
    %v4839 = vadd.f32 %v4838, %v4776
    %v4840 = vadd.f32 %v4839, %v4777
    %v4841 = vadd.f32 %v4840, %v4778
    %v4842 = vadd.f32 %v4841, %v4779
    %v4843 = vadd.f32 %v4842, %v4780
    %v4844 = vadd.f32 %v4843, %v4781
    %v4845 = vadd.f32 %v4844, %v4782
    %v4846 = vrot.slane %v4845, 4
    %v4847 = vadd.f32 %v4845, %v4846
    %v4848 = vrot.slane %v4847, 2
    %v4849 = vadd.f32 %v4847, %v4848
    %v4850 = vrot.slane %v4849, 1
    %v4851 = vadd.f32 %v4849, %v4850
    %v4852 = vmul.f32 %v4851, %v4653
    %v4853 = vadd.f32 %v4852, 1e-05
    %v4854 = vrsqrt.pop %v4853
    %v4855 = vmul.f32 %v4655, %v4854
    %v4856 = vmul.f32 %v4656, %v4854
    %v4857 = vmul.f32 %v4657, %v4854
    %v4858 = vmul.f32 %v4658, %v4854
    %v4859 = vmul.f32 %v4659, %v4854
    %v4860 = vmul.f32 %v4660, %v4854
    %v4861 = vmul.f32 %v4661, %v4854
    %v4862 = vmul.f32 %v4662, %v4854
    %v4863 = vmul.f32 %v4663, %v4854
    %v4864 = vmul.f32 %v4664, %v4854
    %v4865 = vmul.f32 %v4665, %v4854
    %v4866 = vmul.f32 %v4666, %v4854
    %v4867 = vmul.f32 %v4667, %v4854
    %v4868 = vmul.f32 %v4668, %v4854
    %v4869 = vmul.f32 %v4669, %v4854
    %v4870 = vmul.f32 %v4670, %v4854
    %v4871 = vmul.f32 %v4671, %v4854
    %v4872 = vmul.f32 %v4672, %v4854
    %v4873 = vmul.f32 %v4673, %v4854
    %v4874 = vmul.f32 %v4674, %v4854
    %v4875 = vmul.f32 %v4675, %v4854
    %v4876 = vmul.f32 %v4676, %v4854
    %v4877 = vmul.f32 %v4677, %v4854
    %v4878 = vmul.f32 %v4678, %v4854
    %v4879 = vmul.f32 %v4679, %v4854
    %v4880 = vmul.f32 %v4680, %v4854
    %v4881 = vmul.f32 %v4681, %v4854
    %v4882 = vmul.f32 %v4682, %v4854
    %v4883 = vmul.f32 %v4683, %v4854
    %v4884 = vmul.f32 %v4684, %v4854
    %v4885 = vmul.f32 %v4685, %v4854
    %v4886 = vmul.f32 %v4686, %v4854
    %v4887 = vmul.f32 %v4687, %v4854
    %v4888 = vmul.f32 %v4688, %v4854
    %v4889 = vmul.f32 %v4689, %v4854
    %v4890 = vmul.f32 %v4690, %v4854
    %v4891 = vmul.f32 %v4691, %v4854
    %v4892 = vmul.f32 %v4692, %v4854
    %v4893 = vmul.f32 %v4693, %v4854
    %v4894 = vmul.f32 %v4694, %v4854
    %v4895 = vmul.f32 %v4695, %v4854
    %v4896 = vmul.f32 %v4696, %v4854
    %v4897 = vmul.f32 %v4697, %v4854
    %v4898 = vmul.f32 %v4698, %v4854
    %v4899 = vmul.f32 %v4699, %v4854
    %v4900 = vmul.f32 %v4700, %v4854
    %v4901 = vmul.f32 %v4701, %v4854
    %v4902 = vmul.f32 %v4702, %v4854
    %v4903 = vmul.f32 %v4703, %v4854
    %v4904 = vmul.f32 %v4704, %v4854
    %v4905 = vmul.f32 %v4705, %v4854
    %v4906 = vmul.f32 %v4706, %v4854
    %v4907 = vmul.f32 %v4707, %v4854
    %v4908 = vmul.f32 %v4708, %v4854
    %v4909 = vmul.f32 %v4709, %v4854
    %v4910 = vmul.f32 %v4710, %v4854
    %v4911 = vmul.f32 %v4711, %v4854
    %v4912 = vmul.f32 %v4712, %v4854
    %v4913 = vmul.f32 %v4713, %v4854
    %v4914 = vmul.f32 %v4714, %v4854
    %v4915 = vmul.f32 %v4715, %v4854
    %v4916 = vmul.f32 %v4716, %v4854
    %v4917 = vmul.f32 %v4717, %v4854
    %v4918 = vmul.f32 %v4718, %v4854
    %v4919 = vld [vmem:[%s3] sm:$0x1]
    %v4921 = vlaneseq
    %v4922 = vshrl.u32 %v4921, 7
    %v4923 = vsub.s32 0, %v4922
    %v4924 = vrot.slane %v4919, %v4923
    %v4926 = vmul.f32 %v4855, %v4924
    %v4927 = vmul.f32 %v4856, %v4924
    %v4928 = vmul.f32 %v4857, %v4924
    %v4929 = vmul.f32 %v4858, %v4924
    %v4930 = vmul.f32 %v4859, %v4924
    %v4931 = vmul.f32 %v4860, %v4924
    %v4932 = vmul.f32 %v4861, %v4924
    %v4933 = vmul.f32 %v4862, %v4924
    %v4934 = vmul.f32 %v4863, %v4924
    %v4935 = vmul.f32 %v4864, %v4924
    %v4936 = vmul.f32 %v4865, %v4924
    %v4937 = vmul.f32 %v4866, %v4924
    %v4938 = vmul.f32 %v4867, %v4924
    %v4939 = vmul.f32 %v4868, %v4924
    %v4940 = vmul.f32 %v4869, %v4924
    %v4941 = vmul.f32 %v4870, %v4924
    %v4942 = vmul.f32 %v4871, %v4924
    %v4943 = vmul.f32 %v4872, %v4924
    %v4944 = vmul.f32 %v4873, %v4924
    %v4945 = vmul.f32 %v4874, %v4924
    %v4946 = vmul.f32 %v4875, %v4924
    %v4947 = vmul.f32 %v4876, %v4924
    %v4948 = vmul.f32 %v4877, %v4924
    %v4949 = vmul.f32 %v4878, %v4924
    %v4950 = vmul.f32 %v4879, %v4924
    %v4951 = vmul.f32 %v4880, %v4924
    %v4952 = vmul.f32 %v4881, %v4924
    %v4953 = vmul.f32 %v4882, %v4924
    %v4954 = vmul.f32 %v4883, %v4924
    %v4955 = vmul.f32 %v4884, %v4924
    %v4956 = vmul.f32 %v4885, %v4924
    %v4957 = vmul.f32 %v4886, %v4924
    %v4958 = vmul.f32 %v4887, %v4924
    %v4959 = vmul.f32 %v4888, %v4924
    %v4960 = vmul.f32 %v4889, %v4924
    %v4961 = vmul.f32 %v4890, %v4924
    %v4962 = vmul.f32 %v4891, %v4924
    %v4963 = vmul.f32 %v4892, %v4924
    %v4964 = vmul.f32 %v4893, %v4924
    %v4965 = vmul.f32 %v4894, %v4924
    %v4966 = vmul.f32 %v4895, %v4924
    %v4967 = vmul.f32 %v4896, %v4924
    %v4968 = vmul.f32 %v4897, %v4924
    %v4969 = vmul.f32 %v4898, %v4924
    %v4970 = vmul.f32 %v4899, %v4924
    %v4971 = vmul.f32 %v4900, %v4924
    %v4972 = vmul.f32 %v4901, %v4924
    %v4973 = vmul.f32 %v4902, %v4924
    %v4974 = vmul.f32 %v4903, %v4924
    %v4975 = vmul.f32 %v4904, %v4924
    %v4976 = vmul.f32 %v4905, %v4924
    %v4977 = vmul.f32 %v4906, %v4924
    %v4978 = vmul.f32 %v4907, %v4924
    %v4979 = vmul.f32 %v4908, %v4924
    %v4980 = vmul.f32 %v4909, %v4924
    %v4981 = vmul.f32 %v4910, %v4924
    %v4982 = vmul.f32 %v4911, %v4924
    %v4983 = vmul.f32 %v4912, %v4924
    %v4984 = vmul.f32 %v4913, %v4924
    %v4985 = vmul.f32 %v4914, %v4924
    %v4986 = vmul.f32 %v4915, %v4924
    %v4987 = vmul.f32 %v4916, %v4924
    %v4988 = vmul.f32 %v4917, %v4924
    %v4989 = vmul.f32 %v4918, %v4924
    %v4990 = vld [vmem:[%s4] sm:$0x1]
    %v4992 = vlaneseq
    %v4993 = vshrl.u32 %v4992, 7
    %v4994 = vsub.s32 0, %v4993
    %v4995 = vrot.slane %v4990, %v4994
    %v4997 = vadd.f32 %v4926, %v4995
    %v4998 = vadd.f32 %v4927, %v4995
    %v4999 = vadd.f32 %v4928, %v4995
    %v5000 = vadd.f32 %v4929, %v4995
    %v5001 = vadd.f32 %v4930, %v4995
    %v5002 = vadd.f32 %v4931, %v4995
    %v5003 = vadd.f32 %v4932, %v4995
    %v5004 = vadd.f32 %v4933, %v4995
    %v5005 = vadd.f32 %v4934, %v4995
    %v5006 = vadd.f32 %v4935, %v4995
    %v5007 = vadd.f32 %v4936, %v4995
    %v5008 = vadd.f32 %v4937, %v4995
    %v5009 = vadd.f32 %v4938, %v4995
    %v5010 = vadd.f32 %v4939, %v4995
    %v5011 = vadd.f32 %v4940, %v4995
    %v5012 = vadd.f32 %v4941, %v4995
    %v5013 = vadd.f32 %v4942, %v4995
    %v5014 = vadd.f32 %v4943, %v4995
    %v5015 = vadd.f32 %v4944, %v4995
    %v5016 = vadd.f32 %v4945, %v4995
    %v5017 = vadd.f32 %v4946, %v4995
    %v5018 = vadd.f32 %v4947, %v4995
    %v5019 = vadd.f32 %v4948, %v4995
    %v5020 = vadd.f32 %v4949, %v4995
    %v5021 = vadd.f32 %v4950, %v4995
    %v5022 = vadd.f32 %v4951, %v4995
    %v5023 = vadd.f32 %v4952, %v4995
    %v5024 = vadd.f32 %v4953, %v4995
    %v5025 = vadd.f32 %v4954, %v4995
    %v5026 = vadd.f32 %v4955, %v4995
    %v5027 = vadd.f32 %v4956, %v4995
    %v5028 = vadd.f32 %v4957, %v4995
    %v5029 = vadd.f32 %v4958, %v4995
    %v5030 = vadd.f32 %v4959, %v4995
    %v5031 = vadd.f32 %v4960, %v4995
    %v5032 = vadd.f32 %v4961, %v4995
    %v5033 = vadd.f32 %v4962, %v4995
    %v5034 = vadd.f32 %v4963, %v4995
    %v5035 = vadd.f32 %v4964, %v4995
    %v5036 = vadd.f32 %v4965, %v4995
    %v5037 = vadd.f32 %v4966, %v4995
    %v5038 = vadd.f32 %v4967, %v4995
    %v5039 = vadd.f32 %v4968, %v4995
    %v5040 = vadd.f32 %v4969, %v4995
    %v5041 = vadd.f32 %v4970, %v4995
    %v5042 = vadd.f32 %v4971, %v4995
    %v5043 = vadd.f32 %v4972, %v4995
    %v5044 = vadd.f32 %v4973, %v4995
    %v5045 = vadd.f32 %v4974, %v4995
    %v5046 = vadd.f32 %v4975, %v4995
    %v5047 = vadd.f32 %v4976, %v4995
    %v5048 = vadd.f32 %v4977, %v4995
    %v5049 = vadd.f32 %v4978, %v4995
    %v5050 = vadd.f32 %v4979, %v4995
    %v5051 = vadd.f32 %v4980, %v4995
    %v5052 = vadd.f32 %v4981, %v4995
    %v5053 = vadd.f32 %v4982, %v4995
    %v5054 = vadd.f32 %v4983, %v4995
    %v5055 = vadd.f32 %v4984, %v4995
    %v5056 = vadd.f32 %v4985, %v4995
    %v5057 = vadd.f32 %v4986, %v4995
    %v5058 = vadd.f32 %v4987, %v4995
    %v5059 = vadd.f32 %v4988, %v4995
    %v5060 = vadd.f32 %v4989, %v4995
    %v5061 = vmax.f32 %v4997, 0.0
    %v5062 = vmax.f32 %v4998, 0.0
    %v5063 = vmax.f32 %v4999, 0.0
    %v5064 = vmax.f32 %v5000, 0.0
    %v5065 = vmax.f32 %v5001, 0.0
    %v5066 = vmax.f32 %v5002, 0.0
    %v5067 = vmax.f32 %v5003, 0.0
    %v5068 = vmax.f32 %v5004, 0.0
    %v5069 = vmax.f32 %v5005, 0.0
    %v5070 = vmax.f32 %v5006, 0.0
    %v5071 = vmax.f32 %v5007, 0.0
    %v5072 = vmax.f32 %v5008, 0.0
    %v5073 = vmax.f32 %v5009, 0.0
    %v5074 = vmax.f32 %v5010, 0.0
    %v5075 = vmax.f32 %v5011, 0.0
    %v5076 = vmax.f32 %v5012, 0.0
    %v5077 = vmax.f32 %v5013, 0.0
    %v5078 = vmax.f32 %v5014, 0.0
    %v5079 = vmax.f32 %v5015, 0.0
    %v5080 = vmax.f32 %v5016, 0.0
    %v5081 = vmax.f32 %v5017, 0.0
    %v5082 = vmax.f32 %v5018, 0.0
    %v5083 = vmax.f32 %v5019, 0.0
    %v5084 = vmax.f32 %v5020, 0.0
    %v5085 = vmax.f32 %v5021, 0.0
    %v5086 = vmax.f32 %v5022, 0.0
    %v5087 = vmax.f32 %v5023, 0.0
    %v5088 = vmax.f32 %v5024, 0.0
    %v5089 = vmax.f32 %v5025, 0.0
    %v5090 = vmax.f32 %v5026, 0.0
    %v5091 = vmax.f32 %v5027, 0.0
    %v5092 = vmax.f32 %v5028, 0.0
    %v5093 = vmax.f32 %v5029, 0.0
    %v5094 = vmax.f32 %v5030, 0.0
    %v5095 = vmax.f32 %v5031, 0.0
    %v5096 = vmax.f32 %v5032, 0.0
    %v5097 = vmax.f32 %v5033, 0.0
    %v5098 = vmax.f32 %v5034, 0.0
    %v5099 = vmax.f32 %v5035, 0.0
    %v5100 = vmax.f32 %v5036, 0.0
    %v5101 = vmax.f32 %v5037, 0.0
    %v5102 = vmax.f32 %v5038, 0.0
    %v5103 = vmax.f32 %v5039, 0.0
    %v5104 = vmax.f32 %v5040, 0.0
    %v5105 = vmax.f32 %v5041, 0.0
    %v5106 = vmax.f32 %v5042, 0.0
    %v5107 = vmax.f32 %v5043, 0.0
    %v5108 = vmax.f32 %v5044, 0.0
    %v5109 = vmax.f32 %v5045, 0.0
    %v5110 = vmax.f32 %v5046, 0.0
    %v5111 = vmax.f32 %v5047, 0.0
    %v5112 = vmax.f32 %v5048, 0.0
    %v5113 = vmax.f32 %v5049, 0.0
    %v5114 = vmax.f32 %v5050, 0.0
    %v5115 = vmax.f32 %v5051, 0.0
    %v5116 = vmax.f32 %v5052, 0.0
    %v5117 = vmax.f32 %v5053, 0.0
    %v5118 = vmax.f32 %v5054, 0.0
    %v5119 = vmax.f32 %v5055, 0.0
    %v5120 = vmax.f32 %v5056, 0.0
    %v5121 = vmax.f32 %v5057, 0.0
    %v5122 = vmax.f32 %v5058, 0.0
    %v5123 = vmax.f32 %v5059, 0.0
    %v5124 = vmax.f32 %v5060, 0.0
    %5125 = vst.msk [vmem:[#allocation3] sm:$0xff] %vm3535, 0.0
    %5126 = vst.msk [vmem:[#allocation3 + $0x8] sm:$0xff] %vm3535, 0.0
    %vm5127 = vcmask 58368
    %5128 = vst.msk [vmem:[#allocation3 + $0x10] sm:$0x3] %vm5127, 0.0
    %5129 = vst.msk [vmem:[#allocation3 + $0x18] sm:$0xff] %vm3535, 0.0
    %5130 = vst.msk [vmem:[#allocation3 + $0x20] sm:$0xff] %vm3535, 0.0
    %5131 = vst.msk [vmem:[#allocation3 + $0x28] sm:$0x3] %vm5127, 0.0
    %5132 = vst.msk [vmem:[#allocation3 + $0x30] sm:$0xff] %vm3535, 0.0
    %5133 = vst.msk [vmem:[#allocation3 + $0x38] sm:$0xff] %vm3535, 0.0
    %5134 = vst.msk [vmem:[#allocation3 + $0x40] sm:$0x3] %vm5127, 0.0
    %5135 = vst.msk [vmem:[#allocation3 + $0x48] sm:$0xff] %vm3535, 0.0
    %5136 = vst.msk [vmem:[#allocation3 + $0x50] sm:$0xff] %vm3535, 0.0
    %5137 = vst.msk [vmem:[#allocation3 + $0x58] sm:$0x3] %vm5127, 0.0
    %5138 = vst.msk [vmem:[#allocation3 + $0x60] sm:$0xff] %vm3535, 0.0
    %5139 = vst.msk [vmem:[#allocation3 + $0x68] sm:$0xff] %vm3535, 0.0
    %5140 = vst.msk [vmem:[#allocation3 + $0x70] sm:$0x3] %vm5127, 0.0
    %5141 = vst.msk [vmem:[#allocation3 + $0x78] sm:$0xff] %vm3535, 0.0
    %5142 = vst.msk [vmem:[#allocation3 + $0x80] sm:$0xff] %vm3535, 0.0
    %5143 = vst.msk [vmem:[#allocation3 + $0x88] sm:$0x3] %vm5127, 0.0
    %5144 = vst.msk [vmem:[#allocation3 + $0x90] sm:$0xff] %vm3535, 0.0
    %5145 = vst.msk [vmem:[#allocation3 + $0x98] sm:$0xff] %vm3535, 0.0
    %5146 = vst.msk [vmem:[#allocation3 + $0xa0] sm:$0x3] %vm5127, 0.0
    %5147 = vst.msk [vmem:[#allocation3 + $0xa8] sm:$0xff] %vm3535, 0.0
    %5148 = vst.msk [vmem:[#allocation3 + $0xb0] sm:$0xff] %vm3535, 0.0
    %5149 = vst.msk [vmem:[#allocation3 + $0xb8] sm:$0x3] %vm5127, 0.0
    %5150 = vst.msk [vmem:[#allocation3 + $0xc0] sm:$0xff] %vm3535, 0.0
    %5151 = vst.msk [vmem:[#allocation3 + $0xc8] sm:$0xff] %vm3535, 0.0
    %5152 = vst.msk [vmem:[#allocation3 + $0xd0] sm:$0x3] %vm5127, 0.0
    %5153 = vst.msk [vmem:[#allocation3 + $0xd8] sm:$0xff] %vm3535, 0.0
    %5154 = vst.msk [vmem:[#allocation3 + $0xe0] sm:$0xff] %vm3535, 0.0
    %5155 = vst.msk [vmem:[#allocation3 + $0xe8] sm:$0x3] %vm5127, 0.0
    %5156 = vst.msk [vmem:[#allocation3 + $0xf0] sm:$0xff] %vm3535, 0.0
    %5157 = vst.msk [vmem:[#allocation3 + $0xf8] sm:$0xff] %vm3535, 0.0
    %5158 = vst.msk [vmem:[#allocation3 + $0x100] sm:$0x3] %vm5127, 0.0
    %5159 = vst.msk [vmem:[#allocation3 + $0x108] sm:$0xff] %vm3535, 0.0
    %5160 = vst.msk [vmem:[#allocation3 + $0x110] sm:$0xff] %vm3535, 0.0
    %5161 = vst.msk [vmem:[#allocation3 + $0x118] sm:$0x3] %vm5127, 0.0
    %5162 = vst.msk [vmem:[#allocation3 + $0x120] sm:$0xff] %vm3535, 0.0
    %5163 = vst.msk [vmem:[#allocation3 + $0x128] sm:$0xff] %vm3535, 0.0
    %5164 = vst.msk [vmem:[#allocation3 + $0x130] sm:$0x3] %vm5127, 0.0
    %5165 = vst.msk [vmem:[#allocation3 + $0x138] sm:$0xff] %vm3535, 0.0
    %5166 = vst.msk [vmem:[#allocation3 + $0x140] sm:$0xff] %vm3535, 0.0
    %5167 = vst.msk [vmem:[#allocation3 + $0x148] sm:$0x3] %vm5127, 0.0
    %5168 = vst.msk [vmem:[#allocation3 + $0x150] sm:$0xff] %vm3535, 0.0
    %5169 = vst.msk [vmem:[#allocation3 + $0x158] sm:$0xff] %vm3535, 0.0
    %5170 = vst.msk [vmem:[#allocation3 + $0x160] sm:$0x3] %vm5127, 0.0
    %5171 = vst.msk [vmem:[#allocation3 + $0x168] sm:$0xff] %vm3535, 0.0
    %5172 = vst.msk [vmem:[#allocation3 + $0x170] sm:$0xff] %vm3535, 0.0
    %5173 = vst.msk [vmem:[#allocation3 + $0x178] sm:$0x3] %vm5127, 0.0
    %5174 = vst.msk [vmem:[#allocation3 + $0x180] sm:$0xff] %vm3535, 0.0
    %5175 = vst.msk [vmem:[#allocation3 + $0x188] sm:$0xff] %vm3535, 0.0
    %5176 = vst.msk [vmem:[#allocation3 + $0x190] sm:$0x3] %vm5127, 0.0
    %5177 = vst.msk [vmem:[#allocation3 + $0x198] sm:$0xff] %vm3535, 0.0
    %5178 = vst.msk [vmem:[#allocation3 + $0x1a0] sm:$0xff] %vm3535, 0.0
    %5179 = vst.msk [vmem:[#allocation3 + $0x1a8] sm:$0x3] %vm5127, 0.0
    %5180 = vst.msk [vmem:[#allocation3 + $0x1b0] sm:$0xff] %vm3535, 0.0
    %5181 = vst.msk [vmem:[#allocation3 + $0x1b8] sm:$0xff] %vm3535, 0.0
    %5182 = vst.msk [vmem:[#allocation3 + $0x1c0] sm:$0x3] %vm5127, 0.0
    %5183 = vst.msk [vmem:[#allocation3 + $0x1c8] sm:$0xff] %vm3535, 0.0
    %5184 = vst.msk [vmem:[#allocation3 + $0x1d0] sm:$0xff] %vm3535, 0.0
    %5185 = vst.msk [vmem:[#allocation3 + $0x1d8] sm:$0x3] %vm5127, 0.0
    %5186 = vst.msk [vmem:[#allocation3 + $0x1e0] sm:$0xff] %vm3535, 0.0
    %5187 = vst.msk [vmem:[#allocation3 + $0x1e8] sm:$0xff] %vm3535, 0.0
    %5188 = vst.msk [vmem:[#allocation3 + $0x1f0] sm:$0x3] %vm5127, 0.0
    %5189 = vst.msk [vmem:[#allocation3 + $0x1f8] sm:$0xff] %vm3535, 0.0
    %5190 = vst.msk [vmem:[#allocation3 + $0x200] sm:$0xff] %vm3535, 0.0
    %5191 = vst.msk [vmem:[#allocation3 + $0x208] sm:$0x3] %vm5127, 0.0
    %5192 = vst.msk [vmem:[#allocation3 + $0x210] sm:$0xff] %vm3535, 0.0
    %5193 = vst.msk [vmem:[#allocation3 + $0x218] sm:$0xff] %vm3535, 0.0
    %5194 = vst.msk [vmem:[#allocation3 + $0x220] sm:$0x3] %vm5127, 0.0
    %5195 = vst.msk [vmem:[#allocation3 + $0x228] sm:$0xff] %vm3535, 0.0
    %5196 = vst.msk [vmem:[#allocation3 + $0x230] sm:$0xff] %vm3535, 0.0
    %5197 = vst.msk [vmem:[#allocation3 + $0x238] sm:$0x3] %vm5127, 0.0
    %5198 = vst.msk [vmem:[#allocation3 + $0x240] sm:$0xff] %vm3535, 0.0
    %5199 = vst.msk [vmem:[#allocation3 + $0x248] sm:$0xff] %vm3535, 0.0
    %5200 = vst.msk [vmem:[#allocation3 + $0x250] sm:$0x3] %vm5127, 0.0
    %5201 = vst.msk [vmem:[#allocation3 + $0x258] sm:$0xff] %vm3535, 0.0
    %5202 = vst.msk [vmem:[#allocation3 + $0x260] sm:$0xff] %vm3535, 0.0
    %5203 = vst.msk [vmem:[#allocation3 + $0x268] sm:$0x3] %vm5127, 0.0
    %5204 = vst.msk [vmem:[#allocation3 + $0x270] sm:$0xff] %vm3535, 0.0
    %5205 = vst.msk [vmem:[#allocation3 + $0x278] sm:$0xff] %vm3535, 0.0
    %5206 = vst.msk [vmem:[#allocation3 + $0x280] sm:$0x3] %vm5127, 0.0
    %5207 = vst.msk [vmem:[#allocation3 + $0x288] sm:$0xff] %vm3535, 0.0
    %5208 = vst.msk [vmem:[#allocation3 + $0x290] sm:$0xff] %vm3535, 0.0
    %5209 = vst.msk [vmem:[#allocation3 + $0x298] sm:$0x3] %vm5127, 0.0
    %5210 = vst.msk [vmem:[#allocation3 + $0x2a0] sm:$0xff] %vm3535, 0.0
    %5211 = vst.msk [vmem:[#allocation3 + $0x2a8] sm:$0xff] %vm3535, 0.0
    %5212 = vst.msk [vmem:[#allocation3 + $0x2b0] sm:$0x3] %vm5127, 0.0
    %5213 = vst.msk [vmem:[#allocation3 + $0x2b8] sm:$0xff] %vm3535, 0.0
    %5214 = vst.msk [vmem:[#allocation3 + $0x2c0] sm:$0xff] %vm3535, 0.0
    %5215 = vst.msk [vmem:[#allocation3 + $0x2c8] sm:$0x3] %vm5127, 0.0
    %5216 = vst.msk [vmem:[#allocation3 + $0x2d0] sm:$0xff] %vm3535, 0.0
    %5217 = vst.msk [vmem:[#allocation3 + $0x2d8] sm:$0xff] %vm3535, 0.0
    %5218 = vst.msk [vmem:[#allocation3 + $0x2e0] sm:$0x3] %vm5127, 0.0
    %5219 = vst.msk [vmem:[#allocation3 + $0x2e8] sm:$0xff] %vm3535, 0.0
    %5220 = vst.msk [vmem:[#allocation3 + $0x2f0] sm:$0xff] %vm3535, 0.0
    %5221 = vst.msk [vmem:[#allocation3 + $0x2f8] sm:$0x3] %vm5127, 0.0
    %5222 = vst.msk [vmem:[#allocation3 + $0x300] sm:$0xff] %vm3535, 0.0
    %5223 = vst.msk [vmem:[#allocation3 + $0x308] sm:$0xff] %vm3535, 0.0
    %5224 = vst.msk [vmem:[#allocation3 + $0x310] sm:$0x3] %vm5127, 0.0
    %5225 = vst.msk [vmem:[#allocation3 + $0x318] sm:$0xff] %vm3535, 0.0
    %5226 = vst.msk [vmem:[#allocation3 + $0x320] sm:$0xff] %vm3535, 0.0
    %5227 = vst.msk [vmem:[#allocation3 + $0x328] sm:$0x3] %vm5127, 0.0
    %5228 = vst.msk [vmem:[#allocation3 + $0x330] sm:$0xff] %vm3535, 0.0
    %5229 = vst.msk [vmem:[#allocation3 + $0x338] sm:$0xff] %vm3535, 0.0
    %5230 = vst.msk [vmem:[#allocation3 + $0x340] sm:$0x3] %vm5127, 0.0
    %5231 = vst.msk [vmem:[#allocation3 + $0x348] sm:$0xff] %vm3535, 0.0
    %5232 = vst.msk [vmem:[#allocation3 + $0x350] sm:$0xff] %vm3535, 0.0
    %5233 = vst.msk [vmem:[#allocation3 + $0x358] sm:$0x3] %vm5127, 0.0
    %s5234 = scalar_lea.vmem [#allocation3], 24
    %5235 = vst.msk [vmem:[%s5234 + $0x1] sm:$0xff] %vm3535, %v5061
    %5236 = vst.msk [vmem:[%s5234 + $0x9] sm:$0xff] %vm3535, %v5062
    %5237 = vst.msk [vmem:[%s5234 + $0x19] sm:$0xff] %vm3535, %v5063
    %5238 = vst.msk [vmem:[%s5234 + $0x21] sm:$0xff] %vm3535, %v5064
    %5239 = vst.msk [vmem:[%s5234 + $0x31] sm:$0xff] %vm3535, %v5065
    %5240 = vst.msk [vmem:[%s5234 + $0x39] sm:$0xff] %vm3535, %v5066
    %5241 = vst.msk [vmem:[%s5234 + $0x49] sm:$0xff] %vm3535, %v5067
    %5242 = vst.msk [vmem:[%s5234 + $0x51] sm:$0xff] %vm3535, %v5068
    %5243 = vst.msk [vmem:[%s5234 + $0x61] sm:$0xff] %vm3535, %v5069
    %5244 = vst.msk [vmem:[%s5234 + $0x69] sm:$0xff] %vm3535, %v5070
    %5245 = vst.msk [vmem:[%s5234 + $0x79] sm:$0xff] %vm3535, %v5071
    %5246 = vst.msk [vmem:[%s5234 + $0x81] sm:$0xff] %vm3535, %v5072
    %5247 = vst.msk [vmem:[%s5234 + $0x91] sm:$0xff] %vm3535, %v5073
    %5248 = vst.msk [vmem:[%s5234 + $0x99] sm:$0xff] %vm3535, %v5074
    %5249 = vst.msk [vmem:[%s5234 + $0xa9] sm:$0xff] %vm3535, %v5075
    %5250 = vst.msk [vmem:[%s5234 + $0xb1] sm:$0xff] %vm3535, %v5076
    %5251 = vst.msk [vmem:[%s5234 + $0xc1] sm:$0xff] %vm3535, %v5077
    %5252 = vst.msk [vmem:[%s5234 + $0xc9] sm:$0xff] %vm3535, %v5078
    %5253 = vst.msk [vmem:[%s5234 + $0xd9] sm:$0xff] %vm3535, %v5079
    %5254 = vst.msk [vmem:[%s5234 + $0xe1] sm:$0xff] %vm3535, %v5080
    %5255 = vst.msk [vmem:[%s5234 + $0xf1] sm:$0xff] %vm3535, %v5081
    %5256 = vst.msk [vmem:[%s5234 + $0xf9] sm:$0xff] %vm3535, %v5082
    %5257 = vst.msk [vmem:[%s5234 + $0x109] sm:$0xff] %vm3535, %v5083
    %5258 = vst.msk [vmem:[%s5234 + $0x111] sm:$0xff] %vm3535, %v5084
    %5259 = vst.msk [vmem:[%s5234 + $0x121] sm:$0xff] %vm3535, %v5085
    %5260 = vst.msk [vmem:[%s5234 + $0x129] sm:$0xff] %vm3535, %v5086
    %5261 = vst.msk [vmem:[%s5234 + $0x139] sm:$0xff] %vm3535, %v5087
    %5262 = vst.msk [vmem:[%s5234 + $0x141] sm:$0xff] %vm3535, %v5088
    %5263 = vst.msk [vmem:[%s5234 + $0x151] sm:$0xff] %vm3535, %v5089
    %5264 = vst.msk [vmem:[%s5234 + $0x159] sm:$0xff] %vm3535, %v5090
    %5265 = vst.msk [vmem:[%s5234 + $0x169] sm:$0xff] %vm3535, %v5091
    %5266 = vst.msk [vmem:[%s5234 + $0x171] sm:$0xff] %vm3535, %v5092
    %5267 = vst.msk [vmem:[%s5234 + $0x1b1] sm:$0xff] %vm3535, %v5093
    %5268 = vst.msk [vmem:[%s5234 + $0x1b9] sm:$0xff] %vm3535, %v5094
    %5269 = vst.msk [vmem:[%s5234 + $0x1c9] sm:$0xff] %vm3535, %v5095
    %5270 = vst.msk [vmem:[%s5234 + $0x1d1] sm:$0xff] %vm3535, %v5096
    %5271 = vst.msk [vmem:[%s5234 + $0x1e1] sm:$0xff] %vm3535, %v5097
    %5272 = vst.msk [vmem:[%s5234 + $0x1e9] sm:$0xff] %vm3535, %v5098
    %5273 = vst.msk [vmem:[%s5234 + $0x1f9] sm:$0xff] %vm3535, %v5099
    %5274 = vst.msk [vmem:[%s5234 + $0x201] sm:$0xff] %vm3535, %v5100
    %5275 = vst.msk [vmem:[%s5234 + $0x211] sm:$0xff] %vm3535, %v5101
    %5276 = vst.msk [vmem:[%s5234 + $0x219] sm:$0xff] %vm3535, %v5102
    %5277 = vst.msk [vmem:[%s5234 + $0x229] sm:$0xff] %vm3535, %v5103
    %5278 = vst.msk [vmem:[%s5234 + $0x231] sm:$0xff] %vm3535, %v5104
    %5279 = vst.msk [vmem:[%s5234 + $0x241] sm:$0xff] %vm3535, %v5105
    %5280 = vst.msk [vmem:[%s5234 + $0x249] sm:$0xff] %vm3535, %v5106
    %5281 = vst.msk [vmem:[%s5234 + $0x259] sm:$0xff] %vm3535, %v5107
    %5282 = vst.msk [vmem:[%s5234 + $0x261] sm:$0xff] %vm3535, %v5108
    %5283 = vst.msk [vmem:[%s5234 + $0x271] sm:$0xff] %vm3535, %v5109
    %5284 = vst.msk [vmem:[%s5234 + $0x279] sm:$0xff] %vm3535, %v5110
    %5285 = vst.msk [vmem:[%s5234 + $0x289] sm:$0xff] %vm3535, %v5111
    %5286 = vst.msk [vmem:[%s5234 + $0x291] sm:$0xff] %vm3535, %v5112
    %5287 = vst.msk [vmem:[%s5234 + $0x2a1] sm:$0xff] %vm3535, %v5113
    %5288 = vst.msk [vmem:[%s5234 + $0x2a9] sm:$0xff] %vm3535, %v5114
    %5289 = vst.msk [vmem:[%s5234 + $0x2b9] sm:$0xff] %vm3535, %v5115
    %5290 = vst.msk [vmem:[%s5234 + $0x2c1] sm:$0xff] %vm3535, %v5116
    %5291 = vst.msk [vmem:[%s5234 + $0x2d1] sm:$0xff] %vm3535, %v5117
    %5292 = vst.msk [vmem:[%s5234 + $0x2d9] sm:$0xff] %vm3535, %v5118
    %5293 = vst.msk [vmem:[%s5234 + $0x2e9] sm:$0xff] %vm3535, %v5119
    %5294 = vst.msk [vmem:[%s5234 + $0x2f1] sm:$0xff] %vm3535, %v5120
    %5295 = vst.msk [vmem:[%s5234 + $0x301] sm:$0xff] %vm3535, %v5121
    %5296 = vst.msk [vmem:[%s5234 + $0x309] sm:$0xff] %vm3535, %v5122
    %5297 = vst.msk [vmem:[%s5234 + $0x319] sm:$0xff] %vm3535, %v5123
    %5298 = vst.msk [vmem:[%s5234 + $0x321] sm:$0xff] %vm3535, %v5124
    %v5299 = vld [vmem:[#allocation3] sm:$0xff]
    %v5300 = vld [vmem:[#allocation3 + $0x8] sm:$0xff]
    %v5301 = vld [vmem:[#allocation3 + $0x18] sm:$0xff]
    %v5302 = vld [vmem:[#allocation3 + $0x20] sm:$0xff]
    %v5303 = vld [vmem:[#allocation3 + $0x30] sm:$0xff]
    %v5304 = vld [vmem:[#allocation3 + $0x38] sm:$0xff]
    %v5305 = vld [vmem:[#allocation3 + $0x48] sm:$0xff]
    %v5306 = vld [vmem:[#allocation3 + $0x50] sm:$0xff]
    %v5307 = vld [vmem:[#allocation3 + $0x60] sm:$0xff]
    %v5308 = vld [vmem:[#allocation3 + $0x68] sm:$0xff]
    %v5309 = vld [vmem:[#allocation3 + $0x78] sm:$0xff]
    %v5310 = vld [vmem:[#allocation3 + $0x80] sm:$0xff]
    %v5311 = vld [vmem:[#allocation3 + $0x90] sm:$0xff]
    %v5312 = vld [vmem:[#allocation3 + $0x98] sm:$0xff]
    %v5313 = vld [vmem:[#allocation3 + $0xa8] sm:$0xff]
    %v5314 = vld [vmem:[#allocation3 + $0xb0] sm:$0xff]
    %v5315 = vld [vmem:[#allocation3 + $0xc0] sm:$0xff]
    %v5316 = vld [vmem:[#allocation3 + $0xc8] sm:$0xff]
    %v5317 = vld [vmem:[#allocation3 + $0xd8] sm:$0xff]
    %v5318 = vld [vmem:[#allocation3 + $0xe0] sm:$0xff]
    %v5319 = vld [vmem:[#allocation3 + $0xf0] sm:$0xff]
    %v5320 = vld [vmem:[#allocation3 + $0xf8] sm:$0xff]
    %v5321 = vld [vmem:[#allocation3 + $0x108] sm:$0xff]
    %v5322 = vld [vmem:[#allocation3 + $0x110] sm:$0xff]
    %v5323 = vld [vmem:[#allocation3 + $0x120] sm:$0xff]
    %v5324 = vld [vmem:[#allocation3 + $0x128] sm:$0xff]
    %v5325 = vld [vmem:[#allocation3 + $0x138] sm:$0xff]
    %v5326 = vld [vmem:[#allocation3 + $0x140] sm:$0xff]
    %v5327 = vld [vmem:[#allocation3 + $0x150] sm:$0xff]
    %v5328 = vld [vmem:[#allocation3 + $0x158] sm:$0xff]
    %v5329 = vld [vmem:[#allocation3 + $0x168] sm:$0xff]
    %v5330 = vld [vmem:[#allocation3 + $0x170] sm:$0xff]
    %v5331 = vld [vmem:[#allocation3 + $0x1b0] sm:$0xff]
    %v5332 = vld [vmem:[#allocation3 + $0x1b8] sm:$0xff]
    %v5333 = vld [vmem:[#allocation3 + $0x1c8] sm:$0xff]
    %v5334 = vld [vmem:[#allocation3 + $0x1d0] sm:$0xff]
    %v5335 = vld [vmem:[#allocation3 + $0x1e0] sm:$0xff]
    %v5336 = vld [vmem:[#allocation3 + $0x1e8] sm:$0xff]
    %v5337 = vld [vmem:[#allocation3 + $0x1f8] sm:$0xff]
    %v5338 = vld [vmem:[#allocation3 + $0x200] sm:$0xff]
    %v5339 = vld [vmem:[#allocation3 + $0x210] sm:$0xff]
    %v5340 = vld [vmem:[#allocation3 + $0x218] sm:$0xff]
    %v5341 = vld [vmem:[#allocation3 + $0x228] sm:$0xff]
    %v5342 = vld [vmem:[#allocation3 + $0x230] sm:$0xff]
    %v5343 = vld [vmem:[#allocation3 + $0x240] sm:$0xff]
    %v5344 = vld [vmem:[#allocation3 + $0x248] sm:$0xff]
    %v5345 = vld [vmem:[#allocation3 + $0x258] sm:$0xff]
    %v5346 = vld [vmem:[#allocation3 + $0x260] sm:$0xff]
    %v5347 = vld [vmem:[#allocation3 + $0x270] sm:$0xff]
    %v5348 = vld [vmem:[#allocation3 + $0x278] sm:$0xff]
    %v5349 = vld [vmem:[#allocation3 + $0x288] sm:$0xff]
    %v5350 = vld [vmem:[#allocation3 + $0x290] sm:$0xff]
    %v5351 = vld [vmem:[#allocation3 + $0x2a0] sm:$0xff]
    %v5352 = vld [vmem:[#allocation3 + $0x2a8] sm:$0xff]
    %v5353 = vld [vmem:[#allocation3 + $0x2b8] sm:$0xff]
    %v5354 = vld [vmem:[#allocation3 + $0x2c0] sm:$0xff]
    %v5355 = vld [vmem:[#allocation3 + $0x2d0] sm:$0xff]
    %v5356 = vld [vmem:[#allocation3 + $0x2d8] sm:$0xff]
    %v5357 = vld [vmem:[#allocation3 + $0x2e8] sm:$0xff]
    %v5358 = vld [vmem:[#allocation3 + $0x2f0] sm:$0xff]
    %v5359 = vld [vmem:[#allocation3 + $0x300] sm:$0xff]
    %v5360 = vld [vmem:[#allocation3 + $0x308] sm:$0xff]
    %v5361 = vld [vmem:[#allocation3 + $0x318] sm:$0xff]
    %v5362 = vld [vmem:[#allocation3 + $0x320] sm:$0xff]
    %v5363 = vld [vmem:[#allocation3 + $0x1] sm:$0xff]
    %v5364 = vld [vmem:[#allocation3 + $0x9] sm:$0xff]
    %v5365 = vld [vmem:[#allocation3 + $0x19] sm:$0xff]
    %v5366 = vld [vmem:[#allocation3 + $0x21] sm:$0xff]
    %v5367 = vld [vmem:[#allocation3 + $0x31] sm:$0xff]
    %v5368 = vld [vmem:[#allocation3 + $0x39] sm:$0xff]
    %v5369 = vld [vmem:[#allocation3 + $0x49] sm:$0xff]
    %v5370 = vld [vmem:[#allocation3 + $0x51] sm:$0xff]
    %v5371 = vld [vmem:[#allocation3 + $0x61] sm:$0xff]
    %v5372 = vld [vmem:[#allocation3 + $0x69] sm:$0xff]
    %v5373 = vld [vmem:[#allocation3 + $0x79] sm:$0xff]
    %v5374 = vld [vmem:[#allocation3 + $0x81] sm:$0xff]
    %v5375 = vld [vmem:[#allocation3 + $0x91] sm:$0xff]
    %v5376 = vld [vmem:[#allocation3 + $0x99] sm:$0xff]
    %v5377 = vld [vmem:[#allocation3 + $0xa9] sm:$0xff]
    %v5378 = vld [vmem:[#allocation3 + $0xb1] sm:$0xff]
    %v5379 = vld [vmem:[#allocation3 + $0xc1] sm:$0xff]
    %v5380 = vld [vmem:[#allocation3 + $0xc9] sm:$0xff]
    %v5381 = vld [vmem:[#allocation3 + $0xd9] sm:$0xff]
    %v5382 = vld [vmem:[#allocation3 + $0xe1] sm:$0xff]
    %v5383 = vld [vmem:[#allocation3 + $0xf1] sm:$0xff]
    %v5384 = vld [vmem:[#allocation3 + $0xf9] sm:$0xff]
    %v5385 = vld [vmem:[#allocation3 + $0x109] sm:$0xff]
    %v5386 = vld [vmem:[#allocation3 + $0x111] sm:$0xff]
    %v5387 = vld [vmem:[#allocation3 + $0x121] sm:$0xff]
    %v5388 = vld [vmem:[#allocation3 + $0x129] sm:$0xff]
    %v5389 = vld [vmem:[#allocation3 + $0x139] sm:$0xff]
    %v5390 = vld [vmem:[#allocation3 + $0x141] sm:$0xff]
    %v5391 = vld [vmem:[#allocation3 + $0x151] sm:$0xff]
    %v5392 = vld [vmem:[#allocation3 + $0x159] sm:$0xff]
    %v5393 = vld [vmem:[#allocation3 + $0x169] sm:$0xff]
    %v5394 = vld [vmem:[#allocation3 + $0x171] sm:$0xff]
    %v5395 = vld [vmem:[#allocation3 + $0x1b1] sm:$0xff]
    %v5396 = vld [vmem:[#allocation3 + $0x1b9] sm:$0xff]
    %v5397 = vld [vmem:[#allocation3 + $0x1c9] sm:$0xff]
    %v5398 = vld [vmem:[#allocation3 + $0x1d1] sm:$0xff]
    %v5399 = vld [vmem:[#allocation3 + $0x1e1] sm:$0xff]
    %v5400 = vld [vmem:[#allocation3 + $0x1e9] sm:$0xff]
    %v5401 = vld [vmem:[#allocation3 + $0x1f9] sm:$0xff]
    %v5402 = vld [vmem:[#allocation3 + $0x201] sm:$0xff]
    %v5403 = vld [vmem:[#allocation3 + $0x211] sm:$0xff]
    %v5404 = vld [vmem:[#allocation3 + $0x219] sm:$0xff]
    %v5405 = vld [vmem:[#allocation3 + $0x229] sm:$0xff]
    %v5406 = vld [vmem:[#allocation3 + $0x231] sm:$0xff]
    %v5407 = vld [vmem:[#allocation3 + $0x241] sm:$0xff]
    %v5408 = vld [vmem:[#allocation3 + $0x249] sm:$0xff]
    %v5409 = vld [vmem:[#allocation3 + $0x259] sm:$0xff]
    %v5410 = vld [vmem:[#allocation3 + $0x261] sm:$0xff]
    %v5411 = vld [vmem:[#allocation3 + $0x271] sm:$0xff]
    %v5412 = vld [vmem:[#allocation3 + $0x279] sm:$0xff]
    %v5413 = vld [vmem:[#allocation3 + $0x289] sm:$0xff]
    %v5414 = vld [vmem:[#allocation3 + $0x291] sm:$0xff]
    %v5415 = vld [vmem:[#allocation3 + $0x2a1] sm:$0xff]
    %v5416 = vld [vmem:[#allocation3 + $0x2a9] sm:$0xff]
    %v5417 = vld [vmem:[#allocation3 + $0x2b9] sm:$0xff]
    %v5418 = vld [vmem:[#allocation3 + $0x2c1] sm:$0xff]
    %v5419 = vld [vmem:[#allocation3 + $0x2d1] sm:$0xff]
    %v5420 = vld [vmem:[#allocation3 + $0x2d9] sm:$0xff]
    %v5421 = vld [vmem:[#allocation3 + $0x2e9] sm:$0xff]
    %v5422 = vld [vmem:[#allocation3 + $0x2f1] sm:$0xff]
    %v5423 = vld [vmem:[#allocation3 + $0x301] sm:$0xff]
    %v5424 = vld [vmem:[#allocation3 + $0x309] sm:$0xff]
    %v5425 = vld [vmem:[#allocation3 + $0x319] sm:$0xff]
    %v5426 = vld [vmem:[#allocation3 + $0x321] sm:$0xff]
    %v5427 = vld [vmem:[#allocation3 + $0x2] sm:$0xff]
    %v5428 = vld [vmem:[#allocation3 + $0xa] sm:$0xff]
    %v5429 = vld [vmem:[#allocation3 + $0x1a] sm:$0xff]
    %v5430 = vld [vmem:[#allocation3 + $0x22] sm:$0xff]
    %v5431 = vld [vmem:[#allocation3 + $0x32] sm:$0xff]
    %v5432 = vld [vmem:[#allocation3 + $0x3a] sm:$0xff]
    %v5433 = vld [vmem:[#allocation3 + $0x4a] sm:$0xff]
    %v5434 = vld [vmem:[#allocation3 + $0x52] sm:$0xff]
    %v5435 = vld [vmem:[#allocation3 + $0x62] sm:$0xff]
    %v5436 = vld [vmem:[#allocation3 + $0x6a] sm:$0xff]
    %v5437 = vld [vmem:[#allocation3 + $0x7a] sm:$0xff]
    %v5438 = vld [vmem:[#allocation3 + $0x82] sm:$0xff]
    %v5439 = vld [vmem:[#allocation3 + $0x92] sm:$0xff]
    %v5440 = vld [vmem:[#allocation3 + $0x9a] sm:$0xff]
    %v5441 = vld [vmem:[#allocation3 + $0xaa] sm:$0xff]
    %v5442 = vld [vmem:[#allocation3 + $0xb2] sm:$0xff]
    %v5443 = vld [vmem:[#allocation3 + $0xc2] sm:$0xff]
    %v5444 = vld [vmem:[#allocation3 + $0xca] sm:$0xff]
    %v5445 = vld [vmem:[#allocation3 + $0xda] sm:$0xff]
    %v5446 = vld [vmem:[#allocation3 + $0xe2] sm:$0xff]
    %v5447 = vld [vmem:[#allocation3 + $0xf2] sm:$0xff]
    %v5448 = vld [vmem:[#allocation3 + $0xfa] sm:$0xff]
    %v5449 = vld [vmem:[#allocation3 + $0x10a] sm:$0xff]
    %v5450 = vld [vmem:[#allocation3 + $0x112] sm:$0xff]
    %v5451 = vld [vmem:[#allocation3 + $0x122] sm:$0xff]
    %v5452 = vld [vmem:[#allocation3 + $0x12a] sm:$0xff]
    %v5453 = vld [vmem:[#allocation3 + $0x13a] sm:$0xff]
    %v5454 = vld [vmem:[#allocation3 + $0x142] sm:$0xff]
    %v5455 = vld [vmem:[#allocation3 + $0x152] sm:$0xff]
    %v5456 = vld [vmem:[#allocation3 + $0x15a] sm:$0xff]
    %v5457 = vld [vmem:[#allocation3 + $0x16a] sm:$0xff]
    %v5458 = vld [vmem:[#allocation3 + $0x172] sm:$0xff]
    %v5459 = vld [vmem:[#allocation3 + $0x1b2] sm:$0xff]
    %v5460 = vld [vmem:[#allocation3 + $0x1ba] sm:$0xff]
    %v5461 = vld [vmem:[#allocation3 + $0x1ca] sm:$0xff]
    %v5462 = vld [vmem:[#allocation3 + $0x1d2] sm:$0xff]
    %v5463 = vld [vmem:[#allocation3 + $0x1e2] sm:$0xff]
    %v5464 = vld [vmem:[#allocation3 + $0x1ea] sm:$0xff]
    %v5465 = vld [vmem:[#allocation3 + $0x1fa] sm:$0xff]
    %v5466 = vld [vmem:[#allocation3 + $0x202] sm:$0xff]
    %v5467 = vld [vmem:[#allocation3 + $0x212] sm:$0xff]
    %v5468 = vld [vmem:[#allocation3 + $0x21a] sm:$0xff]
    %v5469 = vld [vmem:[#allocation3 + $0x22a] sm:$0xff]
    %v5470 = vld [vmem:[#allocation3 + $0x232] sm:$0xff]
    %v5471 = vld [vmem:[#allocation3 + $0x242] sm:$0xff]
    %v5472 = vld [vmem:[#allocation3 + $0x24a] sm:$0xff]
    %v5473 = vld [vmem:[#allocation3 + $0x25a] sm:$0xff]
    %v5474 = vld [vmem:[#allocation3 + $0x262] sm:$0xff]
    %v5475 = vld [vmem:[#allocation3 + $0x272] sm:$0xff]
    %v5476 = vld [vmem:[#allocation3 + $0x27a] sm:$0xff]
    %v5477 = vld [vmem:[#allocation3 + $0x28a] sm:$0xff]
    %v5478 = vld [vmem:[#allocation3 + $0x292] sm:$0xff]
    %v5479 = vld [vmem:[#allocation3 + $0x2a2] sm:$0xff]
    %v5480 = vld [vmem:[#allocation3 + $0x2aa] sm:$0xff]
    %v5481 = vld [vmem:[#allocation3 + $0x2ba] sm:$0xff]
    %v5482 = vld [vmem:[#allocation3 + $0x2c2] sm:$0xff]
    %v5483 = vld [vmem:[#allocation3 + $0x2d2] sm:$0xff]
    %v5484 = vld [vmem:[#allocation3 + $0x2da] sm:$0xff]
    %v5485 = vld [vmem:[#allocation3 + $0x2ea] sm:$0xff]
    %v5486 = vld [vmem:[#allocation3 + $0x2f2] sm:$0xff]
    %v5487 = vld [vmem:[#allocation3 + $0x302] sm:$0xff]
    %v5488 = vld [vmem:[#allocation3 + $0x30a] sm:$0xff]
    %v5489 = vld [vmem:[#allocation3 + $0x31a] sm:$0xff]
    %v5490 = vld [vmem:[#allocation3 + $0x322] sm:$0xff]
    %v5491 = vld [vmem:[%s5234] sm:$0xff]
    %v5492 = vld [vmem:[%s5234 + $0x8] sm:$0xff]
    %v5493 = vld [vmem:[%s5234 + $0x18] sm:$0xff]
    %v5494 = vld [vmem:[%s5234 + $0x20] sm:$0xff]
    %v5495 = vld [vmem:[%s5234 + $0x30] sm:$0xff]
    %v5496 = vld [vmem:[%s5234 + $0x38] sm:$0xff]
    %v5497 = vld [vmem:[%s5234 + $0x48] sm:$0xff]
    %v5498 = vld [vmem:[%s5234 + $0x50] sm:$0xff]
    %v5499 = vld [vmem:[%s5234 + $0x60] sm:$0xff]
    %v5500 = vld [vmem:[%s5234 + $0x68] sm:$0xff]
    %v5501 = vld [vmem:[%s5234 + $0x78] sm:$0xff]
    %v5502 = vld [vmem:[%s5234 + $0x80] sm:$0xff]
    %v5503 = vld [vmem:[%s5234 + $0x90] sm:$0xff]
    %v5504 = vld [vmem:[%s5234 + $0x98] sm:$0xff]
    %v5505 = vld [vmem:[%s5234 + $0xa8] sm:$0xff]
    %v5506 = vld [vmem:[%s5234 + $0xb0] sm:$0xff]
    %v5507 = vld [vmem:[%s5234 + $0xc0] sm:$0xff]
    %v5508 = vld [vmem:[%s5234 + $0xc8] sm:$0xff]
    %v5509 = vld [vmem:[%s5234 + $0xd8] sm:$0xff]
    %v5510 = vld [vmem:[%s5234 + $0xe0] sm:$0xff]
    %v5511 = vld [vmem:[%s5234 + $0xf0] sm:$0xff]
    %v5512 = vld [vmem:[%s5234 + $0xf8] sm:$0xff]
    %v5513 = vld [vmem:[%s5234 + $0x108] sm:$0xff]
    %v5514 = vld [vmem:[%s5234 + $0x110] sm:$0xff]
    %v5515 = vld [vmem:[%s5234 + $0x120] sm:$0xff]
    %v5516 = vld [vmem:[%s5234 + $0x128] sm:$0xff]
    %v5517 = vld [vmem:[%s5234 + $0x138] sm:$0xff]
    %v5518 = vld [vmem:[%s5234 + $0x140] sm:$0xff]
    %v5519 = vld [vmem:[%s5234 + $0x150] sm:$0xff]
    %v5520 = vld [vmem:[%s5234 + $0x158] sm:$0xff]
    %v5521 = vld [vmem:[%s5234 + $0x168] sm:$0xff]
    %v5522 = vld [vmem:[%s5234 + $0x170] sm:$0xff]
    %v5523 = vld [vmem:[%s5234 + $0x1b0] sm:$0xff]
    %v5524 = vld [vmem:[%s5234 + $0x1b8] sm:$0xff]
    %v5525 = vld [vmem:[%s5234 + $0x1c8] sm:$0xff]
    %v5526 = vld [vmem:[%s5234 + $0x1d0] sm:$0xff]
    %v5527 = vld [vmem:[%s5234 + $0x1e0] sm:$0xff]
    %v5528 = vld [vmem:[%s5234 + $0x1e8] sm:$0xff]
    %v5529 = vld [vmem:[%s5234 + $0x1f8] sm:$0xff]
    %v5530 = vld [vmem:[%s5234 + $0x200] sm:$0xff]
    %v5531 = vld [vmem:[%s5234 + $0x210] sm:$0xff]
    %v5532 = vld [vmem:[%s5234 + $0x218] sm:$0xff]
    %v5533 = vld [vmem:[%s5234 + $0x228] sm:$0xff]
    %v5534 = vld [vmem:[%s5234 + $0x230] sm:$0xff]
    %v5535 = vld [vmem:[%s5234 + $0x240] sm:$0xff]
    %v5536 = vld [vmem:[%s5234 + $0x248] sm:$0xff]
    %v5537 = vld [vmem:[%s5234 + $0x258] sm:$0xff]
    %v5538 = vld [vmem:[%s5234 + $0x260] sm:$0xff]
    %v5539 = vld [vmem:[%s5234 + $0x270] sm:$0xff]
    %v5540 = vld [vmem:[%s5234 + $0x278] sm:$0xff]
    %v5541 = vld [vmem:[%s5234 + $0x288] sm:$0xff]
    %v5542 = vld [vmem:[%s5234 + $0x290] sm:$0xff]
    %v5543 = vld [vmem:[%s5234 + $0x2a0] sm:$0xff]
    %v5544 = vld [vmem:[%s5234 + $0x2a8] sm:$0xff]
    %v5545 = vld [vmem:[%s5234 + $0x2b8] sm:$0xff]
    %v5546 = vld [vmem:[%s5234 + $0x2c0] sm:$0xff]
    %v5547 = vld [vmem:[%s5234 + $0x2d0] sm:$0xff]
    %v5548 = vld [vmem:[%s5234 + $0x2d8] sm:$0xff]
    %v5549 = vld [vmem:[%s5234 + $0x2e8] sm:$0xff]
    %v5550 = vld [vmem:[%s5234 + $0x2f0] sm:$0xff]
    %v5551 = vld [vmem:[%s5234 + $0x300] sm:$0xff]
    %v5552 = vld [vmem:[%s5234 + $0x308] sm:$0xff]
    %v5553 = vld [vmem:[%s5234 + $0x318] sm:$0xff]
    %v5554 = vld [vmem:[%s5234 + $0x320] sm:$0xff]
    %v5555 = vld [vmem:[%s5234 + $0x1] sm:$0xff]
    %v5556 = vld [vmem:[%s5234 + $0x9] sm:$0xff]
    %v5557 = vld [vmem:[%s5234 + $0x19] sm:$0xff]
    %v5558 = vld [vmem:[%s5234 + $0x21] sm:$0xff]
    %v5559 = vld [vmem:[%s5234 + $0x31] sm:$0xff]
    %v5560 = vld [vmem:[%s5234 + $0x39] sm:$0xff]
    %v5561 = vld [vmem:[%s5234 + $0x49] sm:$0xff]
    %v5562 = vld [vmem:[%s5234 + $0x51] sm:$0xff]
    %v5563 = vld [vmem:[%s5234 + $0x61] sm:$0xff]
    %v5564 = vld [vmem:[%s5234 + $0x69] sm:$0xff]
    %v5565 = vld [vmem:[%s5234 + $0x79] sm:$0xff]
    %v5566 = vld [vmem:[%s5234 + $0x81] sm:$0xff]
    %v5567 = vld [vmem:[%s5234 + $0x91] sm:$0xff]
    %v5568 = vld [vmem:[%s5234 + $0x99] sm:$0xff]
    %v5569 = vld [vmem:[%s5234 + $0xa9] sm:$0xff]
    %v5570 = vld [vmem:[%s5234 + $0xb1] sm:$0xff]
    %v5571 = vld [vmem:[%s5234 + $0xc1] sm:$0xff]
    %v5572 = vld [vmem:[%s5234 + $0xc9] sm:$0xff]
    %v5573 = vld [vmem:[%s5234 + $0xd9] sm:$0xff]
    %v5574 = vld [vmem:[%s5234 + $0xe1] sm:$0xff]
    %v5575 = vld [vmem:[%s5234 + $0xf1] sm:$0xff]
    %v5576 = vld [vmem:[%s5234 + $0xf9] sm:$0xff]
    %v5577 = vld [vmem:[%s5234 + $0x109] sm:$0xff]
    %v5578 = vld [vmem:[%s5234 + $0x111] sm:$0xff]
    %v5579 = vld [vmem:[%s5234 + $0x121] sm:$0xff]
    %v5580 = vld [vmem:[%s5234 + $0x129] sm:$0xff]
    %v5581 = vld [vmem:[%s5234 + $0x139] sm:$0xff]
    %v5582 = vld [vmem:[%s5234 + $0x141] sm:$0xff]
    %v5583 = vld [vmem:[%s5234 + $0x151] sm:$0xff]
    %v5584 = vld [vmem:[%s5234 + $0x159] sm:$0xff]
    %v5585 = vld [vmem:[%s5234 + $0x169] sm:$0xff]
    %v5586 = vld [vmem:[%s5234 + $0x171] sm:$0xff]
    %v5587 = vld [vmem:[%s5234 + $0x1b1] sm:$0xff]
    %v5588 = vld [vmem:[%s5234 + $0x1b9] sm:$0xff]
    %v5589 = vld [vmem:[%s5234 + $0x1c9] sm:$0xff]
    %v5590 = vld [vmem:[%s5234 + $0x1d1] sm:$0xff]
    %v5591 = vld [vmem:[%s5234 + $0x1e1] sm:$0xff]
    %v5592 = vld [vmem:[%s5234 + $0x1e9] sm:$0xff]
    %v5593 = vld [vmem:[%s5234 + $0x1f9] sm:$0xff]
    %v5594 = vld [vmem:[%s5234 + $0x201] sm:$0xff]
    %v5595 = vld [vmem:[%s5234 + $0x211] sm:$0xff]
    %v5596 = vld [vmem:[%s5234 + $0x219] sm:$0xff]
    %v5597 = vld [vmem:[%s5234 + $0x229] sm:$0xff]
    %v5598 = vld [vmem:[%s5234 + $0x231] sm:$0xff]
    %v5599 = vld [vmem:[%s5234 + $0x241] sm:$0xff]
    %v5600 = vld [vmem:[%s5234 + $0x249] sm:$0xff]
    %v5601 = vld [vmem:[%s5234 + $0x259] sm:$0xff]
    %v5602 = vld [vmem:[%s5234 + $0x261] sm:$0xff]
    %v5603 = vld [vmem:[%s5234 + $0x271] sm:$0xff]
    %v5604 = vld [vmem:[%s5234 + $0x279] sm:$0xff]
    %v5605 = vld [vmem:[%s5234 + $0x289] sm:$0xff]
    %v5606 = vld [vmem:[%s5234 + $0x291] sm:$0xff]
    %v5607 = vld [vmem:[%s5234 + $0x2a1] sm:$0xff]
    %v5608 = vld [vmem:[%s5234 + $0x2a9] sm:$0xff]
    %v5609 = vld [vmem:[%s5234 + $0x2b9] sm:$0xff]
    %v5610 = vld [vmem:[%s5234 + $0x2c1] sm:$0xff]
    %v5611 = vld [vmem:[%s5234 + $0x2d1] sm:$0xff]
    %v5612 = vld [vmem:[%s5234 + $0x2d9] sm:$0xff]
    %v5613 = vld [vmem:[%s5234 + $0x2e9] sm:$0xff]
    %v5614 = vld [vmem:[%s5234 + $0x2f1] sm:$0xff]
    %v5615 = vld [vmem:[%s5234 + $0x301] sm:$0xff]
    %v5616 = vld [vmem:[%s5234 + $0x309] sm:$0xff]
    %v5617 = vld [vmem:[%s5234 + $0x319] sm:$0xff]
    %v5618 = vld [vmem:[%s5234 + $0x321] sm:$0xff]
    %v5619 = vld [vmem:[%s5234 + $0x2] sm:$0xff]
    %v5620 = vld [vmem:[%s5234 + $0xa] sm:$0xff]
    %v5621 = vld [vmem:[%s5234 + $0x1a] sm:$0xff]
    %v5622 = vld [vmem:[%s5234 + $0x22] sm:$0xff]
    %v5623 = vld [vmem:[%s5234 + $0x32] sm:$0xff]
    %v5624 = vld [vmem:[%s5234 + $0x3a] sm:$0xff]
    %v5625 = vld [vmem:[%s5234 + $0x4a] sm:$0xff]
    %v5626 = vld [vmem:[%s5234 + $0x52] sm:$0xff]
    %v5627 = vld [vmem:[%s5234 + $0x62] sm:$0xff]
    %v5628 = vld [vmem:[%s5234 + $0x6a] sm:$0xff]
    %v5629 = vld [vmem:[%s5234 + $0x7a] sm:$0xff]
    %v5630 = vld [vmem:[%s5234 + $0x82] sm:$0xff]
    %v5631 = vld [vmem:[%s5234 + $0x92] sm:$0xff]
    %v5632 = vld [vmem:[%s5234 + $0x9a] sm:$0xff]
    %v5633 = vld [vmem:[%s5234 + $0xaa] sm:$0xff]
    %v5634 = vld [vmem:[%s5234 + $0xb2] sm:$0xff]
    %v5635 = vld [vmem:[%s5234 + $0xc2] sm:$0xff]
    %v5636 = vld [vmem:[%s5234 + $0xca] sm:$0xff]
    %v5637 = vld [vmem:[%s5234 + $0xda] sm:$0xff]
    %v5638 = vld [vmem:[%s5234 + $0xe2] sm:$0xff]
    %v5639 = vld [vmem:[%s5234 + $0xf2] sm:$0xff]
    %v5640 = vld [vmem:[%s5234 + $0xfa] sm:$0xff]
    %v5641 = vld [vmem:[%s5234 + $0x10a] sm:$0xff]
    %v5642 = vld [vmem:[%s5234 + $0x112] sm:$0xff]
    %v5643 = vld [vmem:[%s5234 + $0x122] sm:$0xff]
    %v5644 = vld [vmem:[%s5234 + $0x12a] sm:$0xff]
    %v5645 = vld [vmem:[%s5234 + $0x13a] sm:$0xff]
    %v5646 = vld [vmem:[%s5234 + $0x142] sm:$0xff]
    %v5647 = vld [vmem:[%s5234 + $0x152] sm:$0xff]
    %v5648 = vld [vmem:[%s5234 + $0x15a] sm:$0xff]
    %v5649 = vld [vmem:[%s5234 + $0x16a] sm:$0xff]
    %v5650 = vld [vmem:[%s5234 + $0x172] sm:$0xff]
    %v5651 = vld [vmem:[%s5234 + $0x1b2] sm:$0xff]
    %v5652 = vld [vmem:[%s5234 + $0x1ba] sm:$0xff]
    %v5653 = vld [vmem:[%s5234 + $0x1ca] sm:$0xff]
    %v5654 = vld [vmem:[%s5234 + $0x1d2] sm:$0xff]
    %v5655 = vld [vmem:[%s5234 + $0x1e2] sm:$0xff]
    %v5656 = vld [vmem:[%s5234 + $0x1ea] sm:$0xff]
    %v5657 = vld [vmem:[%s5234 + $0x1fa] sm:$0xff]
    %v5658 = vld [vmem:[%s5234 + $0x202] sm:$0xff]
    %v5659 = vld [vmem:[%s5234 + $0x212] sm:$0xff]
    %v5660 = vld [vmem:[%s5234 + $0x21a] sm:$0xff]
    %v5661 = vld [vmem:[%s5234 + $0x22a] sm:$0xff]
    %v5662 = vld [vmem:[%s5234 + $0x232] sm:$0xff]
    %v5663 = vld [vmem:[%s5234 + $0x242] sm:$0xff]
    %v5664 = vld [vmem:[%s5234 + $0x24a] sm:$0xff]
    %v5665 = vld [vmem:[%s5234 + $0x25a] sm:$0xff]
    %v5666 = vld [vmem:[%s5234 + $0x262] sm:$0xff]
    %v5667 = vld [vmem:[%s5234 + $0x272] sm:$0xff]
    %v5668 = vld [vmem:[%s5234 + $0x27a] sm:$0xff]
    %v5669 = vld [vmem:[%s5234 + $0x28a] sm:$0xff]
    %v5670 = vld [vmem:[%s5234 + $0x292] sm:$0xff]
    %v5671 = vld [vmem:[%s5234 + $0x2a2] sm:$0xff]
    %v5672 = vld [vmem:[%s5234 + $0x2aa] sm:$0xff]
    %v5673 = vld [vmem:[%s5234 + $0x2ba] sm:$0xff]
    %v5674 = vld [vmem:[%s5234 + $0x2c2] sm:$0xff]
    %v5675 = vld [vmem:[%s5234 + $0x2d2] sm:$0xff]
    %v5676 = vld [vmem:[%s5234 + $0x2da] sm:$0xff]
    %v5677 = vld [vmem:[%s5234 + $0x2ea] sm:$0xff]
    %v5678 = vld [vmem:[%s5234 + $0x2f2] sm:$0xff]
    %v5679 = vld [vmem:[%s5234 + $0x302] sm:$0xff]
    %v5680 = vld [vmem:[%s5234 + $0x30a] sm:$0xff]
    %v5681 = vld [vmem:[%s5234 + $0x31a] sm:$0xff]
    %v5682 = vld [vmem:[%s5234 + $0x322] sm:$0xff]
    %s5683 = scalar_lea.vmem [#allocation3], 48
    %v5684 = vld [vmem:[%s5683] sm:$0xff]
    %v5685 = vld [vmem:[%s5683 + $0x8] sm:$0xff]
    %v5686 = vld [vmem:[%s5683 + $0x18] sm:$0xff]
    %v5687 = vld [vmem:[%s5683 + $0x20] sm:$0xff]
    %v5688 = vld [vmem:[%s5683 + $0x30] sm:$0xff]
    %v5689 = vld [vmem:[%s5683 + $0x38] sm:$0xff]
    %v5690 = vld [vmem:[%s5683 + $0x48] sm:$0xff]
    %v5691 = vld [vmem:[%s5683 + $0x50] sm:$0xff]
    %v5692 = vld [vmem:[%s5683 + $0x60] sm:$0xff]
    %v5693 = vld [vmem:[%s5683 + $0x68] sm:$0xff]
    %v5694 = vld [vmem:[%s5683 + $0x78] sm:$0xff]
    %v5695 = vld [vmem:[%s5683 + $0x80] sm:$0xff]
    %v5696 = vld [vmem:[%s5683 + $0x90] sm:$0xff]
    %v5697 = vld [vmem:[%s5683 + $0x98] sm:$0xff]
    %v5698 = vld [vmem:[%s5683 + $0xa8] sm:$0xff]
    %v5699 = vld [vmem:[%s5683 + $0xb0] sm:$0xff]
    %v5700 = vld [vmem:[%s5683 + $0xc0] sm:$0xff]
    %v5701 = vld [vmem:[%s5683 + $0xc8] sm:$0xff]
    %v5702 = vld [vmem:[%s5683 + $0xd8] sm:$0xff]
    %v5703 = vld [vmem:[%s5683 + $0xe0] sm:$0xff]
    %v5704 = vld [vmem:[%s5683 + $0xf0] sm:$0xff]
    %v5705 = vld [vmem:[%s5683 + $0xf8] sm:$0xff]
    %v5706 = vld [vmem:[%s5683 + $0x108] sm:$0xff]
    %v5707 = vld [vmem:[%s5683 + $0x110] sm:$0xff]
    %v5708 = vld [vmem:[%s5683 + $0x120] sm:$0xff]
    %v5709 = vld [vmem:[%s5683 + $0x128] sm:$0xff]
    %v5710 = vld [vmem:[%s5683 + $0x138] sm:$0xff]
    %v5711 = vld [vmem:[%s5683 + $0x140] sm:$0xff]
    %v5712 = vld [vmem:[%s5683 + $0x150] sm:$0xff]
    %v5713 = vld [vmem:[%s5683 + $0x158] sm:$0xff]
    %v5714 = vld [vmem:[%s5683 + $0x168] sm:$0xff]
    %v5715 = vld [vmem:[%s5683 + $0x170] sm:$0xff]
    %v5716 = vld [vmem:[%s5683 + $0x1b0] sm:$0xff]
    %v5717 = vld [vmem:[%s5683 + $0x1b8] sm:$0xff]
    %v5718 = vld [vmem:[%s5683 + $0x1c8] sm:$0xff]
    %v5719 = vld [vmem:[%s5683 + $0x1d0] sm:$0xff]
    %v5720 = vld [vmem:[%s5683 + $0x1e0] sm:$0xff]
    %v5721 = vld [vmem:[%s5683 + $0x1e8] sm:$0xff]
    %v5722 = vld [vmem:[%s5683 + $0x1f8] sm:$0xff]
    %v5723 = vld [vmem:[%s5683 + $0x200] sm:$0xff]
    %v5724 = vld [vmem:[%s5683 + $0x210] sm:$0xff]
    %v5725 = vld [vmem:[%s5683 + $0x218] sm:$0xff]
    %v5726 = vld [vmem:[%s5683 + $0x228] sm:$0xff]
    %v5727 = vld [vmem:[%s5683 + $0x230] sm:$0xff]
    %v5728 = vld [vmem:[%s5683 + $0x240] sm:$0xff]
    %v5729 = vld [vmem:[%s5683 + $0x248] sm:$0xff]
    %v5730 = vld [vmem:[%s5683 + $0x258] sm:$0xff]
    %v5731 = vld [vmem:[%s5683 + $0x260] sm:$0xff]
    %v5732 = vld [vmem:[%s5683 + $0x270] sm:$0xff]
    %v5733 = vld [vmem:[%s5683 + $0x278] sm:$0xff]
    %v5734 = vld [vmem:[%s5683 + $0x288] sm:$0xff]
    %v5735 = vld [vmem:[%s5683 + $0x290] sm:$0xff]
    %v5736 = vld [vmem:[%s5683 + $0x2a0] sm:$0xff]
    %v5737 = vld [vmem:[%s5683 + $0x2a8] sm:$0xff]
    %v5738 = vld [vmem:[%s5683 + $0x2b8] sm:$0xff]
    %v5739 = vld [vmem:[%s5683 + $0x2c0] sm:$0xff]
    %v5740 = vld [vmem:[%s5683 + $0x2d0] sm:$0xff]
    %v5741 = vld [vmem:[%s5683 + $0x2d8] sm:$0xff]
    %v5742 = vld [vmem:[%s5683 + $0x2e8] sm:$0xff]
    %v5743 = vld [vmem:[%s5683 + $0x2f0] sm:$0xff]
    %v5744 = vld [vmem:[%s5683 + $0x300] sm:$0xff]
    %v5745 = vld [vmem:[%s5683 + $0x308] sm:$0xff]
    %v5746 = vld [vmem:[%s5683 + $0x318] sm:$0xff]
    %v5747 = vld [vmem:[%s5683 + $0x320] sm:$0xff]
    %v5748 = vld [vmem:[%s5683 + $0x1] sm:$0xff]
    %v5749 = vld [vmem:[%s5683 + $0x9] sm:$0xff]
    %v5750 = vld [vmem:[%s5683 + $0x19] sm:$0xff]
    %v5751 = vld [vmem:[%s5683 + $0x21] sm:$0xff]
    %v5752 = vld [vmem:[%s5683 + $0x31] sm:$0xff]
    %v5753 = vld [vmem:[%s5683 + $0x39] sm:$0xff]
    %v5754 = vld [vmem:[%s5683 + $0x49] sm:$0xff]
    %v5755 = vld [vmem:[%s5683 + $0x51] sm:$0xff]
    %v5756 = vld [vmem:[%s5683 + $0x61] sm:$0xff]
    %v5757 = vld [vmem:[%s5683 + $0x69] sm:$0xff]
    %v5758 = vld [vmem:[%s5683 + $0x79] sm:$0xff]
    %v5759 = vld [vmem:[%s5683 + $0x81] sm:$0xff]
    %v5760 = vld [vmem:[%s5683 + $0x91] sm:$0xff]
    %v5761 = vld [vmem:[%s5683 + $0x99] sm:$0xff]
    %v5762 = vld [vmem:[%s5683 + $0xa9] sm:$0xff]
    %v5763 = vld [vmem:[%s5683 + $0xb1] sm:$0xff]
    %v5764 = vld [vmem:[%s5683 + $0xc1] sm:$0xff]
    %v5765 = vld [vmem:[%s5683 + $0xc9] sm:$0xff]
    %v5766 = vld [vmem:[%s5683 + $0xd9] sm:$0xff]
    %v5767 = vld [vmem:[%s5683 + $0xe1] sm:$0xff]
    %v5768 = vld [vmem:[%s5683 + $0xf1] sm:$0xff]
    %v5769 = vld [vmem:[%s5683 + $0xf9] sm:$0xff]
    %v5770 = vld [vmem:[%s5683 + $0x109] sm:$0xff]
    %v5771 = vld [vmem:[%s5683 + $0x111] sm:$0xff]
    %v5772 = vld [vmem:[%s5683 + $0x121] sm:$0xff]
    %v5773 = vld [vmem:[%s5683 + $0x129] sm:$0xff]
    %v5774 = vld [vmem:[%s5683 + $0x139] sm:$0xff]
    %v5775 = vld [vmem:[%s5683 + $0x141] sm:$0xff]
    %v5776 = vld [vmem:[%s5683 + $0x151] sm:$0xff]
    %v5777 = vld [vmem:[%s5683 + $0x159] sm:$0xff]
    %v5778 = vld [vmem:[%s5683 + $0x169] sm:$0xff]
    %v5779 = vld [vmem:[%s5683 + $0x171] sm:$0xff]
    %v5780 = vld [vmem:[%s5683 + $0x1b1] sm:$0xff]
    %v5781 = vld [vmem:[%s5683 + $0x1b9] sm:$0xff]
    %v5782 = vld [vmem:[%s5683 + $0x1c9] sm:$0xff]
    %v5783 = vld [vmem:[%s5683 + $0x1d1] sm:$0xff]
    %v5784 = vld [vmem:[%s5683 + $0x1e1] sm:$0xff]
    %v5785 = vld [vmem:[%s5683 + $0x1e9] sm:$0xff]
    %v5786 = vld [vmem:[%s5683 + $0x1f9] sm:$0xff]
    %v5787 = vld [vmem:[%s5683 + $0x201] sm:$0xff]
    %v5788 = vld [vmem:[%s5683 + $0x211] sm:$0xff]
    %v5789 = vld [vmem:[%s5683 + $0x219] sm:$0xff]
    %v5790 = vld [vmem:[%s5683 + $0x229] sm:$0xff]
    %v5791 = vld [vmem:[%s5683 + $0x231] sm:$0xff]
    %v5792 = vld [vmem:[%s5683 + $0x241] sm:$0xff]
    %v5793 = vld [vmem:[%s5683 + $0x249] sm:$0xff]
    %v5794 = vld [vmem:[%s5683 + $0x259] sm:$0xff]
    %v5795 = vld [vmem:[%s5683 + $0x261] sm:$0xff]
    %v5796 = vld [vmem:[%s5683 + $0x271] sm:$0xff]
    %v5797 = vld [vmem:[%s5683 + $0x279] sm:$0xff]
    %v5798 = vld [vmem:[%s5683 + $0x289] sm:$0xff]
    %v5799 = vld [vmem:[%s5683 + $0x291] sm:$0xff]
    %v5800 = vld [vmem:[%s5683 + $0x2a1] sm:$0xff]
    %v5801 = vld [vmem:[%s5683 + $0x2a9] sm:$0xff]
    %v5802 = vld [vmem:[%s5683 + $0x2b9] sm:$0xff]
    %v5803 = vld [vmem:[%s5683 + $0x2c1] sm:$0xff]
    %v5804 = vld [vmem:[%s5683 + $0x2d1] sm:$0xff]
    %v5805 = vld [vmem:[%s5683 + $0x2d9] sm:$0xff]
    %v5806 = vld [vmem:[%s5683 + $0x2e9] sm:$0xff]
    %v5807 = vld [vmem:[%s5683 + $0x2f1] sm:$0xff]
    %v5808 = vld [vmem:[%s5683 + $0x301] sm:$0xff]
    %v5809 = vld [vmem:[%s5683 + $0x309] sm:$0xff]
    %v5810 = vld [vmem:[%s5683 + $0x319] sm:$0xff]
    %v5811 = vld [vmem:[%s5683 + $0x321] sm:$0xff]
    %v5812 = vld [vmem:[%s5683 + $0x2] sm:$0xff]
    %v5813 = vld [vmem:[%s5683 + $0xa] sm:$0xff]
    %v5814 = vld [vmem:[%s5683 + $0x1a] sm:$0xff]
    %v5815 = vld [vmem:[%s5683 + $0x22] sm:$0xff]
    %v5816 = vld [vmem:[%s5683 + $0x32] sm:$0xff]
    %v5817 = vld [vmem:[%s5683 + $0x3a] sm:$0xff]
    %v5818 = vld [vmem:[%s5683 + $0x4a] sm:$0xff]
    %v5819 = vld [vmem:[%s5683 + $0x52] sm:$0xff]
    %v5820 = vld [vmem:[%s5683 + $0x62] sm:$0xff]
    %v5821 = vld [vmem:[%s5683 + $0x6a] sm:$0xff]
    %v5822 = vld [vmem:[%s5683 + $0x7a] sm:$0xff]
    %v5823 = vld [vmem:[%s5683 + $0x82] sm:$0xff]
    %v5824 = vld [vmem:[%s5683 + $0x92] sm:$0xff]
    %v5825 = vld [vmem:[%s5683 + $0x9a] sm:$0xff]
    %v5826 = vld [vmem:[%s5683 + $0xaa] sm:$0xff]
    %v5827 = vld [vmem:[%s5683 + $0xb2] sm:$0xff]
    %v5828 = vld [vmem:[%s5683 + $0xc2] sm:$0xff]
    %v5829 = vld [vmem:[%s5683 + $0xca] sm:$0xff]
    %v5830 = vld [vmem:[%s5683 + $0xda] sm:$0xff]
    %v5831 = vld [vmem:[%s5683 + $0xe2] sm:$0xff]
    %v5832 = vld [vmem:[%s5683 + $0xf2] sm:$0xff]
    %v5833 = vld [vmem:[%s5683 + $0xfa] sm:$0xff]
    %v5834 = vld [vmem:[%s5683 + $0x10a] sm:$0xff]
    %v5835 = vld [vmem:[%s5683 + $0x112] sm:$0xff]
    %v5836 = vld [vmem:[%s5683 + $0x122] sm:$0xff]
    %v5837 = vld [vmem:[%s5683 + $0x12a] sm:$0xff]
    %v5838 = vld [vmem:[%s5683 + $0x13a] sm:$0xff]
    %v5839 = vld [vmem:[%s5683 + $0x142] sm:$0xff]
    %v5840 = vld [vmem:[%s5683 + $0x152] sm:$0xff]
    %v5841 = vld [vmem:[%s5683 + $0x15a] sm:$0xff]
    %v5842 = vld [vmem:[%s5683 + $0x16a] sm:$0xff]
    %v5843 = vld [vmem:[%s5683 + $0x172] sm:$0xff]
    %v5844 = vld [vmem:[%s5683 + $0x1b2] sm:$0xff]
    %v5845 = vld [vmem:[%s5683 + $0x1ba] sm:$0xff]
    %v5846 = vld [vmem:[%s5683 + $0x1ca] sm:$0xff]
    %v5847 = vld [vmem:[%s5683 + $0x1d2] sm:$0xff]
    %v5848 = vld [vmem:[%s5683 + $0x1e2] sm:$0xff]
    %v5849 = vld [vmem:[%s5683 + $0x1ea] sm:$0xff]
    %v5850 = vld [vmem:[%s5683 + $0x1fa] sm:$0xff]
    %v5851 = vld [vmem:[%s5683 + $0x202] sm:$0xff]
    %v5852 = vld [vmem:[%s5683 + $0x212] sm:$0xff]
    %v5853 = vld [vmem:[%s5683 + $0x21a] sm:$0xff]
    %v5854 = vld [vmem:[%s5683 + $0x22a] sm:$0xff]
    %v5855 = vld [vmem:[%s5683 + $0x232] sm:$0xff]
    %v5856 = vld [vmem:[%s5683 + $0x242] sm:$0xff]
    %v5857 = vld [vmem:[%s5683 + $0x24a] sm:$0xff]
    %v5858 = vld [vmem:[%s5683 + $0x25a] sm:$0xff]
    %v5859 = vld [vmem:[%s5683 + $0x262] sm:$0xff]
    %v5860 = vld [vmem:[%s5683 + $0x272] sm:$0xff]
    %v5861 = vld [vmem:[%s5683 + $0x27a] sm:$0xff]
    %v5862 = vld [vmem:[%s5683 + $0x28a] sm:$0xff]
    %v5863 = vld [vmem:[%s5683 + $0x292] sm:$0xff]
    %v5864 = vld [vmem:[%s5683 + $0x2a2] sm:$0xff]
    %v5865 = vld [vmem:[%s5683 + $0x2aa] sm:$0xff]
    %v5866 = vld [vmem:[%s5683 + $0x2ba] sm:$0xff]
    %v5867 = vld [vmem:[%s5683 + $0x2c2] sm:$0xff]
    %v5868 = vld [vmem:[%s5683 + $0x2d2] sm:$0xff]
    %v5869 = vld [vmem:[%s5683 + $0x2da] sm:$0xff]
    %v5870 = vld [vmem:[%s5683 + $0x2ea] sm:$0xff]
    %v5871 = vld [vmem:[%s5683 + $0x2f2] sm:$0xff]
    %v5872 = vld [vmem:[%s5683 + $0x302] sm:$0xff]
    %v5873 = vld [vmem:[%s5683 + $0x30a] sm:$0xff]
    %v5874 = vld [vmem:[%s5683 + $0x31a] sm:$0xff]
    %v5875 = vld [vmem:[%s5683 + $0x322] sm:$0xff]
    %5940 = vrot.lane.b32.xlu0 %v5363, 8
    %v5941 = vpop.permute.xlu0 %5940
    %5942 = vrot.lane.b32.xlu0 %v5364, 8
    %v5943 = vpop.permute.xlu0 %5942
    %5944 = vrot.lane.b32.xlu0 %v5365, 8
    %v5945 = vpop.permute.xlu0 %5944
    %5946 = vrot.lane.b32.xlu0 %v5366, 8
    %v5947 = vpop.permute.xlu0 %5946
    %5948 = vrot.lane.b32.xlu0 %v5367, 8
    %v5949 = vpop.permute.xlu0 %5948
    %5950 = vrot.lane.b32.xlu0 %v5368, 8
    %v5951 = vpop.permute.xlu0 %5950
    %5952 = vrot.lane.b32.xlu0 %v5369, 8
    %v5953 = vpop.permute.xlu0 %5952
    %5954 = vrot.lane.b32.xlu0 %v5370, 8
    %v5955 = vpop.permute.xlu0 %5954
    %5956 = vrot.lane.b32.xlu0 %v5371, 8
    %v5957 = vpop.permute.xlu0 %5956
    %5958 = vrot.lane.b32.xlu0 %v5372, 8
    %v5959 = vpop.permute.xlu0 %5958
    %5960 = vrot.lane.b32.xlu0 %v5373, 8
    %v5961 = vpop.permute.xlu0 %5960
    %5962 = vrot.lane.b32.xlu0 %v5374, 8
    %v5963 = vpop.permute.xlu0 %5962
    %5964 = vrot.lane.b32.xlu0 %v5375, 8
    %v5965 = vpop.permute.xlu0 %5964
    %5966 = vrot.lane.b32.xlu0 %v5376, 8
    %v5967 = vpop.permute.xlu0 %5966
    %5968 = vrot.lane.b32.xlu0 %v5377, 8
    %v5969 = vpop.permute.xlu0 %5968
    %5970 = vrot.lane.b32.xlu0 %v5378, 8
    %v5971 = vpop.permute.xlu0 %5970
    %5972 = vrot.lane.b32.xlu0 %v5379, 8
    %v5973 = vpop.permute.xlu0 %5972
    %5974 = vrot.lane.b32.xlu0 %v5380, 8
    %v5975 = vpop.permute.xlu0 %5974
    %5976 = vrot.lane.b32.xlu0 %v5381, 8
    %v5977 = vpop.permute.xlu0 %5976
    %5978 = vrot.lane.b32.xlu0 %v5382, 8
    %v5979 = vpop.permute.xlu0 %5978
    %5980 = vrot.lane.b32.xlu0 %v5383, 8
    %v5981 = vpop.permute.xlu0 %5980
    %5982 = vrot.lane.b32.xlu0 %v5384, 8
    %v5983 = vpop.permute.xlu0 %5982
    %5984 = vrot.lane.b32.xlu0 %v5385, 8
    %v5985 = vpop.permute.xlu0 %5984
    %5986 = vrot.lane.b32.xlu0 %v5386, 8
    %v5987 = vpop.permute.xlu0 %5986
    %5988 = vrot.lane.b32.xlu0 %v5387, 8
    %v5989 = vpop.permute.xlu0 %5988
    %5990 = vrot.lane.b32.xlu0 %v5388, 8
    %v5991 = vpop.permute.xlu0 %5990
    %5992 = vrot.lane.b32.xlu0 %v5389, 8
    %v5993 = vpop.permute.xlu0 %5992
    %5994 = vrot.lane.b32.xlu0 %v5390, 8
    %v5995 = vpop.permute.xlu0 %5994
    %5996 = vrot.lane.b32.xlu0 %v5391, 8
    %v5997 = vpop.permute.xlu0 %5996
    %5998 = vrot.lane.b32.xlu0 %v5392, 8
    %v5999 = vpop.permute.xlu0 %5998
    %6000 = vrot.lane.b32.xlu0 %v5393, 8
    %v6001 = vpop.permute.xlu0 %6000
    %6002 = vrot.lane.b32.xlu0 %v5394, 8
    %v6003 = vpop.permute.xlu0 %6002
    %6004 = vrot.lane.b32.xlu0 %v5395, 8
    %v6005 = vpop.permute.xlu0 %6004
    %6006 = vrot.lane.b32.xlu0 %v5396, 8
    %v6007 = vpop.permute.xlu0 %6006
    %6008 = vrot.lane.b32.xlu0 %v5397, 8
    %v6009 = vpop.permute.xlu0 %6008
    %6010 = vrot.lane.b32.xlu0 %v5398, 8
    %v6011 = vpop.permute.xlu0 %6010
    %6012 = vrot.lane.b32.xlu0 %v5399, 8
    %v6013 = vpop.permute.xlu0 %6012
    %6014 = vrot.lane.b32.xlu0 %v5400, 8
    %v6015 = vpop.permute.xlu0 %6014
    %6016 = vrot.lane.b32.xlu0 %v5401, 8
    %v6017 = vpop.permute.xlu0 %6016
    %6018 = vrot.lane.b32.xlu0 %v5402, 8
    %v6019 = vpop.permute.xlu0 %6018
    %6020 = vrot.lane.b32.xlu0 %v5403, 8
    %v6021 = vpop.permute.xlu0 %6020
    %6022 = vrot.lane.b32.xlu0 %v5404, 8
    %v6023 = vpop.permute.xlu0 %6022
    %6024 = vrot.lane.b32.xlu0 %v5405, 8
    %v6025 = vpop.permute.xlu0 %6024
    %6026 = vrot.lane.b32.xlu0 %v5406, 8
    %v6027 = vpop.permute.xlu0 %6026
    %6028 = vrot.lane.b32.xlu0 %v5407, 8
    %v6029 = vpop.permute.xlu0 %6028
    %6030 = vrot.lane.b32.xlu0 %v5408, 8
    %v6031 = vpop.permute.xlu0 %6030
    %6032 = vrot.lane.b32.xlu0 %v5409, 8
    %v6033 = vpop.permute.xlu0 %6032
    %6034 = vrot.lane.b32.xlu0 %v5410, 8
    %v6035 = vpop.permute.xlu0 %6034
    %6036 = vrot.lane.b32.xlu0 %v5411, 8
    %v6037 = vpop.permute.xlu0 %6036
    %6038 = vrot.lane.b32.xlu0 %v5412, 8
    %v6039 = vpop.permute.xlu0 %6038
    %6040 = vrot.lane.b32.xlu0 %v5413, 8
    %v6041 = vpop.permute.xlu0 %6040
    %6042 = vrot.lane.b32.xlu0 %v5414, 8
    %v6043 = vpop.permute.xlu0 %6042
    %6044 = vrot.lane.b32.xlu0 %v5415, 8
    %v6045 = vpop.permute.xlu0 %6044
    %6046 = vrot.lane.b32.xlu0 %v5416, 8
    %v6047 = vpop.permute.xlu0 %6046
    %6048 = vrot.lane.b32.xlu0 %v5417, 8
    %v6049 = vpop.permute.xlu0 %6048
    %6050 = vrot.lane.b32.xlu0 %v5418, 8
    %v6051 = vpop.permute.xlu0 %6050
    %6052 = vrot.lane.b32.xlu0 %v5419, 8
    %v6053 = vpop.permute.xlu0 %6052
    %6054 = vrot.lane.b32.xlu0 %v5420, 8
    %v6055 = vpop.permute.xlu0 %6054
    %6056 = vrot.lane.b32.xlu0 %v5421, 8
    %v6057 = vpop.permute.xlu0 %6056
    %6058 = vrot.lane.b32.xlu0 %v5422, 8
    %v6059 = vpop.permute.xlu0 %6058
    %6060 = vrot.lane.b32.xlu0 %v5423, 8
    %v6061 = vpop.permute.xlu0 %6060
    %6062 = vrot.lane.b32.xlu0 %v5424, 8
    %v6063 = vpop.permute.xlu0 %6062
    %6064 = vrot.lane.b32.xlu0 %v5425, 8
    %v6065 = vpop.permute.xlu0 %6064
    %6066 = vrot.lane.b32.xlu0 %v5426, 8
    %v6067 = vpop.permute.xlu0 %6066
    %6196 = vrot.lane.b32.xlu0 %v5427, 16
    %v6197 = vpop.permute.xlu0 %6196
    %6198 = vrot.lane.b32.xlu0 %v5428, 16
    %v6199 = vpop.permute.xlu0 %6198
    %6200 = vrot.lane.b32.xlu0 %v5429, 16
    %v6201 = vpop.permute.xlu0 %6200
    %6202 = vrot.lane.b32.xlu0 %v5430, 16
    %v6203 = vpop.permute.xlu0 %6202
    %6204 = vrot.lane.b32.xlu0 %v5431, 16
    %v6205 = vpop.permute.xlu0 %6204
    %6206 = vrot.lane.b32.xlu0 %v5432, 16
    %v6207 = vpop.permute.xlu0 %6206
    %6208 = vrot.lane.b32.xlu0 %v5433, 16
    %v6209 = vpop.permute.xlu0 %6208
    %6210 = vrot.lane.b32.xlu0 %v5434, 16
    %v6211 = vpop.permute.xlu0 %6210
    %6212 = vrot.lane.b32.xlu0 %v5435, 16
    %v6213 = vpop.permute.xlu0 %6212
    %6214 = vrot.lane.b32.xlu0 %v5436, 16
    %v6215 = vpop.permute.xlu0 %6214
    %6216 = vrot.lane.b32.xlu0 %v5437, 16
    %v6217 = vpop.permute.xlu0 %6216
    %6218 = vrot.lane.b32.xlu0 %v5438, 16
    %v6219 = vpop.permute.xlu0 %6218
    %6220 = vrot.lane.b32.xlu0 %v5439, 16
    %v6221 = vpop.permute.xlu0 %6220
    %6222 = vrot.lane.b32.xlu0 %v5440, 16
    %v6223 = vpop.permute.xlu0 %6222
    %6224 = vrot.lane.b32.xlu0 %v5441, 16
    %v6225 = vpop.permute.xlu0 %6224
    %6226 = vrot.lane.b32.xlu0 %v5442, 16
    %v6227 = vpop.permute.xlu0 %6226
    %6228 = vrot.lane.b32.xlu0 %v5443, 16
    %v6229 = vpop.permute.xlu0 %6228
    %6230 = vrot.lane.b32.xlu0 %v5444, 16
    %v6231 = vpop.permute.xlu0 %6230
    %6232 = vrot.lane.b32.xlu0 %v5445, 16
    %v6233 = vpop.permute.xlu0 %6232
    %6234 = vrot.lane.b32.xlu0 %v5446, 16
    %v6235 = vpop.permute.xlu0 %6234
    %6236 = vrot.lane.b32.xlu0 %v5447, 16
    %v6237 = vpop.permute.xlu0 %6236
    %6238 = vrot.lane.b32.xlu0 %v5448, 16
    %v6239 = vpop.permute.xlu0 %6238
    %6240 = vrot.lane.b32.xlu0 %v5449, 16
    %v6241 = vpop.permute.xlu0 %6240
    %6242 = vrot.lane.b32.xlu0 %v5450, 16
    %v6243 = vpop.permute.xlu0 %6242
    %6244 = vrot.lane.b32.xlu0 %v5451, 16
    %v6245 = vpop.permute.xlu0 %6244
    %6246 = vrot.lane.b32.xlu0 %v5452, 16
    %v6247 = vpop.permute.xlu0 %6246
    %6248 = vrot.lane.b32.xlu0 %v5453, 16
    %v6249 = vpop.permute.xlu0 %6248
    %6250 = vrot.lane.b32.xlu0 %v5454, 16
    %v6251 = vpop.permute.xlu0 %6250
    %6252 = vrot.lane.b32.xlu0 %v5455, 16
    %v6253 = vpop.permute.xlu0 %6252
    %6254 = vrot.lane.b32.xlu0 %v5456, 16
    %v6255 = vpop.permute.xlu0 %6254
    %6256 = vrot.lane.b32.xlu0 %v5457, 16
    %v6257 = vpop.permute.xlu0 %6256
    %6258 = vrot.lane.b32.xlu0 %v5458, 16
    %v6259 = vpop.permute.xlu0 %6258
    %6260 = vrot.lane.b32.xlu0 %v5459, 16
    %v6261 = vpop.permute.xlu0 %6260
    %6262 = vrot.lane.b32.xlu0 %v5460, 16
    %v6263 = vpop.permute.xlu0 %6262
    %6264 = vrot.lane.b32.xlu0 %v5461, 16
    %v6265 = vpop.permute.xlu0 %6264
    %6266 = vrot.lane.b32.xlu0 %v5462, 16
    %v6267 = vpop.permute.xlu0 %6266
    %6268 = vrot.lane.b32.xlu0 %v5463, 16
    %v6269 = vpop.permute.xlu0 %6268
    %6270 = vrot.lane.b32.xlu0 %v5464, 16
    %v6271 = vpop.permute.xlu0 %6270
    %6272 = vrot.lane.b32.xlu0 %v5465, 16
    %v6273 = vpop.permute.xlu0 %6272
    %6274 = vrot.lane.b32.xlu0 %v5466, 16
    %v6275 = vpop.permute.xlu0 %6274
    %6276 = vrot.lane.b32.xlu0 %v5467, 16
    %v6277 = vpop.permute.xlu0 %6276
    %6278 = vrot.lane.b32.xlu0 %v5468, 16
    %v6279 = vpop.permute.xlu0 %6278
    %6280 = vrot.lane.b32.xlu0 %v5469, 16
    %v6281 = vpop.permute.xlu0 %6280
    %6282 = vrot.lane.b32.xlu0 %v5470, 16
    %v6283 = vpop.permute.xlu0 %6282
    %6284 = vrot.lane.b32.xlu0 %v5471, 16
    %v6285 = vpop.permute.xlu0 %6284
    %6286 = vrot.lane.b32.xlu0 %v5472, 16
    %v6287 = vpop.permute.xlu0 %6286
    %6288 = vrot.lane.b32.xlu0 %v5473, 16
    %v6289 = vpop.permute.xlu0 %6288
    %6290 = vrot.lane.b32.xlu0 %v5474, 16
    %v6291 = vpop.permute.xlu0 %6290
    %6292 = vrot.lane.b32.xlu0 %v5475, 16
    %v6293 = vpop.permute.xlu0 %6292
    %6294 = vrot.lane.b32.xlu0 %v5476, 16
    %v6295 = vpop.permute.xlu0 %6294
    %6296 = vrot.lane.b32.xlu0 %v5477, 16
    %v6297 = vpop.permute.xlu0 %6296
    %6298 = vrot.lane.b32.xlu0 %v5478, 16
    %v6299 = vpop.permute.xlu0 %6298
    %6300 = vrot.lane.b32.xlu0 %v5479, 16
    %v6301 = vpop.permute.xlu0 %6300
    %6302 = vrot.lane.b32.xlu0 %v5480, 16
    %v6303 = vpop.permute.xlu0 %6302
    %6304 = vrot.lane.b32.xlu0 %v5481, 16
    %v6305 = vpop.permute.xlu0 %6304
    %6306 = vrot.lane.b32.xlu0 %v5482, 16
    %v6307 = vpop.permute.xlu0 %6306
    %6308 = vrot.lane.b32.xlu0 %v5483, 16
    %v6309 = vpop.permute.xlu0 %6308
    %6310 = vrot.lane.b32.xlu0 %v5484, 16
    %v6311 = vpop.permute.xlu0 %6310
    %6312 = vrot.lane.b32.xlu0 %v5485, 16
    %v6313 = vpop.permute.xlu0 %6312
    %6314 = vrot.lane.b32.xlu0 %v5486, 16
    %v6315 = vpop.permute.xlu0 %6314
    %6316 = vrot.lane.b32.xlu0 %v5487, 16
    %v6317 = vpop.permute.xlu0 %6316
    %6318 = vrot.lane.b32.xlu0 %v5488, 16
    %v6319 = vpop.permute.xlu0 %6318
    %6320 = vrot.lane.b32.xlu0 %v5489, 16
    %v6321 = vpop.permute.xlu0 %6320
    %6322 = vrot.lane.b32.xlu0 %v5490, 16
    %v6323 = vpop.permute.xlu0 %6322
    %6452 = vrot.lane.b32.xlu0 %v5491, 24
    %v6453 = vpop.permute.xlu0 %6452
    %6454 = vrot.lane.b32.xlu0 %v5492, 24
    %v6455 = vpop.permute.xlu0 %6454
    %6456 = vrot.lane.b32.xlu0 %v5493, 24
    %v6457 = vpop.permute.xlu0 %6456
    %6458 = vrot.lane.b32.xlu0 %v5494, 24
    %v6459 = vpop.permute.xlu0 %6458
    %6460 = vrot.lane.b32.xlu0 %v5495, 24
    %v6461 = vpop.permute.xlu0 %6460
    %6462 = vrot.lane.b32.xlu0 %v5496, 24
    %v6463 = vpop.permute.xlu0 %6462
    %6464 = vrot.lane.b32.xlu0 %v5497, 24
    %v6465 = vpop.permute.xlu0 %6464
    %6466 = vrot.lane.b32.xlu0 %v5498, 24
    %v6467 = vpop.permute.xlu0 %6466
    %6468 = vrot.lane.b32.xlu0 %v5499, 24
    %v6469 = vpop.permute.xlu0 %6468
    %6470 = vrot.lane.b32.xlu0 %v5500, 24
    %v6471 = vpop.permute.xlu0 %6470
    %6472 = vrot.lane.b32.xlu0 %v5501, 24
    %v6473 = vpop.permute.xlu0 %6472
    %6474 = vrot.lane.b32.xlu0 %v5502, 24
    %v6475 = vpop.permute.xlu0 %6474
    %6476 = vrot.lane.b32.xlu0 %v5503, 24
    %v6477 = vpop.permute.xlu0 %6476
    %6478 = vrot.lane.b32.xlu0 %v5504, 24
    %v6479 = vpop.permute.xlu0 %6478
    %6480 = vrot.lane.b32.xlu0 %v5505, 24
    %v6481 = vpop.permute.xlu0 %6480
    %6482 = vrot.lane.b32.xlu0 %v5506, 24
    %v6483 = vpop.permute.xlu0 %6482
    %6484 = vrot.lane.b32.xlu0 %v5507, 24
    %v6485 = vpop.permute.xlu0 %6484
    %6486 = vrot.lane.b32.xlu0 %v5508, 24
    %v6487 = vpop.permute.xlu0 %6486
    %6488 = vrot.lane.b32.xlu0 %v5509, 24
    %v6489 = vpop.permute.xlu0 %6488
    %6490 = vrot.lane.b32.xlu0 %v5510, 24
    %v6491 = vpop.permute.xlu0 %6490
    %6492 = vrot.lane.b32.xlu0 %v5511, 24
    %v6493 = vpop.permute.xlu0 %6492
    %6494 = vrot.lane.b32.xlu0 %v5512, 24
    %v6495 = vpop.permute.xlu0 %6494
    %6496 = vrot.lane.b32.xlu0 %v5513, 24
    %v6497 = vpop.permute.xlu0 %6496
    %6498 = vrot.lane.b32.xlu0 %v5514, 24
    %v6499 = vpop.permute.xlu0 %6498
    %6500 = vrot.lane.b32.xlu0 %v5515, 24
    %v6501 = vpop.permute.xlu0 %6500
    %6502 = vrot.lane.b32.xlu0 %v5516, 24
    %v6503 = vpop.permute.xlu0 %6502
    %6504 = vrot.lane.b32.xlu0 %v5517, 24
    %v6505 = vpop.permute.xlu0 %6504
    %6506 = vrot.lane.b32.xlu0 %v5518, 24
    %v6507 = vpop.permute.xlu0 %6506
    %6508 = vrot.lane.b32.xlu0 %v5519, 24
    %v6509 = vpop.permute.xlu0 %6508
    %6510 = vrot.lane.b32.xlu0 %v5520, 24
    %v6511 = vpop.permute.xlu0 %6510
    %6512 = vrot.lane.b32.xlu0 %v5521, 24
    %v6513 = vpop.permute.xlu0 %6512
    %6514 = vrot.lane.b32.xlu0 %v5522, 24
    %v6515 = vpop.permute.xlu0 %6514
    %6516 = vrot.lane.b32.xlu0 %v5523, 24
    %v6517 = vpop.permute.xlu0 %6516
    %6518 = vrot.lane.b32.xlu0 %v5524, 24
    %v6519 = vpop.permute.xlu0 %6518
    %6520 = vrot.lane.b32.xlu0 %v5525, 24
    %v6521 = vpop.permute.xlu0 %6520
    %6522 = vrot.lane.b32.xlu0 %v5526, 24
    %v6523 = vpop.permute.xlu0 %6522
    %6524 = vrot.lane.b32.xlu0 %v5527, 24
    %v6525 = vpop.permute.xlu0 %6524
    %6526 = vrot.lane.b32.xlu0 %v5528, 24
    %v6527 = vpop.permute.xlu0 %6526
    %6528 = vrot.lane.b32.xlu0 %v5529, 24
    %v6529 = vpop.permute.xlu0 %6528
    %6530 = vrot.lane.b32.xlu0 %v5530, 24
    %v6531 = vpop.permute.xlu0 %6530
    %6532 = vrot.lane.b32.xlu0 %v5531, 24
    %v6533 = vpop.permute.xlu0 %6532
    %6534 = vrot.lane.b32.xlu0 %v5532, 24
    %v6535 = vpop.permute.xlu0 %6534
    %6536 = vrot.lane.b32.xlu0 %v5533, 24
    %v6537 = vpop.permute.xlu0 %6536
    %6538 = vrot.lane.b32.xlu0 %v5534, 24
    %v6539 = vpop.permute.xlu0 %6538
    %6540 = vrot.lane.b32.xlu0 %v5535, 24
    %v6541 = vpop.permute.xlu0 %6540
    %6542 = vrot.lane.b32.xlu0 %v5536, 24
    %v6543 = vpop.permute.xlu0 %6542
    %6544 = vrot.lane.b32.xlu0 %v5537, 24
    %v6545 = vpop.permute.xlu0 %6544
    %6546 = vrot.lane.b32.xlu0 %v5538, 24
    %v6547 = vpop.permute.xlu0 %6546
    %6548 = vrot.lane.b32.xlu0 %v5539, 24
    %v6549 = vpop.permute.xlu0 %6548
    %6550 = vrot.lane.b32.xlu0 %v5540, 24
    %v6551 = vpop.permute.xlu0 %6550
    %6552 = vrot.lane.b32.xlu0 %v5541, 24
    %v6553 = vpop.permute.xlu0 %6552
    %6554 = vrot.lane.b32.xlu0 %v5542, 24
    %v6555 = vpop.permute.xlu0 %6554
    %6556 = vrot.lane.b32.xlu0 %v5543, 24
    %v6557 = vpop.permute.xlu0 %6556
    %6558 = vrot.lane.b32.xlu0 %v5544, 24
    %v6559 = vpop.permute.xlu0 %6558
    %6560 = vrot.lane.b32.xlu0 %v5545, 24
    %v6561 = vpop.permute.xlu0 %6560
    %6562 = vrot.lane.b32.xlu0 %v5546, 24
    %v6563 = vpop.permute.xlu0 %6562
    %6564 = vrot.lane.b32.xlu0 %v5547, 24
    %v6565 = vpop.permute.xlu0 %6564
    %6566 = vrot.lane.b32.xlu0 %v5548, 24
    %v6567 = vpop.permute.xlu0 %6566
    %6568 = vrot.lane.b32.xlu0 %v5549, 24
    %v6569 = vpop.permute.xlu0 %6568
    %6570 = vrot.lane.b32.xlu0 %v5550, 24
    %v6571 = vpop.permute.xlu0 %6570
    %6572 = vrot.lane.b32.xlu0 %v5551, 24
    %v6573 = vpop.permute.xlu0 %6572
    %6574 = vrot.lane.b32.xlu0 %v5552, 24
    %v6575 = vpop.permute.xlu0 %6574
    %6576 = vrot.lane.b32.xlu0 %v5553, 24
    %v6577 = vpop.permute.xlu0 %6576
    %6578 = vrot.lane.b32.xlu0 %v5554, 24
    %v6579 = vpop.permute.xlu0 %6578
    %6708 = vrot.lane.b32.xlu0 %v5555, 32
    %v6709 = vpop.permute.xlu0 %6708
    %6710 = vrot.lane.b32.xlu0 %v5556, 32
    %v6711 = vpop.permute.xlu0 %6710
    %6712 = vrot.lane.b32.xlu0 %v5557, 32
    %v6713 = vpop.permute.xlu0 %6712
    %6714 = vrot.lane.b32.xlu0 %v5558, 32
    %v6715 = vpop.permute.xlu0 %6714
    %6716 = vrot.lane.b32.xlu0 %v5559, 32
    %v6717 = vpop.permute.xlu0 %6716
    %6718 = vrot.lane.b32.xlu0 %v5560, 32
    %v6719 = vpop.permute.xlu0 %6718
    %6720 = vrot.lane.b32.xlu0 %v5561, 32
    %v6721 = vpop.permute.xlu0 %6720
    %6722 = vrot.lane.b32.xlu0 %v5562, 32
    %v6723 = vpop.permute.xlu0 %6722
    %6724 = vrot.lane.b32.xlu0 %v5563, 32
    %v6725 = vpop.permute.xlu0 %6724
    %6726 = vrot.lane.b32.xlu0 %v5564, 32
    %v6727 = vpop.permute.xlu0 %6726
    %6728 = vrot.lane.b32.xlu0 %v5565, 32
    %v6729 = vpop.permute.xlu0 %6728
    %6730 = vrot.lane.b32.xlu0 %v5566, 32
    %v6731 = vpop.permute.xlu0 %6730
    %6732 = vrot.lane.b32.xlu0 %v5567, 32
    %v6733 = vpop.permute.xlu0 %6732
    %6734 = vrot.lane.b32.xlu0 %v5568, 32
    %v6735 = vpop.permute.xlu0 %6734
    %6736 = vrot.lane.b32.xlu0 %v5569, 32
    %v6737 = vpop.permute.xlu0 %6736
    %6738 = vrot.lane.b32.xlu0 %v5570, 32
    %v6739 = vpop.permute.xlu0 %6738
    %6740 = vrot.lane.b32.xlu0 %v5571, 32
    %v6741 = vpop.permute.xlu0 %6740
    %6742 = vrot.lane.b32.xlu0 %v5572, 32
    %v6743 = vpop.permute.xlu0 %6742
    %6744 = vrot.lane.b32.xlu0 %v5573, 32
    %v6745 = vpop.permute.xlu0 %6744
    %6746 = vrot.lane.b32.xlu0 %v5574, 32
    %v6747 = vpop.permute.xlu0 %6746
    %6748 = vrot.lane.b32.xlu0 %v5575, 32
    %v6749 = vpop.permute.xlu0 %6748
    %6750 = vrot.lane.b32.xlu0 %v5576, 32
    %v6751 = vpop.permute.xlu0 %6750
    %6752 = vrot.lane.b32.xlu0 %v5577, 32
    %v6753 = vpop.permute.xlu0 %6752
    %6754 = vrot.lane.b32.xlu0 %v5578, 32
    %v6755 = vpop.permute.xlu0 %6754
    %6756 = vrot.lane.b32.xlu0 %v5579, 32
    %v6757 = vpop.permute.xlu0 %6756
    %6758 = vrot.lane.b32.xlu0 %v5580, 32
    %v6759 = vpop.permute.xlu0 %6758
    %6760 = vrot.lane.b32.xlu0 %v5581, 32
    %v6761 = vpop.permute.xlu0 %6760
    %6762 = vrot.lane.b32.xlu0 %v5582, 32
    %v6763 = vpop.permute.xlu0 %6762
    %6764 = vrot.lane.b32.xlu0 %v5583, 32
    %v6765 = vpop.permute.xlu0 %6764
    %6766 = vrot.lane.b32.xlu0 %v5584, 32
    %v6767 = vpop.permute.xlu0 %6766
    %6768 = vrot.lane.b32.xlu0 %v5585, 32
    %v6769 = vpop.permute.xlu0 %6768
    %6770 = vrot.lane.b32.xlu0 %v5586, 32
    %v6771 = vpop.permute.xlu0 %6770
    %6772 = vrot.lane.b32.xlu0 %v5587, 32
    %v6773 = vpop.permute.xlu0 %6772
    %6774 = vrot.lane.b32.xlu0 %v5588, 32
    %v6775 = vpop.permute.xlu0 %6774
    %6776 = vrot.lane.b32.xlu0 %v5589, 32
    %v6777 = vpop.permute.xlu0 %6776
    %6778 = vrot.lane.b32.xlu0 %v5590, 32
    %v6779 = vpop.permute.xlu0 %6778
    %6780 = vrot.lane.b32.xlu0 %v5591, 32
    %v6781 = vpop.permute.xlu0 %6780
    %6782 = vrot.lane.b32.xlu0 %v5592, 32
    %v6783 = vpop.permute.xlu0 %6782
    %6784 = vrot.lane.b32.xlu0 %v5593, 32
    %v6785 = vpop.permute.xlu0 %6784
    %6786 = vrot.lane.b32.xlu0 %v5594, 32
    %v6787 = vpop.permute.xlu0 %6786
    %6788 = vrot.lane.b32.xlu0 %v5595, 32
    %v6789 = vpop.permute.xlu0 %6788
    %6790 = vrot.lane.b32.xlu0 %v5596, 32
    %v6791 = vpop.permute.xlu0 %6790
    %6792 = vrot.lane.b32.xlu0 %v5597, 32
    %v6793 = vpop.permute.xlu0 %6792
    %6794 = vrot.lane.b32.xlu0 %v5598, 32
    %v6795 = vpop.permute.xlu0 %6794
    %6796 = vrot.lane.b32.xlu0 %v5599, 32
    %v6797 = vpop.permute.xlu0 %6796
    %6798 = vrot.lane.b32.xlu0 %v5600, 32
    %v6799 = vpop.permute.xlu0 %6798
    %6800 = vrot.lane.b32.xlu0 %v5601, 32
    %v6801 = vpop.permute.xlu0 %6800
    %6802 = vrot.lane.b32.xlu0 %v5602, 32
    %v6803 = vpop.permute.xlu0 %6802
    %6804 = vrot.lane.b32.xlu0 %v5603, 32
    %v6805 = vpop.permute.xlu0 %6804
    %6806 = vrot.lane.b32.xlu0 %v5604, 32
    %v6807 = vpop.permute.xlu0 %6806
    %6808 = vrot.lane.b32.xlu0 %v5605, 32
    %v6809 = vpop.permute.xlu0 %6808
    %6810 = vrot.lane.b32.xlu0 %v5606, 32
    %v6811 = vpop.permute.xlu0 %6810
    %6812 = vrot.lane.b32.xlu0 %v5607, 32
    %v6813 = vpop.permute.xlu0 %6812
    %6814 = vrot.lane.b32.xlu0 %v5608, 32
    %v6815 = vpop.permute.xlu0 %6814
    %6816 = vrot.lane.b32.xlu0 %v5609, 32
    %v6817 = vpop.permute.xlu0 %6816
    %6818 = vrot.lane.b32.xlu0 %v5610, 32
    %v6819 = vpop.permute.xlu0 %6818
    %6820 = vrot.lane.b32.xlu0 %v5611, 32
    %v6821 = vpop.permute.xlu0 %6820
    %6822 = vrot.lane.b32.xlu0 %v5612, 32
    %v6823 = vpop.permute.xlu0 %6822
    %6824 = vrot.lane.b32.xlu0 %v5613, 32
    %v6825 = vpop.permute.xlu0 %6824
    %6826 = vrot.lane.b32.xlu0 %v5614, 32
    %v6827 = vpop.permute.xlu0 %6826
    %6828 = vrot.lane.b32.xlu0 %v5615, 32
    %v6829 = vpop.permute.xlu0 %6828
    %6830 = vrot.lane.b32.xlu0 %v5616, 32
    %v6831 = vpop.permute.xlu0 %6830
    %6832 = vrot.lane.b32.xlu0 %v5617, 32
    %v6833 = vpop.permute.xlu0 %6832
    %6834 = vrot.lane.b32.xlu0 %v5618, 32
    %v6835 = vpop.permute.xlu0 %6834
    %6964 = vrot.lane.b32.xlu0 %v5619, 40
    %v6965 = vpop.permute.xlu0 %6964
    %6966 = vrot.lane.b32.xlu0 %v5620, 40
    %v6967 = vpop.permute.xlu0 %6966
    %6968 = vrot.lane.b32.xlu0 %v5621, 40
    %v6969 = vpop.permute.xlu0 %6968
    %6970 = vrot.lane.b32.xlu0 %v5622, 40
    %v6971 = vpop.permute.xlu0 %6970
    %6972 = vrot.lane.b32.xlu0 %v5623, 40
    %v6973 = vpop.permute.xlu0 %6972
    %6974 = vrot.lane.b32.xlu0 %v5624, 40
    %v6975 = vpop.permute.xlu0 %6974
    %6976 = vrot.lane.b32.xlu0 %v5625, 40
    %v6977 = vpop.permute.xlu0 %6976
    %6978 = vrot.lane.b32.xlu0 %v5626, 40
    %v6979 = vpop.permute.xlu0 %6978
    %6980 = vrot.lane.b32.xlu0 %v5627, 40
    %v6981 = vpop.permute.xlu0 %6980
    %6982 = vrot.lane.b32.xlu0 %v5628, 40
    %v6983 = vpop.permute.xlu0 %6982
    %6984 = vrot.lane.b32.xlu0 %v5629, 40
    %v6985 = vpop.permute.xlu0 %6984
    %6986 = vrot.lane.b32.xlu0 %v5630, 40
    %v6987 = vpop.permute.xlu0 %6986
    %6988 = vrot.lane.b32.xlu0 %v5631, 40
    %v6989 = vpop.permute.xlu0 %6988
    %6990 = vrot.lane.b32.xlu0 %v5632, 40
    %v6991 = vpop.permute.xlu0 %6990
    %6992 = vrot.lane.b32.xlu0 %v5633, 40
    %v6993 = vpop.permute.xlu0 %6992
    %6994 = vrot.lane.b32.xlu0 %v5634, 40
    %v6995 = vpop.permute.xlu0 %6994
    %6996 = vrot.lane.b32.xlu0 %v5635, 40
    %v6997 = vpop.permute.xlu0 %6996
    %6998 = vrot.lane.b32.xlu0 %v5636, 40
    %v6999 = vpop.permute.xlu0 %6998
    %7000 = vrot.lane.b32.xlu0 %v5637, 40
    %v7001 = vpop.permute.xlu0 %7000
    %7002 = vrot.lane.b32.xlu0 %v5638, 40
    %v7003 = vpop.permute.xlu0 %7002
    %7004 = vrot.lane.b32.xlu0 %v5639, 40
    %v7005 = vpop.permute.xlu0 %7004
    %7006 = vrot.lane.b32.xlu0 %v5640, 40
    %v7007 = vpop.permute.xlu0 %7006
    %7008 = vrot.lane.b32.xlu0 %v5641, 40
    %v7009 = vpop.permute.xlu0 %7008
    %7010 = vrot.lane.b32.xlu0 %v5642, 40
    %v7011 = vpop.permute.xlu0 %7010
    %7012 = vrot.lane.b32.xlu0 %v5643, 40
    %v7013 = vpop.permute.xlu0 %7012
    %7014 = vrot.lane.b32.xlu0 %v5644, 40
    %v7015 = vpop.permute.xlu0 %7014
    %7016 = vrot.lane.b32.xlu0 %v5645, 40
    %v7017 = vpop.permute.xlu0 %7016
    %7018 = vrot.lane.b32.xlu0 %v5646, 40
    %v7019 = vpop.permute.xlu0 %7018
    %7020 = vrot.lane.b32.xlu0 %v5647, 40
    %v7021 = vpop.permute.xlu0 %7020
    %7022 = vrot.lane.b32.xlu0 %v5648, 40
    %v7023 = vpop.permute.xlu0 %7022
    %7024 = vrot.lane.b32.xlu0 %v5649, 40
    %v7025 = vpop.permute.xlu0 %7024
    %7026 = vrot.lane.b32.xlu0 %v5650, 40
    %v7027 = vpop.permute.xlu0 %7026
    %7028 = vrot.lane.b32.xlu0 %v5651, 40
    %v7029 = vpop.permute.xlu0 %7028
    %7030 = vrot.lane.b32.xlu0 %v5652, 40
    %v7031 = vpop.permute.xlu0 %7030
    %7032 = vrot.lane.b32.xlu0 %v5653, 40
    %v7033 = vpop.permute.xlu0 %7032
    %7034 = vrot.lane.b32.xlu0 %v5654, 40
    %v7035 = vpop.permute.xlu0 %7034
    %7036 = vrot.lane.b32.xlu0 %v5655, 40
    %v7037 = vpop.permute.xlu0 %7036
    %7038 = vrot.lane.b32.xlu0 %v5656, 40
    %v7039 = vpop.permute.xlu0 %7038
    %7040 = vrot.lane.b32.xlu0 %v5657, 40
    %v7041 = vpop.permute.xlu0 %7040
    %7042 = vrot.lane.b32.xlu0 %v5658, 40
    %v7043 = vpop.permute.xlu0 %7042
    %7044 = vrot.lane.b32.xlu0 %v5659, 40
    %v7045 = vpop.permute.xlu0 %7044
    %7046 = vrot.lane.b32.xlu0 %v5660, 40
    %v7047 = vpop.permute.xlu0 %7046
    %7048 = vrot.lane.b32.xlu0 %v5661, 40
    %v7049 = vpop.permute.xlu0 %7048
    %7050 = vrot.lane.b32.xlu0 %v5662, 40
    %v7051 = vpop.permute.xlu0 %7050
    %7052 = vrot.lane.b32.xlu0 %v5663, 40
    %v7053 = vpop.permute.xlu0 %7052
    %7054 = vrot.lane.b32.xlu0 %v5664, 40
    %v7055 = vpop.permute.xlu0 %7054
    %7056 = vrot.lane.b32.xlu0 %v5665, 40
    %v7057 = vpop.permute.xlu0 %7056
    %7058 = vrot.lane.b32.xlu0 %v5666, 40
    %v7059 = vpop.permute.xlu0 %7058
    %7060 = vrot.lane.b32.xlu0 %v5667, 40
    %v7061 = vpop.permute.xlu0 %7060
    %7062 = vrot.lane.b32.xlu0 %v5668, 40
    %v7063 = vpop.permute.xlu0 %7062
    %7064 = vrot.lane.b32.xlu0 %v5669, 40
    %v7065 = vpop.permute.xlu0 %7064
    %7066 = vrot.lane.b32.xlu0 %v5670, 40
    %v7067 = vpop.permute.xlu0 %7066
    %7068 = vrot.lane.b32.xlu0 %v5671, 40
    %v7069 = vpop.permute.xlu0 %7068
    %7070 = vrot.lane.b32.xlu0 %v5672, 40
    %v7071 = vpop.permute.xlu0 %7070
    %7072 = vrot.lane.b32.xlu0 %v5673, 40
    %v7073 = vpop.permute.xlu0 %7072
    %7074 = vrot.lane.b32.xlu0 %v5674, 40
    %v7075 = vpop.permute.xlu0 %7074
    %7076 = vrot.lane.b32.xlu0 %v5675, 40
    %v7077 = vpop.permute.xlu0 %7076
    %7078 = vrot.lane.b32.xlu0 %v5676, 40
    %v7079 = vpop.permute.xlu0 %7078
    %7080 = vrot.lane.b32.xlu0 %v5677, 40
    %v7081 = vpop.permute.xlu0 %7080
    %7082 = vrot.lane.b32.xlu0 %v5678, 40
    %v7083 = vpop.permute.xlu0 %7082
    %7084 = vrot.lane.b32.xlu0 %v5679, 40
    %v7085 = vpop.permute.xlu0 %7084
    %7086 = vrot.lane.b32.xlu0 %v5680, 40
    %v7087 = vpop.permute.xlu0 %7086
    %7088 = vrot.lane.b32.xlu0 %v5681, 40
    %v7089 = vpop.permute.xlu0 %7088
    %7090 = vrot.lane.b32.xlu0 %v5682, 40
    %v7091 = vpop.permute.xlu0 %7090
    %7220 = vrot.lane.b32.xlu0 %v5684, 48
    %v7221 = vpop.permute.xlu0 %7220
    %7222 = vrot.lane.b32.xlu0 %v5685, 48
    %v7223 = vpop.permute.xlu0 %7222
    %7224 = vrot.lane.b32.xlu0 %v5686, 48
    %v7225 = vpop.permute.xlu0 %7224
    %7226 = vrot.lane.b32.xlu0 %v5687, 48
    %v7227 = vpop.permute.xlu0 %7226
    %7228 = vrot.lane.b32.xlu0 %v5688, 48
    %v7229 = vpop.permute.xlu0 %7228
    %7230 = vrot.lane.b32.xlu0 %v5689, 48
    %v7231 = vpop.permute.xlu0 %7230
    %7232 = vrot.lane.b32.xlu0 %v5690, 48
    %v7233 = vpop.permute.xlu0 %7232
    %7234 = vrot.lane.b32.xlu0 %v5691, 48
    %v7235 = vpop.permute.xlu0 %7234
    %7236 = vrot.lane.b32.xlu0 %v5692, 48
    %v7237 = vpop.permute.xlu0 %7236
    %7238 = vrot.lane.b32.xlu0 %v5693, 48
    %v7239 = vpop.permute.xlu0 %7238
    %7240 = vrot.lane.b32.xlu0 %v5694, 48
    %v7241 = vpop.permute.xlu0 %7240
    %7242 = vrot.lane.b32.xlu0 %v5695, 48
    %v7243 = vpop.permute.xlu0 %7242
    %7244 = vrot.lane.b32.xlu0 %v5696, 48
    %v7245 = vpop.permute.xlu0 %7244
    %7246 = vrot.lane.b32.xlu0 %v5697, 48
    %v7247 = vpop.permute.xlu0 %7246
    %7248 = vrot.lane.b32.xlu0 %v5698, 48
    %v7249 = vpop.permute.xlu0 %7248
    %7250 = vrot.lane.b32.xlu0 %v5699, 48
    %v7251 = vpop.permute.xlu0 %7250
    %7252 = vrot.lane.b32.xlu0 %v5700, 48
    %v7253 = vpop.permute.xlu0 %7252
    %7254 = vrot.lane.b32.xlu0 %v5701, 48
    %v7255 = vpop.permute.xlu0 %7254
    %7256 = vrot.lane.b32.xlu0 %v5702, 48
    %v7257 = vpop.permute.xlu0 %7256
    %7258 = vrot.lane.b32.xlu0 %v5703, 48
    %v7259 = vpop.permute.xlu0 %7258
    %7260 = vrot.lane.b32.xlu0 %v5704, 48
    %v7261 = vpop.permute.xlu0 %7260
    %7262 = vrot.lane.b32.xlu0 %v5705, 48
    %v7263 = vpop.permute.xlu0 %7262
    %7264 = vrot.lane.b32.xlu0 %v5706, 48
    %v7265 = vpop.permute.xlu0 %7264
    %7266 = vrot.lane.b32.xlu0 %v5707, 48
    %v7267 = vpop.permute.xlu0 %7266
    %7268 = vrot.lane.b32.xlu0 %v5708, 48
    %v7269 = vpop.permute.xlu0 %7268
    %7270 = vrot.lane.b32.xlu0 %v5709, 48
    %v7271 = vpop.permute.xlu0 %7270
    %7272 = vrot.lane.b32.xlu0 %v5710, 48
    %v7273 = vpop.permute.xlu0 %7272
    %7274 = vrot.lane.b32.xlu0 %v5711, 48
    %v7275 = vpop.permute.xlu0 %7274
    %7276 = vrot.lane.b32.xlu0 %v5712, 48
    %v7277 = vpop.permute.xlu0 %7276
    %7278 = vrot.lane.b32.xlu0 %v5713, 48
    %v7279 = vpop.permute.xlu0 %7278
    %7280 = vrot.lane.b32.xlu0 %v5714, 48
    %v7281 = vpop.permute.xlu0 %7280
    %7282 = vrot.lane.b32.xlu0 %v5715, 48
    %v7283 = vpop.permute.xlu0 %7282
    %7284 = vrot.lane.b32.xlu0 %v5716, 48
    %v7285 = vpop.permute.xlu0 %7284
    %7286 = vrot.lane.b32.xlu0 %v5717, 48
    %v7287 = vpop.permute.xlu0 %7286
    %7288 = vrot.lane.b32.xlu0 %v5718, 48
    %v7289 = vpop.permute.xlu0 %7288
    %7290 = vrot.lane.b32.xlu0 %v5719, 48
    %v7291 = vpop.permute.xlu0 %7290
    %7292 = vrot.lane.b32.xlu0 %v5720, 48
    %v7293 = vpop.permute.xlu0 %7292
    %7294 = vrot.lane.b32.xlu0 %v5721, 48
    %v7295 = vpop.permute.xlu0 %7294
    %7296 = vrot.lane.b32.xlu0 %v5722, 48
    %v7297 = vpop.permute.xlu0 %7296
    %7298 = vrot.lane.b32.xlu0 %v5723, 48
    %v7299 = vpop.permute.xlu0 %7298
    %7300 = vrot.lane.b32.xlu0 %v5724, 48
    %v7301 = vpop.permute.xlu0 %7300
    %7302 = vrot.lane.b32.xlu0 %v5725, 48
    %v7303 = vpop.permute.xlu0 %7302
    %7304 = vrot.lane.b32.xlu0 %v5726, 48
    %v7305 = vpop.permute.xlu0 %7304
    %7306 = vrot.lane.b32.xlu0 %v5727, 48
    %v7307 = vpop.permute.xlu0 %7306
    %7308 = vrot.lane.b32.xlu0 %v5728, 48
    %v7309 = vpop.permute.xlu0 %7308
    %7310 = vrot.lane.b32.xlu0 %v5729, 48
    %v7311 = vpop.permute.xlu0 %7310
    %7312 = vrot.lane.b32.xlu0 %v5730, 48
    %v7313 = vpop.permute.xlu0 %7312
    %7314 = vrot.lane.b32.xlu0 %v5731, 48
    %v7315 = vpop.permute.xlu0 %7314
    %7316 = vrot.lane.b32.xlu0 %v5732, 48
    %v7317 = vpop.permute.xlu0 %7316
    %7318 = vrot.lane.b32.xlu0 %v5733, 48
    %v7319 = vpop.permute.xlu0 %7318
    %7320 = vrot.lane.b32.xlu0 %v5734, 48
    %v7321 = vpop.permute.xlu0 %7320
    %7322 = vrot.lane.b32.xlu0 %v5735, 48
    %v7323 = vpop.permute.xlu0 %7322
    %7324 = vrot.lane.b32.xlu0 %v5736, 48
    %v7325 = vpop.permute.xlu0 %7324
    %7326 = vrot.lane.b32.xlu0 %v5737, 48
    %v7327 = vpop.permute.xlu0 %7326
    %7328 = vrot.lane.b32.xlu0 %v5738, 48
    %v7329 = vpop.permute.xlu0 %7328
    %7330 = vrot.lane.b32.xlu0 %v5739, 48
    %v7331 = vpop.permute.xlu0 %7330
    %7332 = vrot.lane.b32.xlu0 %v5740, 48
    %v7333 = vpop.permute.xlu0 %7332
    %7334 = vrot.lane.b32.xlu0 %v5741, 48
    %v7335 = vpop.permute.xlu0 %7334
    %7336 = vrot.lane.b32.xlu0 %v5742, 48
    %v7337 = vpop.permute.xlu0 %7336
    %7338 = vrot.lane.b32.xlu0 %v5743, 48
    %v7339 = vpop.permute.xlu0 %7338
    %7340 = vrot.lane.b32.xlu0 %v5744, 48
    %v7341 = vpop.permute.xlu0 %7340
    %7342 = vrot.lane.b32.xlu0 %v5745, 48
    %v7343 = vpop.permute.xlu0 %7342
    %7344 = vrot.lane.b32.xlu0 %v5746, 48
    %v7345 = vpop.permute.xlu0 %7344
    %7346 = vrot.lane.b32.xlu0 %v5747, 48
    %v7347 = vpop.permute.xlu0 %7346
    %7476 = vrot.lane.b32.xlu0 %v5748, 56
    %v7477 = vpop.permute.xlu0 %7476
    %7478 = vrot.lane.b32.xlu0 %v5749, 56
    %v7479 = vpop.permute.xlu0 %7478
    %7480 = vrot.lane.b32.xlu0 %v5750, 56
    %v7481 = vpop.permute.xlu0 %7480
    %7482 = vrot.lane.b32.xlu0 %v5751, 56
    %v7483 = vpop.permute.xlu0 %7482
    %7484 = vrot.lane.b32.xlu0 %v5752, 56
    %v7485 = vpop.permute.xlu0 %7484
    %7486 = vrot.lane.b32.xlu0 %v5753, 56
    %v7487 = vpop.permute.xlu0 %7486
    %7488 = vrot.lane.b32.xlu0 %v5754, 56
    %v7489 = vpop.permute.xlu0 %7488
    %7490 = vrot.lane.b32.xlu0 %v5755, 56
    %v7491 = vpop.permute.xlu0 %7490
    %7492 = vrot.lane.b32.xlu0 %v5756, 56
    %v7493 = vpop.permute.xlu0 %7492
    %7494 = vrot.lane.b32.xlu0 %v5757, 56
    %v7495 = vpop.permute.xlu0 %7494
    %7496 = vrot.lane.b32.xlu0 %v5758, 56
    %v7497 = vpop.permute.xlu0 %7496
    %7498 = vrot.lane.b32.xlu0 %v5759, 56
    %v7499 = vpop.permute.xlu0 %7498
    %7500 = vrot.lane.b32.xlu0 %v5760, 56
    %v7501 = vpop.permute.xlu0 %7500
    %7502 = vrot.lane.b32.xlu0 %v5761, 56
    %v7503 = vpop.permute.xlu0 %7502
    %7504 = vrot.lane.b32.xlu0 %v5762, 56
    %v7505 = vpop.permute.xlu0 %7504
    %7506 = vrot.lane.b32.xlu0 %v5763, 56
    %v7507 = vpop.permute.xlu0 %7506
    %7508 = vrot.lane.b32.xlu0 %v5764, 56
    %v7509 = vpop.permute.xlu0 %7508
    %7510 = vrot.lane.b32.xlu0 %v5765, 56
    %v7511 = vpop.permute.xlu0 %7510
    %7512 = vrot.lane.b32.xlu0 %v5766, 56
    %v7513 = vpop.permute.xlu0 %7512
    %7514 = vrot.lane.b32.xlu0 %v5767, 56
    %v7515 = vpop.permute.xlu0 %7514
    %7516 = vrot.lane.b32.xlu0 %v5768, 56
    %v7517 = vpop.permute.xlu0 %7516
    %7518 = vrot.lane.b32.xlu0 %v5769, 56
    %v7519 = vpop.permute.xlu0 %7518
    %7520 = vrot.lane.b32.xlu0 %v5770, 56
    %v7521 = vpop.permute.xlu0 %7520
    %7522 = vrot.lane.b32.xlu0 %v5771, 56
    %v7523 = vpop.permute.xlu0 %7522
    %7524 = vrot.lane.b32.xlu0 %v5772, 56
    %v7525 = vpop.permute.xlu0 %7524
    %7526 = vrot.lane.b32.xlu0 %v5773, 56
    %v7527 = vpop.permute.xlu0 %7526
    %7528 = vrot.lane.b32.xlu0 %v5774, 56
    %v7529 = vpop.permute.xlu0 %7528
    %7530 = vrot.lane.b32.xlu0 %v5775, 56
    %v7531 = vpop.permute.xlu0 %7530
    %7532 = vrot.lane.b32.xlu0 %v5776, 56
    %v7533 = vpop.permute.xlu0 %7532
    %7534 = vrot.lane.b32.xlu0 %v5777, 56
    %v7535 = vpop.permute.xlu0 %7534
    %7536 = vrot.lane.b32.xlu0 %v5778, 56
    %v7537 = vpop.permute.xlu0 %7536
    %7538 = vrot.lane.b32.xlu0 %v5779, 56
    %v7539 = vpop.permute.xlu0 %7538
    %7540 = vrot.lane.b32.xlu0 %v5780, 56
    %v7541 = vpop.permute.xlu0 %7540
    %7542 = vrot.lane.b32.xlu0 %v5781, 56
    %v7543 = vpop.permute.xlu0 %7542
    %7544 = vrot.lane.b32.xlu0 %v5782, 56
    %v7545 = vpop.permute.xlu0 %7544
    %7546 = vrot.lane.b32.xlu0 %v5783, 56
    %v7547 = vpop.permute.xlu0 %7546
    %7548 = vrot.lane.b32.xlu0 %v5784, 56
    %v7549 = vpop.permute.xlu0 %7548
    %7550 = vrot.lane.b32.xlu0 %v5785, 56
    %v7551 = vpop.permute.xlu0 %7550
    %7552 = vrot.lane.b32.xlu0 %v5786, 56
    %v7553 = vpop.permute.xlu0 %7552
    %7554 = vrot.lane.b32.xlu0 %v5787, 56
    %v7555 = vpop.permute.xlu0 %7554
    %7556 = vrot.lane.b32.xlu0 %v5788, 56
    %v7557 = vpop.permute.xlu0 %7556
    %7558 = vrot.lane.b32.xlu0 %v5789, 56
    %v7559 = vpop.permute.xlu0 %7558
    %7560 = vrot.lane.b32.xlu0 %v5790, 56
    %v7561 = vpop.permute.xlu0 %7560
    %7562 = vrot.lane.b32.xlu0 %v5791, 56
    %v7563 = vpop.permute.xlu0 %7562
    %7564 = vrot.lane.b32.xlu0 %v5792, 56
    %v7565 = vpop.permute.xlu0 %7564
    %7566 = vrot.lane.b32.xlu0 %v5793, 56
    %v7567 = vpop.permute.xlu0 %7566
    %7568 = vrot.lane.b32.xlu0 %v5794, 56
    %v7569 = vpop.permute.xlu0 %7568
    %7570 = vrot.lane.b32.xlu0 %v5795, 56
    %v7571 = vpop.permute.xlu0 %7570
    %7572 = vrot.lane.b32.xlu0 %v5796, 56
    %v7573 = vpop.permute.xlu0 %7572
    %7574 = vrot.lane.b32.xlu0 %v5797, 56
    %v7575 = vpop.permute.xlu0 %7574
    %7576 = vrot.lane.b32.xlu0 %v5798, 56
    %v7577 = vpop.permute.xlu0 %7576
    %7578 = vrot.lane.b32.xlu0 %v5799, 56
    %v7579 = vpop.permute.xlu0 %7578
    %7580 = vrot.lane.b32.xlu0 %v5800, 56
    %v7581 = vpop.permute.xlu0 %7580
    %7582 = vrot.lane.b32.xlu0 %v5801, 56
    %v7583 = vpop.permute.xlu0 %7582
    %7584 = vrot.lane.b32.xlu0 %v5802, 56
    %v7585 = vpop.permute.xlu0 %7584
    %7586 = vrot.lane.b32.xlu0 %v5803, 56
    %v7587 = vpop.permute.xlu0 %7586
    %7588 = vrot.lane.b32.xlu0 %v5804, 56
    %v7589 = vpop.permute.xlu0 %7588
    %7590 = vrot.lane.b32.xlu0 %v5805, 56
    %v7591 = vpop.permute.xlu0 %7590
    %7592 = vrot.lane.b32.xlu0 %v5806, 56
    %v7593 = vpop.permute.xlu0 %7592
    %7594 = vrot.lane.b32.xlu0 %v5807, 56
    %v7595 = vpop.permute.xlu0 %7594
    %7596 = vrot.lane.b32.xlu0 %v5808, 56
    %v7597 = vpop.permute.xlu0 %7596
    %7598 = vrot.lane.b32.xlu0 %v5809, 56
    %v7599 = vpop.permute.xlu0 %7598
    %7600 = vrot.lane.b32.xlu0 %v5810, 56
    %v7601 = vpop.permute.xlu0 %7600
    %7602 = vrot.lane.b32.xlu0 %v5811, 56
    %v7603 = vpop.permute.xlu0 %7602
    %7732 = vrot.lane.b32.xlu0 %v5812, 64
    %v7733 = vpop.permute.xlu0 %7732
    %7734 = vrot.lane.b32.xlu0 %v5813, 64
    %v7735 = vpop.permute.xlu0 %7734
    %7736 = vrot.lane.b32.xlu0 %v5814, 64
    %v7737 = vpop.permute.xlu0 %7736
    %7738 = vrot.lane.b32.xlu0 %v5815, 64
    %v7739 = vpop.permute.xlu0 %7738
    %7740 = vrot.lane.b32.xlu0 %v5816, 64
    %v7741 = vpop.permute.xlu0 %7740
    %7742 = vrot.lane.b32.xlu0 %v5817, 64
    %v7743 = vpop.permute.xlu0 %7742
    %7744 = vrot.lane.b32.xlu0 %v5818, 64
    %v7745 = vpop.permute.xlu0 %7744
    %7746 = vrot.lane.b32.xlu0 %v5819, 64
    %v7747 = vpop.permute.xlu0 %7746
    %7748 = vrot.lane.b32.xlu0 %v5820, 64
    %v7749 = vpop.permute.xlu0 %7748
    %7750 = vrot.lane.b32.xlu0 %v5821, 64
    %v7751 = vpop.permute.xlu0 %7750
    %7752 = vrot.lane.b32.xlu0 %v5822, 64
    %v7753 = vpop.permute.xlu0 %7752
    %7754 = vrot.lane.b32.xlu0 %v5823, 64
    %v7755 = vpop.permute.xlu0 %7754
    %7756 = vrot.lane.b32.xlu0 %v5824, 64
    %v7757 = vpop.permute.xlu0 %7756
    %7758 = vrot.lane.b32.xlu0 %v5825, 64
    %v7759 = vpop.permute.xlu0 %7758
    %7760 = vrot.lane.b32.xlu0 %v5826, 64
    %v7761 = vpop.permute.xlu0 %7760
    %7762 = vrot.lane.b32.xlu0 %v5827, 64
    %v7763 = vpop.permute.xlu0 %7762
    %7764 = vrot.lane.b32.xlu0 %v5828, 64
    %v7765 = vpop.permute.xlu0 %7764
    %7766 = vrot.lane.b32.xlu0 %v5829, 64
    %v7767 = vpop.permute.xlu0 %7766
    %7768 = vrot.lane.b32.xlu0 %v5830, 64
    %v7769 = vpop.permute.xlu0 %7768
    %7770 = vrot.lane.b32.xlu0 %v5831, 64
    %v7771 = vpop.permute.xlu0 %7770
    %7772 = vrot.lane.b32.xlu0 %v5832, 64
    %v7773 = vpop.permute.xlu0 %7772
    %7774 = vrot.lane.b32.xlu0 %v5833, 64
    %v7775 = vpop.permute.xlu0 %7774
    %7776 = vrot.lane.b32.xlu0 %v5834, 64
    %v7777 = vpop.permute.xlu0 %7776
    %7778 = vrot.lane.b32.xlu0 %v5835, 64
    %v7779 = vpop.permute.xlu0 %7778
    %7780 = vrot.lane.b32.xlu0 %v5836, 64
    %v7781 = vpop.permute.xlu0 %7780
    %7782 = vrot.lane.b32.xlu0 %v5837, 64
    %v7783 = vpop.permute.xlu0 %7782
    %7784 = vrot.lane.b32.xlu0 %v5838, 64
    %v7785 = vpop.permute.xlu0 %7784
    %7786 = vrot.lane.b32.xlu0 %v5839, 64
    %v7787 = vpop.permute.xlu0 %7786
    %7788 = vrot.lane.b32.xlu0 %v5840, 64
    %v7789 = vpop.permute.xlu0 %7788
    %7790 = vrot.lane.b32.xlu0 %v5841, 64
    %v7791 = vpop.permute.xlu0 %7790
    %7792 = vrot.lane.b32.xlu0 %v5842, 64
    %v7793 = vpop.permute.xlu0 %7792
    %7794 = vrot.lane.b32.xlu0 %v5843, 64
    %v7795 = vpop.permute.xlu0 %7794
    %7796 = vrot.lane.b32.xlu0 %v5844, 64
    %v7797 = vpop.permute.xlu0 %7796
    %7798 = vrot.lane.b32.xlu0 %v5845, 64
    %v7799 = vpop.permute.xlu0 %7798
    %7800 = vrot.lane.b32.xlu0 %v5846, 64
    %v7801 = vpop.permute.xlu0 %7800
    %7802 = vrot.lane.b32.xlu0 %v5847, 64
    %v7803 = vpop.permute.xlu0 %7802
    %7804 = vrot.lane.b32.xlu0 %v5848, 64
    %v7805 = vpop.permute.xlu0 %7804
    %7806 = vrot.lane.b32.xlu0 %v5849, 64
    %v7807 = vpop.permute.xlu0 %7806
    %7808 = vrot.lane.b32.xlu0 %v5850, 64
    %v7809 = vpop.permute.xlu0 %7808
    %7810 = vrot.lane.b32.xlu0 %v5851, 64
    %v7811 = vpop.permute.xlu0 %7810
    %7812 = vrot.lane.b32.xlu0 %v5852, 64
    %v7813 = vpop.permute.xlu0 %7812
    %7814 = vrot.lane.b32.xlu0 %v5853, 64
    %v7815 = vpop.permute.xlu0 %7814
    %7816 = vrot.lane.b32.xlu0 %v5854, 64
    %v7817 = vpop.permute.xlu0 %7816
    %7818 = vrot.lane.b32.xlu0 %v5855, 64
    %v7819 = vpop.permute.xlu0 %7818
    %7820 = vrot.lane.b32.xlu0 %v5856, 64
    %v7821 = vpop.permute.xlu0 %7820
    %7822 = vrot.lane.b32.xlu0 %v5857, 64
    %v7823 = vpop.permute.xlu0 %7822
    %7824 = vrot.lane.b32.xlu0 %v5858, 64
    %v7825 = vpop.permute.xlu0 %7824
    %7826 = vrot.lane.b32.xlu0 %v5859, 64
    %v7827 = vpop.permute.xlu0 %7826
    %7828 = vrot.lane.b32.xlu0 %v5860, 64
    %v7829 = vpop.permute.xlu0 %7828
    %7830 = vrot.lane.b32.xlu0 %v5861, 64
    %v7831 = vpop.permute.xlu0 %7830
    %7832 = vrot.lane.b32.xlu0 %v5862, 64
    %v7833 = vpop.permute.xlu0 %7832
    %7834 = vrot.lane.b32.xlu0 %v5863, 64
    %v7835 = vpop.permute.xlu0 %7834
    %7836 = vrot.lane.b32.xlu0 %v5864, 64
    %v7837 = vpop.permute.xlu0 %7836
    %7838 = vrot.lane.b32.xlu0 %v5865, 64
    %v7839 = vpop.permute.xlu0 %7838
    %7840 = vrot.lane.b32.xlu0 %v5866, 64
    %v7841 = vpop.permute.xlu0 %7840
    %7842 = vrot.lane.b32.xlu0 %v5867, 64
    %v7843 = vpop.permute.xlu0 %7842
    %7844 = vrot.lane.b32.xlu0 %v5868, 64
    %v7845 = vpop.permute.xlu0 %7844
    %7846 = vrot.lane.b32.xlu0 %v5869, 64
    %v7847 = vpop.permute.xlu0 %7846
    %7848 = vrot.lane.b32.xlu0 %v5870, 64
    %v7849 = vpop.permute.xlu0 %7848
    %7850 = vrot.lane.b32.xlu0 %v5871, 64
    %v7851 = vpop.permute.xlu0 %7850
    %7852 = vrot.lane.b32.xlu0 %v5872, 64
    %v7853 = vpop.permute.xlu0 %7852
    %7854 = vrot.lane.b32.xlu0 %v5873, 64
    %v7855 = vpop.permute.xlu0 %7854
    %7856 = vrot.lane.b32.xlu0 %v5874, 64
    %v7857 = vpop.permute.xlu0 %7856
    %7858 = vrot.lane.b32.xlu0 %v5875, 64
    %v7859 = vpop.permute.xlu0 %7858
    %v7924 = vsel %vm3535, %v5299, %v5941
    %v7925 = vsel %vm3535, %v5300, %v5943
    %v7926 = vsel %vm3535, %v5301, %v5945
    %v7927 = vsel %vm3535, %v5302, %v5947
    %v7928 = vsel %vm3535, %v5303, %v5949
    %v7929 = vsel %vm3535, %v5304, %v5951
    %v7930 = vsel %vm3535, %v5305, %v5953
    %v7931 = vsel %vm3535, %v5306, %v5955
    %v7932 = vsel %vm3535, %v5307, %v5957
    %v7933 = vsel %vm3535, %v5308, %v5959
    %v7934 = vsel %vm3535, %v5309, %v5961
    %v7935 = vsel %vm3535, %v5310, %v5963
    %v7936 = vsel %vm3535, %v5311, %v5965
    %v7937 = vsel %vm3535, %v5312, %v5967
    %v7938 = vsel %vm3535, %v5313, %v5969
    %v7939 = vsel %vm3535, %v5314, %v5971
    %v7940 = vsel %vm3535, %v5315, %v5973
    %v7941 = vsel %vm3535, %v5316, %v5975
    %v7942 = vsel %vm3535, %v5317, %v5977
    %v7943 = vsel %vm3535, %v5318, %v5979
    %v7944 = vsel %vm3535, %v5319, %v5981
    %v7945 = vsel %vm3535, %v5320, %v5983
    %v7946 = vsel %vm3535, %v5321, %v5985
    %v7947 = vsel %vm3535, %v5322, %v5987
    %v7948 = vsel %vm3535, %v5323, %v5989
    %v7949 = vsel %vm3535, %v5324, %v5991
    %v7950 = vsel %vm3535, %v5325, %v5993
    %v7951 = vsel %vm3535, %v5326, %v5995
    %v7952 = vsel %vm3535, %v5327, %v5997
    %v7953 = vsel %vm3535, %v5328, %v5999
    %v7954 = vsel %vm3535, %v5329, %v6001
    %v7955 = vsel %vm3535, %v5330, %v6003
    %v7956 = vsel %vm3535, %v5331, %v6005
    %v7957 = vsel %vm3535, %v5332, %v6007
    %v7958 = vsel %vm3535, %v5333, %v6009
    %v7959 = vsel %vm3535, %v5334, %v6011
    %v7960 = vsel %vm3535, %v5335, %v6013
    %v7961 = vsel %vm3535, %v5336, %v6015
    %v7962 = vsel %vm3535, %v5337, %v6017
    %v7963 = vsel %vm3535, %v5338, %v6019
    %v7964 = vsel %vm3535, %v5339, %v6021
    %v7965 = vsel %vm3535, %v5340, %v6023
    %v7966 = vsel %vm3535, %v5341, %v6025
    %v7967 = vsel %vm3535, %v5342, %v6027
    %v7968 = vsel %vm3535, %v5343, %v6029
    %v7969 = vsel %vm3535, %v5344, %v6031
    %v7970 = vsel %vm3535, %v5345, %v6033
    %v7971 = vsel %vm3535, %v5346, %v6035
    %v7972 = vsel %vm3535, %v5347, %v6037
    %v7973 = vsel %vm3535, %v5348, %v6039
    %v7974 = vsel %vm3535, %v5349, %v6041
    %v7975 = vsel %vm3535, %v5350, %v6043
    %v7976 = vsel %vm3535, %v5351, %v6045
    %v7977 = vsel %vm3535, %v5352, %v6047
    %v7978 = vsel %vm3535, %v5353, %v6049
    %v7979 = vsel %vm3535, %v5354, %v6051
    %v7980 = vsel %vm3535, %v5355, %v6053
    %v7981 = vsel %vm3535, %v5356, %v6055
    %v7982 = vsel %vm3535, %v5357, %v6057
    %v7983 = vsel %vm3535, %v5358, %v6059
    %v7984 = vsel %vm3535, %v5359, %v6061
    %v7985 = vsel %vm3535, %v5360, %v6063
    %v7986 = vsel %vm3535, %v5361, %v6065
    %v7987 = vsel %vm3535, %v5362, %v6067
    %v7988 = vsel %vm3665, %v7924, %v6197
    %v7989 = vsel %vm3665, %v7925, %v6199
    %v7990 = vsel %vm3665, %v7926, %v6201
    %v7991 = vsel %vm3665, %v7927, %v6203
    %v7992 = vsel %vm3665, %v7928, %v6205
    %v7993 = vsel %vm3665, %v7929, %v6207
    %v7994 = vsel %vm3665, %v7930, %v6209
    %v7995 = vsel %vm3665, %v7931, %v6211
    %v7996 = vsel %vm3665, %v7932, %v6213
    %v7997 = vsel %vm3665, %v7933, %v6215
    %v7998 = vsel %vm3665, %v7934, %v6217
    %v7999 = vsel %vm3665, %v7935, %v6219
    %v8000 = vsel %vm3665, %v7936, %v6221
    %v8001 = vsel %vm3665, %v7937, %v6223
    %v8002 = vsel %vm3665, %v7938, %v6225
    %v8003 = vsel %vm3665, %v7939, %v6227
    %v8004 = vsel %vm3665, %v7940, %v6229
    %v8005 = vsel %vm3665, %v7941, %v6231
    %v8006 = vsel %vm3665, %v7942, %v6233
    %v8007 = vsel %vm3665, %v7943, %v6235
    %v8008 = vsel %vm3665, %v7944, %v6237
    %v8009 = vsel %vm3665, %v7945, %v6239
    %v8010 = vsel %vm3665, %v7946, %v6241
    %v8011 = vsel %vm3665, %v7947, %v6243
    %v8012 = vsel %vm3665, %v7948, %v6245
    %v8013 = vsel %vm3665, %v7949, %v6247
    %v8014 = vsel %vm3665, %v7950, %v6249
    %v8015 = vsel %vm3665, %v7951, %v6251
    %v8016 = vsel %vm3665, %v7952, %v6253
    %v8017 = vsel %vm3665, %v7953, %v6255
    %v8018 = vsel %vm3665, %v7954, %v6257
    %v8019 = vsel %vm3665, %v7955, %v6259
    %v8020 = vsel %vm3665, %v7956, %v6261
    %v8021 = vsel %vm3665, %v7957, %v6263
    %v8022 = vsel %vm3665, %v7958, %v6265
    %v8023 = vsel %vm3665, %v7959, %v6267
    %v8024 = vsel %vm3665, %v7960, %v6269
    %v8025 = vsel %vm3665, %v7961, %v6271
    %v8026 = vsel %vm3665, %v7962, %v6273
    %v8027 = vsel %vm3665, %v7963, %v6275
    %v8028 = vsel %vm3665, %v7964, %v6277
    %v8029 = vsel %vm3665, %v7965, %v6279
    %v8030 = vsel %vm3665, %v7966, %v6281
    %v8031 = vsel %vm3665, %v7967, %v6283
    %v8032 = vsel %vm3665, %v7968, %v6285
    %v8033 = vsel %vm3665, %v7969, %v6287
    %v8034 = vsel %vm3665, %v7970, %v6289
    %v8035 = vsel %vm3665, %v7971, %v6291
    %v8036 = vsel %vm3665, %v7972, %v6293
    %v8037 = vsel %vm3665, %v7973, %v6295
    %v8038 = vsel %vm3665, %v7974, %v6297
    %v8039 = vsel %vm3665, %v7975, %v6299
    %v8040 = vsel %vm3665, %v7976, %v6301
    %v8041 = vsel %vm3665, %v7977, %v6303
    %v8042 = vsel %vm3665, %v7978, %v6305
    %v8043 = vsel %vm3665, %v7979, %v6307
    %v8044 = vsel %vm3665, %v7980, %v6309
    %v8045 = vsel %vm3665, %v7981, %v6311
    %v8046 = vsel %vm3665, %v7982, %v6313
    %v8047 = vsel %vm3665, %v7983, %v6315
    %v8048 = vsel %vm3665, %v7984, %v6317
    %v8049 = vsel %vm3665, %v7985, %v6319
    %v8050 = vsel %vm3665, %v7986, %v6321
    %v8051 = vsel %vm3665, %v7987, %v6323
    %v8052 = vsel %vm3795, %v7988, %v6453
    %v8053 = vsel %vm3795, %v7989, %v6455
    %v8054 = vsel %vm3795, %v7990, %v6457
    %v8055 = vsel %vm3795, %v7991, %v6459
    %v8056 = vsel %vm3795, %v7992, %v6461
    %v8057 = vsel %vm3795, %v7993, %v6463
    %v8058 = vsel %vm3795, %v7994, %v6465
    %v8059 = vsel %vm3795, %v7995, %v6467
    %v8060 = vsel %vm3795, %v7996, %v6469
    %v8061 = vsel %vm3795, %v7997, %v6471
    %v8062 = vsel %vm3795, %v7998, %v6473
    %v8063 = vsel %vm3795, %v7999, %v6475
    %v8064 = vsel %vm3795, %v8000, %v6477
    %v8065 = vsel %vm3795, %v8001, %v6479
    %v8066 = vsel %vm3795, %v8002, %v6481
    %v8067 = vsel %vm3795, %v8003, %v6483
    %v8068 = vsel %vm3795, %v8004, %v6485
    %v8069 = vsel %vm3795, %v8005, %v6487
    %v8070 = vsel %vm3795, %v8006, %v6489
    %v8071 = vsel %vm3795, %v8007, %v6491
    %v8072 = vsel %vm3795, %v8008, %v6493
    %v8073 = vsel %vm3795, %v8009, %v6495
    %v8074 = vsel %vm3795, %v8010, %v6497
    %v8075 = vsel %vm3795, %v8011, %v6499
    %v8076 = vsel %vm3795, %v8012, %v6501
    %v8077 = vsel %vm3795, %v8013, %v6503
    %v8078 = vsel %vm3795, %v8014, %v6505
    %v8079 = vsel %vm3795, %v8015, %v6507
    %v8080 = vsel %vm3795, %v8016, %v6509
    %v8081 = vsel %vm3795, %v8017, %v6511
    %v8082 = vsel %vm3795, %v8018, %v6513
    %v8083 = vsel %vm3795, %v8019, %v6515
    %v8084 = vsel %vm3795, %v8020, %v6517
    %v8085 = vsel %vm3795, %v8021, %v6519
    %v8086 = vsel %vm3795, %v8022, %v6521
    %v8087 = vsel %vm3795, %v8023, %v6523
    %v8088 = vsel %vm3795, %v8024, %v6525
    %v8089 = vsel %vm3795, %v8025, %v6527
    %v8090 = vsel %vm3795, %v8026, %v6529
    %v8091 = vsel %vm3795, %v8027, %v6531
    %v8092 = vsel %vm3795, %v8028, %v6533
    %v8093 = vsel %vm3795, %v8029, %v6535
    %v8094 = vsel %vm3795, %v8030, %v6537
    %v8095 = vsel %vm3795, %v8031, %v6539
    %v8096 = vsel %vm3795, %v8032, %v6541
    %v8097 = vsel %vm3795, %v8033, %v6543
    %v8098 = vsel %vm3795, %v8034, %v6545
    %v8099 = vsel %vm3795, %v8035, %v6547
    %v8100 = vsel %vm3795, %v8036, %v6549
    %v8101 = vsel %vm3795, %v8037, %v6551
    %v8102 = vsel %vm3795, %v8038, %v6553
    %v8103 = vsel %vm3795, %v8039, %v6555
    %v8104 = vsel %vm3795, %v8040, %v6557
    %v8105 = vsel %vm3795, %v8041, %v6559
    %v8106 = vsel %vm3795, %v8042, %v6561
    %v8107 = vsel %vm3795, %v8043, %v6563
    %v8108 = vsel %vm3795, %v8044, %v6565
    %v8109 = vsel %vm3795, %v8045, %v6567
    %v8110 = vsel %vm3795, %v8046, %v6569
    %v8111 = vsel %vm3795, %v8047, %v6571
    %v8112 = vsel %vm3795, %v8048, %v6573
    %v8113 = vsel %vm3795, %v8049, %v6575
    %v8114 = vsel %vm3795, %v8050, %v6577
    %v8115 = vsel %vm3795, %v8051, %v6579
    %v8116 = vsel %vm3925, %v8052, %v6709
    %v8117 = vsel %vm3925, %v8053, %v6711
    %v8118 = vsel %vm3925, %v8054, %v6713
    %v8119 = vsel %vm3925, %v8055, %v6715
    %v8120 = vsel %vm3925, %v8056, %v6717
    %v8121 = vsel %vm3925, %v8057, %v6719
    %v8122 = vsel %vm3925, %v8058, %v6721
    %v8123 = vsel %vm3925, %v8059, %v6723
    %v8124 = vsel %vm3925, %v8060, %v6725
    %v8125 = vsel %vm3925, %v8061, %v6727
    %v8126 = vsel %vm3925, %v8062, %v6729
    %v8127 = vsel %vm3925, %v8063, %v6731
    %v8128 = vsel %vm3925, %v8064, %v6733
    %v8129 = vsel %vm3925, %v8065, %v6735
    %v8130 = vsel %vm3925, %v8066, %v6737
    %v8131 = vsel %vm3925, %v8067, %v6739
    %v8132 = vsel %vm3925, %v8068, %v6741
    %v8133 = vsel %vm3925, %v8069, %v6743
    %v8134 = vsel %vm3925, %v8070, %v6745
    %v8135 = vsel %vm3925, %v8071, %v6747
    %v8136 = vsel %vm3925, %v8072, %v6749
    %v8137 = vsel %vm3925, %v8073, %v6751
    %v8138 = vsel %vm3925, %v8074, %v6753
    %v8139 = vsel %vm3925, %v8075, %v6755
    %v8140 = vsel %vm3925, %v8076, %v6757
    %v8141 = vsel %vm3925, %v8077, %v6759
    %v8142 = vsel %vm3925, %v8078, %v6761
    %v8143 = vsel %vm3925, %v8079, %v6763
    %v8144 = vsel %vm3925, %v8080, %v6765
    %v8145 = vsel %vm3925, %v8081, %v6767
    %v8146 = vsel %vm3925, %v8082, %v6769
    %v8147 = vsel %vm3925, %v8083, %v6771
    %v8148 = vsel %vm3925, %v8084, %v6773
    %v8149 = vsel %vm3925, %v8085, %v6775
    %v8150 = vsel %vm3925, %v8086, %v6777
    %v8151 = vsel %vm3925, %v8087, %v6779
    %v8152 = vsel %vm3925, %v8088, %v6781
    %v8153 = vsel %vm3925, %v8089, %v6783
    %v8154 = vsel %vm3925, %v8090, %v6785
    %v8155 = vsel %vm3925, %v8091, %v6787
    %v8156 = vsel %vm3925, %v8092, %v6789
    %v8157 = vsel %vm3925, %v8093, %v6791
    %v8158 = vsel %vm3925, %v8094, %v6793
    %v8159 = vsel %vm3925, %v8095, %v6795
    %v8160 = vsel %vm3925, %v8096, %v6797
    %v8161 = vsel %vm3925, %v8097, %v6799
    %v8162 = vsel %vm3925, %v8098, %v6801
    %v8163 = vsel %vm3925, %v8099, %v6803
    %v8164 = vsel %vm3925, %v8100, %v6805
    %v8165 = vsel %vm3925, %v8101, %v6807
    %v8166 = vsel %vm3925, %v8102, %v6809
    %v8167 = vsel %vm3925, %v8103, %v6811
    %v8168 = vsel %vm3925, %v8104, %v6813
    %v8169 = vsel %vm3925, %v8105, %v6815
    %v8170 = vsel %vm3925, %v8106, %v6817
    %v8171 = vsel %vm3925, %v8107, %v6819
    %v8172 = vsel %vm3925, %v8108, %v6821
    %v8173 = vsel %vm3925, %v8109, %v6823
    %v8174 = vsel %vm3925, %v8110, %v6825
    %v8175 = vsel %vm3925, %v8111, %v6827
    %v8176 = vsel %vm3925, %v8112, %v6829
    %v8177 = vsel %vm3925, %v8113, %v6831
    %v8178 = vsel %vm3925, %v8114, %v6833
    %v8179 = vsel %vm3925, %v8115, %v6835
    %vm8180 = vcmask 326656
    %v8181 = vsel %vm8180, %v8116, %v6965
    %v8182 = vsel %vm8180, %v8117, %v6967
    %v8183 = vsel %vm8180, %v8118, %v6969
    %v8184 = vsel %vm8180, %v8119, %v6971
    %v8185 = vsel %vm8180, %v8120, %v6973
    %v8186 = vsel %vm8180, %v8121, %v6975
    %v8187 = vsel %vm8180, %v8122, %v6977
    %v8188 = vsel %vm8180, %v8123, %v6979
    %v8189 = vsel %vm8180, %v8124, %v6981
    %v8190 = vsel %vm8180, %v8125, %v6983
    %v8191 = vsel %vm8180, %v8126, %v6985
    %v8192 = vsel %vm8180, %v8127, %v6987
    %v8193 = vsel %vm8180, %v8128, %v6989
    %v8194 = vsel %vm8180, %v8129, %v6991
    %v8195 = vsel %vm8180, %v8130, %v6993
    %v8196 = vsel %vm8180, %v8131, %v6995
    %v8197 = vsel %vm8180, %v8132, %v6997
    %v8198 = vsel %vm8180, %v8133, %v6999
    %v8199 = vsel %vm8180, %v8134, %v7001
    %v8200 = vsel %vm8180, %v8135, %v7003
    %v8201 = vsel %vm8180, %v8136, %v7005
    %v8202 = vsel %vm8180, %v8137, %v7007
    %v8203 = vsel %vm8180, %v8138, %v7009
    %v8204 = vsel %vm8180, %v8139, %v7011
    %v8205 = vsel %vm8180, %v8140, %v7013
    %v8206 = vsel %vm8180, %v8141, %v7015
    %v8207 = vsel %vm8180, %v8142, %v7017
    %v8208 = vsel %vm8180, %v8143, %v7019
    %v8209 = vsel %vm8180, %v8144, %v7021
    %v8210 = vsel %vm8180, %v8145, %v7023
    %v8211 = vsel %vm8180, %v8146, %v7025
    %v8212 = vsel %vm8180, %v8147, %v7027
    %v8213 = vsel %vm8180, %v8148, %v7029
    %v8214 = vsel %vm8180, %v8149, %v7031
    %v8215 = vsel %vm8180, %v8150, %v7033
    %v8216 = vsel %vm8180, %v8151, %v7035
    %v8217 = vsel %vm8180, %v8152, %v7037
    %v8218 = vsel %vm8180, %v8153, %v7039
    %v8219 = vsel %vm8180, %v8154, %v7041
    %v8220 = vsel %vm8180, %v8155, %v7043
    %v8221 = vsel %vm8180, %v8156, %v7045
    %v8222 = vsel %vm8180, %v8157, %v7047
    %v8223 = vsel %vm8180, %v8158, %v7049
    %v8224 = vsel %vm8180, %v8159, %v7051
    %v8225 = vsel %vm8180, %v8160, %v7053
    %v8226 = vsel %vm8180, %v8161, %v7055
    %v8227 = vsel %vm8180, %v8162, %v7057
    %v8228 = vsel %vm8180, %v8163, %v7059
    %v8229 = vsel %vm8180, %v8164, %v7061
    %v8230 = vsel %vm8180, %v8165, %v7063
    %v8231 = vsel %vm8180, %v8166, %v7065
    %v8232 = vsel %vm8180, %v8167, %v7067
    %v8233 = vsel %vm8180, %v8168, %v7069
    %v8234 = vsel %vm8180, %v8169, %v7071
    %v8235 = vsel %vm8180, %v8170, %v7073
    %v8236 = vsel %vm8180, %v8171, %v7075
    %v8237 = vsel %vm8180, %v8172, %v7077
    %v8238 = vsel %vm8180, %v8173, %v7079
    %v8239 = vsel %vm8180, %v8174, %v7081
    %v8240 = vsel %vm8180, %v8175, %v7083
    %v8241 = vsel %vm8180, %v8176, %v7085
    %v8242 = vsel %vm8180, %v8177, %v7087
    %v8243 = vsel %vm8180, %v8178, %v7089
    %v8244 = vsel %vm8180, %v8179, %v7091
    %vm8245 = vcmask 392192
    %v8246 = vsel %vm8245, %v8181, %v7221
    %v8247 = vsel %vm8245, %v8182, %v7223
    %v8248 = vsel %vm8245, %v8183, %v7225
    %v8249 = vsel %vm8245, %v8184, %v7227
    %v8250 = vsel %vm8245, %v8185, %v7229
    %v8251 = vsel %vm8245, %v8186, %v7231
    %v8252 = vsel %vm8245, %v8187, %v7233
    %v8253 = vsel %vm8245, %v8188, %v7235
    %v8254 = vsel %vm8245, %v8189, %v7237
    %v8255 = vsel %vm8245, %v8190, %v7239
    %v8256 = vsel %vm8245, %v8191, %v7241
    %v8257 = vsel %vm8245, %v8192, %v7243
    %v8258 = vsel %vm8245, %v8193, %v7245
    %v8259 = vsel %vm8245, %v8194, %v7247
    %v8260 = vsel %vm8245, %v8195, %v7249
    %v8261 = vsel %vm8245, %v8196, %v7251
    %v8262 = vsel %vm8245, %v8197, %v7253
    %v8263 = vsel %vm8245, %v8198, %v7255
    %v8264 = vsel %vm8245, %v8199, %v7257
    %v8265 = vsel %vm8245, %v8200, %v7259
    %v8266 = vsel %vm8245, %v8201, %v7261
    %v8267 = vsel %vm8245, %v8202, %v7263
    %v8268 = vsel %vm8245, %v8203, %v7265
    %v8269 = vsel %vm8245, %v8204, %v7267
    %v8270 = vsel %vm8245, %v8205, %v7269
    %v8271 = vsel %vm8245, %v8206, %v7271
    %v8272 = vsel %vm8245, %v8207, %v7273
    %v8273 = vsel %vm8245, %v8208, %v7275
    %v8274 = vsel %vm8245, %v8209, %v7277
    %v8275 = vsel %vm8245, %v8210, %v7279
    %v8276 = vsel %vm8245, %v8211, %v7281
    %v8277 = vsel %vm8245, %v8212, %v7283
    %v8278 = vsel %vm8245, %v8213, %v7285
    %v8279 = vsel %vm8245, %v8214, %v7287
    %v8280 = vsel %vm8245, %v8215, %v7289
    %v8281 = vsel %vm8245, %v8216, %v7291
    %v8282 = vsel %vm8245, %v8217, %v7293
    %v8283 = vsel %vm8245, %v8218, %v7295
    %v8284 = vsel %vm8245, %v8219, %v7297
    %v8285 = vsel %vm8245, %v8220, %v7299
    %v8286 = vsel %vm8245, %v8221, %v7301
    %v8287 = vsel %vm8245, %v8222, %v7303
    %v8288 = vsel %vm8245, %v8223, %v7305
    %v8289 = vsel %vm8245, %v8224, %v7307
    %v8290 = vsel %vm8245, %v8225, %v7309
    %v8291 = vsel %vm8245, %v8226, %v7311
    %v8292 = vsel %vm8245, %v8227, %v7313
    %v8293 = vsel %vm8245, %v8228, %v7315
    %v8294 = vsel %vm8245, %v8229, %v7317
    %v8295 = vsel %vm8245, %v8230, %v7319
    %v8296 = vsel %vm8245, %v8231, %v7321
    %v8297 = vsel %vm8245, %v8232, %v7323
    %v8298 = vsel %vm8245, %v8233, %v7325
    %v8299 = vsel %vm8245, %v8234, %v7327
    %v8300 = vsel %vm8245, %v8235, %v7329
    %v8301 = vsel %vm8245, %v8236, %v7331
    %v8302 = vsel %vm8245, %v8237, %v7333
    %v8303 = vsel %vm8245, %v8238, %v7335
    %v8304 = vsel %vm8245, %v8239, %v7337
    %v8305 = vsel %vm8245, %v8240, %v7339
    %v8306 = vsel %vm8245, %v8241, %v7341
    %v8307 = vsel %vm8245, %v8242, %v7343
    %v8308 = vsel %vm8245, %v8243, %v7345
    %v8309 = vsel %vm8245, %v8244, %v7347
    %vm8310 = vcmask 457728
    %v8311 = vsel %vm8310, %v8246, %v7477
    %v8312 = vsel %vm8310, %v8247, %v7479
    %v8313 = vsel %vm8310, %v8248, %v7481
    %v8314 = vsel %vm8310, %v8249, %v7483
    %v8315 = vsel %vm8310, %v8250, %v7485
    %v8316 = vsel %vm8310, %v8251, %v7487
    %v8317 = vsel %vm8310, %v8252, %v7489
    %v8318 = vsel %vm8310, %v8253, %v7491
    %v8319 = vsel %vm8310, %v8254, %v7493
    %v8320 = vsel %vm8310, %v8255, %v7495
    %v8321 = vsel %vm8310, %v8256, %v7497
    %v8322 = vsel %vm8310, %v8257, %v7499
    %v8323 = vsel %vm8310, %v8258, %v7501
    %v8324 = vsel %vm8310, %v8259, %v7503
    %v8325 = vsel %vm8310, %v8260, %v7505
    %v8326 = vsel %vm8310, %v8261, %v7507
    %v8327 = vsel %vm8310, %v8262, %v7509
    %v8328 = vsel %vm8310, %v8263, %v7511
    %v8329 = vsel %vm8310, %v8264, %v7513
    %v8330 = vsel %vm8310, %v8265, %v7515
    %v8331 = vsel %vm8310, %v8266, %v7517
    %v8332 = vsel %vm8310, %v8267, %v7519
    %v8333 = vsel %vm8310, %v8268, %v7521
    %v8334 = vsel %vm8310, %v8269, %v7523
    %v8335 = vsel %vm8310, %v8270, %v7525
    %v8336 = vsel %vm8310, %v8271, %v7527
    %v8337 = vsel %vm8310, %v8272, %v7529
    %v8338 = vsel %vm8310, %v8273, %v7531
    %v8339 = vsel %vm8310, %v8274, %v7533
    %v8340 = vsel %vm8310, %v8275, %v7535
    %v8341 = vsel %vm8310, %v8276, %v7537
    %v8342 = vsel %vm8310, %v8277, %v7539
    %v8343 = vsel %vm8310, %v8278, %v7541
    %v8344 = vsel %vm8310, %v8279, %v7543
    %v8345 = vsel %vm8310, %v8280, %v7545
    %v8346 = vsel %vm8310, %v8281, %v7547
    %v8347 = vsel %vm8310, %v8282, %v7549
    %v8348 = vsel %vm8310, %v8283, %v7551
    %v8349 = vsel %vm8310, %v8284, %v7553
    %v8350 = vsel %vm8310, %v8285, %v7555
    %v8351 = vsel %vm8310, %v8286, %v7557
    %v8352 = vsel %vm8310, %v8287, %v7559
    %v8353 = vsel %vm8310, %v8288, %v7561
    %v8354 = vsel %vm8310, %v8289, %v7563
    %v8355 = vsel %vm8310, %v8290, %v7565
    %v8356 = vsel %vm8310, %v8291, %v7567
    %v8357 = vsel %vm8310, %v8292, %v7569
    %v8358 = vsel %vm8310, %v8293, %v7571
    %v8359 = vsel %vm8310, %v8294, %v7573
    %v8360 = vsel %vm8310, %v8295, %v7575
    %v8361 = vsel %vm8310, %v8296, %v7577
    %v8362 = vsel %vm8310, %v8297, %v7579
    %v8363 = vsel %vm8310, %v8298, %v7581
    %v8364 = vsel %vm8310, %v8299, %v7583
    %v8365 = vsel %vm8310, %v8300, %v7585
    %v8366 = vsel %vm8310, %v8301, %v7587
    %v8367 = vsel %vm8310, %v8302, %v7589
    %v8368 = vsel %vm8310, %v8303, %v7591
    %v8369 = vsel %vm8310, %v8304, %v7593
    %v8370 = vsel %vm8310, %v8305, %v7595
    %v8371 = vsel %vm8310, %v8306, %v7597
    %v8372 = vsel %vm8310, %v8307, %v7599
    %v8373 = vsel %vm8310, %v8308, %v7601
    %v8374 = vsel %vm8310, %v8309, %v7603
    %vm8375 = vcmask 523264
    %v8376 = vsel %vm8375, %v8311, %v7733
    %v8377 = vsel %vm8375, %v8312, %v7735
    %v8378 = vsel %vm8375, %v8313, %v7737
    %v8379 = vsel %vm8375, %v8314, %v7739
    %v8380 = vsel %vm8375, %v8315, %v7741
    %v8381 = vsel %vm8375, %v8316, %v7743
    %v8382 = vsel %vm8375, %v8317, %v7745
    %v8383 = vsel %vm8375, %v8318, %v7747
    %v8384 = vsel %vm8375, %v8319, %v7749
    %v8385 = vsel %vm8375, %v8320, %v7751
    %v8386 = vsel %vm8375, %v8321, %v7753
    %v8387 = vsel %vm8375, %v8322, %v7755
    %v8388 = vsel %vm8375, %v8323, %v7757
    %v8389 = vsel %vm8375, %v8324, %v7759
    %v8390 = vsel %vm8375, %v8325, %v7761
    %v8391 = vsel %vm8375, %v8326, %v7763
    %v8392 = vsel %vm8375, %v8327, %v7765
    %v8393 = vsel %vm8375, %v8328, %v7767
    %v8394 = vsel %vm8375, %v8329, %v7769
    %v8395 = vsel %vm8375, %v8330, %v7771
    %v8396 = vsel %vm8375, %v8331, %v7773
    %v8397 = vsel %vm8375, %v8332, %v7775
    %v8398 = vsel %vm8375, %v8333, %v7777
    %v8399 = vsel %vm8375, %v8334, %v7779
    %v8400 = vsel %vm8375, %v8335, %v7781
    %v8401 = vsel %vm8375, %v8336, %v7783
    %v8402 = vsel %vm8375, %v8337, %v7785
    %v8403 = vsel %vm8375, %v8338, %v7787
    %v8404 = vsel %vm8375, %v8339, %v7789
    %v8405 = vsel %vm8375, %v8340, %v7791
    %v8406 = vsel %vm8375, %v8341, %v7793
    %v8407 = vsel %vm8375, %v8342, %v7795
    %v8408 = vsel %vm8375, %v8343, %v7797
    %v8409 = vsel %vm8375, %v8344, %v7799
    %v8410 = vsel %vm8375, %v8345, %v7801
    %v8411 = vsel %vm8375, %v8346, %v7803
    %v8412 = vsel %vm8375, %v8347, %v7805
    %v8413 = vsel %vm8375, %v8348, %v7807
    %v8414 = vsel %vm8375, %v8349, %v7809
    %v8415 = vsel %vm8375, %v8350, %v7811
    %v8416 = vsel %vm8375, %v8351, %v7813
    %v8417 = vsel %vm8375, %v8352, %v7815
    %v8418 = vsel %vm8375, %v8353, %v7817
    %v8419 = vsel %vm8375, %v8354, %v7819
    %v8420 = vsel %vm8375, %v8355, %v7821
    %v8421 = vsel %vm8375, %v8356, %v7823
    %v8422 = vsel %vm8375, %v8357, %v7825
    %v8423 = vsel %vm8375, %v8358, %v7827
    %v8424 = vsel %vm8375, %v8359, %v7829
    %v8425 = vsel %vm8375, %v8360, %v7831
    %v8426 = vsel %vm8375, %v8361, %v7833
    %v8427 = vsel %vm8375, %v8362, %v7835
    %v8428 = vsel %vm8375, %v8363, %v7837
    %v8429 = vsel %vm8375, %v8364, %v7839
    %v8430 = vsel %vm8375, %v8365, %v7841
    %v8431 = vsel %vm8375, %v8366, %v7843
    %v8432 = vsel %vm8375, %v8367, %v7845
    %v8433 = vsel %vm8375, %v8368, %v7847
    %v8434 = vsel %vm8375, %v8369, %v7849
    %v8435 = vsel %vm8375, %v8370, %v7851
    %v8436 = vsel %vm8375, %v8371, %v7853
    %v8437 = vsel %vm8375, %v8372, %v7855
    %v8438 = vsel %vm8375, %v8373, %v7857
    %v8439 = vsel %vm8375, %v8374, %v7859
    %v8440 = vld [vmem:[%s5] sm:$0xff]
    %v8441 = vld [vmem:[%s6] sm:$0xff]
    %8443 = vset.pattern.permute.xlu0 0
    %8444 = vperm.xlu0 %8443, %v8441
    %v8445 = vpop.permute.xlu0 %8444
    %vm8447 = vcmask 588800
    %v8449 = vsel %vm8447, %v8440, 0
    %v8452 = vsel %vm8447, %v8376, 0
    %v8455 = vsel %vm8447, %v8377, 0
    %v8458 = vsel %vm8447, %v8378, 0
    %v8461 = vsel %vm8447, %v8379, 0
    %v8464 = vsel %vm8447, %v8380, 0
    %v8467 = vsel %vm8447, %v8381, 0
    %v8470 = vsel %vm8447, %v8382, 0
    %v8473 = vsel %vm8447, %v8383, 0
    %v8476 = vsel %vm8447, %v8384, 0
    %v8479 = vsel %vm8447, %v8385, 0
    %v8482 = vsel %vm8447, %v8386, 0
    %v8485 = vsel %vm8447, %v8387, 0
    %v8488 = vsel %vm8447, %v8388, 0
    %v8491 = vsel %vm8447, %v8389, 0
    %v8494 = vsel %vm8447, %v8390, 0
    %v8497 = vsel %vm8447, %v8391, 0
    %v8500 = vsel %vm8447, %v8392, 0
    %v8503 = vsel %vm8447, %v8393, 0
    %v8506 = vsel %vm8447, %v8394, 0
    %v8509 = vsel %vm8447, %v8395, 0
    %v8512 = vsel %vm8447, %v8396, 0
    %v8515 = vsel %vm8447, %v8397, 0
    %v8518 = vsel %vm8447, %v8398, 0
    %v8521 = vsel %vm8447, %v8399, 0
    %v8524 = vsel %vm8447, %v8400, 0
    %v8527 = vsel %vm8447, %v8401, 0
    %v8530 = vsel %vm8447, %v8402, 0
    %v8533 = vsel %vm8447, %v8403, 0
    %v8536 = vsel %vm8447, %v8404, 0
    %v8539 = vsel %vm8447, %v8405, 0
    %v8542 = vsel %vm8447, %v8406, 0
    %v8545 = vsel %vm8447, %v8407, 0
    %v8548 = vsel %vm8447, %v8408, 0
    %v8551 = vsel %vm8447, %v8409, 0
    %v8554 = vsel %vm8447, %v8410, 0
    %v8557 = vsel %vm8447, %v8411, 0
    %v8560 = vsel %vm8447, %v8412, 0
    %v8563 = vsel %vm8447, %v8413, 0
    %v8566 = vsel %vm8447, %v8414, 0
    %v8569 = vsel %vm8447, %v8415, 0
    %v8572 = vsel %vm8447, %v8416, 0
    %v8575 = vsel %vm8447, %v8417, 0
    %v8578 = vsel %vm8447, %v8418, 0
    %v8581 = vsel %vm8447, %v8419, 0
    %v8584 = vsel %vm8447, %v8420, 0
    %v8587 = vsel %vm8447, %v8421, 0
    %v8590 = vsel %vm8447, %v8422, 0
    %v8593 = vsel %vm8447, %v8423, 0
    %v8596 = vsel %vm8447, %v8424, 0
    %v8599 = vsel %vm8447, %v8425, 0
    %v8602 = vsel %vm8447, %v8426, 0
    %v8605 = vsel %vm8447, %v8427, 0
    %v8608 = vsel %vm8447, %v8428, 0
    %v8611 = vsel %vm8447, %v8429, 0
    %v8614 = vsel %vm8447, %v8430, 0
    %v8617 = vsel %vm8447, %v8431, 0
    %v8620 = vsel %vm8447, %v8432, 0
    %v8623 = vsel %vm8447, %v8433, 0
    %v8626 = vsel %vm8447, %v8434, 0
    %v8629 = vsel %vm8447, %v8435, 0
    %v8632 = vsel %vm8447, %v8436, 0
    %v8635 = vsel %vm8447, %v8437, 0
    %v8638 = vsel %vm8447, %v8438, 0
    %v8641 = vsel %vm8447, %v8439, 0
    %8643 = vmatprep.subr.mxu0 0.0
    %8644 = vmatpush1.xpose.msra.mxu0 %v8497
    %8645 = vmatprep.subr.mxu0 0.0
    %8646 = vmatpush1.xpose.msra.mxu0 %v8494
    %8647 = vmatprep.subr.mxu0 0.0
    %8648 = vmatpush1.xpose.msra.mxu0 %v8491
    %8649 = vmatprep.subr.mxu0 0.0
    %8650 = vmatpush1.xpose.msra.mxu0 %v8488
    %8651 = vmatprep.subr.mxu0 0.0
    %8652 = vmatpush1.xpose.msra.mxu0 %v8485
    %8653 = vmatprep.subr.mxu0 0.0
    %8654 = vmatpush1.xpose.msra.mxu0 %v8482
    %8655 = vmatprep.subr.mxu0 0.0
    %8656 = vmatpush1.xpose.msra.mxu0 %v8479
    %8657 = vmatprep.subr.mxu0 0.0
    %8658 = vmatpush1.xpose.msra.mxu0 %v8476
    %8659 = vmatprep.subr.mxu0 0.0
    %8660 = vmatpush1.xpose.msra.mxu0 %v8473
    %8661 = vmatprep.subr.mxu0 0.0
    %8662 = vmatpush1.xpose.msra.mxu0 %v8470
    %8663 = vmatprep.subr.mxu0 0.0
    %8664 = vmatpush1.xpose.msra.mxu0 %v8467
    %8665 = vmatprep.subr.mxu0 0.0
    %8666 = vmatpush1.xpose.msra.mxu0 %v8464
    %8667 = vmatprep.subr.mxu0 0.0
    %8668 = vmatpush1.xpose.msra.mxu0 %v8461
    %8669 = vmatprep.subr.mxu0 0.0
    %8670 = vmatpush1.xpose.msra.mxu0 %v8458
    %8671 = vmatprep.subr.mxu0 0.0
    %8672 = vmatpush1.xpose.msra.mxu0 %v8455
    %8673 = vmatprep.subr.mxu0 0.0
    %8674 = vmatpush1.xpose.msra.mxu0 %v8452
    %8675 = vmatprep.subr.mxu0 0.0
    %8676 = vmatpush2.xpose.msra.mxu0 %v8545
    %8677 = vmatprep.subr.mxu0 0.0
    %8678 = vmatpush2.xpose.msra.mxu0 %v8542
    %8679 = vmatprep.subr.mxu0 0.0
    %8680 = vmatpush2.xpose.msra.mxu0 %v8539
    %8681 = vmatprep.subr.mxu0 0.0
    %8682 = vmatpush2.xpose.msra.mxu0 %v8536
    %8683 = vmatprep.subr.mxu0 0.0
    %8684 = vmatpush2.xpose.msra.mxu0 %v8533
    %8685 = vmatprep.subr.mxu0 0.0
    %8686 = vmatpush2.xpose.msra.mxu0 %v8530
    %8687 = vmatprep.subr.mxu0 0.0
    %8688 = vmatpush2.xpose.msra.mxu0 %v8527
    %8689 = vmatprep.subr.mxu0 0.0
    %8690 = vmatpush2.xpose.msra.mxu0 %v8524
    %8691 = vmatprep.subr.mxu0 0.0
    %8692 = vmatpush2.xpose.msra.mxu0 %v8521
    %8693 = vmatprep.subr.mxu0 0.0
    %8694 = vmatpush2.xpose.msra.mxu0 %v8518
    %8695 = vmatprep.subr.mxu0 0.0
    %8696 = vmatpush2.xpose.msra.mxu0 %v8515
    %8697 = vmatprep.subr.mxu0 0.0
    %8698 = vmatpush2.xpose.msra.mxu0 %v8512
    %8699 = vmatprep.subr.mxu0 0.0
    %8700 = vmatpush2.xpose.msra.mxu0 %v8509
    %8701 = vmatprep.subr.mxu0 0.0
    %8702 = vmatpush2.xpose.msra.mxu0 %v8506
    %8703 = vmatprep.subr.mxu0 0.0
    %8704 = vmatpush2.xpose.msra.mxu0 %v8503
    %8705 = vmatprep.subr.mxu0 0.0
    %8706 = vmatpush2.xpose.msra.mxu0 %v8500
    %8707 = vmatprep.mubr.f32.mxu0 0.0
    %8708 = vmatmul.mubr.f32.gmra.mxu0 %v8449
    %v8709 = vpop.f32.mrf.mxu0
    %v8710 = vadd.f32 %v8445, %v8709
    %v8711 = vpop.f32.mrf.mxu0
    %v8712 = vadd.f32 %v8445, %v8711
    %8713 = vdwg.mxu0
    %8714 = vmatprep.subr.mxu0 0.0
    %8715 = vmatpush1.xpose.msra.mxu0 %v8593
    %8716 = vmatprep.subr.mxu0 0.0
    %8717 = vmatpush1.xpose.msra.mxu0 %v8590
    %8718 = vmatprep.subr.mxu0 0.0
    %8719 = vmatpush1.xpose.msra.mxu0 %v8587
    %8720 = vmatprep.subr.mxu0 0.0
    %8721 = vmatpush1.xpose.msra.mxu0 %v8584
    %8722 = vmatprep.subr.mxu0 0.0
    %8723 = vmatpush1.xpose.msra.mxu0 %v8581
    %8724 = vmatprep.subr.mxu0 0.0
    %8725 = vmatpush1.xpose.msra.mxu0 %v8578
    %8726 = vmatprep.subr.mxu0 0.0
    %8727 = vmatpush1.xpose.msra.mxu0 %v8575
    %8728 = vmatprep.subr.mxu0 0.0
    %8729 = vmatpush1.xpose.msra.mxu0 %v8572
    %8730 = vmatprep.subr.mxu0 0.0
    %8731 = vmatpush1.xpose.msra.mxu0 %v8569
    %8732 = vmatprep.subr.mxu0 0.0
    %8733 = vmatpush1.xpose.msra.mxu0 %v8566
    %8734 = vmatprep.subr.mxu0 0.0
    %8735 = vmatpush1.xpose.msra.mxu0 %v8563
    %8736 = vmatprep.subr.mxu0 0.0
    %8737 = vmatpush1.xpose.msra.mxu0 %v8560
    %8738 = vmatprep.subr.mxu0 0.0
    %8739 = vmatpush1.xpose.msra.mxu0 %v8557
    %8740 = vmatprep.subr.mxu0 0.0
    %8741 = vmatpush1.xpose.msra.mxu0 %v8554
    %8742 = vmatprep.subr.mxu0 0.0
    %8743 = vmatpush1.xpose.msra.mxu0 %v8551
    %8744 = vmatprep.subr.mxu0 0.0
    %8745 = vmatpush1.xpose.msra.mxu0 %v8548
    %8746 = vmatprep.subr.mxu0 0.0
    %8747 = vmatpush2.xpose.msra.mxu0 %v8641
    %8748 = vmatprep.subr.mxu0 0.0
    %8749 = vmatpush2.xpose.msra.mxu0 %v8638
    %8750 = vmatprep.subr.mxu0 0.0
    %8751 = vmatpush2.xpose.msra.mxu0 %v8635
    %8752 = vmatprep.subr.mxu0 0.0
    %8753 = vmatpush2.xpose.msra.mxu0 %v8632
    %8754 = vmatprep.subr.mxu0 0.0
    %8755 = vmatpush2.xpose.msra.mxu0 %v8629
    %8756 = vmatprep.subr.mxu0 0.0
    %8757 = vmatpush2.xpose.msra.mxu0 %v8626
    %8758 = vmatprep.subr.mxu0 0.0
    %8759 = vmatpush2.xpose.msra.mxu0 %v8623
    %8760 = vmatprep.subr.mxu0 0.0
    %8761 = vmatpush2.xpose.msra.mxu0 %v8620
    %8762 = vmatprep.subr.mxu0 0.0
    %8763 = vmatpush2.xpose.msra.mxu0 %v8617
    %8764 = vmatprep.subr.mxu0 0.0
    %8765 = vmatpush2.xpose.msra.mxu0 %v8614
    %8766 = vmatprep.subr.mxu0 0.0
    %8767 = vmatpush2.xpose.msra.mxu0 %v8611
    %8768 = vmatprep.subr.mxu0 0.0
    %8769 = vmatpush2.xpose.msra.mxu0 %v8608
    %8770 = vmatprep.subr.mxu0 0.0
    %8771 = vmatpush2.xpose.msra.mxu0 %v8605
    %8772 = vmatprep.subr.mxu0 0.0
    %8773 = vmatpush2.xpose.msra.mxu0 %v8602
    %8774 = vmatprep.subr.mxu0 0.0
    %8775 = vmatpush2.xpose.msra.mxu0 %v8599
    %8776 = vmatprep.subr.mxu0 0.0
    %8777 = vmatpush2.xpose.msra.mxu0 %v8596
    %8778 = vmatprep.mubr.f32.mxu0 0.0
    %8779 = vmatmul.mubr.f32.gmra.mxu0 %v8449
    %v8780 = vpop.f32.mrf.mxu0
    %v8781 = vadd.f32 %v8445, %v8780
    %v8782 = vpop.f32.mrf.mxu0
    %v8783 = vadd.f32 %v8445, %v8782
    %8784 = vdwg.mxu0
    %v8785 = vadd.f32 %v8710, %v8712
    %v8786 = vadd.f32 %v8785, %v8781
    %v8787 = vadd.f32 %v8786, %v8783
    %8788 = vadd.xlane.f32.xlu0 %v8787
    %v8789 = vpop.xlane.xlu0 %8788
    %v8790 = vmul.f32 %v8789, %v4653
    %v8791 = vsub.f32 %v8710, %v8790
    %v8792 = vsub.f32 %v8712, %v8790
    %v8793 = vsub.f32 %v8781, %v8790
    %v8794 = vsub.f32 %v8783, %v8790
    %v8795 = vmul.f32 %v8791, %v8791
    %v8796 = vmul.f32 %v8792, %v8792
    %v8797 = vmul.f32 %v8793, %v8793
    %v8798 = vmul.f32 %v8794, %v8794
    %v8799 = vadd.f32 %v8795, %v8796
    %v8800 = vadd.f32 %v8799, %v8797
    %v8801 = vadd.f32 %v8800, %v8798
    %8802 = vadd.xlane.f32.xlu0 %v8801
    %v8803 = vpop.xlane.xlu0 %8802
    %v8804 = vmul.f32 %v8803, %v4653
    %v8805 = vadd.f32 %v8804, 1e-05
    %v8806 = vrsqrt.pop %v8805
    %v8807 = vmul.f32 %v8791, %v8806
    %v8808 = vmul.f32 %v8792, %v8806
    %v8809 = vmul.f32 %v8793, %v8806
    %v8810 = vmul.f32 %v8794, %v8806
    %v8811 = vld [vmem:[%s7] sm:$0xff]
    %8813 = vset.pattern.permute.xlu0 0
    %8814 = vperm.xlu0 %8813, %v8811
    %v8815 = vpop.permute.xlu0 %8814
    %v8817 = vmul.f32 %v8807, %v8815
    %v8818 = vmul.f32 %v8808, %v8815
    %v8819 = vmul.f32 %v8809, %v8815
    %v8820 = vmul.f32 %v8810, %v8815
    %v8821 = vld [vmem:[%s8] sm:$0xff]
    %8823 = vset.pattern.permute.xlu0 0
    %8824 = vperm.xlu0 %8823, %v8821
    %v8825 = vpop.permute.xlu0 %8824
    %v8827 = vadd.f32 %v8817, %v8825
    %v8828 = vadd.f32 %v8818, %v8825
    %v8829 = vadd.f32 %v8819, %v8825
    %v8830 = vadd.f32 %v8820, %v8825
    %v8831 = vmax.f32 %v8827, 0.0
    %v8832 = vmax.f32 %v8828, 0.0
    %v8833 = vmax.f32 %v8829, 0.0
    %v8834 = vmax.f32 %v8830, 0.0
    %8835 = vst [vmem:[#allocation7] sm:$0xff] %v8831
    %8836 = vst [vmem:[#allocation7 + $0x8] sm:$0xff] %v8832
    %s8837 = scalar_lea.vmem [#allocation7], 16
    %8838 = vst [vmem:[%s8837] sm:$0xff] %v8833
    %8839 = vst [vmem:[%s8837 + $0x8] sm:$0xff] %v8834
    // Predicated region
    $region42: #{tpu_custom_call.1} parent=1 // pred_check
      _
    $region43: #{tpu_custom_call.1} parent=1 // pred_check_branch
      %8841 = sbr.rel (0) target = $region45
    $region44: #{tpu_custom_call.1} parent=1 // pred_region
      %s8843 = ssub.s32 512, 512
      %8844 = vsyncadd [#allocation6], %s8843
      %s8845 = sshll.u32 [#allocation7], 4
      %s8846 = int_to_ptr.vmem [resolvable:$true] %s8845
      %8851 = dma.vmem_to_hbm [thread:$0]  %s8846, 512, %s9, [#allocation6], 256, 256, 16
    $region45: #{tpu_custom_call.1} parent=1 // pred_fallthru
      _
    // Predicated region
    $region46: #{tpu_custom_call.1} parent=1 // pred_check
      _
    $region47: #{tpu_custom_call.1} parent=1 // pred_check_branch
      %8853 = sbr.rel (0) target = $region49
    $region48: #{tpu_custom_call.1} parent=1 // pred_region
      %8854 = dma.done [#allocation6], 512
    $region49: #{tpu_custom_call.1} parent=1 // pred_fallthru
      _
    %8855 = vsyncpa [#allocation5], 1
    %8856 = vsyncpa [#allocation6], 1

</llo_original>
